<compile_context>
chip_gen: v5e
topology: v5e:2x2
jax: 0.10.0
libtpu: 0.0.40
codegen_flags: <defaults>
</compile_context>

<pallas_src>
import functools

import jax
import jax.numpy as jnp
from jax import lax
from jax.experimental import pallas as pl
from jax.experimental.pallas import tpu as pltpu

EPS = 1e-5
LANE = 128
PADW = 8                              # sublane-aligned width padding of conv2 scratch
_VMEM_LIMIT = 32 * 1024 * 1024        # safe scoped-VMEM budget on v5e/v6e/v7x


def _round_up(x, m):
    return (x + m - 1) // m * m


def _pad_last(a, size):
    pad = size - a.shape[-1]
    if pad == 0:
        return a
    return jnp.pad(a, [(0, 0)] * (a.ndim - 1) + [(0, pad)])


def _pick_row_tile(ho, wo, target_rows=512):
    """Largest divisor of Ho whose tile has at most ~target_rows output rows."""
    best = 1
    for cand in range(1, ho + 1):
        if ho % cand == 0 and cand * wo <= target_rows:
            best = cand
    return best


# ----------------------------- Pallas kernels ------------------------------ #

def _conv3x3_stats_kernel(xp_ref, w_ref, y_ref, stats_ref, *, stride):
    """One (image, row-tile) step of a 3x3 conv + BN-stats accumulation.

    xp_ref   : (H_pad, W_pad, Cin)   bf16, resident per image across row tiles
    w_ref    : (9, Cin, Cout_p)      bf16, resident for the whole grid
    y_ref    : (TR, Wo, Cout_p)      f32 pre-BN conv output tile
    stats_ref: (2, Cout_p)           f32 per-image [sum, sum_sq] accumulator
    """
    r = pl.program_id(1)
    tr, wo, cout = y_ref.shape
    cin = xp_ref.shape[-1]
    row0 = r * (tr * stride)

    acc = jnp.zeros((tr * wo, cout), jnp.float32)
    for kh in range(3):
        # Row band for this kernel row; only the (untiled) leading dim is
        # dynamically indexed, minor dims are read full-extent.
        if stride == 1:
            band = xp_ref[pl.ds(row0 + kh, tr), :, :]            # (tr, W_pad, cin)
        else:
            band = xp_ref[pl.ds(row0 + kh, tr, stride), :, :]
        for kw in range(3):
            if stride == 1:
                a = band[:, kw:kw + wo, :]                        # (tr, wo, cin)
            else:
                a = lax.slice(band, (0, kw, 0),
                              (tr, kw + stride * (wo - 1) + 1, cin),
                              (1, stride, 1))
            acc += jnp.dot(a.reshape(tr * wo, cin), w_ref[3 * kh + kw],
                           preferred_element_type=jnp.float32)

    y_ref[...] = acc.reshape(tr, wo, cout)

    tile_stats = jnp.concatenate(
        [jnp.sum(acc, axis=0, keepdims=True),
         jnp.sum(acc * acc, axis=0, keepdims=True)], axis=0)      # (2, cout)

    @pl.when(r == 0)
    def _():
        stats_ref[...] = jnp.zeros_like(stats_ref)

    stats_ref[...] += tile_stats


def _bn_relu_conv3x3_stats_kernel(y1_ref, sc_ref, sh_ref, w_ref,
                                  y_ref, stats_ref, h1p_ref):
    """Fused BN1+ReLU -> 3x3 stride-1 conv -> BN2 stats.

    y1_ref   : (Ho, Wo, C)       f32 conv1 output, resident per image
    sc_ref   : (1, 1, C)         f32 folded BN1 scale
    sh_ref   : (1, 1, C)         f32 folded BN1 shift
    w_ref    : (9, C, C)         bf16 conv2 weights, resident
    y_ref    : (TR, Wo, C)       f32 pre-BN2 conv output tile
    stats_ref: (2, C)            f32 per-image [sum, sum_sq] accumulator
    h1p_ref  : scratch (Ho+2, Wo+2*PADW, C) bf16 — BN1+ReLU activation with a
               zero halo; built once per image (r == 0), reused by all row tiles.
    """
    r = pl.program_id(1)
    tr, wo, cout = y_ref.shape
    ho, _, cmid = y1_ref.shape

    @pl.when(r == 0)
    def _():
        # Zero the halo (rows 0 / Ho+1 and the PADW-wide column aprons), then
        # fill the interior band-by-band to bound register pressure.
        # TODO(synk): for very large images, this per-image pass could itself be
        # split across the row-tile axis with an extra halo-row recompute.
        h1p_ref[...] = jnp.zeros_like(h1p_ref)
        zc = jnp.zeros((tr, PADW, cmid), jnp.float32)
        for rr in range(ho // tr):
            blk = y1_ref[pl.ds(rr * tr, tr), :, :]                 # (tr, wo, cmid)
            h1 = jnp.maximum(blk * sc_ref[...] + sh_ref[...], 0.0)
            h1w = jnp.concatenate([zc, h1, zc], axis=1)            # (tr, wo+2*PADW, cmid)
            h1p_ref[pl.ds(1 + rr * tr, tr)] = h1w.astype(jnp.bfloat16)

    row0 = r * tr
    acc = jnp.zeros((tr * wo, cout), jnp.float32)
    for kh in range(3):
        band = h1p_ref[pl.ds(row0 + kh, tr), :, :]                 # (tr, wo+2*PADW, cmid)
        for kw in range(3):
            a = band[:, PADW - 1 + kw: PADW - 1 + kw + wo, :]      # (tr, wo, cmid)
            acc += jnp.dot(a.reshape(tr * wo, cmid), w_ref[3 * kh + kw],
                           preferred_element_type=jnp.float32)

    y_ref[...] = acc.reshape(tr, wo, cout)

    tile_stats = jnp.concatenate(
        [jnp.sum(acc, axis=0, keepdims=True),
         jnp.sum(acc * acc, axis=0, keepdims=True)], axis=0)

    @pl.when(r == 0)
    def _():
        stats_ref[...] = jnp.zeros_like(stats_ref)

    stats_ref[...] += tile_stats


def _bn_add_relu_kernel(y_ref, res_ref, sc_ref, sh_ref, o_ref):
    """o = relu(y * scale + shift + residual)   (identity residual, channel-padded)."""
    out = y_ref[...] * sc_ref[...] + sh_ref[...] + res_ref[...]
    o_ref[...] = jnp.maximum(out, 0.0)


def _bn_proj_add_relu_kernel(y_ref, xs_ref, wres_ref, sc_ref, sh_ref, o_ref):
    """o = relu(y * scale + shift + xs @ wres)  (fused 1x1-conv residual)."""
    y = y_ref[...]
    tr, wo, _ = y.shape
    cin = xs_ref.shape[-1]
    res = jnp.dot(xs_ref[...].reshape(tr * wo, cin), wres_ref[...],
                  preferred_element_type=jnp.float32)
    out = y * sc_ref[...] + sh_ref[...] + res.reshape(y.shape)
    o_ref[...] = jnp.maximum(out, 0.0)


# ------------------------------ pallas_call glue --------------------------- #

def _conv3x3(xp, w9, ho, wo, tr, stride):
    """3x3 conv (stride) of a padded NHWC bf16 input; returns (y, stats)."""
    n, hp, wp, cin = xp.shape
    cout_p = w9.shape[-1]
    r_steps = ho // tr
    kernel = functools.partial(_conv3x3_stats_kernel, stride=stride)
    flops = 2 * n * ho * wo * 9 * cin * cout_p
    bytes_accessed = int(xp.size) * 2 + int(w9.size) * 2 \
        + n * ho * wo * cout_p * 4 + n * 2 * cout_p * 4

    # TODO(synk): the whole padded image is kept VMEM-resident per grid step;
    # extremely large spatial inputs would need row-band manual DMA with halos.
    y, stats = pl.pallas_call(
        kernel,
        out_shape=(jax.ShapeDtypeStruct((n, ho, wo, cout_p), jnp.float32),
                   jax.ShapeDtypeStruct((n, 2, cout_p), jnp.float32)),
        grid=(n, r_steps),
        in_specs=[
            pl.BlockSpec((None, hp, wp, cin), lambda i, r: (i, 0, 0, 0)),
            pl.BlockSpec((9, cin, cout_p), lambda i, r: (0, 0, 0)),
        ],
        out_specs=(
            pl.BlockSpec((None, tr, wo, cout_p), lambda i, r: (i, r, 0, 0)),
            pl.BlockSpec((None, 2, cout_p), lambda i, r: (i, 0, 0)),
        ),
        compiler_params=pltpu.CompilerParams(
            dimension_semantics=("parallel", "arbitrary"),
            vmem_limit_bytes=_VMEM_LIMIT),
        cost_estimate=pl.CostEstimate(
            flops=flops, transcendentals=0, bytes_accessed=int(bytes_accessed)),
    )(xp, w9)
    return y, stats


def _conv3x3_fused_bn(y1, scale, shift, w9, tr):
    """BN1+ReLU fused into the 3x3 stride-1 conv2; returns (y2, stats2)."""
    n, ho, wo, cmid = y1.shape
    cout_p = w9.shape[-1]
    r_steps = ho // tr
    sc = scale.reshape(1, 1, cmid)
    sh = shift.reshape(1, 1, cmid)
    flops = 2 * n * ho * wo * 9 * cmid * cout_p
    bytes_accessed = int(y1.size) * 4 + int(w9.size) * 2 \
        + n * ho * wo * cout_p * 4 + n * 2 * cout_p * 4

    return pl.pallas_call(
        _bn_relu_conv3x3_stats_kernel,
        out_shape=(jax.ShapeDtypeStruct((n, ho, wo, cout_p), jnp.float32),
                   jax.ShapeDtypeStruct((n, 2, cout_p), jnp.float32)),
        grid=(n, r_steps),
        in_specs=[
            pl.BlockSpec((None, ho, wo, cmid), lambda i, r: (i, 0, 0, 0)),
            pl.BlockSpec((1, 1, cmid), lambda i, r: (0, 0, 0)),
            pl.BlockSpec((1, 1, cmid), lambda i, r: (0, 0, 0)),
            pl.BlockSpec((9, cmid, cout_p), lambda i, r: (0, 0, 0)),
        ],
        out_specs=(
            pl.BlockSpec((None, tr, wo, cout_p), lambda i, r: (i, r, 0, 0)),
            pl.BlockSpec((None, 2, cout_p), lambda i, r: (i, 0, 0)),
        ),
        scratch_shapes=[pltpu.VMEM((ho + 2, wo + 2 * PADW, cmid), jnp.bfloat16)],
        compiler_params=pltpu.CompilerParams(
            dimension_semantics=("parallel", "arbitrary"),
            vmem_limit_bytes=_VMEM_LIMIT),
        cost_estimate=pl.CostEstimate(
            flops=flops, transcendentals=0, bytes_accessed=int(bytes_accessed)),
    )(y1, sc, sh, w9)


def _bn_scale_shift(stats, gamma, beta, m, cout_p):
    """Fold batch statistics into per-channel scale/shift (f32, tiny vectors)."""
    s = jnp.sum(stats, axis=0)                 # (2, cout_p): [sum, sum_sq]
    mean = s[0] / m
    var = s[1] / m - mean * mean               # biased variance (BN training mode)
    g = _pad_last(gamma, cout_p)
    b = _pad_last(beta, cout_p)
    scale = g * lax.rsqrt(var + EPS)
    shift = b - mean * scale
    return scale, shift


def _finalize(y2, scale, shift, residual, tr, *, projected):
    """Fused BN2 + residual add (+1x1-conv projection) + ReLU."""
    n, ho, wo, cout_p = y2.shape
    r_steps = ho // tr
    sc = scale.reshape(1, 1, cout_p)
    sh = shift.reshape(1, 1, cout_p)

    def tile4(c):
        return pl.BlockSpec((None, tr, wo, c), lambda i, r: (i, r, 0, 0))

    def const(shape):
        return pl.BlockSpec(shape, lambda i, r: (0,) * len(shape))

    if projected:
        xs, wres = residual
        kernel = _bn_proj_add_relu_kernel
        in_specs = [tile4(cout_p), tile4(xs.shape[-1]),
                    const(wres.shape), const(sc.shape), const(sh.shape)]
        args = (y2, xs, wres, sc, sh)
    else:
        kernel = _bn_add_relu_kernel
        in_specs = [tile4(cout_p), tile4(cout_p), const(sc.shape), const(sh.shape)]
        args = (y2, residual, sc, sh)

    return pl.pallas_call(
        kernel,
        out_shape=jax.ShapeDtypeStruct((n, ho, wo, cout_p), jnp.float32),
        grid=(n, r_steps),
        in_specs=in_specs,
        out_specs=tile4(cout_p),
        compiler_params=pltpu.CompilerParams(
            dimension_semantics=("parallel", "parallel"),
            vmem_limit_bytes=_VMEM_LIMIT),
    )(*args)


# --------------------------- BasicBlock forward ----------------------------- #

def basic_block_forward(x, params, *, stride=1, padding=1, row_tile=None,
                        fuse_bn1=True):
    """x: (N, H, W, Cin) NHWC float32. Returns (N, Ho, Wo, Cout) float32."""
    n, h, w, cin = x.shape
    cout = params["w1"].shape[-1]
    cout_p = _round_up(cout, LANE)            # lane-dense padded channel count
    ho = (h + 2 * padding - 3) // stride + 1
    wo = (w + 2 * padding - 3) // stride + 1
    tr = row_tile if row_tile is not None else _pick_row_tile(ho, wo)
    if ho % tr != 0:
        raise ValueError(f"row_tile={tr} must divide Ho={ho}")
    m = n * ho * wo

    # --- conv1 (3x3, stride, padding) + BN1 statistics ----------------------
    xp = jnp.pad(x, ((0, 0), (padding, padding), (padding, padding), (0, 0)))
    xp = xp.astype(jnp.bfloat16)
    w1 = _pad_last(params["w1"].reshape(9, cin, cout), cout_p).astype(jnp.bfloat16)
    y1, st1 = _conv3x3(xp, w1, ho, wo, tr, stride)
    sc1, sh1 = _bn_scale_shift(st1, params["g1"], params["b1"], m, cout_p)

    # --- conv2 (3x3, stride 1, pad 1) + BN2 statistics -----------------------
    w2 = params["w2"].reshape(9, cout, cout)
    w2 = jnp.pad(w2, ((0, 0), (0, cout_p - cout), (0, cout_p - cout)))
    w2 = w2.astype(jnp.bfloat16)
    if fuse_bn1:
        # BN1 + ReLU + zero-halo padding happen inside the conv2 kernel (VMEM
        # scratch) — no extra HBM round trip for the intermediate activation.
        y2, st2 = _conv3x3_fused_bn(y1, sc1, sh1, w2, tr)
    else:
        # Unfused fallback: BN1 + ReLU + pad as one XLA elementwise pass, then
        # the generic conv kernel.  Numerically identical to the fused path.
        h1 = jnp.maximum(y1 * sc1.reshape(1, 1, 1, -1)
                         + sh1.reshape(1, 1, 1, -1), 0.0)
        h1p = jnp.pad(h1, ((0, 0), (1, 1), (1, 1), (0, 0))).astype(jnp.bfloat16)
        y2, st2 = _conv3x3(h1p, w2, ho, wo, tr, 1)
    sc2, sh2 = _bn_scale_shift(st2, params["g2"], params["b2"], m, cout_p)

    # --- BN2 + residual add + ReLU (1x1-conv projection fused in-kernel) ----
    if params["wres"] is None:
        res = _pad_last(x[:, ::stride, ::stride, :], cout_p)
        out = _finalize(y2, sc2, sh2, res, tr, projected=False)
    else:
        xs = x[:, ::stride, ::stride, :].astype(jnp.bfloat16)
        wres = _pad_last(params["wres"].reshape(cin, cout), cout_p)
        out = _finalize(y2, sc2, sh2, (xs, wres.astype(jnp.bfloat16)), tr,
                        projected=True)

    return out[..., :cout]


# ------------------------------- pure-JAX reference ------------------------- #

def reference_forward(x, params, *, stride=1, padding=1):
    """Reference mirroring the kernels' data path (bf16 conv operands, f32 BN)."""
    dn = ("NHWC", "HWIO", "NHWC")

    def conv(z, wgt, s, p):
        return lax.conv_general_dilated(
            z.astype(jnp.bfloat16), wgt.astype(jnp.bfloat16),
            (s, s), ((p, p), (p, p)), dimension_numbers=dn,
            preferred_element_type=jnp.float32)

    def bn(y, g, b):
        mean = jnp.mean(y, axis=(0, 1, 2), keepdims=True)
        var = jnp.mean(jnp.square(y - mean), axis=(0, 1, 2), keepdims=True)
        return (y - mean) * lax.rsqrt(var + EPS) * g.reshape(1, 1, 1, -1) \
            + b.reshape(1, 1, 1, -1)

    hid = jax.nn.relu(bn(conv(x, params["w1"], stride, padding),
                         params["g1"], params["b1"]))
    h2 = bn(conv(hid, params["w2"], 1, 1), params["g2"], params["b2"])
    if params["wres"] is None:
        res = x[:, ::stride, ::stride, :]
    else:
        res = conv(x, params["wres"], stride, 0)
    return jax.nn.relu(h2 + res)


# ----------------------------------- main ----------------------------------- #

def make_params(key, cin, cout):
    ks = jax.random.split(key, 7)
    p = {
        "w1": jax.random.normal(ks[0], (3, 3, cin, cout), jnp.float32) * (2.0 / (9 * cin)) ** 0.5,
        "g1": 1.0 + 0.1 * jax.random.normal(ks[1], (cout,), jnp.float32),
        "b1": 0.1 * jax.random.normal(ks[2], (cout,), jnp.float32),
        "w2": jax.random.normal(ks[3], (3, 3, cout, cout), jnp.float32) * (2.0 / (9 * cout)) ** 0.5,
        "g2": 1.0 + 0.1 * jax.random.normal(ks[4], (cout,), jnp.float32),
        "b2": 0.1 * jax.random.normal(ks[5], (cout,), jnp.float32),
    }
    if cin == cout:
        p["wres"] = None
    else:
        p["wres"] = jax.random.normal(ks[6], (1, 1, cin, cout), jnp.float32) * (2.0 / cin) ** 0.5
    return p


def _run_case(key, cin, cout, *, n=2, h=16, w=16, stride=1, padding=1, row_tile=4):
    kx, kp = jax.random.split(key)
    # NHWC input (equivalent to the PyTorch NCHW input [n, cin, h, w] permuted).
    x = jax.random.normal(kx, (n, h, w, cin), jnp.float32)
    params = make_params(kp, cin, cout)

    try:
        fwd = jax.jit(functools.partial(basic_block_forward, stride=stride,
                                        padding=padding, row_tile=row_tile,
                                        fuse_bn1=True))
        out = jax.block_until_ready(fwd(x, params))
    except Exception:
        # Conservative guard: if the fused BN1->conv2 kernel fails to lower on a
        # given toolchain, fall back to the numerically identical unfused path.
        fwd = jax.jit(functools.partial(basic_block_forward, stride=stride,
                                        padding=padding, row_tile=row_tile,
                                        fuse_bn1=False))
        out = jax.block_until_ready(fwd(x, params))

    ref = jax.block_until_ready(
        reference_forward(x, params, stride=stride, padding=padding))
    assert out.shape == ref.shape

    # Tolerance: both paths use bf16 matmul operands with f32 accumulation; the
    # residual divergence comes from accumulation order and rare bf16 rounding
    # flips of the intermediate activation (bounded well below these thresholds).
    err = jnp.abs(out - ref)
    max_err = float(jnp.max(err))
    mean_err = float(jnp.mean(err))
    assert max_err < 5e-2 and mean_err < 2e-3, \
        f"cin={cin} cout={cout}: max abs err={max_err}, mean abs err={mean_err}"


if __name__ == "__main__":
    key = jax.random.PRNGKey(0)
    k1, k2 = jax.random.split(key)

    # row_tile=4 -> grid (N=2, R=4): exercises the tiled pipeline, the cross-tile
    # BN-statistics accumulation, and the per-image fused BN1 scratch rebuild.
    _run_case(k1, cin=4, cout=8)   # 1x1-conv projection residual path
    _run_case(k2, cin=8, cout=8)   # identity residual path

    print("KERNEL_OK")
</pallas_src>

<mosaic_0001>
module attributes {stable_mosaic.version = 11 : i64} {
  func.func @_bn_relu_conv3x3_stats_kernel(%arg0: i32, %arg1: i32, %arg2: memref<1x16x16x128xf32, #tpu.memory_space<vmem>>, %arg3: memref<1x1x128xf32, #tpu.memory_space<vmem>>, %arg4: memref<1x1x128xf32, #tpu.memory_space<vmem>>, %arg5: memref<9x128x128xbf16, #tpu.memory_space<vmem>>, %arg6: memref<1x4x16x128xf32, #tpu.memory_space<vmem>>, %arg7: memref<1x2x128xf32, #tpu.memory_space<vmem>>, %arg8: memref<18x32x128xbf16, #tpu.memory_space<vmem>>) attributes {dimension_semantics = [#tpu.dimension_semantics<parallel>, #tpu.dimension_semantics<arbitrary>], iteration_bounds = array<i64: 2, 4>, scalar_prefetch = 0 : i64, scratch_operands = 1 : i64, tpu.core_type = #tpu.core_type<tc>, window_params = [{transform_indices = @transform_0, window_bounds = array<i64: 1, 16, 16, 128>}, {pipeline_mode = #tpu.pipeline_mode<synchronous>, transform_indices = @transform_1, window_bounds = array<i64: 1, 1, 128>}, {pipeline_mode = #tpu.pipeline_mode<synchronous>, transform_indices = @transform_2, window_bounds = array<i64: 1, 1, 128>}, {pipeline_mode = #tpu.pipeline_mode<synchronous>, transform_indices = @transform_3, window_bounds = array<i64: 9, 128, 128>}, {transform_indices = @transform_4, window_bounds = array<i64: 1, 4, 16, 128>}, {transform_indices = @transform_5, window_bounds = array<i64: 1, 2, 128>}]} {
    %c0_i32 = arith.constant 0 : i32
    %0 = arith.cmpi eq, %arg1, %c0_i32 : i32
    %1 = arith.extui %0 : i1 to i32
    %c0_i32_0 = arith.constant 0 : i32
    %2 = arith.cmpi ne, %1, %c0_i32_0 : i32
    scf.if %2 {
      %cst_49 = arith.constant 0.000000e+00 : bf16
      %87 = vector.broadcast %cst_49 : bf16 to vector<18x32x128xbf16>
      %c0_50 = arith.constant 0 : index
      %c0_51 = arith.constant 0 : index
      %c0_52 = arith.constant 0 : index
      %88 = vector.load %arg8[%c0_50, %c0_51, %c0_52] : memref<18x32x128xbf16, #tpu.memory_space<vmem>>, vector<18x32x128xbf16>
      tpu.vector_store %arg8[%c0_50, %c0_51, %c0_52], %87 {strides = array<i32>} : memref<18x32x128xbf16, #tpu.memory_space<vmem>>, vector<18x32x128xbf16>,
      %cst_53 = arith.constant 0.000000e+00 : f32
      %89 = vector.broadcast %cst_53 : f32 to vector<4x8x128xf32>
      %c0_54 = arith.constant 0 : index
      %c0_55 = arith.constant 0 : index
      %c0_56 = arith.constant 0 : index
      %c0_57 = arith.constant 0 : index
      %90 = vector.load %arg2[%c0_54, %c0_55, %c0_56, %c0_57] : memref<1x16x16x128xf32, #tpu.memory_space<vmem>>, vector<1x4x16x128xf32>
      %91 = vector.shape_cast %90 : vector<1x4x16x128xf32> to vector<4x16x128xf32>
      %c0_58 = arith.constant 0 : index
      %c0_59 = arith.constant 0 : index
      %c0_60 = arith.constant 0 : index
      %92 = vector.load %arg3[%c0_58, %c0_59, %c0_60] : memref<1x1x128xf32, #tpu.memory_space<vmem>>, vector<1x1x128xf32>
      %93 = vector.broadcast %92 : vector<1x1x128xf32> to vector<4x16x128xf32>
      %94 = arith.mulf %91, %93 : vector<4x16x128xf32>
      %c0_61 = arith.constant 0 : index
      %c0_62 = arith.constant 0 : index
      %c0_63 = arith.constant 0 : index
      %95 = vector.load %arg4[%c0_61, %c0_62, %c0_63] : memref<1x1x128xf32, #tpu.memory_space<vmem>>, vector<1x1x128xf32>
      %96 = vector.broadcast %95 : vector<1x1x128xf32> to vector<4x16x128xf32>
      %97 = arith.addf %94, %96 : vector<4x16x128xf32>
      %cst_64 = arith.constant 0.000000e+00 : f32
      %98 = vector.broadcast %cst_64 : f32 to vector<4x16x128xf32>
      %99 = arith.maximumf %97, %98 : vector<4x16x128xf32>
      %100 = tpu.concatenate %89, %99, %89 in 1 : vector<4x8x128xf32>, vector<4x16x128xf32>, vector<4x8x128xf32> -> vector<4x32x128xf32>
      %101 = arith.truncf %100 : vector<4x32x128xf32> to vector<4x32x128xbf16>
      %c1_65 = arith.constant 1 : index
      %c0_66 = arith.constant 0 : index
      %c0_67 = arith.constant 0 : index
      %102 = vector.load %arg8[%c1_65, %c0_66, %c0_67] : memref<18x32x128xbf16, #tpu.memory_space<vmem>>, vector<4x32x128xbf16>
      tpu.vector_store %arg8[%c1_65, %c0_66, %c0_67], %101 {strides = array<i32>} : memref<18x32x128xbf16, #tpu.memory_space<vmem>>, vector<4x32x128xbf16>,
      %c0_68 = arith.constant 0 : index
      %c4_69 = arith.constant 4 : index
      %c0_70 = arith.constant 0 : index
      %c0_71 = arith.constant 0 : index
      %103 = vector.load %arg2[%c0_68, %c4_69, %c0_70, %c0_71] : memref<1x16x16x128xf32, #tpu.memory_space<vmem>>, vector<1x4x16x128xf32>
      %104 = vector.shape_cast %103 : vector<1x4x16x128xf32> to vector<4x16x128xf32>
      %c0_72 = arith.constant 0 : index
      %c0_73 = arith.constant 0 : index
      %c0_74 = arith.constant 0 : index
      %105 = vector.load %arg3[%c0_72, %c0_73, %c0_74] : memref<1x1x128xf32, #tpu.memory_space<vmem>>, vector<1x1x128xf32>
      %106 = vector.broadcast %105 : vector<1x1x128xf32> to vector<4x16x128xf32>
      %107 = arith.mulf %104, %106 : vector<4x16x128xf32>
      %c0_75 = arith.constant 0 : index
      %c0_76 = arith.constant 0 : index
      %c0_77 = arith.constant 0 : index
      %108 = vector.load %arg4[%c0_75, %c0_76, %c0_77] : memref<1x1x128xf32, #tpu.memory_space<vmem>>, vector<1x1x128xf32>
      %109 = vector.broadcast %108 : vector<1x1x128xf32> to vector<4x16x128xf32>
      %110 = arith.addf %107, %109 : vector<4x16x128xf32>
      %cst_78 = arith.constant 0.000000e+00 : f32
      %111 = vector.broadcast %cst_78 : f32 to vector<4x16x128xf32>
      %112 = arith.maximumf %110, %111 : vector<4x16x128xf32>
      %113 = tpu.concatenate %89, %112, %89 in 1 : vector<4x8x128xf32>, vector<4x16x128xf32>, vector<4x8x128xf32> -> vector<4x32x128xf32>
      %114 = arith.truncf %113 : vector<4x32x128xf32> to vector<4x32x128xbf16>
      %c5_79 = arith.constant 5 : index
      %c0_80 = arith.constant 0 : index
      %c0_81 = arith.constant 0 : index
      %115 = vector.load %arg8[%c5_79, %c0_80, %c0_81] : memref<18x32x128xbf16, #tpu.memory_space<vmem>>, vector<4x32x128xbf16>
      tpu.vector_store %arg8[%c5_79, %c0_80, %c0_81], %114 {strides = array<i32>} : memref<18x32x128xbf16, #tpu.memory_space<vmem>>, vector<4x32x128xbf16>,
      %c0_82 = arith.constant 0 : index
      %c8_83 = arith.constant 8 : index
      %c0_84 = arith.constant 0 : index
      %c0_85 = arith.constant 0 : index
      %116 = vector.load %arg2[%c0_82, %c8_83, %c0_84, %c0_85] : memref<1x16x16x128xf32, #tpu.memory_space<vmem>>, vector<1x4x16x128xf32>
      %117 = vector.shape_cast %116 : vector<1x4x16x128xf32> to vector<4x16x128xf32>
      %c0_86 = arith.constant 0 : index
      %c0_87 = arith.constant 0 : index
      %c0_88 = arith.constant 0 : index
      %118 = vector.load %arg3[%c0_86, %c0_87, %c0_88] : memref<1x1x128xf32, #tpu.memory_space<vmem>>, vector<1x1x128xf32>
      %119 = vector.broadcast %118 : vector<1x1x128xf32> to vector<4x16x128xf32>
      %120 = arith.mulf %117, %119 : vector<4x16x128xf32>
      %c0_89 = arith.constant 0 : index
      %c0_90 = arith.constant 0 : index
      %c0_91 = arith.constant 0 : index
      %121 = vector.load %arg4[%c0_89, %c0_90, %c0_91] : memref<1x1x128xf32, #tpu.memory_space<vmem>>, vector<1x1x128xf32>
      %122 = vector.broadcast %121 : vector<1x1x128xf32> to vector<4x16x128xf32>
      %123 = arith.addf %120, %122 : vector<4x16x128xf32>
      %cst_92 = arith.constant 0.000000e+00 : f32
      %124 = vector.broadcast %cst_92 : f32 to vector<4x16x128xf32>
      %125 = arith.maximumf %123, %124 : vector<4x16x128xf32>
      %126 = tpu.concatenate %89, %125, %89 in 1 : vector<4x8x128xf32>, vector<4x16x128xf32>, vector<4x8x128xf32> -> vector<4x32x128xf32>
      %127 = arith.truncf %126 : vector<4x32x128xf32> to vector<4x32x128xbf16>
      %c9 = arith.constant 9 : index
      %c0_93 = arith.constant 0 : index
      %c0_94 = arith.constant 0 : index
      %128 = vector.load %arg8[%c9, %c0_93, %c0_94] : memref<18x32x128xbf16, #tpu.memory_space<vmem>>, vector<4x32x128xbf16>
      tpu.vector_store %arg8[%c9, %c0_93, %c0_94], %127 {strides = array<i32>} : memref<18x32x128xbf16, #tpu.memory_space<vmem>>, vector<4x32x128xbf16>,
      %c0_95 = arith.constant 0 : index
      %c12 = arith.constant 12 : index
      %c0_96 = arith.constant 0 : index
      %c0_97 = arith.constant 0 : index
      %129 = vector.load %arg2[%c0_95, %c12, %c0_96, %c0_97] : memref<1x16x16x128xf32, #tpu.memory_space<vmem>>, vector<1x4x16x128xf32>
      %130 = vector.shape_cast %129 : vector<1x4x16x128xf32> to vector<4x16x128xf32>
      %c0_98 = arith.constant 0 : index
      %c0_99 = arith.constant 0 : index
      %c0_100 = arith.constant 0 : index
      %131 = vector.load %arg3[%c0_98, %c0_99, %c0_100] : memref<1x1x128xf32, #tpu.memory_space<vmem>>, vector<1x1x128xf32>
      %132 = vector.broadcast %131 : vector<1x1x128xf32> to vector<4x16x128xf32>
      %133 = arith.mulf %130, %132 : vector<4x16x128xf32>
      %c0_101 = arith.constant 0 : index
      %c0_102 = arith.constant 0 : index
      %c0_103 = arith.constant 0 : index
      %134 = vector.load %arg4[%c0_101, %c0_102, %c0_103] : memref<1x1x128xf32, #tpu.memory_space<vmem>>, vector<1x1x128xf32>
      %135 = vector.broadcast %134 : vector<1x1x128xf32> to vector<4x16x128xf32>
      %136 = arith.addf %133, %135 : vector<4x16x128xf32>
      %cst_104 = arith.constant 0.000000e+00 : f32
      %137 = vector.broadcast %cst_104 : f32 to vector<4x16x128xf32>
      %138 = arith.maximumf %136, %137 : vector<4x16x128xf32>
      %139 = tpu.concatenate %89, %138, %89 in 1 : vector<4x8x128xf32>, vector<4x16x128xf32>, vector<4x8x128xf32> -> vector<4x32x128xf32>
      %140 = arith.truncf %139 : vector<4x32x128xf32> to vector<4x32x128xbf16>
      %c13 = arith.constant 13 : index
      %c0_105 = arith.constant 0 : index
      %c0_106 = arith.constant 0 : index
      %141 = vector.load %arg8[%c13, %c0_105, %c0_106] : memref<18x32x128xbf16, #tpu.memory_space<vmem>>, vector<4x32x128xbf16>
      tpu.vector_store %arg8[%c13, %c0_105, %c0_106], %140 {strides = array<i32>} : memref<18x32x128xbf16, #tpu.memory_space<vmem>>, vector<4x32x128xbf16>,
    } else {
    }
    %c4_i32 = arith.constant 4 : i32
    %3 = arith.muli %arg1, %c4_i32 : i32
    %cst = arith.constant 0.000000e+00 : f32
    %4 = vector.broadcast %cst : f32 to vector<64x128xf32>
    %c0_i32_1 = arith.constant 0 : i32
    %5 = arith.addi %3, %c0_i32_1 : i32
    %6 = arith.index_cast %5 : i32 to index
    %c0 = arith.constant 0 : index
    %c0_2 = arith.constant 0 : index
    %7 = vector.load %arg8[%6, %c0, %c0_2] : memref<18x32x128xbf16, #tpu.memory_space<vmem>>, vector<4x32x128xbf16>
    %8 = vector.extract_strided_slice %7 {offsets = [0, 7, 0], sizes = [4, 16, 128], strides = [1, 1, 1]} : vector<4x32x128xbf16> to vector<4x16x128xbf16>
    %9 = vector.shape_cast %8 : vector<4x16x128xbf16> to vector<64x128xbf16>
    %c0_3 = arith.constant 0 : index
    %c0_4 = arith.constant 0 : index
    %c0_5 = arith.constant 0 : index
    %10 = vector.load %arg5[%c0_3, %c0_4, %c0_5] : memref<9x128x128xbf16, #tpu.memory_space<vmem>>, vector<1x128x128xbf16>
    %11 = vector.shape_cast %10 : vector<1x128x128xbf16> to vector<128x128xbf16>
    %cst_6 = arith.constant dense<0.000000e+00> : vector<64x128xf32>
    %12 = tpu.matmul %9, %11, %cst_6 {dimension_numbers = #tpu.dot_dimension_numbers<[1], [0], [0], [1], [0, 0, 1, 1], [], []>} : vector<64x128xbf16>, vector<128x128xbf16>, vector<64x128xf32> -> vector<64x128xf32>
    %13 = arith.addf %4, %12 : vector<64x128xf32>
    %14 = vector.extract_strided_slice %7 {offsets = [0, 8, 0], sizes = [4, 16, 128], strides = [1, 1, 1]} : vector<4x32x128xbf16> to vector<4x16x128xbf16>
    %15 = vector.shape_cast %14 : vector<4x16x128xbf16> to vector<64x128xbf16>
    %c1 = arith.constant 1 : index
    %c0_7 = arith.constant 0 : index
    %c0_8 = arith.constant 0 : index
    %16 = vector.load %arg5[%c1, %c0_7, %c0_8] : memref<9x128x128xbf16, #tpu.memory_space<vmem>>, vector<1x128x128xbf16>
    %17 = vector.shape_cast %16 : vector<1x128x128xbf16> to vector<128x128xbf16>
    %cst_9 = arith.constant dense<0.000000e+00> : vector<64x128xf32>
    %18 = tpu.matmul %15, %17, %cst_9 {dimension_numbers = #tpu.dot_dimension_numbers<[1], [0], [0], [1], [0, 0, 1, 1], [], []>} : vector<64x128xbf16>, vector<128x128xbf16>, vector<64x128xf32> -> vector<64x128xf32>
    %19 = arith.addf %13, %18 : vector<64x128xf32>
    %20 = vector.extract_strided_slice %7 {offsets = [0, 9, 0], sizes = [4, 16, 128], strides = [1, 1, 1]} : vector<4x32x128xbf16> to vector<4x16x128xbf16>
    %21 = vector.shape_cast %20 : vector<4x16x128xbf16> to vector<64x128xbf16>
    %c2 = arith.constant 2 : index
    %c0_10 = arith.constant 0 : index
    %c0_11 = arith.constant 0 : index
    %22 = vector.load %arg5[%c2, %c0_10, %c0_11] : memref<9x128x128xbf16, #tpu.memory_space<vmem>>, vector<1x128x128xbf16>
    %23 = vector.shape_cast %22 : vector<1x128x128xbf16> to vector<128x128xbf16>
    %cst_12 = arith.constant dense<0.000000e+00> : vector<64x128xf32>
    %24 = tpu.matmul %21, %23, %cst_12 {dimension_numbers = #tpu.dot_dimension_numbers<[1], [0], [0], [1], [0, 0, 1, 1], [], []>} : vector<64x128xbf16>, vector<128x128xbf16>, vector<64x128xf32> -> vector<64x128xf32>
    %25 = arith.addf %19, %24 : vector<64x128xf32>
    %c1_i32 = arith.constant 1 : i32
    %26 = arith.addi %3, %c1_i32 : i32
    %27 = arith.index_cast %26 : i32 to index
    %c0_13 = arith.constant 0 : index
    %c0_14 = arith.constant 0 : index
    %28 = vector.load %arg8[%27, %c0_13, %c0_14] : memref<18x32x128xbf16, #tpu.memory_space<vmem>>, vector<4x32x128xbf16>
    %29 = vector.extract_strided_slice %28 {offsets = [0, 7, 0], sizes = [4, 16, 128], strides = [1, 1, 1]} : vector<4x32x128xbf16> to vector<4x16x128xbf16>
    %30 = vector.shape_cast %29 : vector<4x16x128xbf16> to vector<64x128xbf16>
    %c3 = arith.constant 3 : index
    %c0_15 = arith.constant 0 : index
    %c0_16 = arith.constant 0 : index
    %31 = vector.load %arg5[%c3, %c0_15, %c0_16] : memref<9x128x128xbf16, #tpu.memory_space<vmem>>, vector<1x128x128xbf16>
    %32 = vector.shape_cast %31 : vector<1x128x128xbf16> to vector<128x128xbf16>
    %cst_17 = arith.constant dense<0.000000e+00> : vector<64x128xf32>
    %33 = tpu.matmul %30, %32, %cst_17 {dimension_numbers = #tpu.dot_dimension_numbers<[1], [0], [0], [1], [0, 0, 1, 1], [], []>} : vector<64x128xbf16>, vector<128x128xbf16>, vector<64x128xf32> -> vector<64x128xf32>
    %34 = arith.addf %25, %33 : vector<64x128xf32>
    %35 = vector.extract_strided_slice %28 {offsets = [0, 8, 0], sizes = [4, 16, 128], strides = [1, 1, 1]} : vector<4x32x128xbf16> to vector<4x16x128xbf16>
    %36 = vector.shape_cast %35 : vector<4x16x128xbf16> to vector<64x128xbf16>
    %c4 = arith.constant 4 : index
    %c0_18 = arith.constant 0 : index
    %c0_19 = arith.constant 0 : index
    %37 = vector.load %arg5[%c4, %c0_18, %c0_19] : memref<9x128x128xbf16, #tpu.memory_space<vmem>>, vector<1x128x128xbf16>
    %38 = vector.shape_cast %37 : vector<1x128x128xbf16> to vector<128x128xbf16>
    %cst_20 = arith.constant dense<0.000000e+00> : vector<64x128xf32>
    %39 = tpu.matmul %36, %38, %cst_20 {dimension_numbers = #tpu.dot_dimension_numbers<[1], [0], [0], [1], [0, 0, 1, 1], [], []>} : vector<64x128xbf16>, vector<128x128xbf16>, vector<64x128xf32> -> vector<64x128xf32>
    %40 = arith.addf %34, %39 : vector<64x128xf32>
    %41 = vector.extract_strided_slice %28 {offsets = [0, 9, 0], sizes = [4, 16, 128], strides = [1, 1, 1]} : vector<4x32x128xbf16> to vector<4x16x128xbf16>
    %42 = vector.shape_cast %41 : vector<4x16x128xbf16> to vector<64x128xbf16>
    %c5 = arith.constant 5 : index
    %c0_21 = arith.constant 0 : index
    %c0_22 = arith.constant 0 : index
    %43 = vector.load %arg5[%c5, %c0_21, %c0_22] : memref<9x128x128xbf16, #tpu.memory_space<vmem>>, vector<1x128x128xbf16>
    %44 = vector.shape_cast %43 : vector<1x128x128xbf16> to vector<128x128xbf16>
    %cst_23 = arith.constant dense<0.000000e+00> : vector<64x128xf32>
    %45 = tpu.matmul %42, %44, %cst_23 {dimension_numbers = #tpu.dot_dimension_numbers<[1], [0], [0], [1], [0, 0, 1, 1], [], []>} : vector<64x128xbf16>, vector<128x128xbf16>, vector<64x128xf32> -> vector<64x128xf32>
    %46 = arith.addf %40, %45 : vector<64x128xf32>
    %c2_i32 = arith.constant 2 : i32
    %47 = arith.addi %3, %c2_i32 : i32
    %48 = arith.index_cast %47 : i32 to index
    %c0_24 = arith.constant 0 : index
    %c0_25 = arith.constant 0 : index
    %49 = vector.load %arg8[%48, %c0_24, %c0_25] : memref<18x32x128xbf16, #tpu.memory_space<vmem>>, vector<4x32x128xbf16>
    %50 = vector.extract_strided_slice %49 {offsets = [0, 7, 0], sizes = [4, 16, 128], strides = [1, 1, 1]} : vector<4x32x128xbf16> to vector<4x16x128xbf16>
    %51 = vector.shape_cast %50 : vector<4x16x128xbf16> to vector<64x128xbf16>
    %c6 = arith.constant 6 : index
    %c0_26 = arith.constant 0 : index
    %c0_27 = arith.constant 0 : index
    %52 = vector.load %arg5[%c6, %c0_26, %c0_27] : memref<9x128x128xbf16, #tpu.memory_space<vmem>>, vector<1x128x128xbf16>
    %53 = vector.shape_cast %52 : vector<1x128x128xbf16> to vector<128x128xbf16>
    %cst_28 = arith.constant dense<0.000000e+00> : vector<64x128xf32>
    %54 = tpu.matmul %51, %53, %cst_28 {dimension_numbers = #tpu.dot_dimension_numbers<[1], [0], [0], [1], [0, 0, 1, 1], [], []>} : vector<64x128xbf16>, vector<128x128xbf16>, vector<64x128xf32> -> vector<64x128xf32>
    %55 = arith.addf %46, %54 : vector<64x128xf32>
    %56 = vector.extract_strided_slice %49 {offsets = [0, 8, 0], sizes = [4, 16, 128], strides = [1, 1, 1]} : vector<4x32x128xbf16> to vector<4x16x128xbf16>
    %57 = vector.shape_cast %56 : vector<4x16x128xbf16> to vector<64x128xbf16>
    %c7 = arith.constant 7 : index
    %c0_29 = arith.constant 0 : index
    %c0_30 = arith.constant 0 : index
    %58 = vector.load %arg5[%c7, %c0_29, %c0_30] : memref<9x128x128xbf16, #tpu.memory_space<vmem>>, vector<1x128x128xbf16>
    %59 = vector.shape_cast %58 : vector<1x128x128xbf16> to vector<128x128xbf16>
    %cst_31 = arith.constant dense<0.000000e+00> : vector<64x128xf32>
    %60 = tpu.matmul %57, %59, %cst_31 {dimension_numbers = #tpu.dot_dimension_numbers<[1], [0], [0], [1], [0, 0, 1, 1], [], []>} : vector<64x128xbf16>, vector<128x128xbf16>, vector<64x128xf32> -> vector<64x128xf32>
    %61 = arith.addf %55, %60 : vector<64x128xf32>
    %62 = vector.extract_strided_slice %49 {offsets = [0, 9, 0], sizes = [4, 16, 128], strides = [1, 1, 1]} : vector<4x32x128xbf16> to vector<4x16x128xbf16>
    %63 = vector.shape_cast %62 : vector<4x16x128xbf16> to vector<64x128xbf16>
    %c8 = arith.constant 8 : index
    %c0_32 = arith.constant 0 : index
    %c0_33 = arith.constant 0 : index
    %64 = vector.load %arg5[%c8, %c0_32, %c0_33] : memref<9x128x128xbf16, #tpu.memory_space<vmem>>, vector<1x128x128xbf16>
    %65 = vector.shape_cast %64 : vector<1x128x128xbf16> to vector<128x128xbf16>
    %cst_34 = arith.constant dense<0.000000e+00> : vector<64x128xf32>
    %66 = tpu.matmul %63, %65, %cst_34 {dimension_numbers = #tpu.dot_dimension_numbers<[1], [0], [0], [1], [0, 0, 1, 1], [], []>} : vector<64x128xbf16>, vector<128x128xbf16>, vector<64x128xf32> -> vector<64x128xf32>
    %67 = arith.addf %61, %66 : vector<64x128xf32>
    %68 = vector.shape_cast %67 : vector<64x128xf32> to vector<4x16x128xf32>
    %c0_35 = arith.constant 0 : index
    %c0_36 = arith.constant 0 : index
    %c0_37 = arith.constant 0 : index
    %c0_38 = arith.constant 0 : index
    %69 = vector.load %arg6[%c0_35, %c0_36, %c0_37, %c0_38] : memref<1x4x16x128xf32, #tpu.memory_space<vmem>>, vector<1x4x16x128xf32>
    %70 = vector.shape_cast %69 : vector<1x4x16x128xf32> to vector<4x16x128xf32>
    %71 = vector.shape_cast %68 : vector<4x16x128xf32> to vector<1x4x16x128xf32>
    tpu.vector_store %arg6[%c0_35, %c0_36, %c0_37, %c0_38], %71 {strides = array<i32>} : memref<1x4x16x128xf32, #tpu.memory_space<vmem>>, vector<1x4x16x128xf32>,
    %cst_39 = arith.constant dense<0.000000e+00> : vector<128xf32>
    %72 = vector.multi_reduction <add>, %67, %cst_39 [0] : vector<64x128xf32> to vector<128xf32>
    %73 = vector.shape_cast %72 : vector<128xf32> to vector<1x128xf32>
    %74 = arith.mulf %67, %67 : vector<64x128xf32>
    %cst_40 = arith.constant dense<0.000000e+00> : vector<128xf32>
    %75 = vector.multi_reduction <add>, %74, %cst_40 [0] : vector<64x128xf32> to vector<128xf32>
    %76 = vector.shape_cast %75 : vector<128xf32> to vector<1x128xf32>
    %77 = tpu.concatenate %73, %76 in 0 : vector<1x128xf32>, vector<1x128xf32> -> vector<2x128xf32>
    %c0_i32_41 = arith.constant 0 : i32
    %78 = arith.cmpi eq, %arg1, %c0_i32_41 : i32
    %79 = arith.extui %78 : i1 to i32
    %c0_i32_42 = arith.constant 0 : i32
    %80 = arith.cmpi ne, %79, %c0_i32_42 : i32
    scf.if %80 {
      %cst_49 = arith.constant 0.000000e+00 : f32
      %87 = vector.broadcast %cst_49 : f32 to vector<2x128xf32>
      %c0_50 = arith.constant 0 : index
      %c0_51 = arith.constant 0 : index
      %c0_52 = arith.constant 0 : index
      %88 = vector.load %arg7[%c0_50, %c0_51, %c0_52] : memref<1x2x128xf32, #tpu.memory_space<vmem>>, vector<1x2x128xf32>
      %89 = vector.shape_cast %88 : vector<1x2x128xf32> to vector<2x128xf32>
      %90 = vector.shape_cast %87 : vector<2x128xf32> to vector<1x2x128xf32>
      tpu.vector_store %arg7[%c0_50, %c0_51, %c0_52], %90 {strides = array<i32>} : memref<1x2x128xf32, #tpu.memory_space<vmem>>, vector<1x2x128xf32>,
    } else {
    }
    %c0_43 = arith.constant 0 : index
    %c0_44 = arith.constant 0 : index
    %c0_45 = arith.constant 0 : index
    %81 = vector.load %arg7[%c0_43, %c0_44, %c0_45] : memref<1x2x128xf32, #tpu.memory_space<vmem>>, vector<1x2x128xf32>
    %82 = vector.shape_cast %81 : vector<1x2x128xf32> to vector<2x128xf32>
    %83 = arith.addf %82, %77 : vector<2x128xf32>
    %c0_46 = arith.constant 0 : index
    %c0_47 = arith.constant 0 : index
    %c0_48 = arith.constant 0 : index
    %84 = vector.load %arg7[%c0_46, %c0_47, %c0_48] : memref<1x2x128xf32, #tpu.memory_space<vmem>>, vector<1x2x128xf32>
    %85 = vector.shape_cast %84 : vector<1x2x128xf32> to vector<2x128xf32>
    %86 = vector.shape_cast %83 : vector<2x128xf32> to vector<1x2x128xf32>
    tpu.vector_store %arg7[%c0_46, %c0_47, %c0_48], %86 {strides = array<i32>} : memref<1x2x128xf32, #tpu.memory_space<vmem>>, vector<1x2x128xf32>,
    return
  }
  func.func @transform_0(%arg0: i32, %arg1: i32) -> (i32, i32, i32, i32) {
    %c0_i32 = arith.constant 0 : i32
    %c0_i32_0 = arith.constant 0 : i32
    %c0_i32_1 = arith.constant 0 : i32
    %c0_i32_2 = arith.constant 0 : i32
    return %arg0, %c0_i32, %c0_i32_0, %c0_i32_1 : i32, i32, i32, i32
  }
  func.func @transform_1(%arg0: i32, %arg1: i32) -> (i32, i32, i32) {
    %c0_i32 = arith.constant 0 : i32
    %c0_i32_0 = arith.constant 0 : i32
    %c0_i32_1 = arith.constant 0 : i32
    %c0_i32_2 = arith.constant 0 : i32
    return %c0_i32, %c0_i32_0, %c0_i32_1 : i32, i32, i32
  }
  func.func @transform_2(%arg0: i32, %arg1: i32) -> (i32, i32, i32) {
    %c0_i32 = arith.constant 0 : i32
    %c0_i32_0 = arith.constant 0 : i32
    %c0_i32_1 = arith.constant 0 : i32
    %c0_i32_2 = arith.constant 0 : i32
    return %c0_i32, %c0_i32_0, %c0_i32_1 : i32, i32, i32
  }
  func.func @transform_3(%arg0: i32, %arg1: i32) -> (i32, i32, i32) {
    %c0_i32 = arith.constant 0 : i32
    %c0_i32_0 = arith.constant 0 : i32
    %c0_i32_1 = arith.constant 0 : i32
    %c0_i32_2 = arith.constant 0 : i32
    return %c0_i32, %c0_i32_0, %c0_i32_1 : i32, i32, i32
  }
  func.func @transform_4(%arg0: i32, %arg1: i32) -> (i32, i32, i32, i32) {
    %c0_i32 = arith.constant 0 : i32
    %c0_i32_0 = arith.constant 0 : i32
    %c0_i32_1 = arith.constant 0 : i32
    return %arg0, %arg1, %c0_i32, %c0_i32_0 : i32, i32, i32, i32
  }
  func.func @transform_5(%arg0: i32, %arg1: i32) -> (i32, i32, i32) {
    %c0_i32 = arith.constant 0 : i32
    %c0_i32_0 = arith.constant 0 : i32
    %c0_i32_1 = arith.constant 0 : i32
    return %arg0, %c0_i32, %c0_i32_0 : i32, i32, i32
  }
}

module attributes {stable_mosaic.version = 11 : i64} {
  func.func @_conv3x3_stats_kernel(%arg0: i32, %arg1: i32, %arg2: memref<1x18x18x4xbf16, #tpu.memory_space<vmem>>, %arg3: memref<9x4x128xbf16, #tpu.memory_space<vmem>>, %arg4: memref<1x4x16x128xf32, #tpu.memory_space<vmem>>, %arg5: memref<1x2x128xf32, #tpu.memory_space<vmem>>) attributes {dimension_semantics = [#tpu.dimension_semantics<parallel>, #tpu.dimension_semantics<arbitrary>], iteration_bounds = array<i64: 2, 4>, scalar_prefetch = 0 : i64, scratch_operands = 0 : i64, tpu.core_type = #tpu.core_type<tc>, window_params = [{transform_indices = @transform_0, window_bounds = array<i64: 1, 18, 18, 4>}, {pipeline_mode = #tpu.pipeline_mode<synchronous>, transform_indices = @transform_1, window_bounds = array<i64: 9, 4, 128>}, {transform_indices = @transform_2, window_bounds = array<i64: 1, 4, 16, 128>}, {transform_indices = @transform_3, window_bounds = array<i64: 1, 2, 128>}]} {
    %c4_i32 = arith.constant 4 : i32
    %0 = arith.muli %arg1, %c4_i32 : i32
    %cst = arith.constant 0.000000e+00 : f32
    %1 = vector.broadcast %cst : f32 to vector<64x128xf32>
    %c0_i32 = arith.constant 0 : i32
    %2 = arith.addi %0, %c0_i32 : i32
    %c0 = arith.constant 0 : index
    %3 = arith.index_cast %2 : i32 to index
    %c0_0 = arith.constant 0 : index
    %c0_1 = arith.constant 0 : index
    %4 = vector.load %arg2[%c0, %3, %c0_0, %c0_1] : memref<1x18x18x4xbf16, #tpu.memory_space<vmem>>, vector<1x4x18x4xbf16>
    %5 = vector.shape_cast %4 : vector<1x4x18x4xbf16> to vector<4x18x4xbf16>
    %6 = vector.extract_strided_slice %5 {offsets = [0, 0, 0], sizes = [4, 16, 4], strides = [1, 1, 1]} : vector<4x18x4xbf16> to vector<4x16x4xbf16>
    %7 = vector.shape_cast %6 : vector<4x16x4xbf16> to vector<64x4xbf16>
    %c0_2 = arith.constant 0 : index
    %c0_3 = arith.constant 0 : index
    %c0_4 = arith.constant 0 : index
    %8 = vector.load %arg3[%c0_2, %c0_3, %c0_4] : memref<9x4x128xbf16, #tpu.memory_space<vmem>>, vector<1x4x128xbf16>
    %9 = vector.shape_cast %8 : vector<1x4x128xbf16> to vector<4x128xbf16>
    %cst_5 = arith.constant dense<0.000000e+00> : vector<64x128xf32>
    %10 = tpu.matmul %7, %9, %cst_5 {dimension_numbers = #tpu.dot_dimension_numbers<[1], [0], [0], [1], [0, 0, 1, 1], [], []>} : vector<64x4xbf16>, vector<4x128xbf16>, vector<64x128xf32> -> vector<64x128xf32>
    %11 = arith.addf %1, %10 : vector<64x128xf32>
    %12 = vector.extract_strided_slice %5 {offsets = [0, 1, 0], sizes = [4, 16, 4], strides = [1, 1, 1]} : vector<4x18x4xbf16> to vector<4x16x4xbf16>
    %13 = vector.shape_cast %12 : vector<4x16x4xbf16> to vector<64x4xbf16>
    %c1 = arith.constant 1 : index
    %c0_6 = arith.constant 0 : index
    %c0_7 = arith.constant 0 : index
    %14 = vector.load %arg3[%c1, %c0_6, %c0_7] : memref<9x4x128xbf16, #tpu.memory_space<vmem>>, vector<1x4x128xbf16>
    %15 = vector.shape_cast %14 : vector<1x4x128xbf16> to vector<4x128xbf16>
    %cst_8 = arith.constant dense<0.000000e+00> : vector<64x128xf32>
    %16 = tpu.matmul %13, %15, %cst_8 {dimension_numbers = #tpu.dot_dimension_numbers<[1], [0], [0], [1], [0, 0, 1, 1], [], []>} : vector<64x4xbf16>, vector<4x128xbf16>, vector<64x128xf32> -> vector<64x128xf32>
    %17 = arith.addf %11, %16 : vector<64x128xf32>
    %18 = vector.extract_strided_slice %5 {offsets = [0, 2, 0], sizes = [4, 16, 4], strides = [1, 1, 1]} : vector<4x18x4xbf16> to vector<4x16x4xbf16>
    %19 = vector.shape_cast %18 : vector<4x16x4xbf16> to vector<64x4xbf16>
    %c2 = arith.constant 2 : index
    %c0_9 = arith.constant 0 : index
    %c0_10 = arith.constant 0 : index
    %20 = vector.load %arg3[%c2, %c0_9, %c0_10] : memref<9x4x128xbf16, #tpu.memory_space<vmem>>, vector<1x4x128xbf16>
    %21 = vector.shape_cast %20 : vector<1x4x128xbf16> to vector<4x128xbf16>
    %cst_11 = arith.constant dense<0.000000e+00> : vector<64x128xf32>
    %22 = tpu.matmul %19, %21, %cst_11 {dimension_numbers = #tpu.dot_dimension_numbers<[1], [0], [0], [1], [0, 0, 1, 1], [], []>} : vector<64x4xbf16>, vector<4x128xbf16>, vector<64x128xf32> -> vector<64x128xf32>
    %23 = arith.addf %17, %22 : vector<64x128xf32>
    %c1_i32 = arith.constant 1 : i32
    %24 = arith.addi %0, %c1_i32 : i32
    %c0_12 = arith.constant 0 : index
    %25 = arith.index_cast %24 : i32 to index
    %c0_13 = arith.constant 0 : index
    %c0_14 = arith.constant 0 : index
    %26 = vector.load %arg2[%c0_12, %25, %c0_13, %c0_14] : memref<1x18x18x4xbf16, #tpu.memory_space<vmem>>, vector<1x4x18x4xbf16>
    %27 = vector.shape_cast %26 : vector<1x4x18x4xbf16> to vector<4x18x4xbf16>
    %28 = vector.extract_strided_slice %27 {offsets = [0, 0, 0], sizes = [4, 16, 4], strides = [1, 1, 1]} : vector<4x18x4xbf16> to vector<4x16x4xbf16>
    %29 = vector.shape_cast %28 : vector<4x16x4xbf16> to vector<64x4xbf16>
    %c3 = arith.constant 3 : index
    %c0_15 = arith.constant 0 : index
    %c0_16 = arith.constant 0 : index
    %30 = vector.load %arg3[%c3, %c0_15, %c0_16] : memref<9x4x128xbf16, #tpu.memory_space<vmem>>, vector<1x4x128xbf16>
    %31 = vector.shape_cast %30 : vector<1x4x128xbf16> to vector<4x128xbf16>
    %cst_17 = arith.constant dense<0.000000e+00> : vector<64x128xf32>
    %32 = tpu.matmul %29, %31, %cst_17 {dimension_numbers = #tpu.dot_dimension_numbers<[1], [0], [0], [1], [0, 0, 1, 1], [], []>} : vector<64x4xbf16>, vector<4x128xbf16>, vector<64x128xf32> -> vector<64x128xf32>
    %33 = arith.addf %23, %32 : vector<64x128xf32>
    %34 = vector.extract_strided_slice %27 {offsets = [0, 1, 0], sizes = [4, 16, 4], strides = [1, 1, 1]} : vector<4x18x4xbf16> to vector<4x16x4xbf16>
    %35 = vector.shape_cast %34 : vector<4x16x4xbf16> to vector<64x4xbf16>
    %c4 = arith.constant 4 : index
    %c0_18 = arith.constant 0 : index
    %c0_19 = arith.constant 0 : index
    %36 = vector.load %arg3[%c4, %c0_18, %c0_19] : memref<9x4x128xbf16, #tpu.memory_space<vmem>>, vector<1x4x128xbf16>
    %37 = vector.shape_cast %36 : vector<1x4x128xbf16> to vector<4x128xbf16>
    %cst_20 = arith.constant dense<0.000000e+00> : vector<64x128xf32>
    %38 = tpu.matmul %35, %37, %cst_20 {dimension_numbers = #tpu.dot_dimension_numbers<[1], [0], [0], [1], [0, 0, 1, 1], [], []>} : vector<64x4xbf16>, vector<4x128xbf16>, vector<64x128xf32> -> vector<64x128xf32>
    %39 = arith.addf %33, %38 : vector<64x128xf32>
    %40 = vector.extract_strided_slice %27 {offsets = [0, 2, 0], sizes = [4, 16, 4], strides = [1, 1, 1]} : vector<4x18x4xbf16> to vector<4x16x4xbf16>
    %41 = vector.shape_cast %40 : vector<4x16x4xbf16> to vector<64x4xbf16>
    %c5 = arith.constant 5 : index
    %c0_21 = arith.constant 0 : index
    %c0_22 = arith.constant 0 : index
    %42 = vector.load %arg3[%c5, %c0_21, %c0_22] : memref<9x4x128xbf16, #tpu.memory_space<vmem>>, vector<1x4x128xbf16>
    %43 = vector.shape_cast %42 : vector<1x4x128xbf16> to vector<4x128xbf16>
    %cst_23 = arith.constant dense<0.000000e+00> : vector<64x128xf32>
    %44 = tpu.matmul %41, %43, %cst_23 {dimension_numbers = #tpu.dot_dimension_numbers<[1], [0], [0], [1], [0, 0, 1, 1], [], []>} : vector<64x4xbf16>, vector<4x128xbf16>, vector<64x128xf32> -> vector<64x128xf32>
    %45 = arith.addf %39, %44 : vector<64x128xf32>
    %c2_i32 = arith.constant 2 : i32
    %46 = arith.addi %0, %c2_i32 : i32
    %c0_24 = arith.constant 0 : index
    %47 = arith.index_cast %46 : i32 to index
    %c0_25 = arith.constant 0 : index
    %c0_26 = arith.constant 0 : index
    %48 = vector.load %arg2[%c0_24, %47, %c0_25, %c0_26] : memref<1x18x18x4xbf16, #tpu.memory_space<vmem>>, vector<1x4x18x4xbf16>
    %49 = vector.shape_cast %48 : vector<1x4x18x4xbf16> to vector<4x18x4xbf16>
    %50 = vector.extract_strided_slice %49 {offsets = [0, 0, 0], sizes = [4, 16, 4], strides = [1, 1, 1]} : vector<4x18x4xbf16> to vector<4x16x4xbf16>
    %51 = vector.shape_cast %50 : vector<4x16x4xbf16> to vector<64x4xbf16>
    %c6 = arith.constant 6 : index
    %c0_27 = arith.constant 0 : index
    %c0_28 = arith.constant 0 : index
    %52 = vector.load %arg3[%c6, %c0_27, %c0_28] : memref<9x4x128xbf16, #tpu.memory_space<vmem>>, vector<1x4x128xbf16>
    %53 = vector.shape_cast %52 : vector<1x4x128xbf16> to vector<4x128xbf16>
    %cst_29 = arith.constant dense<0.000000e+00> : vector<64x128xf32>
    %54 = tpu.matmul %51, %53, %cst_29 {dimension_numbers = #tpu.dot_dimension_numbers<[1], [0], [0], [1], [0, 0, 1, 1], [], []>} : vector<64x4xbf16>, vector<4x128xbf16>, vector<64x128xf32> -> vector<64x128xf32>
    %55 = arith.addf %45, %54 : vector<64x128xf32>
    %56 = vector.extract_strided_slice %49 {offsets = [0, 1, 0], sizes = [4, 16, 4], strides = [1, 1, 1]} : vector<4x18x4xbf16> to vector<4x16x4xbf16>
    %57 = vector.shape_cast %56 : vector<4x16x4xbf16> to vector<64x4xbf16>
    %c7 = arith.constant 7 : index
    %c0_30 = arith.constant 0 : index
    %c0_31 = arith.constant 0 : index
    %58 = vector.load %arg3[%c7, %c0_30, %c0_31] : memref<9x4x128xbf16, #tpu.memory_space<vmem>>, vector<1x4x128xbf16>
    %59 = vector.shape_cast %58 : vector<1x4x128xbf16> to vector<4x128xbf16>
    %cst_32 = arith.constant dense<0.000000e+00> : vector<64x128xf32>
    %60 = tpu.matmul %57, %59, %cst_32 {dimension_numbers = #tpu.dot_dimension_numbers<[1], [0], [0], [1], [0, 0, 1, 1], [], []>} : vector<64x4xbf16>, vector<4x128xbf16>, vector<64x128xf32> -> vector<64x128xf32>
    %61 = arith.addf %55, %60 : vector<64x128xf32>
    %62 = vector.extract_strided_slice %49 {offsets = [0, 2, 0], sizes = [4, 16, 4], strides = [1, 1, 1]} : vector<4x18x4xbf16> to vector<4x16x4xbf16>
    %63 = vector.shape_cast %62 : vector<4x16x4xbf16> to vector<64x4xbf16>
    %c8 = arith.constant 8 : index
    %c0_33 = arith.constant 0 : index
    %c0_34 = arith.constant 0 : index
    %64 = vector.load %arg3[%c8, %c0_33, %c0_34] : memref<9x4x128xbf16, #tpu.memory_space<vmem>>, vector<1x4x128xbf16>
    %65 = vector.shape_cast %64 : vector<1x4x128xbf16> to vector<4x128xbf16>
    %cst_35 = arith.constant dense<0.000000e+00> : vector<64x128xf32>
    %66 = tpu.matmul %63, %65, %cst_35 {dimension_numbers = #tpu.dot_dimension_numbers<[1], [0], [0], [1], [0, 0, 1, 1], [], []>} : vector<64x4xbf16>, vector<4x128xbf16>, vector<64x128xf32> -> vector<64x128xf32>
    %67 = arith.addf %61, %66 : vector<64x128xf32>
    %68 = vector.shape_cast %67 : vector<64x128xf32> to vector<4x16x128xf32>
    %c0_36 = arith.constant 0 : index
    %c0_37 = arith.constant 0 : index
    %c0_38 = arith.constant 0 : index
    %c0_39 = arith.constant 0 : index
    %69 = vector.load %arg4[%c0_36, %c0_37, %c0_38, %c0_39] : memref<1x4x16x128xf32, #tpu.memory_space<vmem>>, vector<1x4x16x128xf32>
    %70 = vector.shape_cast %69 : vector<1x4x16x128xf32> to vector<4x16x128xf32>
    %71 = vector.shape_cast %68 : vector<4x16x128xf32> to vector<1x4x16x128xf32>
    tpu.vector_store %arg4[%c0_36, %c0_37, %c0_38, %c0_39], %71 {strides = array<i32>} : memref<1x4x16x128xf32, #tpu.memory_space<vmem>>, vector<1x4x16x128xf32>,
    %cst_40 = arith.constant dense<0.000000e+00> : vector<128xf32>
    %72 = vector.multi_reduction <add>, %67, %cst_40 [0] : vector<64x128xf32> to vector<128xf32>
    %73 = vector.shape_cast %72 : vector<128xf32> to vector<1x128xf32>
    %74 = arith.mulf %67, %67 : vector<64x128xf32>
    %cst_41 = arith.constant dense<0.000000e+00> : vector<128xf32>
    %75 = vector.multi_reduction <add>, %74, %cst_41 [0] : vector<64x128xf32> to vector<128xf32>
    %76 = vector.shape_cast %75 : vector<128xf32> to vector<1x128xf32>
    %77 = tpu.concatenate %73, %76 in 0 : vector<1x128xf32>, vector<1x128xf32> -> vector<2x128xf32>
    %c0_i32_42 = arith.constant 0 : i32
    %78 = arith.cmpi eq, %arg1, %c0_i32_42 : i32
    %79 = arith.extui %78 : i1 to i32
    %c0_i32_43 = arith.constant 0 : i32
    %80 = arith.cmpi ne, %79, %c0_i32_43 : i32
    scf.if %80 {
      %cst_50 = arith.constant 0.000000e+00 : f32
      %87 = vector.broadcast %cst_50 : f32 to vector<2x128xf32>
      %c0_51 = arith.constant 0 : index
      %c0_52 = arith.constant 0 : index
      %c0_53 = arith.constant 0 : index
      %88 = vector.load %arg5[%c0_51, %c0_52, %c0_53] : memref<1x2x128xf32, #tpu.memory_space<vmem>>, vector<1x2x128xf32>
      %89 = vector.shape_cast %88 : vector<1x2x128xf32> to vector<2x128xf32>
      %90 = vector.shape_cast %87 : vector<2x128xf32> to vector<1x2x128xf32>
      tpu.vector_store %arg5[%c0_51, %c0_52, %c0_53], %90 {strides = array<i32>} : memref<1x2x128xf32, #tpu.memory_space<vmem>>, vector<1x2x128xf32>,
    } else {
    }
    %c0_44 = arith.constant 0 : index
    %c0_45 = arith.constant 0 : index
    %c0_46 = arith.constant 0 : index
    %81 = vector.load %arg5[%c0_44, %c0_45, %c0_46] : memref<1x2x128xf32, #tpu.memory_space<vmem>>, vector<1x2x128xf32>
    %82 = vector.shape_cast %81 : vector<1x2x128xf32> to vector<2x128xf32>
    %83 = arith.addf %82, %77 : vector<2x128xf32>
    %c0_47 = arith.constant 0 : index
    %c0_48 = arith.constant 0 : index
    %c0_49 = arith.constant 0 : index
    %84 = vector.load %arg5[%c0_47, %c0_48, %c0_49] : memref<1x2x128xf32, #tpu.memory_space<vmem>>, vector<1x2x128xf32>
    %85 = vector.shape_cast %84 : vector<1x2x128xf32> to vector<2x128xf32>
    %86 = vector.shape_cast %83 : vector<2x128xf32> to vector<1x2x128xf32>
    tpu.vector_store %arg5[%c0_47, %c0_48, %c0_49], %86 {strides = array<i32>} : memref<1x2x128xf32, #tpu.memory_space<vmem>>, vector<1x2x128xf32>,
    return
  }
  func.func @transform_0(%arg0: i32, %arg1: i32) -> (i32, i32, i32, i32) {
    %c0_i32 = arith.constant 0 : i32
    %c0_i32_0 = arith.constant 0 : i32
    %c0_i32_1 = arith.constant 0 : i32
    %c0_i32_2 = arith.constant 0 : i32
    return %arg0, %c0_i32, %c0_i32_0, %c0_i32_1 : i32, i32, i32, i32
  }
  func.func @transform_1(%arg0: i32, %arg1: i32) -> (i32, i32, i32) {
    %c0_i32 = arith.constant 0 : i32
    %c0_i32_0 = arith.constant 0 : i32
    %c0_i32_1 = arith.constant 0 : i32
    %c0_i32_2 = arith.constant 0 : i32
    return %c0_i32, %c0_i32_0, %c0_i32_1 : i32, i32, i32
  }
  func.func @transform_2(%arg0: i32, %arg1: i32) -> (i32, i32, i32, i32) {
    %c0_i32 = arith.constant 0 : i32
    %c0_i32_0 = arith.constant 0 : i32
    %c0_i32_1 = arith.constant 0 : i32
    return %arg0, %arg1, %c0_i32, %c0_i32_0 : i32, i32, i32, i32
  }
  func.func @transform_3(%arg0: i32, %arg1: i32) -> (i32, i32, i32) {
    %c0_i32 = arith.constant 0 : i32
    %c0_i32_0 = arith.constant 0 : i32
    %c0_i32_1 = arith.constant 0 : i32
    return %arg0, %c0_i32, %c0_i32_0 : i32, i32, i32
  }
}

module attributes {stable_mosaic.version = 11 : i64} {
  func.func @_bn_proj_add_relu_kernel(%arg0: i32, %arg1: i32, %arg2: memref<1x4x16x128xf32, #tpu.memory_space<vmem>>, %arg3: memref<1x4x16x4xbf16, #tpu.memory_space<vmem>>, %arg4: memref<4x128xbf16, #tpu.memory_space<vmem>>, %arg5: memref<1x1x128xf32, #tpu.memory_space<vmem>>, %arg6: memref<1x1x128xf32, #tpu.memory_space<vmem>>, %arg7: memref<1x4x16x128xf32, #tpu.memory_space<vmem>>) attributes {dimension_semantics = [#tpu.dimension_semantics<parallel>, #tpu.dimension_semantics<parallel>], iteration_bounds = array<i64: 2, 4>, scalar_prefetch = 0 : i64, scratch_operands = 0 : i64, tpu.core_type = #tpu.core_type<tc>, window_params = [{transform_indices = @transform_0, window_bounds = array<i64: 1, 4, 16, 128>}, {transform_indices = @transform_1, window_bounds = array<i64: 1, 4, 16, 4>}, {pipeline_mode = #tpu.pipeline_mode<synchronous>, transform_indices = @transform_2, window_bounds = array<i64: 4, 128>}, {pipeline_mode = #tpu.pipeline_mode<synchronous>, transform_indices = @transform_3, window_bounds = array<i64: 1, 1, 128>}, {pipeline_mode = #tpu.pipeline_mode<synchronous>, transform_indices = @transform_4, window_bounds = array<i64: 1, 1, 128>}, {transform_indices = @transform_5, window_bounds = array<i64: 1, 4, 16, 128>}]} {
    %c0 = arith.constant 0 : index
    %c0_0 = arith.constant 0 : index
    %c0_1 = arith.constant 0 : index
    %c0_2 = arith.constant 0 : index
    %0 = vector.load %arg2[%c0, %c0_0, %c0_1, %c0_2] : memref<1x4x16x128xf32, #tpu.memory_space<vmem>>, vector<1x4x16x128xf32>
    %1 = vector.shape_cast %0 : vector<1x4x16x128xf32> to vector<4x16x128xf32>
    %c0_3 = arith.constant 0 : index
    %c0_4 = arith.constant 0 : index
    %c0_5 = arith.constant 0 : index
    %c0_6 = arith.constant 0 : index
    %2 = vector.load %arg3[%c0_3, %c0_4, %c0_5, %c0_6] : memref<1x4x16x4xbf16, #tpu.memory_space<vmem>>, vector<1x4x16x4xbf16>
    %3 = vector.shape_cast %2 : vector<1x4x16x4xbf16> to vector<4x16x4xbf16>
    %4 = vector.shape_cast %3 : vector<4x16x4xbf16> to vector<64x4xbf16>
    %c0_7 = arith.constant 0 : index
    %c0_8 = arith.constant 0 : index
    %5 = vector.load %arg4[%c0_7, %c0_8] : memref<4x128xbf16, #tpu.memory_space<vmem>>, vector<4x128xbf16>
    %cst = arith.constant dense<0.000000e+00> : vector<64x128xf32>
    %6 = tpu.matmul %4, %5, %cst {dimension_numbers = #tpu.dot_dimension_numbers<[1], [0], [0], [1], [0, 0, 1, 1], [], []>} : vector<64x4xbf16>, vector<4x128xbf16>, vector<64x128xf32> -> vector<64x128xf32>
    %c0_9 = arith.constant 0 : index
    %c0_10 = arith.constant 0 : index
    %c0_11 = arith.constant 0 : index
    %7 = vector.load %arg5[%c0_9, %c0_10, %c0_11] : memref<1x1x128xf32, #tpu.memory_space<vmem>>, vector<1x1x128xf32>
    %8 = vector.broadcast %7 : vector<1x1x128xf32> to vector<4x16x128xf32>
    %9 = arith.mulf %1, %8 : vector<4x16x128xf32>
    %c0_12 = arith.constant 0 : index
    %c0_13 = arith.constant 0 : index
    %c0_14 = arith.constant 0 : index
    %10 = vector.load %arg6[%c0_12, %c0_13, %c0_14] : memref<1x1x128xf32, #tpu.memory_space<vmem>>, vector<1x1x128xf32>
    %11 = vector.broadcast %10 : vector<1x1x128xf32> to vector<4x16x128xf32>
    %12 = arith.addf %9, %11 : vector<4x16x128xf32>
    %13 = vector.shape_cast %6 : vector<64x128xf32> to vector<4x16x128xf32>
    %14 = arith.addf %12, %13 : vector<4x16x128xf32>
    %cst_15 = arith.constant 0.000000e+00 : f32
    %15 = vector.broadcast %cst_15 : f32 to vector<4x16x128xf32>
    %16 = arith.maximumf %14, %15 : vector<4x16x128xf32>
    %c0_16 = arith.constant 0 : index
    %c0_17 = arith.constant 0 : index
    %c0_18 = arith.constant 0 : index
    %c0_19 = arith.constant 0 : index
    %17 = vector.load %arg7[%c0_16, %c0_17, %c0_18, %c0_19] : memref<1x4x16x128xf32, #tpu.memory_space<vmem>>, vector<1x4x16x128xf32>
    %18 = vector.shape_cast %17 : vector<1x4x16x128xf32> to vector<4x16x128xf32>
    %19 = vector.shape_cast %16 : vector<4x16x128xf32> to vector<1x4x16x128xf32>
    tpu.vector_store %arg7[%c0_16, %c0_17, %c0_18, %c0_19], %19 {strides = array<i32>} : memref<1x4x16x128xf32, #tpu.memory_space<vmem>>, vector<1x4x16x128xf32>,
    return
  }
  func.func @transform_0(%arg0: i32, %arg1: i32) -> (i32, i32, i32, i32) {
    %c0_i32 = arith.constant 0 : i32
    %c0_i32_0 = arith.constant 0 : i32
    %c0_i32_1 = arith.constant 0 : i32
    return %arg0, %arg1, %c0_i32, %c0_i32_0 : i32, i32, i32, i32
  }
  func.func @transform_1(%arg0: i32, %arg1: i32) -> (i32, i32, i32, i32) {
    %c0_i32 = arith.constant 0 : i32
    %c0_i32_0 = arith.constant 0 : i32
    %c0_i32_1 = arith.constant 0 : i32
    return %arg0, %arg1, %c0_i32, %c0_i32_0 : i32, i32, i32, i32
  }
  func.func @transform_2(%arg0: i32, %arg1: i32) -> (i32, i32) {
    %c0_i32 = arith.constant 0 : i32
    %c0_i32_0 = arith.constant 0 : i32
    %c0_i32_1 = arith.constant 0 : i32
    return %c0_i32, %c0_i32_0 : i32, i32
  }
  func.func @transform_3(%arg0: i32, %arg1: i32) -> (i32, i32, i32) {
    %c0_i32 = arith.constant 0 : i32
    %c0_i32_0 = arith.constant 0 : i32
    %c0_i32_1 = arith.constant 0 : i32
    %c0_i32_2 = arith.constant 0 : i32
    return %c0_i32, %c0_i32_0, %c0_i32_1 : i32, i32, i32
  }
  func.func @transform_4(%arg0: i32, %arg1: i32) -> (i32, i32, i32) {
    %c0_i32 = arith.constant 0 : i32
    %c0_i32_0 = arith.constant 0 : i32
    %c0_i32_1 = arith.constant 0 : i32
    %c0_i32_2 = arith.constant 0 : i32
    return %c0_i32, %c0_i32_0, %c0_i32_1 : i32, i32, i32
  }
  func.func @transform_5(%arg0: i32, %arg1: i32) -> (i32, i32, i32, i32) {
    %c0_i32 = arith.constant 0 : i32
    %c0_i32_0 = arith.constant 0 : i32
    %c0_i32_1 = arith.constant 0 : i32
    return %arg0, %arg1, %c0_i32, %c0_i32_0 : i32, i32, i32, i32
  }
}

module attributes {stable_mosaic.version = 11 : i64} {
  func.func @_conv3x3_stats_kernel(%arg0: i32, %arg1: i32, %arg2: memref<1x18x18x4xbf16, #tpu.memory_space<vmem>>, %arg3: memref<9x4x128xbf16, #tpu.memory_space<vmem>>, %arg4: memref<1x4x16x128xf32, #tpu.memory_space<vmem>>, %arg5: memref<1x2x128xf32, #tpu.memory_space<vmem>>) attributes {dimension_semantics = [#tpu.dimension_semantics<parallel>, #tpu.dimension_semantics<arbitrary>], iteration_bounds = array<i64: 2, 4>, scalar_prefetch = 0 : i64, scratch_operands = 0 : i64, tpu.core_type = #tpu.core_type<tc>, window_params = [{transform_indices = @transform_0, window_bounds = array<i64: 1, 18, 18, 4>}, {pipeline_mode = #tpu.pipeline_mode<synchronous>, transform_indices = @transform_1, window_bounds = array<i64: 9, 4, 128>}, {transform_indices = @transform_2, window_bounds = array<i64: 1, 4, 16, 128>}, {transform_indices = @transform_3, window_bounds = array<i64: 1, 2, 128>}]} {
    %c4_i32 = arith.constant 4 : i32
    %0 = arith.muli %arg1, %c4_i32 : i32
    %cst = arith.constant 0.000000e+00 : f32
    %1 = vector.broadcast %cst : f32 to vector<64x128xf32>
    %c0_i32 = arith.constant 0 : i32
    %2 = arith.addi %0, %c0_i32 : i32
    %c0 = arith.constant 0 : index
    %3 = arith.index_cast %2 : i32 to index
    %c0_0 = arith.constant 0 : index
    %c0_1 = arith.constant 0 : index
    %4 = vector.load %arg2[%c0, %3, %c0_0, %c0_1] : memref<1x18x18x4xbf16, #tpu.memory_space<vmem>>, vector<1x4x18x4xbf16>
    %5 = vector.shape_cast %4 : vector<1x4x18x4xbf16> to vector<4x18x4xbf16>
    %6 = vector.extract_strided_slice %5 {offsets = [0, 0, 0], sizes = [4, 16, 4], strides = [1, 1, 1]} : vector<4x18x4xbf16> to vector<4x16x4xbf16>
    %7 = vector.shape_cast %6 : vector<4x16x4xbf16> to vector<64x4xbf16>
    %c0_2 = arith.constant 0 : index
    %c0_3 = arith.constant 0 : index
    %c0_4 = arith.constant 0 : index
    %8 = vector.load %arg3[%c0_2, %c0_3, %c0_4] : memref<9x4x128xbf16, #tpu.memory_space<vmem>>, vector<1x4x128xbf16>
    %9 = vector.shape_cast %8 : vector<1x4x128xbf16> to vector<4x128xbf16>
    %cst_5 = arith.constant dense<0.000000e+00> : vector<64x128xf32>
    %10 = tpu.matmul %7, %9, %cst_5 {dimension_numbers = #tpu.dot_dimension_numbers<[1], [0], [0], [1], [0, 0, 1, 1], [], []>} : vector<64x4xbf16>, vector<4x128xbf16>, vector<64x128xf32> -> vector<64x128xf32>
    %11 = arith.addf %1, %10 : vector<64x128xf32>
    %12 = vector.extract_strided_slice %5 {offsets = [0, 1, 0], sizes = [4, 16, 4], strides = [1, 1, 1]} : vector<4x18x4xbf16> to vector<4x16x4xbf16>
    %13 = vector.shape_cast %12 : vector<4x16x4xbf16> to vector<64x4xbf16>
    %c1 = arith.constant 1 : index
    %c0_6 = arith.constant 0 : index
    %c0_7 = arith.constant 0 : index
    %14 = vector.load %arg3[%c1, %c0_6, %c0_7] : memref<9x4x128xbf16, #tpu.memory_space<vmem>>, vector<1x4x128xbf16>
    %15 = vector.shape_cast %14 : vector<1x4x128xbf16> to vector<4x128xbf16>
    %cst_8 = arith.constant dense<0.000000e+00> : vector<64x128xf32>
    %16 = tpu.matmul %13, %15, %cst_8 {dimension_numbers = #tpu.dot_dimension_numbers<[1], [0], [0], [1], [0, 0, 1, 1], [], []>} : vector<64x4xbf16>, vector<4x128xbf16>, vector<64x128xf32> -> vector<64x128xf32>
    %17 = arith.addf %11, %16 : vector<64x128xf32>
    %18 = vector.extract_strided_slice %5 {offsets = [0, 2, 0], sizes = [4, 16, 4], strides = [1, 1, 1]} : vector<4x18x4xbf16> to vector<4x16x4xbf16>
    %19 = vector.shape_cast %18 : vector<4x16x4xbf16> to vector<64x4xbf16>
    %c2 = arith.constant 2 : index
    %c0_9 = arith.constant 0 : index
    %c0_10 = arith.constant 0 : index
    %20 = vector.load %arg3[%c2, %c0_9, %c0_10] : memref<9x4x128xbf16, #tpu.memory_space<vmem>>, vector<1x4x128xbf16>
    %21 = vector.shape_cast %20 : vector<1x4x128xbf16> to vector<4x128xbf16>
    %cst_11 = arith.constant dense<0.000000e+00> : vector<64x128xf32>
    %22 = tpu.matmul %19, %21, %cst_11 {dimension_numbers = #tpu.dot_dimension_numbers<[1], [0], [0], [1], [0, 0, 1, 1], [], []>} : vector<64x4xbf16>, vector<4x128xbf16>, vector<64x128xf32> -> vector<64x128xf32>
    %23 = arith.addf %17, %22 : vector<64x128xf32>
    %c1_i32 = arith.constant 1 : i32
    %24 = arith.addi %0, %c1_i32 : i32
    %c0_12 = arith.constant 0 : index
    %25 = arith.index_cast %24 : i32 to index
    %c0_13 = arith.constant 0 : index
    %c0_14 = arith.constant 0 : index
    %26 = vector.load %arg2[%c0_12, %25, %c0_13, %c0_14] : memref<1x18x18x4xbf16, #tpu.memory_space<vmem>>, vector<1x4x18x4xbf16>
    %27 = vector.shape_cast %26 : vector<1x4x18x4xbf16> to vector<4x18x4xbf16>
    %28 = vector.extract_strided_slice %27 {offsets = [0, 0, 0], sizes = [4, 16, 4], strides = [1, 1, 1]} : vector<4x18x4xbf16> to vector<4x16x4xbf16>
    %29 = vector.shape_cast %28 : vector<4x16x4xbf16> to vector<64x4xbf16>
    %c3 = arith.constant 3 : index
    %c0_15 = arith.constant 0 : index
    %c0_16 = arith.constant 0 : index
    %30 = vector.load %arg3[%c3, %c0_15, %c0_16] : memref<9x4x128xbf16, #tpu.memory_space<vmem>>, vector<1x4x128xbf16>
    %31 = vector.shape_cast %30 : vector<1x4x128xbf16> to vector<4x128xbf16>
    %cst_17 = arith.constant dense<0.000000e+00> : vector<64x128xf32>
    %32 = tpu.matmul %29, %31, %cst_17 {dimension_numbers = #tpu.dot_dimension_numbers<[1], [0], [0], [1], [0, 0, 1, 1], [], []>} : vector<64x4xbf16>, vector<4x128xbf16>, vector<64x128xf32> -> vector<64x128xf32>
    %33 = arith.addf %23, %32 : vector<64x128xf32>
    %34 = vector.extract_strided_slice %27 {offsets = [0, 1, 0], sizes = [4, 16, 4], strides = [1, 1, 1]} : vector<4x18x4xbf16> to vector<4x16x4xbf16>
    %35 = vector.shape_cast %34 : vector<4x16x4xbf16> to vector<64x4xbf16>
    %c4 = arith.constant 4 : index
    %c0_18 = arith.constant 0 : index
    %c0_19 = arith.constant 0 : index
    %36 = vector.load %arg3[%c4, %c0_18, %c0_19] : memref<9x4x128xbf16, #tpu.memory_space<vmem>>, vector<1x4x128xbf16>
    %37 = vector.shape_cast %36 : vector<1x4x128xbf16> to vector<4x128xbf16>
    %cst_20 = arith.constant dense<0.000000e+00> : vector<64x128xf32>
    %38 = tpu.matmul %35, %37, %cst_20 {dimension_numbers = #tpu.dot_dimension_numbers<[1], [0], [0], [1], [0, 0, 1, 1], [], []>} : vector<64x4xbf16>, vector<4x128xbf16>, vector<64x128xf32> -> vector<64x128xf32>
    %39 = arith.addf %33, %38 : vector<64x128xf32>
    %40 = vector.extract_strided_slice %27 {offsets = [0, 2, 0], sizes = [4, 16, 4], strides = [1, 1, 1]} : vector<4x18x4xbf16> to vector<4x16x4xbf16>
    %41 = vector.shape_cast %40 : vector<4x16x4xbf16> to vector<64x4xbf16>
    %c5 = arith.constant 5 : index
    %c0_21 = arith.constant 0 : index
    %c0_22 = arith.constant 0 : index
    %42 = vector.load %arg3[%c5, %c0_21, %c0_22] : memref<9x4x128xbf16, #tpu.memory_space<vmem>>, vector<1x4x128xbf16>
    %43 = vector.shape_cast %42 : vector<1x4x128xbf16> to vector<4x128xbf16>
    %cst_23 = arith.constant dense<0.000000e+00> : vector<64x128xf32>
    %44 = tpu.matmul %41, %43, %cst_23 {dimension_numbers = #tpu.dot_dimension_numbers<[1], [0], [0], [1], [0, 0, 1, 1], [], []>} : vector<64x4xbf16>, vector<4x128xbf16>, vector<64x128xf32> -> vector<64x128xf32>
    %45 = arith.addf %39, %44 : vector<64x128xf32>
    %c2_i32 = arith.constant 2 : i32
    %46 = arith.addi %0, %c2_i32 : i32
    %c0_24 = arith.constant 0 : index
    %47 = arith.index_cast %46 : i32 to index
    %c0_25 = arith.constant 0 : index
    %c0_26 = arith.constant 0 : index
    %48 = vector.load %arg2[%c0_24, %47, %c0_25, %c0_26] : memref<1x18x18x4xbf16, #tpu.memory_space<vmem>>, vector<1x4x18x4xbf16>
    %49 = vector.shape_cast %48 : vector<1x4x18x4xbf16> to vector<4x18x4xbf16>
    %50 = vector.extract_strided_slice %49 {offsets = [0, 0, 0], sizes = [4, 16, 4], strides = [1, 1, 1]} : vector<4x18x4xbf16> to vector<4x16x4xbf16>
    %51 = vector.shape_cast %50 : vector<4x16x4xbf16> to vector<64x4xbf16>
    %c6 = arith.constant 6 : index
    %c0_27 = arith.constant 0 : index
    %c0_28 = arith.constant 0 : index
    %52 = vector.load %arg3[%c6, %c0_27, %c0_28] : memref<9x4x128xbf16, #tpu.memory_space<vmem>>, vector<1x4x128xbf16>
    %53 = vector.shape_cast %52 : vector<1x4x128xbf16> to vector<4x128xbf16>
    %cst_29 = arith.constant dense<0.000000e+00> : vector<64x128xf32>
    %54 = tpu.matmul %51, %53, %cst_29 {dimension_numbers = #tpu.dot_dimension_numbers<[1], [0], [0], [1], [0, 0, 1, 1], [], []>} : vector<64x4xbf16>, vector<4x128xbf16>, vector<64x128xf32> -> vector<64x128xf32>
    %55 = arith.addf %45, %54 : vector<64x128xf32>
    %56 = vector.extract_strided_slice %49 {offsets = [0, 1, 0], sizes = [4, 16, 4], strides = [1, 1, 1]} : vector<4x18x4xbf16> to vector<4x16x4xbf16>
    %57 = vector.shape_cast %56 : vector<4x16x4xbf16> to vector<64x4xbf16>
    %c7 = arith.constant 7 : index
    %c0_30 = arith.constant 0 : index
    %c0_31 = arith.constant 0 : index
    %58 = vector.load %arg3[%c7, %c0_30, %c0_31] : memref<9x4x128xbf16, #tpu.memory_space<vmem>>, vector<1x4x128xbf16>
    %59 = vector.shape_cast %58 : vector<1x4x128xbf16> to vector<4x128xbf16>
    %cst_32 = arith.constant dense<0.000000e+00> : vector<64x128xf32>
    %60 = tpu.matmul %57, %59, %cst_32 {dimension_numbers = #tpu.dot_dimension_numbers<[1], [0], [0], [1], [0, 0, 1, 1], [], []>} : vector<64x4xbf16>, vector<4x128xbf16>, vector<64x128xf32> -> vector<64x128xf32>
    %61 = arith.addf %55, %60 : vector<64x128xf32>
    %62 = vector.extract_strided_slice %49 {offsets = [0, 2, 0], sizes = [4, 16, 4], strides = [1, 1, 1]} : vector<4x18x4xbf16> to vector<4x16x4xbf16>
    %63 = vector.shape_cast %62 : vector<4x16x4xbf16> to vector<64x4xbf16>
    %c8 = arith.constant 8 : index
    %c0_33 = arith.constant 0 : index
    %c0_34 = arith.constant 0 : index
    %64 = vector.load %arg3[%c8, %c0_33, %c0_34] : memref<9x4x128xbf16, #tpu.memory_space<vmem>>, vector<1x4x128xbf16>
    %65 = vector.shape_cast %64 : vector<1x4x128xbf16> to vector<4x128xbf16>
    %cst_35 = arith.constant dense<0.000000e+00> : vector<64x128xf32>
    %66 = tpu.matmul %63, %65, %cst_35 {dimension_numbers = #tpu.dot_dimension_numbers<[1], [0], [0], [1], [0, 0, 1, 1], [], []>} : vector<64x4xbf16>, vector<4x128xbf16>, vector<64x128xf32> -> vector<64x128xf32>
    %67 = arith.addf %61, %66 : vector<64x128xf32>
    %68 = vector.shape_cast %67 : vector<64x128xf32> to vector<4x16x128xf32>
    %c0_36 = arith.constant 0 : index
    %c0_37 = arith.constant 0 : index
    %c0_38 = arith.constant 0 : index
    %c0_39 = arith.constant 0 : index
    %69 = vector.load %arg4[%c0_36, %c0_37, %c0_38, %c0_39] : memref<1x4x16x128xf32, #tpu.memory_space<vmem>>, vector<1x4x16x128xf32>
    %70 = vector.shape_cast %69 : vector<1x4x16x128xf32> to vector<4x16x128xf32>
    %71 = vector.shape_cast %68 : vector<4x16x128xf32> to vector<1x4x16x128xf32>
    tpu.vector_store %arg4[%c0_36, %c0_37, %c0_38, %c0_39], %71 {strides = array<i32>} : memref<1x4x16x128xf32, #tpu.memory_space<vmem>>, vector<1x4x16x128xf32>,
    %cst_40 = arith.constant dense<0.000000e+00> : vector<128xf32>
    %72 = vector.multi_reduction <add>, %67, %cst_40 [0] : vector<64x128xf32> to vector<128xf32>
    %73 = vector.shape_cast %72 : vector<128xf32> to vector<1x128xf32>
    %74 = arith.mulf %67, %67 : vector<64x128xf32>
    %cst_41 = arith.constant dense<0.000000e+00> : vector<128xf32>
    %75 = vector.multi_reduction <add>, %74, %cst_41 [0] : vector<64x128xf32> to vector<128xf32>
    %76 = vector.shape_cast %75 : vector<128xf32> to vector<1x128xf32>
    %77 = tpu.concatenate %73, %76 in 0 : vector<1x128xf32>, vector<1x128xf32> -> vector<2x128xf32>
    %c0_i32_42 = arith.constant 0 : i32
    %78 = arith.cmpi eq, %arg1, %c0_i32_42 : i32
    %79 = arith.extui %78 : i1 to i32
    %c0_i32_43 = arith.constant 0 : i32
    %80 = arith.cmpi ne, %79, %c0_i32_43 : i32
    scf.if %80 {
      %cst_50 = arith.constant 0.000000e+00 : f32
      %87 = vector.broadcast %cst_50 : f32 to vector<2x128xf32>
      %c0_51 = arith.constant 0 : index
      %c0_52 = arith.constant 0 : index
      %c0_53 = arith.constant 0 : index
      %88 = vector.load %arg5[%c0_51, %c0_52, %c0_53] : memref<1x2x128xf32, #tpu.memory_space<vmem>>, vector<1x2x128xf32>
      %89 = vector.shape_cast %88 : vector<1x2x128xf32> to vector<2x128xf32>
      %90 = vector.shape_cast %87 : vector<2x128xf32> to vector<1x2x128xf32>
      tpu.vector_store %arg5[%c0_51, %c0_52, %c0_53], %90 {strides = array<i32>} : memref<1x2x128xf32, #tpu.memory_space<vmem>>, vector<1x2x128xf32>,
    } else {
    }
    %c0_44 = arith.constant 0 : index
    %c0_45 = arith.constant 0 : index
    %c0_46 = arith.constant 0 : index
    %81 = vector.load %arg5[%c0_44, %c0_45, %c0_46] : memref<1x2x128xf32, #tpu.memory_space<vmem>>, vector<1x2x128xf32>
    %82 = vector.shape_cast %81 : vector<1x2x128xf32> to vector<2x128xf32>
    %83 = arith.addf %82, %77 : vector<2x128xf32>
    %c0_47 = arith.constant 0 : index
    %c0_48 = arith.constant 0 : index
    %c0_49 = arith.constant 0 : index
    %84 = vector.load %arg5[%c0_47, %c0_48, %c0_49] : memref<1x2x128xf32, #tpu.memory_space<vmem>>, vector<1x2x128xf32>
    %85 = vector.shape_cast %84 : vector<1x2x128xf32> to vector<2x128xf32>
    %86 = vector.shape_cast %83 : vector<2x128xf32> to vector<1x2x128xf32>
    tpu.vector_store %arg5[%c0_47, %c0_48, %c0_49], %86 {strides = array<i32>} : memref<1x2x128xf32, #tpu.memory_space<vmem>>, vector<1x2x128xf32>,
    return
  }
  func.func @transform_0(%arg0: i32, %arg1: i32) -> (i32, i32, i32, i32) {
    %c0_i32 = arith.constant 0 : i32
    %c0_i32_0 = arith.constant 0 : i32
    %c0_i32_1 = arith.constant 0 : i32
    %c0_i32_2 = arith.constant 0 : i32
    return %arg0, %c0_i32, %c0_i32_0, %c0_i32_1 : i32, i32, i32, i32
  }
  func.func @transform_1(%arg0: i32, %arg1: i32) -> (i32, i32, i32) {
    %c0_i32 = arith.constant 0 : i32
    %c0_i32_0 = arith.constant 0 : i32
    %c0_i32_1 = arith.constant 0 : i32
    %c0_i32_2 = arith.constant 0 : i32
    return %c0_i32, %c0_i32_0, %c0_i32_1 : i32, i32, i32
  }
  func.func @transform_2(%arg0: i32, %arg1: i32) -> (i32, i32, i32, i32) {
    %c0_i32 = arith.constant 0 : i32
    %c0_i32_0 = arith.constant 0 : i32
    %c0_i32_1 = arith.constant 0 : i32
    return %arg0, %arg1, %c0_i32, %c0_i32_0 : i32, i32, i32, i32
  }
  func.func @transform_3(%arg0: i32, %arg1: i32) -> (i32, i32, i32) {
    %c0_i32 = arith.constant 0 : i32
    %c0_i32_0 = arith.constant 0 : i32
    %c0_i32_1 = arith.constant 0 : i32
    return %arg0, %c0_i32, %c0_i32_0 : i32, i32, i32
  }
}

module attributes {stable_mosaic.version = 11 : i64} {
  func.func @_conv3x3_stats_kernel(%arg0: i32, %arg1: i32, %arg2: memref<1x18x18x128xbf16, #tpu.memory_space<vmem>>, %arg3: memref<9x128x128xbf16, #tpu.memory_space<vmem>>, %arg4: memref<1x4x16x128xf32, #tpu.memory_space<vmem>>, %arg5: memref<1x2x128xf32, #tpu.memory_space<vmem>>) attributes {dimension_semantics = [#tpu.dimension_semantics<parallel>, #tpu.dimension_semantics<arbitrary>], iteration_bounds = array<i64: 2, 4>, scalar_prefetch = 0 : i64, scratch_operands = 0 : i64, tpu.core_type = #tpu.core_type<tc>, window_params = [{transform_indices = @transform_0, window_bounds = array<i64: 1, 18, 18, 128>}, {pipeline_mode = #tpu.pipeline_mode<synchronous>, transform_indices = @transform_1, window_bounds = array<i64: 9, 128, 128>}, {transform_indices = @transform_2, window_bounds = array<i64: 1, 4, 16, 128>}, {transform_indices = @transform_3, window_bounds = array<i64: 1, 2, 128>}]} {
    %c4_i32 = arith.constant 4 : i32
    %0 = arith.muli %arg1, %c4_i32 : i32
    %cst = arith.constant 0.000000e+00 : f32
    %1 = vector.broadcast %cst : f32 to vector<64x128xf32>
    %c0_i32 = arith.constant 0 : i32
    %2 = arith.addi %0, %c0_i32 : i32
    %c0 = arith.constant 0 : index
    %3 = arith.index_cast %2 : i32 to index
    %c0_0 = arith.constant 0 : index
    %c0_1 = arith.constant 0 : index
    %4 = vector.load %arg2[%c0, %3, %c0_0, %c0_1] : memref<1x18x18x128xbf16, #tpu.memory_space<vmem>>, vector<1x4x18x128xbf16>
    %5 = vector.shape_cast %4 : vector<1x4x18x128xbf16> to vector<4x18x128xbf16>
    %6 = vector.extract_strided_slice %5 {offsets = [0, 0, 0], sizes = [4, 16, 128], strides = [1, 1, 1]} : vector<4x18x128xbf16> to vector<4x16x128xbf16>
    %7 = vector.shape_cast %6 : vector<4x16x128xbf16> to vector<64x128xbf16>
    %c0_2 = arith.constant 0 : index
    %c0_3 = arith.constant 0 : index
    %c0_4 = arith.constant 0 : index
    %8 = vector.load %arg3[%c0_2, %c0_3, %c0_4] : memref<9x128x128xbf16, #tpu.memory_space<vmem>>, vector<1x128x128xbf16>
    %9 = vector.shape_cast %8 : vector<1x128x128xbf16> to vector<128x128xbf16>
    %cst_5 = arith.constant dense<0.000000e+00> : vector<64x128xf32>
    %10 = tpu.matmul %7, %9, %cst_5 {dimension_numbers = #tpu.dot_dimension_numbers<[1], [0], [0], [1], [0, 0, 1, 1], [], []>} : vector<64x128xbf16>, vector<128x128xbf16>, vector<64x128xf32> -> vector<64x128xf32>
    %11 = arith.addf %1, %10 : vector<64x128xf32>
    %12 = vector.extract_strided_slice %5 {offsets = [0, 1, 0], sizes = [4, 16, 128], strides = [1, 1, 1]} : vector<4x18x128xbf16> to vector<4x16x128xbf16>
    %13 = vector.shape_cast %12 : vector<4x16x128xbf16> to vector<64x128xbf16>
    %c1 = arith.constant 1 : index
    %c0_6 = arith.constant 0 : index
    %c0_7 = arith.constant 0 : index
    %14 = vector.load %arg3[%c1, %c0_6, %c0_7] : memref<9x128x128xbf16, #tpu.memory_space<vmem>>, vector<1x128x128xbf16>
    %15 = vector.shape_cast %14 : vector<1x128x128xbf16> to vector<128x128xbf16>
    %cst_8 = arith.constant dense<0.000000e+00> : vector<64x128xf32>
    %16 = tpu.matmul %13, %15, %cst_8 {dimension_numbers = #tpu.dot_dimension_numbers<[1], [0], [0], [1], [0, 0, 1, 1], [], []>} : vector<64x128xbf16>, vector<128x128xbf16>, vector<64x128xf32> -> vector<64x128xf32>
    %17 = arith.addf %11, %16 : vector<64x128xf32>
    %18 = vector.extract_strided_slice %5 {offsets = [0, 2, 0], sizes = [4, 16, 128], strides = [1, 1, 1]} : vector<4x18x128xbf16> to vector<4x16x128xbf16>
    %19 = vector.shape_cast %18 : vector<4x16x128xbf16> to vector<64x128xbf16>
    %c2 = arith.constant 2 : index
    %c0_9 = arith.constant 0 : index
    %c0_10 = arith.constant 0 : index
    %20 = vector.load %arg3[%c2, %c0_9, %c0_10] : memref<9x128x128xbf16, #tpu.memory_space<vmem>>, vector<1x128x128xbf16>
    %21 = vector.shape_cast %20 : vector<1x128x128xbf16> to vector<128x128xbf16>
    %cst_11 = arith.constant dense<0.000000e+00> : vector<64x128xf32>
    %22 = tpu.matmul %19, %21, %cst_11 {dimension_numbers = #tpu.dot_dimension_numbers<[1], [0], [0], [1], [0, 0, 1, 1], [], []>} : vector<64x128xbf16>, vector<128x128xbf16>, vector<64x128xf32> -> vector<64x128xf32>
    %23 = arith.addf %17, %22 : vector<64x128xf32>
    %c1_i32 = arith.constant 1 : i32
    %24 = arith.addi %0, %c1_i32 : i32
    %c0_12 = arith.constant 0 : index
    %25 = arith.index_cast %24 : i32 to index
    %c0_13 = arith.constant 0 : index
    %c0_14 = arith.constant 0 : index
    %26 = vector.load %arg2[%c0_12, %25, %c0_13, %c0_14] : memref<1x18x18x128xbf16, #tpu.memory_space<vmem>>, vector<1x4x18x128xbf16>
    %27 = vector.shape_cast %26 : vector<1x4x18x128xbf16> to vector<4x18x128xbf16>
    %28 = vector.extract_strided_slice %27 {offsets = [0, 0, 0], sizes = [4, 16, 128], strides = [1, 1, 1]} : vector<4x18x128xbf16> to vector<4x16x128xbf16>
    %29 = vector.shape_cast %28 : vector<4x16x128xbf16> to vector<64x128xbf16>
    %c3 = arith.constant 3 : index
    %c0_15 = arith.constant 0 : index
    %c0_16 = arith.constant 0 : index
    %30 = vector.load %arg3[%c3, %c0_15, %c0_16] : memref<9x128x128xbf16, #tpu.memory_space<vmem>>, vector<1x128x128xbf16>
    %31 = vector.shape_cast %30 : vector<1x128x128xbf16> to vector<128x128xbf16>
    %cst_17 = arith.constant dense<0.000000e+00> : vector<64x128xf32>
    %32 = tpu.matmul %29, %31, %cst_17 {dimension_numbers = #tpu.dot_dimension_numbers<[1], [0], [0], [1], [0, 0, 1, 1], [], []>} : vector<64x128xbf16>, vector<128x128xbf16>, vector<64x128xf32> -> vector<64x128xf32>
    %33 = arith.addf %23, %32 : vector<64x128xf32>
    %34 = vector.extract_strided_slice %27 {offsets = [0, 1, 0], sizes = [4, 16, 128], strides = [1, 1, 1]} : vector<4x18x128xbf16> to vector<4x16x128xbf16>
    %35 = vector.shape_cast %34 : vector<4x16x128xbf16> to vector<64x128xbf16>
    %c4 = arith.constant 4 : index
    %c0_18 = arith.constant 0 : index
    %c0_19 = arith.constant 0 : index
    %36 = vector.load %arg3[%c4, %c0_18, %c0_19] : memref<9x128x128xbf16, #tpu.memory_space<vmem>>, vector<1x128x128xbf16>
    %37 = vector.shape_cast %36 : vector<1x128x128xbf16> to vector<128x128xbf16>
    %cst_20 = arith.constant dense<0.000000e+00> : vector<64x128xf32>
    %38 = tpu.matmul %35, %37, %cst_20 {dimension_numbers = #tpu.dot_dimension_numbers<[1], [0], [0], [1], [0, 0, 1, 1], [], []>} : vector<64x128xbf16>, vector<128x128xbf16>, vector<64x128xf32> -> vector<64x128xf32>
    %39 = arith.addf %33, %38 : vector<64x128xf32>
    %40 = vector.extract_strided_slice %27 {offsets = [0, 2, 0], sizes = [4, 16, 128], strides = [1, 1, 1]} : vector<4x18x128xbf16> to vector<4x16x128xbf16>
    %41 = vector.shape_cast %40 : vector<4x16x128xbf16> to vector<64x128xbf16>
    %c5 = arith.constant 5 : index
    %c0_21 = arith.constant 0 : index
    %c0_22 = arith.constant 0 : index
    %42 = vector.load %arg3[%c5, %c0_21, %c0_22] : memref<9x128x128xbf16, #tpu.memory_space<vmem>>, vector<1x128x128xbf16>
    %43 = vector.shape_cast %42 : vector<1x128x128xbf16> to vector<128x128xbf16>
    %cst_23 = arith.constant dense<0.000000e+00> : vector<64x128xf32>
    %44 = tpu.matmul %41, %43, %cst_23 {dimension_numbers = #tpu.dot_dimension_numbers<[1], [0], [0], [1], [0, 0, 1, 1], [], []>} : vector<64x128xbf16>, vector<128x128xbf16>, vector<64x128xf32> -> vector<64x128xf32>
    %45 = arith.addf %39, %44 : vector<64x128xf32>
    %c2_i32 = arith.constant 2 : i32
    %46 = arith.addi %0, %c2_i32 : i32
    %c0_24 = arith.constant 0 : index
    %47 = arith.index_cast %46 : i32 to index
    %c0_25 = arith.constant 0 : index
    %c0_26 = arith.constant 0 : index
    %48 = vector.load %arg2[%c0_24, %47, %c0_25, %c0_26] : memref<1x18x18x128xbf16, #tpu.memory_space<vmem>>, vector<1x4x18x128xbf16>
    %49 = vector.shape_cast %48 : vector<1x4x18x128xbf16> to vector<4x18x128xbf16>
    %50 = vector.extract_strided_slice %49 {offsets = [0, 0, 0], sizes = [4, 16, 128], strides = [1, 1, 1]} : vector<4x18x128xbf16> to vector<4x16x128xbf16>
    %51 = vector.shape_cast %50 : vector<4x16x128xbf16> to vector<64x128xbf16>
    %c6 = arith.constant 6 : index
    %c0_27 = arith.constant 0 : index
    %c0_28 = arith.constant 0 : index
    %52 = vector.load %arg3[%c6, %c0_27, %c0_28] : memref<9x128x128xbf16, #tpu.memory_space<vmem>>, vector<1x128x128xbf16>
    %53 = vector.shape_cast %52 : vector<1x128x128xbf16> to vector<128x128xbf16>
    %cst_29 = arith.constant dense<0.000000e+00> : vector<64x128xf32>
    %54 = tpu.matmul %51, %53, %cst_29 {dimension_numbers = #tpu.dot_dimension_numbers<[1], [0], [0], [1], [0, 0, 1, 1], [], []>} : vector<64x128xbf16>, vector<128x128xbf16>, vector<64x128xf32> -> vector<64x128xf32>
    %55 = arith.addf %45, %54 : vector<64x128xf32>
    %56 = vector.extract_strided_slice %49 {offsets = [0, 1, 0], sizes = [4, 16, 128], strides = [1, 1, 1]} : vector<4x18x128xbf16> to vector<4x16x128xbf16>
    %57 = vector.shape_cast %56 : vector<4x16x128xbf16> to vector<64x128xbf16>
    %c7 = arith.constant 7 : index
    %c0_30 = arith.constant 0 : index
    %c0_31 = arith.constant 0 : index
    %58 = vector.load %arg3[%c7, %c0_30, %c0_31] : memref<9x128x128xbf16, #tpu.memory_space<vmem>>, vector<1x128x128xbf16>
    %59 = vector.shape_cast %58 : vector<1x128x128xbf16> to vector<128x128xbf16>
    %cst_32 = arith.constant dense<0.000000e+00> : vector<64x128xf32>
    %60 = tpu.matmul %57, %59, %cst_32 {dimension_numbers = #tpu.dot_dimension_numbers<[1], [0], [0], [1], [0, 0, 1, 1], [], []>} : vector<64x128xbf16>, vector<128x128xbf16>, vector<64x128xf32> -> vector<64x128xf32>
    %61 = arith.addf %55, %60 : vector<64x128xf32>
    %62 = vector.extract_strided_slice %49 {offsets = [0, 2, 0], sizes = [4, 16, 128], strides = [1, 1, 1]} : vector<4x18x128xbf16> to vector<4x16x128xbf16>
    %63 = vector.shape_cast %62 : vector<4x16x128xbf16> to vector<64x128xbf16>
    %c8 = arith.constant 8 : index
    %c0_33 = arith.constant 0 : index
    %c0_34 = arith.constant 0 : index
    %64 = vector.load %arg3[%c8, %c0_33, %c0_34] : memref<9x128x128xbf16, #tpu.memory_space<vmem>>, vector<1x128x128xbf16>
    %65 = vector.shape_cast %64 : vector<1x128x128xbf16> to vector<128x128xbf16>
    %cst_35 = arith.constant dense<0.000000e+00> : vector<64x128xf32>
    %66 = tpu.matmul %63, %65, %cst_35 {dimension_numbers = #tpu.dot_dimension_numbers<[1], [0], [0], [1], [0, 0, 1, 1], [], []>} : vector<64x128xbf16>, vector<128x128xbf16>, vector<64x128xf32> -> vector<64x128xf32>
    %67 = arith.addf %61, %66 : vector<64x128xf32>
    %68 = vector.shape_cast %67 : vector<64x128xf32> to vector<4x16x128xf32>
    %c0_36 = arith.constant 0 : index
    %c0_37 = arith.constant 0 : index
    %c0_38 = arith.constant 0 : index
    %c0_39 = arith.constant 0 : index
    %69 = vector.load %arg4[%c0_36, %c0_37, %c0_38, %c0_39] : memref<1x4x16x128xf32, #tpu.memory_space<vmem>>, vector<1x4x16x128xf32>
    %70 = vector.shape_cast %69 : vector<1x4x16x128xf32> to vector<4x16x128xf32>
    %71 = vector.shape_cast %68 : vector<4x16x128xf32> to vector<1x4x16x128xf32>
    tpu.vector_store %arg4[%c0_36, %c0_37, %c0_38, %c0_39], %71 {strides = array<i32>} : memref<1x4x16x128xf32, #tpu.memory_space<vmem>>, vector<1x4x16x128xf32>,
    %cst_40 = arith.constant dense<0.000000e+00> : vector<128xf32>
    %72 = vector.multi_reduction <add>, %67, %cst_40 [0] : vector<64x128xf32> to vector<128xf32>
    %73 = vector.shape_cast %72 : vector<128xf32> to vector<1x128xf32>
    %74 = arith.mulf %67, %67 : vector<64x128xf32>
    %cst_41 = arith.constant dense<0.000000e+00> : vector<128xf32>
    %75 = vector.multi_reduction <add>, %74, %cst_41 [0] : vector<64x128xf32> to vector<128xf32>
    %76 = vector.shape_cast %75 : vector<128xf32> to vector<1x128xf32>
    %77 = tpu.concatenate %73, %76 in 0 : vector<1x128xf32>, vector<1x128xf32> -> vector<2x128xf32>
    %c0_i32_42 = arith.constant 0 : i32
    %78 = arith.cmpi eq, %arg1, %c0_i32_42 : i32
    %79 = arith.extui %78 : i1 to i32
    %c0_i32_43 = arith.constant 0 : i32
    %80 = arith.cmpi ne, %79, %c0_i32_43 : i32
    scf.if %80 {
      %cst_50 = arith.constant 0.000000e+00 : f32
      %87 = vector.broadcast %cst_50 : f32 to vector<2x128xf32>
      %c0_51 = arith.constant 0 : index
      %c0_52 = arith.constant 0 : index
      %c0_53 = arith.constant 0 : index
      %88 = vector.load %arg5[%c0_51, %c0_52, %c0_53] : memref<1x2x128xf32, #tpu.memory_space<vmem>>, vector<1x2x128xf32>
      %89 = vector.shape_cast %88 : vector<1x2x128xf32> to vector<2x128xf32>
      %90 = vector.shape_cast %87 : vector<2x128xf32> to vector<1x2x128xf32>
      tpu.vector_store %arg5[%c0_51, %c0_52, %c0_53], %90 {strides = array<i32>} : memref<1x2x128xf32, #tpu.memory_space<vmem>>, vector<1x2x128xf32>,
    } else {
    }
    %c0_44 = arith.constant 0 : index
    %c0_45 = arith.constant 0 : index
    %c0_46 = arith.constant 0 : index
    %81 = vector.load %arg5[%c0_44, %c0_45, %c0_46] : memref<1x2x128xf32, #tpu.memory_space<vmem>>, vector<1x2x128xf32>
    %82 = vector.shape_cast %81 : vector<1x2x128xf32> to vector<2x128xf32>
    %83 = arith.addf %82, %77 : vector<2x128xf32>
    %c0_47 = arith.constant 0 : index
    %c0_48 = arith.constant 0 : index
    %c0_49 = arith.constant 0 : index
    %84 = vector.load %arg5[%c0_47, %c0_48, %c0_49] : memref<1x2x128xf32, #tpu.memory_space<vmem>>, vector<1x2x128xf32>
    %85 = vector.shape_cast %84 : vector<1x2x128xf32> to vector<2x128xf32>
    %86 = vector.shape_cast %83 : vector<2x128xf32> to vector<1x2x128xf32>
    tpu.vector_store %arg5[%c0_47, %c0_48, %c0_49], %86 {strides = array<i32>} : memref<1x2x128xf32, #tpu.memory_space<vmem>>, vector<1x2x128xf32>,
    return
  }
  func.func @transform_0(%arg0: i32, %arg1: i32) -> (i32, i32, i32, i32) {
    %c0_i32 = arith.constant 0 : i32
    %c0_i32_0 = arith.constant 0 : i32
    %c0_i32_1 = arith.constant 0 : i32
    %c0_i32_2 = arith.constant 0 : i32
    return %arg0, %c0_i32, %c0_i32_0, %c0_i32_1 : i32, i32, i32, i32
  }
  func.func @transform_1(%arg0: i32, %arg1: i32) -> (i32, i32, i32) {
    %c0_i32 = arith.constant 0 : i32
    %c0_i32_0 = arith.constant 0 : i32
    %c0_i32_1 = arith.constant 0 : i32
    %c0_i32_2 = arith.constant 0 : i32
    return %c0_i32, %c0_i32_0, %c0_i32_1 : i32, i32, i32
  }
  func.func @transform_2(%arg0: i32, %arg1: i32) -> (i32, i32, i32, i32) {
    %c0_i32 = arith.constant 0 : i32
    %c0_i32_0 = arith.constant 0 : i32
    %c0_i32_1 = arith.constant 0 : i32
    return %arg0, %arg1, %c0_i32, %c0_i32_0 : i32, i32, i32, i32
  }
  func.func @transform_3(%arg0: i32, %arg1: i32) -> (i32, i32, i32) {
    %c0_i32 = arith.constant 0 : i32
    %c0_i32_0 = arith.constant 0 : i32
    %c0_i32_1 = arith.constant 0 : i32
    return %arg0, %c0_i32, %c0_i32_0 : i32, i32, i32
  }
}

module attributes {stable_mosaic.version = 11 : i64} {
  func.func @_bn_proj_add_relu_kernel(%arg0: i32, %arg1: i32, %arg2: memref<1x4x16x128xf32, #tpu.memory_space<vmem>>, %arg3: memref<1x4x16x4xbf16, #tpu.memory_space<vmem>>, %arg4: memref<4x128xbf16, #tpu.memory_space<vmem>>, %arg5: memref<1x1x128xf32, #tpu.memory_space<vmem>>, %arg6: memref<1x1x128xf32, #tpu.memory_space<vmem>>, %arg7: memref<1x4x16x128xf32, #tpu.memory_space<vmem>>) attributes {dimension_semantics = [#tpu.dimension_semantics<parallel>, #tpu.dimension_semantics<parallel>], iteration_bounds = array<i64: 2, 4>, scalar_prefetch = 0 : i64, scratch_operands = 0 : i64, tpu.core_type = #tpu.core_type<tc>, window_params = [{transform_indices = @transform_0, window_bounds = array<i64: 1, 4, 16, 128>}, {transform_indices = @transform_1, window_bounds = array<i64: 1, 4, 16, 4>}, {pipeline_mode = #tpu.pipeline_mode<synchronous>, transform_indices = @transform_2, window_bounds = array<i64: 4, 128>}, {pipeline_mode = #tpu.pipeline_mode<synchronous>, transform_indices = @transform_3, window_bounds = array<i64: 1, 1, 128>}, {pipeline_mode = #tpu.pipeline_mode<synchronous>, transform_indices = @transform_4, window_bounds = array<i64: 1, 1, 128>}, {transform_indices = @transform_5, window_bounds = array<i64: 1, 4, 16, 128>}]} {
    %c0 = arith.constant 0 : index
    %c0_0 = arith.constant 0 : index
    %c0_1 = arith.constant 0 : index
    %c0_2 = arith.constant 0 : index
    %0 = vector.load %arg2[%c0, %c0_0, %c0_1, %c0_2] : memref<1x4x16x128xf32, #tpu.memory_space<vmem>>, vector<1x4x16x128xf32>
    %1 = vector.shape_cast %0 : vector<1x4x16x128xf32> to vector<4x16x128xf32>
    %c0_3 = arith.constant 0 : index
    %c0_4 = arith.constant 0 : index
    %c0_5 = arith.constant 0 : index
    %c0_6 = arith.constant 0 : index
    %2 = vector.load %arg3[%c0_3, %c0_4, %c0_5, %c0_6] : memref<1x4x16x4xbf16, #tpu.memory_space<vmem>>, vector<1x4x16x4xbf16>
    %3 = vector.shape_cast %2 : vector<1x4x16x4xbf16> to vector<4x16x4xbf16>
    %4 = vector.shape_cast %3 : vector<4x16x4xbf16> to vector<64x4xbf16>
    %c0_7 = arith.constant 0 : index
    %c0_8 = arith.constant 0 : index
    %5 = vector.load %arg4[%c0_7, %c0_8] : memref<4x128xbf16, #tpu.memory_space<vmem>>, vector<4x128xbf16>
    %cst = arith.constant dense<0.000000e+00> : vector<64x128xf32>
    %6 = tpu.matmul %4, %5, %cst {dimension_numbers = #tpu.dot_dimension_numbers<[1], [0], [0], [1], [0, 0, 1, 1], [], []>} : vector<64x4xbf16>, vector<4x128xbf16>, vector<64x128xf32> -> vector<64x128xf32>
    %c0_9 = arith.constant 0 : index
    %c0_10 = arith.constant 0 : index
    %c0_11 = arith.constant 0 : index
    %7 = vector.load %arg5[%c0_9, %c0_10, %c0_11] : memref<1x1x128xf32, #tpu.memory_space<vmem>>, vector<1x1x128xf32>
    %8 = vector.broadcast %7 : vector<1x1x128xf32> to vector<4x16x128xf32>
    %9 = arith.mulf %1, %8 : vector<4x16x128xf32>
    %c0_12 = arith.constant 0 : index
    %c0_13 = arith.constant 0 : index
    %c0_14 = arith.constant 0 : index
    %10 = vector.load %arg6[%c0_12, %c0_13, %c0_14] : memref<1x1x128xf32, #tpu.memory_space<vmem>>, vector<1x1x128xf32>
    %11 = vector.broadcast %10 : vector<1x1x128xf32> to vector<4x16x128xf32>
    %12 = arith.addf %9, %11 : vector<4x16x128xf32>
    %13 = vector.shape_cast %6 : vector<64x128xf32> to vector<4x16x128xf32>
    %14 = arith.addf %12, %13 : vector<4x16x128xf32>
    %cst_15 = arith.constant 0.000000e+00 : f32
    %15 = vector.broadcast %cst_15 : f32 to vector<4x16x128xf32>
    %16 = arith.maximumf %14, %15 : vector<4x16x128xf32>
    %c0_16 = arith.constant 0 : index
    %c0_17 = arith.constant 0 : index
    %c0_18 = arith.constant 0 : index
    %c0_19 = arith.constant 0 : index
    %17 = vector.load %arg7[%c0_16, %c0_17, %c0_18, %c0_19] : memref<1x4x16x128xf32, #tpu.memory_space<vmem>>, vector<1x4x16x128xf32>
    %18 = vector.shape_cast %17 : vector<1x4x16x128xf32> to vector<4x16x128xf32>
    %19 = vector.shape_cast %16 : vector<4x16x128xf32> to vector<1x4x16x128xf32>
    tpu.vector_store %arg7[%c0_16, %c0_17, %c0_18, %c0_19], %19 {strides = array<i32>} : memref<1x4x16x128xf32, #tpu.memory_space<vmem>>, vector<1x4x16x128xf32>,
    return
  }
  func.func @transform_0(%arg0: i32, %arg1: i32) -> (i32, i32, i32, i32) {
    %c0_i32 = arith.constant 0 : i32
    %c0_i32_0 = arith.constant 0 : i32
    %c0_i32_1 = arith.constant 0 : i32
    return %arg0, %arg1, %c0_i32, %c0_i32_0 : i32, i32, i32, i32
  }
  func.func @transform_1(%arg0: i32, %arg1: i32) -> (i32, i32, i32, i32) {
    %c0_i32 = arith.constant 0 : i32
    %c0_i32_0 = arith.constant 0 : i32
    %c0_i32_1 = arith.constant 0 : i32
    return %arg0, %arg1, %c0_i32, %c0_i32_0 : i32, i32, i32, i32
  }
  func.func @transform_2(%arg0: i32, %arg1: i32) -> (i32, i32) {
    %c0_i32 = arith.constant 0 : i32
    %c0_i32_0 = arith.constant 0 : i32
    %c0_i32_1 = arith.constant 0 : i32
    return %c0_i32, %c0_i32_0 : i32, i32
  }
  func.func @transform_3(%arg0: i32, %arg1: i32) -> (i32, i32, i32) {
    %c0_i32 = arith.constant 0 : i32
    %c0_i32_0 = arith.constant 0 : i32
    %c0_i32_1 = arith.constant 0 : i32
    %c0_i32_2 = arith.constant 0 : i32
    return %c0_i32, %c0_i32_0, %c0_i32_1 : i32, i32, i32
  }
  func.func @transform_4(%arg0: i32, %arg1: i32) -> (i32, i32, i32) {
    %c0_i32 = arith.constant 0 : i32
    %c0_i32_0 = arith.constant 0 : i32
    %c0_i32_1 = arith.constant 0 : i32
    %c0_i32_2 = arith.constant 0 : i32
    return %c0_i32, %c0_i32_0, %c0_i32_1 : i32, i32, i32
  }
  func.func @transform_5(%arg0: i32, %arg1: i32) -> (i32, i32, i32, i32) {
    %c0_i32 = arith.constant 0 : i32
    %c0_i32_0 = arith.constant 0 : i32
    %c0_i32_1 = arith.constant 0 : i32
    return %arg0, %arg1, %c0_i32, %c0_i32_0 : i32, i32, i32, i32
  }
}

</mosaic_0001>

<llo_original>
// kernel: basic_block_forward.5
$region0: #{basic_block_forward.5}
  #allocation0 [shape = 'u32[]', space=smem, size = 0x4, offset = 0x4, fixed_abs, tag = 'smem constant byte address 0x4 - core index']
  #allocation1 [shape = 'u32[72,128]{1,0:T(1,128)}', space=vmem, size = 0x9000, scoped, tag = 'internal scratch']
  %s0 = inlined_call_operand.vmem [shape: f32[2,16,16,128], index: 0, kind: input, shape index: {}]
  %s1 = inlined_call_operand.vmem [shape: bf16[2,16,16,4], index: 1, kind: input, shape index: {}]
  %s2 = inlined_call_operand.vmem [shape: bf16[4,128], index: 2, kind: input, shape index: {}]
  %s3 = inlined_call_operand.vmem [shape: f32[1,1,128], index: 3, kind: input, shape index: {}]
  %s4 = inlined_call_operand.vmem [shape: f32[1,1,128], index: 4, kind: input, shape index: {}]
  %s5 = inlined_call_operand.vmem [shape: f32[2,16,16,128], index: 5, kind: output, shape index: {}]
  %s6 = sld [smem:[#allocation0]]
  $region53: #{basic_block_forward.5} parent=0
    _
  %s8 = ssub.s32 1, %s6
  %s9 = scalar_select 0, %s8, %s6
  loop: start=0, step=1, limit=10
  $region2: #{basic_block_forward.5} parent=0 // loop_pre_header
    _
  $region3: #{basic_block_forward.5} parent=0 // loop_header
    %s11 = sphi 0, %s15
    %p12 = scmp.ge.s32.totalorder %s11, 10
    %s18 = sphi 0, %s30
    %s19 = sphi 0, %s26
    %s20 = sphi 0, %s18
    %s21 = sphi 0, %s19
    %s22 = sphi 0, %s20
    %s23 = sphi 0, %s21
    %s35 = sphi 0, %s37
    %s38 = sphi 0, %s35
    %s39 = sphi 0, %s38
    %s55 = sphi 0, %s39
    %s63 = sphi 0, %s65
    %s66 = sphi 0, %s63
    %s67 = sphi 0, %s66
    %s83 = sphi 0, %s67
    %s87 = sphi 0, %s87
    %s89 = sphi 0, %s87
    %s90 = sphi 0, %s89
    %s104 = sphi 0, %s90
    %s108 = sphi 0, %s108
    %s110 = sphi 0, %s108
    %s111 = sphi 0, %s110
    %s125 = sphi 0, %s111
    %s129 = sphi 0, %s129
    %s131 = sphi 0, %s129
    %s132 = sphi 0, %s131
    %s146 = sphi 0, %s132
    %s154 = sphi 0, %s156
    %s157 = sphi 0, %s154
    %s158 = sphi 0, %s157
    %s174 = sphi 0, %s158
  $region4: #{basic_block_forward.5} parent=0 // loop_header_branch
    %14 = sbr.rel (%p12) target = $region8
  $region5: #{basic_block_forward.5} parent=0 // loop_body
    %s16 = ssub.s32 %s11, 1
    %s17 = ssub.s32 %s11, 2
    %s24 = sadd.s32 1, %s19
    %p25 = scmp.ge.s32.totalorder %s24, 4
    %s26 = scalar_select %p25, 0, %s24
    %s27 = sadd.s32 1, %s18
    %s28 = scalar_select %p25, %s27, %s18
    %p29 = scmp.ge.s32.totalorder %s28, 2
    %s30 = scalar_select %p29, 0, %s28
    %s31 = ssub.s32 %s18, %s30
    %s32 = ssub.s32 %s19, %s26
    %s33 = sor.u32 %s31, %s32
    %p34 = scmp.eq.s32.totalorder %s33, 0
    %s36 = sadd.s32 %s35, 1
    %s37 = scalar_select %p34, %s35, %s36
    %p40 = pneg %p34
    %p41 = scmp.eq.s32.totalorder %s11, 7
    %p42 = por %p40, %p41
    %p43 = scmp.ne.s32.totalorder %s35, %s38
    %p44 = scmp.eq.s32.totalorder %s11, 0
    %p45 = por %p43, %p44
    %p46 = scmp.ne.s32.totalorder %s35, %s38
    %p47 = scmp.eq.s32.totalorder %s16, 7
    %p48 = por %p46, %p47
    %p49 = scmp.ne.s32.totalorder %s38, %s39
    %p50 = scmp.eq.s32.totalorder %s16, 0
    %p51 = por %p49, %p50
    %p52 = scmp.ne.s32.totalorder %s38, %s39
    %p53 = scmp.eq.s32.totalorder %s17, 7
    %p54 = por %p52, %p53
    %p56 = scmp.ne.s32.totalorder %s39, %s55
    %p57 = scmp.eq.s32.totalorder %s17, 0
    %p58 = por %p56, %p57
    %s59 = ssub.s32 %s18, %s30
    %s60 = ssub.s32 %s19, %s26
    %s61 = sor.u32 %s59, %s60
    %p62 = scmp.eq.s32.totalorder %s61, 0
    %s64 = sadd.s32 %s63, 1
    %s65 = scalar_select %p62, %s63, %s64
    %p68 = pneg %p62
    %p69 = scmp.eq.s32.totalorder %s11, 7
    %p70 = por %p68, %p69
    %p71 = scmp.ne.s32.totalorder %s63, %s66
    %p72 = scmp.eq.s32.totalorder %s11, 0
    %p73 = por %p71, %p72
    %p74 = scmp.ne.s32.totalorder %s63, %s66
    %p75 = scmp.eq.s32.totalorder %s16, 7
    %p76 = por %p74, %p75
    %p77 = scmp.ne.s32.totalorder %s66, %s67
    %p78 = scmp.eq.s32.totalorder %s16, 0
    %p79 = por %p77, %p78
    %p80 = scmp.ne.s32.totalorder %s66, %s67
    %p81 = scmp.eq.s32.totalorder %s17, 7
    %p82 = por %p80, %p81
    %p84 = scmp.ne.s32.totalorder %s67, %s83
    %p85 = scmp.eq.s32.totalorder %s17, 0
    %p86 = por %p84, %p85
    %s88 = sadd.s32 %s87, 1
    %p91 = scmp.eq.s32.totalorder %s11, 7
    %p92 = scmp.ne.s32.totalorder %s87, %s89
    %p93 = scmp.eq.s32.totalorder %s11, 0
    %p94 = por %p92, %p93
    %p95 = scmp.ne.s32.totalorder %s87, %s89
    %p96 = scmp.eq.s32.totalorder %s16, 7
    %p97 = por %p95, %p96
    %p98 = scmp.ne.s32.totalorder %s89, %s90
    %p99 = scmp.eq.s32.totalorder %s16, 0
    %p100 = por %p98, %p99
    %p101 = scmp.ne.s32.totalorder %s89, %s90
    %p102 = scmp.eq.s32.totalorder %s17, 7
    %p103 = por %p101, %p102
    %p105 = scmp.ne.s32.totalorder %s90, %s104
    %p106 = scmp.eq.s32.totalorder %s17, 0
    %p107 = por %p105, %p106
    %s109 = sadd.s32 %s108, 1
    %p112 = scmp.eq.s32.totalorder %s11, 7
    %p113 = scmp.ne.s32.totalorder %s108, %s110
    %p114 = scmp.eq.s32.totalorder %s11, 0
    %p115 = por %p113, %p114
    %p116 = scmp.ne.s32.totalorder %s108, %s110
    %p117 = scmp.eq.s32.totalorder %s16, 7
    %p118 = por %p116, %p117
    %p119 = scmp.ne.s32.totalorder %s110, %s111
    %p120 = scmp.eq.s32.totalorder %s16, 0
    %p121 = por %p119, %p120
    %p122 = scmp.ne.s32.totalorder %s110, %s111
    %p123 = scmp.eq.s32.totalorder %s17, 7
    %p124 = por %p122, %p123
    %p126 = scmp.ne.s32.totalorder %s111, %s125
    %p127 = scmp.eq.s32.totalorder %s17, 0
    %p128 = por %p126, %p127
    %s130 = sadd.s32 %s129, 1
    %p133 = scmp.eq.s32.totalorder %s11, 7
    %p134 = scmp.ne.s32.totalorder %s129, %s131
    %p135 = scmp.eq.s32.totalorder %s11, 0
    %p136 = por %p134, %p135
    %p137 = scmp.ne.s32.totalorder %s129, %s131
    %p138 = scmp.eq.s32.totalorder %s16, 7
    %p139 = por %p137, %p138
    %p140 = scmp.ne.s32.totalorder %s131, %s132
    %p141 = scmp.eq.s32.totalorder %s16, 0
    %p142 = por %p140, %p141
    %p143 = scmp.ne.s32.totalorder %s131, %s132
    %p144 = scmp.eq.s32.totalorder %s17, 7
    %p145 = por %p143, %p144
    %p147 = scmp.ne.s32.totalorder %s132, %s146
    %p148 = scmp.eq.s32.totalorder %s17, 0
    %p149 = por %p147, %p148
    %s150 = ssub.s32 %s18, %s30
    %s151 = ssub.s32 %s19, %s26
    %s152 = sor.u32 %s150, %s151
    %p153 = scmp.eq.s32.totalorder %s152, 0
    %s155 = sadd.s32 %s154, 1
    %s156 = scalar_select %p153, %s154, %s155
    %p159 = pneg %p153
    %p160 = scmp.eq.s32.totalorder %s11, 7
    %p161 = por %p159, %p160
    %p162 = scmp.ne.s32.totalorder %s154, %s157
    %p163 = scmp.eq.s32.totalorder %s11, 0
    %p164 = por %p162, %p163
    %p165 = scmp.ne.s32.totalorder %s154, %s157
    %p166 = scmp.eq.s32.totalorder %s16, 7
    %p167 = por %p165, %p166
    %p168 = scmp.ne.s32.totalorder %s157, %s158
    %p169 = scmp.eq.s32.totalorder %s16, 0
    %p170 = por %p168, %p169
    %p171 = scmp.ne.s32.totalorder %s157, %s158
    %p172 = scmp.eq.s32.totalorder %s17, 7
    %p173 = por %p171, %p172
    %p175 = scmp.ne.s32.totalorder %s158, %s174
    %p176 = scmp.eq.s32.totalorder %s17, 0
    %p177 = por %p175, %p176
    %p178 = scmp.le.s32.totalorder 1, %s11
    %p179 = scmp.lt.s32.totalorder %s11, 9
    %p180 = pnand %p178, %p179
    %p181 = pneg %p180
    // Predicated region
    $region9: #{basic_block_forward.5} parent=5 // pred_check
      _
    $region10: #{basic_block_forward.5} parent=5 // pred_check_branch
      %183 = sbr.rel (%p180) target = $region12
    $region11: #{basic_block_forward.5} parent=5 // pred_region
      %s184 = ssub.s32 %s11, 1
      // Predicated region
      $region13: #{basic_block_forward.5} parent=11 // pred_check
        %p185 = pneg %p100
      $region14: #{basic_block_forward.5} parent=11 // pred_check_branch
        %187 = sbr.rel (%p185) target = $region16
      $region15: #{basic_block_forward.5} parent=11 // pred_region
        _
      $region16: #{basic_block_forward.5} parent=11 // pred_fallthru
        _
      // Predicated region
      $region17: #{basic_block_forward.5} parent=11 // pred_check
        %p188 = pneg %p121
      $region18: #{basic_block_forward.5} parent=11 // pred_check_branch
        %190 = sbr.rel (%p188) target = $region20
      $region19: #{basic_block_forward.5} parent=11 // pred_region
        _
      $region20: #{basic_block_forward.5} parent=11 // pred_fallthru
        _
      // Predicated region
      $region21: #{basic_block_forward.5} parent=11 // pred_check
        %p191 = pneg %p142
      $region22: #{basic_block_forward.5} parent=11 // pred_check_branch
        %193 = sbr.rel (%p191) target = $region24
      $region23: #{basic_block_forward.5} parent=11 // pred_region
        _
      $region24: #{basic_block_forward.5} parent=11 // pred_fallthru
        _
    $region12: #{basic_block_forward.5} parent=5 // pred_fallthru
      _
    %p194 = scmp.lt.s32.totalorder %s11, 8
    // Predicated region
    $region25: #{basic_block_forward.5} parent=5 // pred_check
      %p195 = pneg %p194
    $region26: #{basic_block_forward.5} parent=5 // pred_check_branch
      %197 = sbr.rel (%p195) target = $region28
    $region27: #{basic_block_forward.5} parent=5 // pred_region
      // Predicated region
      $region29: #{basic_block_forward.5} parent=27 // pred_check
        %p198 = pneg %p45
      $region30: #{basic_block_forward.5} parent=27 // pred_check_branch
        %200 = sbr.rel (%p198) target = $region32
      $region31: #{basic_block_forward.5} parent=27 // pred_region
        %s201 = smul.u32 4, %s19
        %p202 = scmp.lt.s32.totalorder %s18, 1
        %s203 = scalar_select %p202, %s18, 1
        %p204 = scmp.lt.s32.totalorder %s201, 15
        %s205 = scalar_select %p204, %s201, 15
        %s206 = smul.addr %s205, 2
        %s207 = smul.addr %s203, 32
        %s208 = sadd.s32 %s206, %s207
        %s209 = smul.addr %s208, 8
        %s210 = scalar_lea.vmem %s0, %s209
        %s211 = smul.u32 4, %s19
      $region32: #{basic_block_forward.5} parent=27 // pred_fallthru
        _
      // Predicated region
      $region33: #{basic_block_forward.5} parent=27 // pred_check
        %p212 = pneg %p73
      $region34: #{basic_block_forward.5} parent=27 // pred_check_branch
        %214 = sbr.rel (%p212) target = $region36
      $region35: #{basic_block_forward.5} parent=27 // pred_region
        %s215 = smul.u32 4, %s19
        %p216 = scmp.lt.s32.totalorder %s18, 1
        %s217 = scalar_select %p216, %s18, 1
        %p218 = scmp.lt.s32.totalorder %s215, 15
        %s219 = scalar_select %p218, %s215, 15
        %s220 = smul.addr %s219, 2
        %s221 = smul.addr %s217, 32
        %s222 = sadd.s32 %s220, %s221
        %s223 = smul.addr %s222, 4
        %s224 = scalar_lea.vmem %s1, %s223
        %s225 = smul.u32 4, %s19
      $region36: #{basic_block_forward.5} parent=27 // pred_fallthru
        _
    $region28: #{basic_block_forward.5} parent=5 // pred_fallthru
      _
    %p226 = scmp.le.s32.totalorder 1, %s11
    %p227 = scmp.lt.s32.totalorder %s11, 9
    %p228 = pnand %p226, %p227
    %p229 = pneg %p228
    // Predicated region
    $region37: #{basic_block_forward.5} parent=5 // pred_check
      _
    $region38: #{basic_block_forward.5} parent=5 // pred_check_branch
      %231 = sbr.rel (%p228) target = $region40
    $region39: #{basic_block_forward.5} parent=5 // pred_region
      %s232 = ssub.s32 %s11, 1
      %s233 = smul.u32 4, %s21
      %p234 = scmp.lt.s32.totalorder %s20, 1
      %s235 = scalar_select %p234, %s20, 1
      %p236 = scmp.lt.s32.totalorder %s233, 15
      %s237 = scalar_select %p236, %s233, 15
      %s238 = smul.addr %s237, 2
      %s239 = smul.addr %s235, 32
      %s240 = sadd.s32 %s238, %s239
      %s241 = smul.addr %s240, 8
      %s242 = scalar_lea.vmem %s0, %s241
      %p243 = pneg %p51
      %p244 = pneg %p48
      %s245 = smul.u32 4, %s21
      %p246 = scmp.lt.s32.totalorder %s20, 1
      %s247 = scalar_select %p246, %s20, 1
      %p248 = scmp.lt.s32.totalorder %s245, 15
      %s249 = scalar_select %p248, %s245, 15
      %s250 = smul.addr %s249, 2
      %s251 = smul.addr %s247, 32
      %s252 = sadd.s32 %s250, %s251
      %s253 = smul.addr %s252, 4
      %s254 = scalar_lea.vmem %s1, %s253
      %p255 = pneg %p79
      %p256 = pneg %p76
      %p257 = pneg %p100
      %p258 = pneg %p97
      %p259 = pneg %p121
      %p260 = pneg %p118
      %p261 = pneg %p142
      %p262 = pneg %p139
      %p263 = pneg %p170
      %p264 = pneg %p167
      %s265 = smul.u32 4, %s21
      %p266 = scmp.lt.s32.totalorder %s20, 1
      %s267 = scalar_select %p266, %s20, 1
      %p268 = scmp.lt.s32.totalorder %s265, 15
      %s269 = scalar_select %p268, %s265, 15
      %s270 = smul.addr %s269, 2
      %s271 = smul.addr %s267, 32
      %s272 = sadd.s32 %s270, %s271
      %s273 = smul.addr %s272, 8
      %s274 = scalar_lea.vmem %s5, %s273
      %s275 = smul.u32 4, %s21
      %p276 = scmp.lt.s32.totalorder %s20, 1
      %s277 = scalar_select %p276, %s20, 1
      %p278 = scmp.lt.s32.totalorder %s275, 15
      %s279 = scalar_select %p278, %s275, 15
      %s280 = smul.addr %s279, 2
      %s281 = smul.addr %s277, 32
      %s282 = sadd.s32 %s280, %s281
      %s283 = smul.addr %s282, 8
      %s284 = scalar_lea.vmem %s0, %s283
      %s285 = smul.u32 4, %s21
      %s286 = smul.u32 4, %s21
      %p287 = scmp.lt.s32.totalorder %s20, 1
      %s288 = scalar_select %p287, %s20, 1
      %p289 = scmp.lt.s32.totalorder %s286, 15
      %s290 = scalar_select %p289, %s286, 15
      %s291 = smul.addr %s290, 2
      %s292 = smul.addr %s288, 32
      %s293 = sadd.s32 %s291, %s292
      %s294 = smul.addr %s293, 4
      %s295 = scalar_lea.vmem %s1, %s294
      %s296 = smul.u32 4, %s21
      %s297 = smul.u32 4, %s21
      %p298 = scmp.lt.s32.totalorder %s20, 1
      %s299 = scalar_select %p298, %s20, 1
      %p300 = scmp.lt.s32.totalorder %s297, 15
      %s301 = scalar_select %p300, %s297, 15
      %s302 = smul.addr %s301, 2
      %s303 = smul.addr %s299, 32
      %s304 = sadd.s32 %s302, %s303
      %s305 = smul.addr %s304, 8
      %s306 = scalar_lea.vmem %s5, %s305
      %s307 = smul.u32 4, %s21
      %v309 = vld [vmem:[%s284] sm:$0xff]
      %v310 = vld [vmem:[%s284 + $0x8] sm:$0xff]
      %v311 = vld [vmem:[%s284 + $0x10] sm:$0xff]
      %v312 = vld [vmem:[%s284 + $0x18] sm:$0xff]
      %v313 = vld [vmem:[%s284 + $0x20] sm:$0xff]
      %v314 = vld [vmem:[%s284 + $0x28] sm:$0xff]
      %v315 = vld [vmem:[%s284 + $0x30] sm:$0xff]
      %v316 = vld [vmem:[%s284 + $0x38] sm:$0xff]
      %v317 = vld [vmem:[%s295] sm:$0xf]
      %v318 = vld [vmem:[%s295 + $0x4] sm:$0xf]
      %v319 = vld [vmem:[%s295 + $0x8] sm:$0xf]
      %v320 = vld [vmem:[%s295 + $0xc] sm:$0xf]
      %v321 = vld [vmem:[%s295 + $0x10] sm:$0xf]
      %v322 = vld [vmem:[%s295 + $0x14] sm:$0xf]
      %v323 = vld [vmem:[%s295 + $0x18] sm:$0xf]
      %v324 = vld [vmem:[%s295 + $0x1c] sm:$0xf]
      %v325 = vld [vmem:[%s2] sm:$0x3]
      %v334 = vunpack.c.l.b16 %v317
      %v335 = vunpack.c.l.b16 %v318
      %v336 = vunpack.c.l.b16 %v319
      %v337 = vunpack.c.l.b16 %v320
      %v338 = vunpack.c.l.b16 %v321
      %v339 = vunpack.c.l.b16 %v322
      %v340 = vunpack.c.l.b16 %v323
      %v341 = vunpack.c.l.b16 %v324
      %v342 = vpack.c.b16 %v335, %v334
      %v343 = vpack.c.b16 %v337, %v336
      %v344 = vpack.c.b16 %v339, %v338
      %v345 = vpack.c.b16 %v341, %v340
      %vm346 = vcmask 31744
      %v348 = vsel %vm346, %v342, 0
      %v351 = vsel %vm346, %v343, 0
      %v354 = vsel %vm346, %v344, 0
      %v357 = vsel %vm346, %v345, 0
      %vm359 = vcmask 1041408
      %v361 = vsel %vm359, %v325, 0
      %363 = vmatpush.bf16.msra.mxu0 0
      %364 = vmatpush.bf16.msra.mxu0 0
      %365 = vmatpush.bf16.msra.mxu0 0
      %366 = vmatpush.bf16.msra.mxu0 0
      %367 = vmatpush.bf16.msra.mxu0 0
      %368 = vmatpush.bf16.msra.mxu0 0
      %369 = vmatpush.bf16.msra.mxu0 0
      %370 = vmatpush.bf16.msra.mxu0 %v361
      %371 = vmatmul.bf16.gmra.mxu0 %v348
      %v372 = vpop.f32.mrf.mxu0
      %v373 = vadd.f32 0.0, %v372
      %v374 = vpop.f32.mrf.mxu0
      %v375 = vadd.f32 0.0, %v374
      %376 = vmatmul.bf16.gmra.mxu0 %v351
      %v377 = vpop.f32.mrf.mxu0
      %v378 = vadd.f32 0.0, %v377
      %v379 = vpop.f32.mrf.mxu0
      %v380 = vadd.f32 0.0, %v379
      %381 = vmatmul.bf16.gmra.mxu0 %v354
      %v382 = vpop.f32.mrf.mxu0
      %v383 = vadd.f32 0.0, %v382
      %v384 = vpop.f32.mrf.mxu0
      %v385 = vadd.f32 0.0, %v384
      %386 = vmatmul.bf16.gmra.mxu0 %v357
      %v387 = vpop.f32.mrf.mxu0
      %v388 = vadd.f32 0.0, %v387
      %v389 = vpop.f32.mrf.mxu0
      %v390 = vadd.f32 0.0, %v389
      %391 = vdwg.mxu0
      %v392 = vld [vmem:[%s3] sm:$0x1]
      %v394 = vperm.slane %v392, 0
      %v396 = vmul.f32 %v309, %v394
      %v397 = vmul.f32 %v310, %v394
      %v398 = vmul.f32 %v311, %v394
      %v399 = vmul.f32 %v312, %v394
      %v400 = vmul.f32 %v313, %v394
      %v401 = vmul.f32 %v314, %v394
      %v402 = vmul.f32 %v315, %v394
      %v403 = vmul.f32 %v316, %v394
      %v404 = vld [vmem:[%s4] sm:$0x1]
      %v406 = vperm.slane %v404, 0
      %v408 = vadd.f32 %v396, %v406
      %v409 = vadd.f32 %v397, %v406
      %v410 = vadd.f32 %v398, %v406
      %v411 = vadd.f32 %v399, %v406
      %v412 = vadd.f32 %v400, %v406
      %v413 = vadd.f32 %v401, %v406
      %v414 = vadd.f32 %v402, %v406
      %v415 = vadd.f32 %v403, %v406
      %v416 = vadd.f32 %v408, %v373
      %v417 = vadd.f32 %v409, %v375
      %v418 = vadd.f32 %v410, %v378
      %v419 = vadd.f32 %v411, %v380
      %v420 = vadd.f32 %v412, %v383
      %v421 = vadd.f32 %v413, %v385
      %v422 = vadd.f32 %v414, %v388
      %v423 = vadd.f32 %v415, %v390
      %v424 = vmax.f32 %v416, 0.0
      %v425 = vmax.f32 %v417, 0.0
      %v426 = vmax.f32 %v418, 0.0
      %v427 = vmax.f32 %v419, 0.0
      %v428 = vmax.f32 %v420, 0.0
      %v429 = vmax.f32 %v421, 0.0
      %v430 = vmax.f32 %v422, 0.0
      %v431 = vmax.f32 %v423, 0.0
      %432 = vst [vmem:[%s306] sm:$0xff] %v424
      %433 = vst [vmem:[%s306 + $0x8] sm:$0xff] %v425
      %434 = vst [vmem:[%s306 + $0x10] sm:$0xff] %v426
      %435 = vst [vmem:[%s306 + $0x18] sm:$0xff] %v427
      %436 = vst [vmem:[%s306 + $0x20] sm:$0xff] %v428
      %437 = vst [vmem:[%s306 + $0x28] sm:$0xff] %v429
      %438 = vst [vmem:[%s306 + $0x30] sm:$0xff] %v430
      %439 = vst [vmem:[%s306 + $0x38] sm:$0xff] %v431
      %s440 = smul.u32 4, %s21
      %p441 = scmp.lt.s32.totalorder %s20, 1
      %s442 = scalar_select %p441, %s20, 1
      %p443 = scmp.lt.s32.totalorder %s440, 15
      %s444 = scalar_select %p443, %s440, 15
      %s445 = smul.addr %s444, 2
      %s446 = smul.addr %s442, 32
      %s447 = sadd.s32 %s445, %s446
      %s448 = smul.addr %s447, 8
      %s449 = scalar_lea.vmem %s5, %s448
      // Predicated region
      $region41: #{basic_block_forward.5} parent=39 // pred_check
        %p450 = pneg %p167
      $region42: #{basic_block_forward.5} parent=39 // pred_check_branch
        %452 = sbr.rel (%p450) target = $region44
      $region43: #{basic_block_forward.5} parent=39 // pred_region
        %s453 = smul.u32 4, %s21
      $region44: #{basic_block_forward.5} parent=39 // pred_fallthru
        _
    $region40: #{basic_block_forward.5} parent=5 // pred_fallthru
      _
    %p454 = scmp.le.s32.totalorder 2, %s11
    // Predicated region
    $region45: #{basic_block_forward.5} parent=5 // pred_check
      %p455 = pneg %p454
    $region46: #{basic_block_forward.5} parent=5 // pred_check_branch
      %457 = sbr.rel (%p455) target = $region48
    $region47: #{basic_block_forward.5} parent=5 // pred_region
      %s458 = ssub.s32 %s11, 2
      // Predicated region
      $region49: #{basic_block_forward.5} parent=47 // pred_check
        %p459 = pneg %p173
      $region50: #{basic_block_forward.5} parent=47 // pred_check_branch
        %461 = sbr.rel (%p459) target = $region52
      $region51: #{basic_block_forward.5} parent=47 // pred_region
        %s462 = smul.u32 4, %s23
        %p463 = scmp.lt.s32.totalorder %s22, 1
        %s464 = scalar_select %p463, %s22, 1
        %p465 = scmp.lt.s32.totalorder %s462, 15
        %s466 = scalar_select %p465, %s462, 15
        %s467 = smul.addr %s466, 2
        %s468 = smul.addr %s464, 32
        %s469 = sadd.s32 %s467, %s468
        %s470 = smul.addr %s469, 8
        %s471 = scalar_lea.vmem %s5, %s470
      $region52: #{basic_block_forward.5} parent=47 // pred_fallthru
        _
    $region48: #{basic_block_forward.5} parent=5 // pred_fallthru
      _
  $region6: #{basic_block_forward.5} parent=0 // loop_footer
    %s15 = sadd.s32 1, %s11
  $region7: #{basic_block_forward.5} parent=0 // loop_footer_branch
    %10 = sbr.rel target = $region3
  $region8: #{basic_block_forward.5} parent=0 // loop_exit
    _

// kernel: basic_block_forward.3
$region0: #{basic_block_forward.3}
  #allocation0 [shape = 'u32[]', space=smem, size = 0x4, offset = 0x4, fixed_abs, tag = 'smem constant byte address 0x4 - core index']
  #allocation1 [shape = 'u32[72,128]{1,0:T(1,128)}', space=vmem, size = 0x9000, scoped, tag = 'internal scratch']
  %s0 = inlined_call_operand.vmem [shape: bf16[2,18,18,4], index: 0, kind: input, shape index: {}]
  %s1 = inlined_call_operand.vmem [shape: bf16[9,4,128], index: 1, kind: input, shape index: {}]
  %s2 = inlined_call_operand.vmem [shape: f32[2,16,16,128], index: 2, kind: output, shape index: {0}]
  %s3 = inlined_call_operand.vmem [shape: f32[2,2,128], index: 3, kind: output, shape index: {1}]
  %4 = xla_tuple %s2, %s3
  %s5 = sld [smem:[#allocation0]]
  $region53: #{basic_block_forward.3} parent=0
    _
  %s7 = ssub.s32 1, %s5
  %s8 = scalar_select 0, %s7, %s5
  loop: start=0, step=1, limit=10
  $region2: #{basic_block_forward.3} parent=0 // loop_pre_header
    _
  $region3: #{basic_block_forward.3} parent=0 // loop_header
    %s10 = sphi 0, %s14
    %p11 = scmp.ge.s32.totalorder %s10, 10
    %s17 = sphi 0, %s29
    %s18 = sphi 0, %s25
    %s19 = sphi 0, %s17
    %s20 = sphi 0, %s18
    %s21 = sphi 0, %s19
    %s22 = sphi 0, %s20
    %s32 = sphi 0, %s34
    %s35 = sphi 0, %s32
    %s36 = sphi 0, %s35
    %s52 = sphi 0, %s36
    %s56 = sphi 0, %s56
    %s58 = sphi 0, %s56
    %s59 = sphi 0, %s58
    %s73 = sphi 0, %s59
    %s81 = sphi 0, %s83
    %s84 = sphi 0, %s81
    %s85 = sphi 0, %s84
    %s101 = sphi 0, %s85
    %s107 = sphi 0, %s109
    %s110 = sphi 0, %s107
    %s111 = sphi 0, %s110
    %s127 = sphi 0, %s111
  $region4: #{basic_block_forward.3} parent=0 // loop_header_branch
    %13 = sbr.rel (%p11) target = $region8
  $region5: #{basic_block_forward.3} parent=0 // loop_body
    %s15 = ssub.s32 %s10, 1
    %s16 = ssub.s32 %s10, 2
    %s23 = sadd.s32 1, %s18
    %p24 = scmp.ge.s32.totalorder %s23, 4
    %s25 = scalar_select %p24, 0, %s23
    %s26 = sadd.s32 1, %s17
    %s27 = scalar_select %p24, %s26, %s17
    %p28 = scmp.ge.s32.totalorder %s27, 2
    %s29 = scalar_select %p28, 0, %s27
    %s30 = ssub.s32 %s17, %s29
    %p31 = scmp.eq.s32.totalorder %s30, 0
    %s33 = sadd.s32 %s32, 1
    %s34 = scalar_select %p31, %s32, %s33
    %p37 = pneg %p31
    %p38 = scmp.eq.s32.totalorder %s10, 7
    %p39 = por %p37, %p38
    %p40 = scmp.ne.s32.totalorder %s32, %s35
    %p41 = scmp.eq.s32.totalorder %s10, 0
    %p42 = por %p40, %p41
    %p43 = scmp.ne.s32.totalorder %s32, %s35
    %p44 = scmp.eq.s32.totalorder %s15, 7
    %p45 = por %p43, %p44
    %p46 = scmp.ne.s32.totalorder %s35, %s36
    %p47 = scmp.eq.s32.totalorder %s15, 0
    %p48 = por %p46, %p47
    %p49 = scmp.ne.s32.totalorder %s35, %s36
    %p50 = scmp.eq.s32.totalorder %s16, 7
    %p51 = por %p49, %p50
    %p53 = scmp.ne.s32.totalorder %s36, %s52
    %p54 = scmp.eq.s32.totalorder %s16, 0
    %p55 = por %p53, %p54
    %s57 = sadd.s32 %s56, 1
    %p60 = scmp.eq.s32.totalorder %s10, 7
    %p61 = scmp.ne.s32.totalorder %s56, %s58
    %p62 = scmp.eq.s32.totalorder %s10, 0
    %p63 = por %p61, %p62
    %p64 = scmp.ne.s32.totalorder %s56, %s58
    %p65 = scmp.eq.s32.totalorder %s15, 7
    %p66 = por %p64, %p65
    %p67 = scmp.ne.s32.totalorder %s58, %s59
    %p68 = scmp.eq.s32.totalorder %s15, 0
    %p69 = por %p67, %p68
    %p70 = scmp.ne.s32.totalorder %s58, %s59
    %p71 = scmp.eq.s32.totalorder %s16, 7
    %p72 = por %p70, %p71
    %p74 = scmp.ne.s32.totalorder %s59, %s73
    %p75 = scmp.eq.s32.totalorder %s16, 0
    %p76 = por %p74, %p75
    %s77 = ssub.s32 %s17, %s29
    %s78 = ssub.s32 %s18, %s25
    %s79 = sor.u32 %s77, %s78
    %p80 = scmp.eq.s32.totalorder %s79, 0
    %s82 = sadd.s32 %s81, 1
    %s83 = scalar_select %p80, %s81, %s82
    %p86 = pneg %p80
    %p87 = scmp.eq.s32.totalorder %s10, 7
    %p88 = por %p86, %p87
    %p89 = scmp.ne.s32.totalorder %s81, %s84
    %p90 = scmp.eq.s32.totalorder %s10, 0
    %p91 = por %p89, %p90
    %p92 = scmp.ne.s32.totalorder %s81, %s84
    %p93 = scmp.eq.s32.totalorder %s15, 7
    %p94 = por %p92, %p93
    %p95 = scmp.ne.s32.totalorder %s84, %s85
    %p96 = scmp.eq.s32.totalorder %s15, 0
    %p97 = por %p95, %p96
    %p98 = scmp.ne.s32.totalorder %s84, %s85
    %p99 = scmp.eq.s32.totalorder %s16, 7
    %p100 = por %p98, %p99
    %p102 = scmp.ne.s32.totalorder %s85, %s101
    %p103 = scmp.eq.s32.totalorder %s16, 0
    %p104 = por %p102, %p103
    %s105 = ssub.s32 %s17, %s29
    %p106 = scmp.eq.s32.totalorder %s105, 0
    %s108 = sadd.s32 %s107, 1
    %s109 = scalar_select %p106, %s107, %s108
    %p112 = pneg %p106
    %p113 = scmp.eq.s32.totalorder %s10, 7
    %p114 = por %p112, %p113
    %p115 = scmp.ne.s32.totalorder %s107, %s110
    %p116 = scmp.eq.s32.totalorder %s10, 0
    %p117 = por %p115, %p116
    %p118 = scmp.ne.s32.totalorder %s107, %s110
    %p119 = scmp.eq.s32.totalorder %s15, 7
    %p120 = por %p118, %p119
    %p121 = scmp.ne.s32.totalorder %s110, %s111
    %p122 = scmp.eq.s32.totalorder %s15, 0
    %p123 = por %p121, %p122
    %p124 = scmp.ne.s32.totalorder %s110, %s111
    %p125 = scmp.eq.s32.totalorder %s16, 7
    %p126 = por %p124, %p125
    %p128 = scmp.ne.s32.totalorder %s111, %s127
    %p129 = scmp.eq.s32.totalorder %s16, 0
    %p130 = por %p128, %p129
    %p131 = scmp.le.s32.totalorder 1, %s10
    %p132 = scmp.lt.s32.totalorder %s10, 9
    %p133 = pnand %p131, %p132
    %p134 = pneg %p133
    // Predicated region
    $region9: #{basic_block_forward.3} parent=5 // pred_check
      _
    $region10: #{basic_block_forward.3} parent=5 // pred_check_branch
      %136 = sbr.rel (%p133) target = $region12
    $region11: #{basic_block_forward.3} parent=5 // pred_region
      %s137 = ssub.s32 %s10, 1
      // Predicated region
      $region13: #{basic_block_forward.3} parent=11 // pred_check
        %p138 = pneg %p69
      $region14: #{basic_block_forward.3} parent=11 // pred_check_branch
        %140 = sbr.rel (%p138) target = $region16
      $region15: #{basic_block_forward.3} parent=11 // pred_region
        _
      $region16: #{basic_block_forward.3} parent=11 // pred_fallthru
        _
    $region12: #{basic_block_forward.3} parent=5 // pred_fallthru
      _
    %p141 = scmp.lt.s32.totalorder %s10, 8
    // Predicated region
    $region17: #{basic_block_forward.3} parent=5 // pred_check
      %p142 = pneg %p141
    $region18: #{basic_block_forward.3} parent=5 // pred_check_branch
      %144 = sbr.rel (%p142) target = $region20
    $region19: #{basic_block_forward.3} parent=5 // pred_region
      // Predicated region
      $region21: #{basic_block_forward.3} parent=19 // pred_check
        %p145 = pneg %p42
      $region22: #{basic_block_forward.3} parent=19 // pred_check_branch
        %147 = sbr.rel (%p145) target = $region24
      $region23: #{basic_block_forward.3} parent=19 // pred_region
        %p148 = scmp.lt.s32.totalorder %s17, 1
        %s149 = scalar_select %p148, %s17, 1
        %s150 = smul.addr %s149, 54
        %s151 = smul.addr %s150, 4
        %s152 = scalar_lea.vmem %s0, %s151
      $region24: #{basic_block_forward.3} parent=19 // pred_fallthru
        _
    $region20: #{basic_block_forward.3} parent=5 // pred_fallthru
      _
    %p153 = scmp.le.s32.totalorder 1, %s10
    %p154 = scmp.lt.s32.totalorder %s10, 9
    %p155 = pnand %p153, %p154
    %p156 = pneg %p155
    // Predicated region
    $region25: #{basic_block_forward.3} parent=5 // pred_check
      _
    $region26: #{basic_block_forward.3} parent=5 // pred_check_branch
      %158 = sbr.rel (%p155) target = $region28
    $region27: #{basic_block_forward.3} parent=5 // pred_region
      %s159 = ssub.s32 %s10, 1
      %p160 = scmp.lt.s32.totalorder %s19, 1
      %s161 = scalar_select %p160, %s19, 1
      %s162 = smul.addr %s161, 54
      %s163 = smul.addr %s162, 4
      %s164 = scalar_lea.vmem %s0, %s163
      %p165 = pneg %p48
      %p166 = pneg %p45
      %p167 = pneg %p69
      %p168 = pneg %p66
      %p169 = pneg %p97
      %p170 = pneg %p94
      %s171 = smul.u32 4, %s20
      %p172 = scmp.lt.s32.totalorder %s19, 1
      %s173 = scalar_select %p172, %s19, 1
      %p174 = scmp.lt.s32.totalorder %s171, 15
      %s175 = scalar_select %p174, %s171, 15
      %s176 = smul.addr %s175, 2
      %s177 = smul.addr %s173, 32
      %s178 = sadd.s32 %s176, %s177
      %s179 = smul.addr %s178, 8
      %s180 = scalar_lea.vmem %s2, %s179
      %p181 = pneg %p123
      %p182 = pneg %p120
      %p183 = scmp.lt.s32.totalorder %s19, 1
      %s184 = scalar_select %p183, %s19, 1
      %s185 = smul.addr %s184, 2
      %s186 = scalar_lea.vmem %s3, %s185
      %p187 = scmp.lt.s32.totalorder %s19, 1
      %s188 = scalar_select %p187, %s19, 1
      %s189 = smul.addr %s188, 54
      %s190 = smul.addr %s189, 4
      %s191 = scalar_lea.vmem %s0, %s190
      %s192 = smul.u32 4, %s20
      %p193 = scmp.lt.s32.totalorder %s19, 1
      %s194 = scalar_select %p193, %s19, 1
      %p195 = scmp.lt.s32.totalorder %s192, 15
      %s196 = scalar_select %p195, %s192, 15
      %s197 = smul.addr %s196, 2
      %s198 = smul.addr %s194, 32
      %s199 = sadd.s32 %s197, %s198
      %s200 = smul.addr %s199, 8
      %s201 = scalar_lea.vmem %s2, %s200
      %s202 = smul.u32 4, %s20
      %p203 = scmp.lt.s32.totalorder %s19, 1
      %s204 = scalar_select %p203, %s19, 1
      %s205 = smul.addr %s204, 2
      %s206 = scalar_lea.vmem %s3, %s205
      %s208 = smul.u32 %s20, 4
      %s209 = smul.u32 %s208, 3
      %s210 = smul.addr %s209, 4
      %s211 = scalar_lea.vmem %s191, %s210
      %v212 = vld [vmem:[%s211] sm:$0xf]
      %v213 = vld [vmem:[%s211 + $0x4] sm:$0xf]
      %v214 = vld [vmem:[%s211 + $0x8] sm:$0x1]
      %v215 = vld [vmem:[%s211 + $0xc] sm:$0xf]
      %v216 = vld [vmem:[%s211 + $0x10] sm:$0xf]
      %v217 = vld [vmem:[%s211 + $0x14] sm:$0x1]
      %v218 = vld [vmem:[%s211 + $0x18] sm:$0xf]
      %v219 = vld [vmem:[%s211 + $0x1c] sm:$0xf]
      %v220 = vld [vmem:[%s211 + $0x20] sm:$0x1]
      %v221 = vld [vmem:[%s211 + $0x24] sm:$0xf]
      %v222 = vld [vmem:[%s211 + $0x28] sm:$0xf]
      %v223 = vld [vmem:[%s211 + $0x2c] sm:$0x1]
      %v224 = vld [vmem:[%s1] sm:$0x3]
      %vm225 = vsmask.f32 3328
      %vm226 = vsmask.f32 7440
      %vm227 = vmor %vm225, %vm226
      %v229 = vshrl.u32 %v212, 16
      %v231 = vrot.slane %v229, 4
      %v232 = vshll.u32 %v212, 16
      %v234 = vrot.slane %v232, 5
      %v235 = vor.u32 %v231, %v234
      %v236 = vrot.slane %v235, 4
      %v238 = vshll.u32 %v213, 16
      %v240 = vrot.slane %v238, 5
      %v241 = vsel %vm227, %v236, %v240
      %v242 = vshrl.u32 %v213, 16
      %v244 = vrot.slane %v242, 4
      %v245 = vor.u32 %v244, %v240
      %v246 = vrot.slane %v245, 4
      %v248 = vshll.u32 %v214, 16
      %v250 = vrot.slane %v248, 5
      %v251 = vsel %vm227, %v246, %v250
      %v253 = vshrl.u32 %v215, 16
      %v255 = vrot.slane %v253, 4
      %v256 = vshll.u32 %v215, 16
      %v258 = vrot.slane %v256, 5
      %v259 = vor.u32 %v255, %v258
      %v260 = vrot.slane %v259, 4
      %v262 = vshll.u32 %v216, 16
      %v264 = vrot.slane %v262, 5
      %v265 = vsel %vm227, %v260, %v264
      %v266 = vshrl.u32 %v216, 16
      %v268 = vrot.slane %v266, 4
      %v269 = vor.u32 %v268, %v264
      %v270 = vrot.slane %v269, 4
      %v272 = vshll.u32 %v217, 16
      %v274 = vrot.slane %v272, 5
      %v275 = vsel %vm227, %v270, %v274
      %v277 = vshrl.u32 %v218, 16
      %v279 = vrot.slane %v277, 4
      %v280 = vshll.u32 %v218, 16
      %v282 = vrot.slane %v280, 5
      %v283 = vor.u32 %v279, %v282
      %v284 = vrot.slane %v283, 4
      %v286 = vshll.u32 %v219, 16
      %v288 = vrot.slane %v286, 5
      %v289 = vsel %vm227, %v284, %v288
      %v290 = vshrl.u32 %v219, 16
      %v292 = vrot.slane %v290, 4
      %v293 = vor.u32 %v292, %v288
      %v294 = vrot.slane %v293, 4
      %v296 = vshll.u32 %v220, 16
      %v298 = vrot.slane %v296, 5
      %v299 = vsel %vm227, %v294, %v298
      %v301 = vshrl.u32 %v221, 16
      %v303 = vrot.slane %v301, 4
      %v304 = vshll.u32 %v221, 16
      %v306 = vrot.slane %v304, 5
      %v307 = vor.u32 %v303, %v306
      %v308 = vrot.slane %v307, 4
      %v310 = vshll.u32 %v222, 16
      %v312 = vrot.slane %v310, 5
      %v313 = vsel %vm227, %v308, %v312
      %v314 = vshrl.u32 %v222, 16
      %v316 = vrot.slane %v314, 4
      %v317 = vor.u32 %v316, %v312
      %v318 = vrot.slane %v317, 4
      %v320 = vshll.u32 %v223, 16
      %v322 = vrot.slane %v320, 5
      %v323 = vsel %vm227, %v318, %v322
      %s324 = scalar_lea.vmem %s1, 2
      %v325 = vld [vmem:[%s324] sm:$0x3]
      %v326 = vunpack.c.l.b16 %v241
      %v327 = vunpack.c.l.b16 %v251
      %v328 = vunpack.c.l.b16 %v265
      %v329 = vunpack.c.l.b16 %v275
      %v330 = vunpack.c.l.b16 %v289
      %v331 = vunpack.c.l.b16 %v299
      %v332 = vunpack.c.l.b16 %v313
      %v333 = vunpack.c.l.b16 %v323
      %v334 = vpack.c.b16 %v327, %v326
      %v335 = vpack.c.b16 %v329, %v328
      %v336 = vpack.c.b16 %v331, %v330
      %v337 = vpack.c.b16 %v333, %v332
      %vm338 = vcmask 31744
      %v340 = vsel %vm338, %v334, 0
      %v343 = vsel %vm338, %v335, 0
      %v346 = vsel %vm338, %v336, 0
      %v349 = vsel %vm338, %v337, 0
      %vm351 = vcmask 1041408
      %v353 = vsel %vm351, %v325, 0
      %355 = vmatpush.bf16.msra.mxu0 0
      %356 = vmatpush.bf16.msra.mxu0 0
      %357 = vmatpush.bf16.msra.mxu0 0
      %358 = vmatpush.bf16.msra.mxu0 0
      %359 = vmatpush.bf16.msra.mxu0 0
      %360 = vmatpush.bf16.msra.mxu0 0
      %361 = vmatpush.bf16.msra.mxu0 0
      %362 = vmatpush.bf16.msra.mxu0 %v353
      %363 = vmatmul.bf16.gmra.mxu0 %v340
      %v364 = vpop.f32.mrf.mxu0
      %v365 = vadd.f32 0.0, %v364
      %v366 = vpop.f32.mrf.mxu0
      %v367 = vadd.f32 0.0, %v366
      %368 = vmatmul.bf16.gmra.mxu0 %v343
      %v369 = vpop.f32.mrf.mxu0
      %v370 = vadd.f32 0.0, %v369
      %v371 = vpop.f32.mrf.mxu0
      %v372 = vadd.f32 0.0, %v371
      %373 = vmatmul.bf16.gmra.mxu0 %v346
      %v374 = vpop.f32.mrf.mxu0
      %v375 = vadd.f32 0.0, %v374
      %v376 = vpop.f32.mrf.mxu0
      %v377 = vadd.f32 0.0, %v376
      %378 = vmatmul.bf16.gmra.mxu0 %v349
      %v379 = vpop.f32.mrf.mxu0
      %v380 = vadd.f32 0.0, %v379
      %v381 = vpop.f32.mrf.mxu0
      %v382 = vadd.f32 0.0, %v381
      %383 = vdwg.mxu0
      %v392 = vunpack.c.l.b16 %v212
      %v393 = vunpack.c.l.b16 %v213
      %v394 = vunpack.c.l.b16 %v215
      %v395 = vunpack.c.l.b16 %v216
      %v396 = vunpack.c.l.b16 %v218
      %v397 = vunpack.c.l.b16 %v219
      %v398 = vunpack.c.l.b16 %v221
      %v399 = vunpack.c.l.b16 %v222
      %v400 = vpack.c.b16 %v393, %v392
      %v401 = vpack.c.b16 %v395, %v394
      %v402 = vpack.c.b16 %v397, %v396
      %v403 = vpack.c.b16 %v399, %v398
      %v405 = vsel %vm338, %v400, 0
      %v408 = vsel %vm338, %v401, 0
      %v411 = vsel %vm338, %v402, 0
      %v414 = vsel %vm338, %v403, 0
      %v417 = vsel %vm351, %v224, 0
      %419 = vmatpush.bf16.msra.mxu0 0
      %420 = vmatpush.bf16.msra.mxu0 0
      %421 = vmatpush.bf16.msra.mxu0 0
      %422 = vmatpush.bf16.msra.mxu0 0
      %423 = vmatpush.bf16.msra.mxu0 0
      %424 = vmatpush.bf16.msra.mxu0 0
      %425 = vmatpush.bf16.msra.mxu0 0
      %426 = vmatpush.bf16.msra.mxu0 %v417
      %427 = vmatmul.bf16.gmra.mxu0 %v405
      %v428 = vpop.f32.mrf.mxu0
      %v429 = vadd.f32 %v365, %v428
      %v430 = vpop.f32.mrf.mxu0
      %v431 = vadd.f32 %v367, %v430
      %432 = vmatmul.bf16.gmra.mxu0 %v408
      %v433 = vpop.f32.mrf.mxu0
      %v434 = vadd.f32 %v370, %v433
      %v435 = vpop.f32.mrf.mxu0
      %v436 = vadd.f32 %v372, %v435
      %437 = vmatmul.bf16.gmra.mxu0 %v411
      %v438 = vpop.f32.mrf.mxu0
      %v439 = vadd.f32 %v375, %v438
      %v440 = vpop.f32.mrf.mxu0
      %v441 = vadd.f32 %v377, %v440
      %442 = vmatmul.bf16.gmra.mxu0 %v414
      %v443 = vpop.f32.mrf.mxu0
      %v444 = vadd.f32 %v380, %v443
      %v445 = vpop.f32.mrf.mxu0
      %v446 = vadd.f32 %v382, %v445
      %447 = vdwg.mxu0
      %vm452 = vcmask 1042432
      %vm453 = vcmask 1046532
      %vm454 = vmor %vm452, %vm453
      %v455 = vrot.slane %v212, 5
      %v456 = vrot.slane %v455, 4
      %v457 = vrot.slane %v213, 5
      %v458 = vsel %vm454, %v456, %v457
      %v459 = vrot.slane %v457, 4
      %v460 = vrot.slane %v214, 5
      %v461 = vsel %vm454, %v459, %v460
      %v462 = vrot.slane %v215, 5
      %v463 = vrot.slane %v462, 4
      %v464 = vrot.slane %v216, 5
      %v465 = vsel %vm454, %v463, %v464
      %v466 = vrot.slane %v464, 4
      %v467 = vrot.slane %v217, 5
      %v468 = vsel %vm454, %v466, %v467
      %v469 = vrot.slane %v218, 5
      %v470 = vrot.slane %v469, 4
      %v471 = vrot.slane %v219, 5
      %v472 = vsel %vm454, %v470, %v471
      %v473 = vrot.slane %v471, 4
      %v474 = vrot.slane %v220, 5
      %v475 = vsel %vm454, %v473, %v474
      %v476 = vrot.slane %v221, 5
      %v477 = vrot.slane %v476, 4
      %v478 = vrot.slane %v222, 5
      %v479 = vsel %vm454, %v477, %v478
      %v480 = vrot.slane %v478, 4
      %v481 = vrot.slane %v223, 5
      %v482 = vsel %vm454, %v480, %v481
      %s483 = scalar_lea.vmem %s1, 4
      %v484 = vld [vmem:[%s483] sm:$0x3]
      %v485 = vunpack.c.l.b16 %v458
      %v486 = vunpack.c.l.b16 %v461
      %v487 = vunpack.c.l.b16 %v465
      %v488 = vunpack.c.l.b16 %v468
      %v489 = vunpack.c.l.b16 %v472
      %v490 = vunpack.c.l.b16 %v475
      %v491 = vunpack.c.l.b16 %v479
      %v492 = vunpack.c.l.b16 %v482
      %v493 = vpack.c.b16 %v486, %v485
      %v494 = vpack.c.b16 %v488, %v487
      %v495 = vpack.c.b16 %v490, %v489
      %v496 = vpack.c.b16 %v492, %v491
      %v498 = vsel %vm338, %v493, 0
      %v501 = vsel %vm338, %v494, 0
      %v504 = vsel %vm338, %v495, 0
      %v507 = vsel %vm338, %v496, 0
      %v510 = vsel %vm351, %v484, 0
      %512 = vmatpush.bf16.msra.mxu0 0
      %513 = vmatpush.bf16.msra.mxu0 0
      %514 = vmatpush.bf16.msra.mxu0 0
      %515 = vmatpush.bf16.msra.mxu0 0
      %516 = vmatpush.bf16.msra.mxu0 0
      %517 = vmatpush.bf16.msra.mxu0 0
      %518 = vmatpush.bf16.msra.mxu0 0
      %519 = vmatpush.bf16.msra.mxu0 %v510
      %520 = vmatmul.bf16.gmra.mxu0 %v498
      %v521 = vpop.f32.mrf.mxu0
      %v522 = vadd.f32 0.0, %v521
      %v523 = vpop.f32.mrf.mxu0
      %v524 = vadd.f32 0.0, %v523
      %525 = vmatmul.bf16.gmra.mxu0 %v501
      %v526 = vpop.f32.mrf.mxu0
      %v527 = vadd.f32 0.0, %v526
      %v528 = vpop.f32.mrf.mxu0
      %v529 = vadd.f32 0.0, %v528
      %530 = vmatmul.bf16.gmra.mxu0 %v504
      %v531 = vpop.f32.mrf.mxu0
      %v532 = vadd.f32 0.0, %v531
      %v533 = vpop.f32.mrf.mxu0
      %v534 = vadd.f32 0.0, %v533
      %535 = vmatmul.bf16.gmra.mxu0 %v507
      %v536 = vpop.f32.mrf.mxu0
      %v537 = vadd.f32 0.0, %v536
      %v538 = vpop.f32.mrf.mxu0
      %v539 = vadd.f32 0.0, %v538
      %540 = vdwg.mxu0
      %v541 = vadd.f32 %v429, %v522
      %v542 = vadd.f32 %v431, %v524
      %v543 = vadd.f32 %v434, %v527
      %v544 = vadd.f32 %v436, %v529
      %v545 = vadd.f32 %v439, %v532
      %v546 = vadd.f32 %v441, %v534
      %v547 = vadd.f32 %v444, %v537
      %v548 = vadd.f32 %v446, %v539
      %s549 = sadd.s32 %s208, 1
      %s550 = smul.u32 %s549, 3
      %s551 = smul.addr %s550, 4
      %s552 = scalar_lea.vmem %s191, %s551
      %v553 = vld [vmem:[%s552] sm:$0xf]
      %v554 = vld [vmem:[%s552 + $0x4] sm:$0xf]
      %v555 = vld [vmem:[%s552 + $0x8] sm:$0x1]
      %v556 = vld [vmem:[%s552 + $0xc] sm:$0xf]
      %v557 = vld [vmem:[%s552 + $0x10] sm:$0xf]
      %v558 = vld [vmem:[%s552 + $0x14] sm:$0x1]
      %v559 = vld [vmem:[%s552 + $0x18] sm:$0xf]
      %v560 = vld [vmem:[%s552 + $0x1c] sm:$0xf]
      %v561 = vld [vmem:[%s552 + $0x20] sm:$0x1]
      %v562 = vld [vmem:[%s552 + $0x24] sm:$0xf]
      %v563 = vld [vmem:[%s552 + $0x28] sm:$0xf]
      %v564 = vld [vmem:[%s552 + $0x2c] sm:$0x1]
      %s565 = scalar_lea.vmem %s1, 6
      %v566 = vld [vmem:[%s565] sm:$0x3]
      %v575 = vunpack.c.l.b16 %v553
      %v576 = vunpack.c.l.b16 %v554
      %v577 = vunpack.c.l.b16 %v556
      %v578 = vunpack.c.l.b16 %v557
      %v579 = vunpack.c.l.b16 %v559
      %v580 = vunpack.c.l.b16 %v560
      %v581 = vunpack.c.l.b16 %v562
      %v582 = vunpack.c.l.b16 %v563
      %v583 = vpack.c.b16 %v576, %v575
      %v584 = vpack.c.b16 %v578, %v577
      %v585 = vpack.c.b16 %v580, %v579
      %v586 = vpack.c.b16 %v582, %v581
      %v588 = vsel %vm338, %v583, 0
      %v591 = vsel %vm338, %v584, 0
      %v594 = vsel %vm338, %v585, 0
      %v597 = vsel %vm338, %v586, 0
      %v600 = vsel %vm351, %v566, 0
      %602 = vmatpush.bf16.msra.mxu0 0
      %603 = vmatpush.bf16.msra.mxu0 0
      %604 = vmatpush.bf16.msra.mxu0 0
      %605 = vmatpush.bf16.msra.mxu0 0
      %606 = vmatpush.bf16.msra.mxu0 0
      %607 = vmatpush.bf16.msra.mxu0 0
      %608 = vmatpush.bf16.msra.mxu0 0
      %609 = vmatpush.bf16.msra.mxu0 %v600
      %610 = vmatmul.bf16.gmra.mxu0 %v588
      %v611 = vpop.f32.mrf.mxu0
      %v612 = vadd.f32 0.0, %v611
      %v613 = vpop.f32.mrf.mxu0
      %v614 = vadd.f32 0.0, %v613
      %615 = vmatmul.bf16.gmra.mxu0 %v591
      %v616 = vpop.f32.mrf.mxu0
      %v617 = vadd.f32 0.0, %v616
      %v618 = vpop.f32.mrf.mxu0
      %v619 = vadd.f32 0.0, %v618
      %620 = vmatmul.bf16.gmra.mxu0 %v594
      %v621 = vpop.f32.mrf.mxu0
      %v622 = vadd.f32 0.0, %v621
      %v623 = vpop.f32.mrf.mxu0
      %v624 = vadd.f32 0.0, %v623
      %625 = vmatmul.bf16.gmra.mxu0 %v597
      %v626 = vpop.f32.mrf.mxu0
      %v627 = vadd.f32 0.0, %v626
      %v628 = vpop.f32.mrf.mxu0
      %v629 = vadd.f32 0.0, %v628
      %630 = vdwg.mxu0
      %v631 = vadd.f32 %v541, %v612
      %v632 = vadd.f32 %v542, %v614
      %v633 = vadd.f32 %v543, %v617
      %v634 = vadd.f32 %v544, %v619
      %v635 = vadd.f32 %v545, %v622
      %v636 = vadd.f32 %v546, %v624
      %v637 = vadd.f32 %v547, %v627
      %v638 = vadd.f32 %v548, %v629
      %v640 = vshrl.u32 %v553, 16
      %v642 = vrot.slane %v640, 4
      %v643 = vshll.u32 %v553, 16
      %v645 = vrot.slane %v643, 5
      %v646 = vor.u32 %v642, %v645
      %v647 = vrot.slane %v646, 4
      %v649 = vshll.u32 %v554, 16
      %v651 = vrot.slane %v649, 5
      %v652 = vsel %vm227, %v647, %v651
      %v653 = vshrl.u32 %v554, 16
      %v655 = vrot.slane %v653, 4
      %v656 = vor.u32 %v655, %v651
      %v657 = vrot.slane %v656, 4
      %v659 = vshll.u32 %v555, 16
      %v661 = vrot.slane %v659, 5
      %v662 = vsel %vm227, %v657, %v661
      %v664 = vshrl.u32 %v556, 16
      %v666 = vrot.slane %v664, 4
      %v667 = vshll.u32 %v556, 16
      %v669 = vrot.slane %v667, 5
      %v670 = vor.u32 %v666, %v669
      %v671 = vrot.slane %v670, 4
      %v673 = vshll.u32 %v557, 16
      %v675 = vrot.slane %v673, 5
      %v676 = vsel %vm227, %v671, %v675
      %v677 = vshrl.u32 %v557, 16
      %v679 = vrot.slane %v677, 4
      %v680 = vor.u32 %v679, %v675
      %v681 = vrot.slane %v680, 4
      %v683 = vshll.u32 %v558, 16
      %v685 = vrot.slane %v683, 5
      %v686 = vsel %vm227, %v681, %v685
      %v688 = vshrl.u32 %v559, 16
      %v690 = vrot.slane %v688, 4
      %v691 = vshll.u32 %v559, 16
      %v693 = vrot.slane %v691, 5
      %v694 = vor.u32 %v690, %v693
      %v695 = vrot.slane %v694, 4
      %v697 = vshll.u32 %v560, 16
      %v699 = vrot.slane %v697, 5
      %v700 = vsel %vm227, %v695, %v699
      %v701 = vshrl.u32 %v560, 16
      %v703 = vrot.slane %v701, 4
      %v704 = vor.u32 %v703, %v699
      %v705 = vrot.slane %v704, 4
      %v707 = vshll.u32 %v561, 16
      %v709 = vrot.slane %v707, 5
      %v710 = vsel %vm227, %v705, %v709
      %v712 = vshrl.u32 %v562, 16
      %v714 = vrot.slane %v712, 4
      %v715 = vshll.u32 %v562, 16
      %v717 = vrot.slane %v715, 5
      %v718 = vor.u32 %v714, %v717
      %v719 = vrot.slane %v718, 4
      %v721 = vshll.u32 %v563, 16
      %v723 = vrot.slane %v721, 5
      %v724 = vsel %vm227, %v719, %v723
      %v725 = vshrl.u32 %v563, 16
      %v727 = vrot.slane %v725, 4
      %v728 = vor.u32 %v727, %v723
      %v729 = vrot.slane %v728, 4
      %v731 = vshll.u32 %v564, 16
      %v733 = vrot.slane %v731, 5
      %v734 = vsel %vm227, %v729, %v733
      %s735 = scalar_lea.vmem %s1, 8
      %v736 = vld [vmem:[%s735] sm:$0x3]
      %v737 = vunpack.c.l.b16 %v652
      %v738 = vunpack.c.l.b16 %v662
      %v739 = vunpack.c.l.b16 %v676
      %v740 = vunpack.c.l.b16 %v686
      %v741 = vunpack.c.l.b16 %v700
      %v742 = vunpack.c.l.b16 %v710
      %v743 = vunpack.c.l.b16 %v724
      %v744 = vunpack.c.l.b16 %v734
      %v745 = vpack.c.b16 %v738, %v737
      %v746 = vpack.c.b16 %v740, %v739
      %v747 = vpack.c.b16 %v742, %v741
      %v748 = vpack.c.b16 %v744, %v743
      %v750 = vsel %vm338, %v745, 0
      %v753 = vsel %vm338, %v746, 0
      %v756 = vsel %vm338, %v747, 0
      %v759 = vsel %vm338, %v748, 0
      %v762 = vsel %vm351, %v736, 0
      %764 = vmatpush.bf16.msra.mxu0 0
      %765 = vmatpush.bf16.msra.mxu0 0
      %766 = vmatpush.bf16.msra.mxu0 0
      %767 = vmatpush.bf16.msra.mxu0 0
      %768 = vmatpush.bf16.msra.mxu0 0
      %769 = vmatpush.bf16.msra.mxu0 0
      %770 = vmatpush.bf16.msra.mxu0 0
      %771 = vmatpush.bf16.msra.mxu0 %v762
      %772 = vmatmul.bf16.gmra.mxu0 %v750
      %v773 = vpop.f32.mrf.mxu0
      %v774 = vadd.f32 0.0, %v773
      %v775 = vpop.f32.mrf.mxu0
      %v776 = vadd.f32 0.0, %v775
      %777 = vmatmul.bf16.gmra.mxu0 %v753
      %v778 = vpop.f32.mrf.mxu0
      %v779 = vadd.f32 0.0, %v778
      %v780 = vpop.f32.mrf.mxu0
      %v781 = vadd.f32 0.0, %v780
      %782 = vmatmul.bf16.gmra.mxu0 %v756
      %v783 = vpop.f32.mrf.mxu0
      %v784 = vadd.f32 0.0, %v783
      %v785 = vpop.f32.mrf.mxu0
      %v786 = vadd.f32 0.0, %v785
      %787 = vmatmul.bf16.gmra.mxu0 %v759
      %v788 = vpop.f32.mrf.mxu0
      %v789 = vadd.f32 0.0, %v788
      %v790 = vpop.f32.mrf.mxu0
      %v791 = vadd.f32 0.0, %v790
      %792 = vdwg.mxu0
      %v793 = vadd.f32 %v631, %v774
      %v794 = vadd.f32 %v632, %v776
      %v795 = vadd.f32 %v633, %v779
      %v796 = vadd.f32 %v634, %v781
      %v797 = vadd.f32 %v635, %v784
      %v798 = vadd.f32 %v636, %v786
      %v799 = vadd.f32 %v637, %v789
      %v800 = vadd.f32 %v638, %v791
      %v805 = vrot.slane %v553, 5
      %v806 = vrot.slane %v805, 4
      %v807 = vrot.slane %v554, 5
      %v808 = vsel %vm454, %v806, %v807
      %v809 = vrot.slane %v807, 4
      %v810 = vrot.slane %v555, 5
      %v811 = vsel %vm454, %v809, %v810
      %v812 = vrot.slane %v556, 5
      %v813 = vrot.slane %v812, 4
      %v814 = vrot.slane %v557, 5
      %v815 = vsel %vm454, %v813, %v814
      %v816 = vrot.slane %v814, 4
      %v817 = vrot.slane %v558, 5
      %v818 = vsel %vm454, %v816, %v817
      %v819 = vrot.slane %v559, 5
      %v820 = vrot.slane %v819, 4
      %v821 = vrot.slane %v560, 5
      %v822 = vsel %vm454, %v820, %v821
      %v823 = vrot.slane %v821, 4
      %v824 = vrot.slane %v561, 5
      %v825 = vsel %vm454, %v823, %v824
      %v826 = vrot.slane %v562, 5
      %v827 = vrot.slane %v826, 4
      %v828 = vrot.slane %v563, 5
      %v829 = vsel %vm454, %v827, %v828
      %v830 = vrot.slane %v828, 4
      %v831 = vrot.slane %v564, 5
      %v832 = vsel %vm454, %v830, %v831
      %s833 = scalar_lea.vmem %s1, 10
      %v834 = vld [vmem:[%s833] sm:$0x3]
      %v835 = vunpack.c.l.b16 %v808
      %v836 = vunpack.c.l.b16 %v811
      %v837 = vunpack.c.l.b16 %v815
      %v838 = vunpack.c.l.b16 %v818
      %v839 = vunpack.c.l.b16 %v822
      %v840 = vunpack.c.l.b16 %v825
      %v841 = vunpack.c.l.b16 %v829
      %v842 = vunpack.c.l.b16 %v832
      %v843 = vpack.c.b16 %v836, %v835
      %v844 = vpack.c.b16 %v838, %v837
      %v845 = vpack.c.b16 %v840, %v839
      %v846 = vpack.c.b16 %v842, %v841
      %v848 = vsel %vm338, %v843, 0
      %v851 = vsel %vm338, %v844, 0
      %v854 = vsel %vm338, %v845, 0
      %v857 = vsel %vm338, %v846, 0
      %v860 = vsel %vm351, %v834, 0
      %862 = vmatpush.bf16.msra.mxu0 0
      %863 = vmatpush.bf16.msra.mxu0 0
      %864 = vmatpush.bf16.msra.mxu0 0
      %865 = vmatpush.bf16.msra.mxu0 0
      %866 = vmatpush.bf16.msra.mxu0 0
      %867 = vmatpush.bf16.msra.mxu0 0
      %868 = vmatpush.bf16.msra.mxu0 0
      %869 = vmatpush.bf16.msra.mxu0 %v860
      %870 = vmatmul.bf16.gmra.mxu0 %v848
      %v871 = vpop.f32.mrf.mxu0
      %v872 = vadd.f32 0.0, %v871
      %v873 = vpop.f32.mrf.mxu0
      %v874 = vadd.f32 0.0, %v873
      %875 = vmatmul.bf16.gmra.mxu0 %v851
      %v876 = vpop.f32.mrf.mxu0
      %v877 = vadd.f32 0.0, %v876
      %v878 = vpop.f32.mrf.mxu0
      %v879 = vadd.f32 0.0, %v878
      %880 = vmatmul.bf16.gmra.mxu0 %v854
      %v881 = vpop.f32.mrf.mxu0
      %v882 = vadd.f32 0.0, %v881
      %v883 = vpop.f32.mrf.mxu0
      %v884 = vadd.f32 0.0, %v883
      %885 = vmatmul.bf16.gmra.mxu0 %v857
      %v886 = vpop.f32.mrf.mxu0
      %v887 = vadd.f32 0.0, %v886
      %v888 = vpop.f32.mrf.mxu0
      %v889 = vadd.f32 0.0, %v888
      %890 = vdwg.mxu0
      %v891 = vadd.f32 %v793, %v872
      %v892 = vadd.f32 %v794, %v874
      %v893 = vadd.f32 %v795, %v877
      %v894 = vadd.f32 %v796, %v879
      %v895 = vadd.f32 %v797, %v882
      %v896 = vadd.f32 %v798, %v884
      %v897 = vadd.f32 %v799, %v887
      %v898 = vadd.f32 %v800, %v889
      %s899 = sadd.s32 %s208, 2
      %s900 = smul.u32 %s899, 3
      %s901 = smul.addr %s900, 4
      %s902 = scalar_lea.vmem %s191, %s901
      %v903 = vld [vmem:[%s902] sm:$0xf]
      %v904 = vld [vmem:[%s902 + $0x4] sm:$0xf]
      %v905 = vld [vmem:[%s902 + $0x8] sm:$0x1]
      %v906 = vld [vmem:[%s902 + $0xc] sm:$0xf]
      %v907 = vld [vmem:[%s902 + $0x10] sm:$0xf]
      %v908 = vld [vmem:[%s902 + $0x14] sm:$0x1]
      %v909 = vld [vmem:[%s902 + $0x18] sm:$0xf]
      %v910 = vld [vmem:[%s902 + $0x1c] sm:$0xf]
      %v911 = vld [vmem:[%s902 + $0x20] sm:$0x1]
      %v912 = vld [vmem:[%s902 + $0x24] sm:$0xf]
      %v913 = vld [vmem:[%s902 + $0x28] sm:$0xf]
      %v914 = vld [vmem:[%s902 + $0x2c] sm:$0x1]
      %s915 = scalar_lea.vmem %s1, 12
      %v916 = vld [vmem:[%s915] sm:$0x3]
      %v925 = vunpack.c.l.b16 %v903
      %v926 = vunpack.c.l.b16 %v904
      %v927 = vunpack.c.l.b16 %v906
      %v928 = vunpack.c.l.b16 %v907
      %v929 = vunpack.c.l.b16 %v909
      %v930 = vunpack.c.l.b16 %v910
      %v931 = vunpack.c.l.b16 %v912
      %v932 = vunpack.c.l.b16 %v913
      %v933 = vpack.c.b16 %v926, %v925
      %v934 = vpack.c.b16 %v928, %v927
      %v935 = vpack.c.b16 %v930, %v929
      %v936 = vpack.c.b16 %v932, %v931
      %v938 = vsel %vm338, %v933, 0
      %v941 = vsel %vm338, %v934, 0
      %v944 = vsel %vm338, %v935, 0
      %v947 = vsel %vm338, %v936, 0
      %v950 = vsel %vm351, %v916, 0
      %952 = vmatpush.bf16.msra.mxu0 0
      %953 = vmatpush.bf16.msra.mxu0 0
      %954 = vmatpush.bf16.msra.mxu0 0
      %955 = vmatpush.bf16.msra.mxu0 0
      %956 = vmatpush.bf16.msra.mxu0 0
      %957 = vmatpush.bf16.msra.mxu0 0
      %958 = vmatpush.bf16.msra.mxu0 0
      %959 = vmatpush.bf16.msra.mxu0 %v950
      %960 = vmatmul.bf16.gmra.mxu0 %v938
      %v961 = vpop.f32.mrf.mxu0
      %v962 = vadd.f32 0.0, %v961
      %v963 = vpop.f32.mrf.mxu0
      %v964 = vadd.f32 0.0, %v963
      %965 = vmatmul.bf16.gmra.mxu0 %v941
      %v966 = vpop.f32.mrf.mxu0
      %v967 = vadd.f32 0.0, %v966
      %v968 = vpop.f32.mrf.mxu0
      %v969 = vadd.f32 0.0, %v968
      %970 = vmatmul.bf16.gmra.mxu0 %v944
      %v971 = vpop.f32.mrf.mxu0
      %v972 = vadd.f32 0.0, %v971
      %v973 = vpop.f32.mrf.mxu0
      %v974 = vadd.f32 0.0, %v973
      %975 = vmatmul.bf16.gmra.mxu0 %v947
      %v976 = vpop.f32.mrf.mxu0
      %v977 = vadd.f32 0.0, %v976
      %v978 = vpop.f32.mrf.mxu0
      %v979 = vadd.f32 0.0, %v978
      %980 = vdwg.mxu0
      %v981 = vadd.f32 %v891, %v962
      %v982 = vadd.f32 %v892, %v964
      %v983 = vadd.f32 %v893, %v967
      %v984 = vadd.f32 %v894, %v969
      %v985 = vadd.f32 %v895, %v972
      %v986 = vadd.f32 %v896, %v974
      %v987 = vadd.f32 %v897, %v977
      %v988 = vadd.f32 %v898, %v979
      %v990 = vshrl.u32 %v903, 16
      %v992 = vrot.slane %v990, 4
      %v993 = vshll.u32 %v903, 16
      %v995 = vrot.slane %v993, 5
      %v996 = vor.u32 %v992, %v995
      %v997 = vrot.slane %v996, 4
      %v999 = vshll.u32 %v904, 16
      %v1001 = vrot.slane %v999, 5
      %v1002 = vsel %vm227, %v997, %v1001
      %v1003 = vshrl.u32 %v904, 16
      %v1005 = vrot.slane %v1003, 4
      %v1006 = vor.u32 %v1005, %v1001
      %v1007 = vrot.slane %v1006, 4
      %v1009 = vshll.u32 %v905, 16
      %v1011 = vrot.slane %v1009, 5
      %v1012 = vsel %vm227, %v1007, %v1011
      %v1014 = vshrl.u32 %v906, 16
      %v1016 = vrot.slane %v1014, 4
      %v1017 = vshll.u32 %v906, 16
      %v1019 = vrot.slane %v1017, 5
      %v1020 = vor.u32 %v1016, %v1019
      %v1021 = vrot.slane %v1020, 4
      %v1023 = vshll.u32 %v907, 16
      %v1025 = vrot.slane %v1023, 5
      %v1026 = vsel %vm227, %v1021, %v1025
      %v1027 = vshrl.u32 %v907, 16
      %v1029 = vrot.slane %v1027, 4
      %v1030 = vor.u32 %v1029, %v1025
      %v1031 = vrot.slane %v1030, 4
      %v1033 = vshll.u32 %v908, 16
      %v1035 = vrot.slane %v1033, 5
      %v1036 = vsel %vm227, %v1031, %v1035
      %v1038 = vshrl.u32 %v909, 16
      %v1040 = vrot.slane %v1038, 4
      %v1041 = vshll.u32 %v909, 16
      %v1043 = vrot.slane %v1041, 5
      %v1044 = vor.u32 %v1040, %v1043
      %v1045 = vrot.slane %v1044, 4
      %v1047 = vshll.u32 %v910, 16
      %v1049 = vrot.slane %v1047, 5
      %v1050 = vsel %vm227, %v1045, %v1049
      %v1051 = vshrl.u32 %v910, 16
      %v1053 = vrot.slane %v1051, 4
      %v1054 = vor.u32 %v1053, %v1049
      %v1055 = vrot.slane %v1054, 4
      %v1057 = vshll.u32 %v911, 16
      %v1059 = vrot.slane %v1057, 5
      %v1060 = vsel %vm227, %v1055, %v1059
      %v1062 = vshrl.u32 %v912, 16
      %v1064 = vrot.slane %v1062, 4
      %v1065 = vshll.u32 %v912, 16
      %v1067 = vrot.slane %v1065, 5
      %v1068 = vor.u32 %v1064, %v1067
      %v1069 = vrot.slane %v1068, 4
      %v1071 = vshll.u32 %v913, 16
      %v1073 = vrot.slane %v1071, 5
      %v1074 = vsel %vm227, %v1069, %v1073
      %v1075 = vshrl.u32 %v913, 16
      %v1077 = vrot.slane %v1075, 4
      %v1078 = vor.u32 %v1077, %v1073
      %v1079 = vrot.slane %v1078, 4
      %v1081 = vshll.u32 %v914, 16
      %v1083 = vrot.slane %v1081, 5
      %v1084 = vsel %vm227, %v1079, %v1083
      %s1085 = scalar_lea.vmem %s1, 14
      %v1086 = vld [vmem:[%s1085] sm:$0x3]
      %v1087 = vunpack.c.l.b16 %v1002
      %v1088 = vunpack.c.l.b16 %v1012
      %v1089 = vunpack.c.l.b16 %v1026
      %v1090 = vunpack.c.l.b16 %v1036
      %v1091 = vunpack.c.l.b16 %v1050
      %v1092 = vunpack.c.l.b16 %v1060
      %v1093 = vunpack.c.l.b16 %v1074
      %v1094 = vunpack.c.l.b16 %v1084
      %v1095 = vpack.c.b16 %v1088, %v1087
      %v1096 = vpack.c.b16 %v1090, %v1089
      %v1097 = vpack.c.b16 %v1092, %v1091
      %v1098 = vpack.c.b16 %v1094, %v1093
      %v1100 = vsel %vm338, %v1095, 0
      %v1103 = vsel %vm338, %v1096, 0
      %v1106 = vsel %vm338, %v1097, 0
      %v1109 = vsel %vm338, %v1098, 0
      %v1112 = vsel %vm351, %v1086, 0
      %1114 = vmatpush.bf16.msra.mxu0 0
      %1115 = vmatpush.bf16.msra.mxu0 0
      %1116 = vmatpush.bf16.msra.mxu0 0
      %1117 = vmatpush.bf16.msra.mxu0 0
      %1118 = vmatpush.bf16.msra.mxu0 0
      %1119 = vmatpush.bf16.msra.mxu0 0
      %1120 = vmatpush.bf16.msra.mxu0 0
      %1121 = vmatpush.bf16.msra.mxu0 %v1112
      %1122 = vmatmul.bf16.gmra.mxu0 %v1100
      %v1123 = vpop.f32.mrf.mxu0
      %v1124 = vadd.f32 0.0, %v1123
      %v1125 = vpop.f32.mrf.mxu0
      %v1126 = vadd.f32 0.0, %v1125
      %1127 = vmatmul.bf16.gmra.mxu0 %v1103
      %v1128 = vpop.f32.mrf.mxu0
      %v1129 = vadd.f32 0.0, %v1128
      %v1130 = vpop.f32.mrf.mxu0
      %v1131 = vadd.f32 0.0, %v1130
      %1132 = vmatmul.bf16.gmra.mxu0 %v1106
      %v1133 = vpop.f32.mrf.mxu0
      %v1134 = vadd.f32 0.0, %v1133
      %v1135 = vpop.f32.mrf.mxu0
      %v1136 = vadd.f32 0.0, %v1135
      %1137 = vmatmul.bf16.gmra.mxu0 %v1109
      %v1138 = vpop.f32.mrf.mxu0
      %v1139 = vadd.f32 0.0, %v1138
      %v1140 = vpop.f32.mrf.mxu0
      %v1141 = vadd.f32 0.0, %v1140
      %1142 = vdwg.mxu0
      %v1143 = vadd.f32 %v981, %v1124
      %v1144 = vadd.f32 %v982, %v1126
      %v1145 = vadd.f32 %v983, %v1129
      %v1146 = vadd.f32 %v984, %v1131
      %v1147 = vadd.f32 %v985, %v1134
      %v1148 = vadd.f32 %v986, %v1136
      %v1149 = vadd.f32 %v987, %v1139
      %v1150 = vadd.f32 %v988, %v1141
      %v1155 = vrot.slane %v903, 5
      %v1156 = vrot.slane %v1155, 4
      %v1157 = vrot.slane %v904, 5
      %v1158 = vsel %vm454, %v1156, %v1157
      %v1159 = vrot.slane %v1157, 4
      %v1160 = vrot.slane %v905, 5
      %v1161 = vsel %vm454, %v1159, %v1160
      %v1162 = vrot.slane %v906, 5
      %v1163 = vrot.slane %v1162, 4
      %v1164 = vrot.slane %v907, 5
      %v1165 = vsel %vm454, %v1163, %v1164
      %v1166 = vrot.slane %v1164, 4
      %v1167 = vrot.slane %v908, 5
      %v1168 = vsel %vm454, %v1166, %v1167
      %v1169 = vrot.slane %v909, 5
      %v1170 = vrot.slane %v1169, 4
      %v1171 = vrot.slane %v910, 5
      %v1172 = vsel %vm454, %v1170, %v1171
      %v1173 = vrot.slane %v1171, 4
      %v1174 = vrot.slane %v911, 5
      %v1175 = vsel %vm454, %v1173, %v1174
      %v1176 = vrot.slane %v912, 5
      %v1177 = vrot.slane %v1176, 4
      %v1178 = vrot.slane %v913, 5
      %v1179 = vsel %vm454, %v1177, %v1178
      %v1180 = vrot.slane %v1178, 4
      %v1181 = vrot.slane %v914, 5
      %v1182 = vsel %vm454, %v1180, %v1181
      %s1183 = scalar_lea.vmem %s1, 16
      %v1184 = vld [vmem:[%s1183] sm:$0x3]
      %v1185 = vunpack.c.l.b16 %v1158
      %v1186 = vunpack.c.l.b16 %v1161
      %v1187 = vunpack.c.l.b16 %v1165
      %v1188 = vunpack.c.l.b16 %v1168
      %v1189 = vunpack.c.l.b16 %v1172
      %v1190 = vunpack.c.l.b16 %v1175
      %v1191 = vunpack.c.l.b16 %v1179
      %v1192 = vunpack.c.l.b16 %v1182
      %v1193 = vpack.c.b16 %v1186, %v1185
      %v1194 = vpack.c.b16 %v1188, %v1187
      %v1195 = vpack.c.b16 %v1190, %v1189
      %v1196 = vpack.c.b16 %v1192, %v1191
      %v1198 = vsel %vm338, %v1193, 0
      %v1201 = vsel %vm338, %v1194, 0
      %v1204 = vsel %vm338, %v1195, 0
      %v1207 = vsel %vm338, %v1196, 0
      %v1210 = vsel %vm351, %v1184, 0
      %1212 = vmatpush.bf16.msra.mxu0 0
      %1213 = vmatpush.bf16.msra.mxu0 0
      %1214 = vmatpush.bf16.msra.mxu0 0
      %1215 = vmatpush.bf16.msra.mxu0 0
      %1216 = vmatpush.bf16.msra.mxu0 0
      %1217 = vmatpush.bf16.msra.mxu0 0
      %1218 = vmatpush.bf16.msra.mxu0 0
      %1219 = vmatpush.bf16.msra.mxu0 %v1210
      %1220 = vmatmul.bf16.gmra.mxu0 %v1198
      %v1221 = vpop.f32.mrf.mxu0
      %v1222 = vadd.f32 0.0, %v1221
      %v1223 = vpop.f32.mrf.mxu0
      %v1224 = vadd.f32 0.0, %v1223
      %1225 = vmatmul.bf16.gmra.mxu0 %v1201
      %v1226 = vpop.f32.mrf.mxu0
      %v1227 = vadd.f32 0.0, %v1226
      %v1228 = vpop.f32.mrf.mxu0
      %v1229 = vadd.f32 0.0, %v1228
      %1230 = vmatmul.bf16.gmra.mxu0 %v1204
      %v1231 = vpop.f32.mrf.mxu0
      %v1232 = vadd.f32 0.0, %v1231
      %v1233 = vpop.f32.mrf.mxu0
      %v1234 = vadd.f32 0.0, %v1233
      %1235 = vmatmul.bf16.gmra.mxu0 %v1207
      %v1236 = vpop.f32.mrf.mxu0
      %v1237 = vadd.f32 0.0, %v1236
      %v1238 = vpop.f32.mrf.mxu0
      %v1239 = vadd.f32 0.0, %v1238
      %1240 = vdwg.mxu0
      %v1241 = vadd.f32 %v1143, %v1222
      %v1242 = vadd.f32 %v1144, %v1224
      %v1243 = vadd.f32 %v1145, %v1227
      %v1244 = vadd.f32 %v1146, %v1229
      %v1245 = vadd.f32 %v1147, %v1232
      %v1246 = vadd.f32 %v1148, %v1234
      %v1247 = vadd.f32 %v1149, %v1237
      %v1248 = vadd.f32 %v1150, %v1239
      %1249 = vst [vmem:[%s201] sm:$0xff] %v1241
      %1250 = vst [vmem:[%s201 + $0x8] sm:$0xff] %v1242
      %1251 = vst [vmem:[%s201 + $0x10] sm:$0xff] %v1243
      %1252 = vst [vmem:[%s201 + $0x18] sm:$0xff] %v1244
      %1253 = vst [vmem:[%s201 + $0x20] sm:$0xff] %v1245
      %1254 = vst [vmem:[%s201 + $0x28] sm:$0xff] %v1246
      %1255 = vst [vmem:[%s201 + $0x30] sm:$0xff] %v1247
      %1256 = vst [vmem:[%s201 + $0x38] sm:$0xff] %v1248
      %v1257 = vadd.f32 %v1241, %v1242
      %v1258 = vadd.f32 %v1257, %v1243
      %v1259 = vadd.f32 %v1258, %v1244
      %v1260 = vadd.f32 %v1259, %v1245
      %v1261 = vadd.f32 %v1260, %v1246
      %v1262 = vadd.f32 %v1261, %v1247
      %v1263 = vadd.f32 %v1262, %v1248
      %v1264 = vrot.slane %v1263, 4
      %v1265 = vadd.f32 %v1263, %v1264
      %v1266 = vrot.slane %v1265, 2
      %v1267 = vadd.f32 %v1265, %v1266
      %v1268 = vrot.slane %v1267, 1
      %v1269 = vadd.f32 %v1267, %v1268
      %v1270 = vmul.f32 %v1241, %v1241
      %v1271 = vmul.f32 %v1242, %v1242
      %v1272 = vmul.f32 %v1243, %v1243
      %v1273 = vmul.f32 %v1244, %v1244
      %v1274 = vmul.f32 %v1245, %v1245
      %v1275 = vmul.f32 %v1246, %v1246
      %v1276 = vmul.f32 %v1247, %v1247
      %v1277 = vmul.f32 %v1248, %v1248
      %v1278 = vadd.f32 %v1270, %v1271
      %v1279 = vadd.f32 %v1278, %v1272
      %v1280 = vadd.f32 %v1279, %v1273
      %v1281 = vadd.f32 %v1280, %v1274
      %v1282 = vadd.f32 %v1281, %v1275
      %v1283 = vadd.f32 %v1282, %v1276
      %v1284 = vadd.f32 %v1283, %v1277
      %v1285 = vrot.slane %v1284, 4
      %v1286 = vadd.f32 %v1284, %v1285
      %v1287 = vrot.slane %v1286, 2
      %v1288 = vadd.f32 %v1286, %v1287
      %v1289 = vrot.slane %v1288, 1
      %v1290 = vadd.f32 %v1288, %v1289
      %vm1291 = vcmask 1040384
      %v1292 = vsel %vm1291, %v1269, %v1290
      %p1293 = scmp.eq.s32.totalorder %s20, 0
      // Predicated region
      $region29: #{basic_block_forward.3} parent=27 // pred_check
        %p1294 = pneg %p1293
      $region30: #{basic_block_forward.3} parent=27 // pred_check_branch
        %1296 = sbr.rel (%p1294) target = $region32
      $region31: #{basic_block_forward.3} parent=27 // pred_region
        %1297 = vst [vmem:[%s206] sm:$0x3] 0.0
      $region32: #{basic_block_forward.3} parent=27 // pred_fallthru
        _
      %v1298 = vld [vmem:[%s206] sm:$0x3]
      %v1299 = vadd.f32 %v1298, %v1292
      %1300 = vst [vmem:[%s206] sm:$0x3] %v1299
      %s1301 = smul.u32 4, %s20
      %p1302 = scmp.lt.s32.totalorder %s19, 1
      %s1303 = scalar_select %p1302, %s19, 1
      %p1304 = scmp.lt.s32.totalorder %s1301, 15
      %s1305 = scalar_select %p1304, %s1301, 15
      %s1306 = smul.addr %s1305, 2
      %s1307 = smul.addr %s1303, 32
      %s1308 = sadd.s32 %s1306, %s1307
      %s1309 = smul.addr %s1308, 8
      %s1310 = scalar_lea.vmem %s2, %s1309
      %p1311 = scmp.lt.s32.totalorder %s19, 1
      %s1312 = scalar_select %p1311, %s19, 1
      %s1313 = smul.addr %s1312, 2
      %s1314 = scalar_lea.vmem %s3, %s1313
      // Predicated region
      $region33: #{basic_block_forward.3} parent=27 // pred_check
        %p1315 = pneg %p94
      $region34: #{basic_block_forward.3} parent=27 // pred_check_branch
        %1317 = sbr.rel (%p1315) target = $region36
      $region35: #{basic_block_forward.3} parent=27 // pred_region
        %s1318 = smul.u32 4, %s20
      $region36: #{basic_block_forward.3} parent=27 // pred_fallthru
        _
      // Predicated region
      $region37: #{basic_block_forward.3} parent=27 // pred_check
        %p1319 = pneg %p120
      $region38: #{basic_block_forward.3} parent=27 // pred_check_branch
        %1321 = sbr.rel (%p1319) target = $region40
      $region39: #{basic_block_forward.3} parent=27 // pred_region
        _
      $region40: #{basic_block_forward.3} parent=27 // pred_fallthru
        _
    $region28: #{basic_block_forward.3} parent=5 // pred_fallthru
      _
    %p1322 = scmp.le.s32.totalorder 2, %s10
    // Predicated region
    $region41: #{basic_block_forward.3} parent=5 // pred_check
      %p1323 = pneg %p1322
    $region42: #{basic_block_forward.3} parent=5 // pred_check_branch
      %1325 = sbr.rel (%p1323) target = $region44
    $region43: #{basic_block_forward.3} parent=5 // pred_region
      %s1326 = ssub.s32 %s10, 2
      // Predicated region
      $region45: #{basic_block_forward.3} parent=43 // pred_check
        %p1327 = pneg %p100
      $region46: #{basic_block_forward.3} parent=43 // pred_check_branch
        %1329 = sbr.rel (%p1327) target = $region48
      $region47: #{basic_block_forward.3} parent=43 // pred_region
        %s1330 = smul.u32 4, %s22
        %p1331 = scmp.lt.s32.totalorder %s21, 1
        %s1332 = scalar_select %p1331, %s21, 1
        %p1333 = scmp.lt.s32.totalorder %s1330, 15
        %s1334 = scalar_select %p1333, %s1330, 15
        %s1335 = smul.addr %s1334, 2
        %s1336 = smul.addr %s1332, 32
        %s1337 = sadd.s32 %s1335, %s1336
        %s1338 = smul.addr %s1337, 8
        %s1339 = scalar_lea.vmem %s2, %s1338
      $region48: #{basic_block_forward.3} parent=43 // pred_fallthru
        _
      // Predicated region
      $region49: #{basic_block_forward.3} parent=43 // pred_check
        %p1340 = pneg %p126
      $region50: #{basic_block_forward.3} parent=43 // pred_check_branch
        %1342 = sbr.rel (%p1340) target = $region52
      $region51: #{basic_block_forward.3} parent=43 // pred_region
        %p1343 = scmp.lt.s32.totalorder %s21, 1
        %s1344 = scalar_select %p1343, %s21, 1
        %s1345 = smul.addr %s1344, 2
        %s1346 = scalar_lea.vmem %s3, %s1345
      $region52: #{basic_block_forward.3} parent=43 // pred_fallthru
        _
    $region44: #{basic_block_forward.3} parent=5 // pred_fallthru
      _
  $region6: #{basic_block_forward.3} parent=0 // loop_footer
    %s14 = sadd.s32 1, %s10
  $region7: #{basic_block_forward.3} parent=0 // loop_footer_branch
    %9 = sbr.rel target = $region3
  $region8: #{basic_block_forward.3} parent=0 // loop_exit
    _

// kernel: basic_block_forward.4
$region0: #{basic_block_forward.4}
  #allocation0 [shape = 'u32[]', space=smem, size = 0x4, offset = 0x4, fixed_abs, tag = 'smem constant byte address 0x4 - core index']
  #allocation1 [shape = 'u32[72,128]{1,0:T(1,128)}', space=vmem, size = 0x9000, scoped, tag = 'internal scratch']
  #allocation2 [shape = 'bf16[18,32,128]{2,1,0:T(8,128)(2,1)}', space=vmem, size = 0x24000, scoped, tag = 'scratch operand']
  %s0 = inlined_call_operand.vmem [shape: f32[2,16,16,128], index: 0, kind: input, shape index: {}]
  %s1 = inlined_call_operand.vmem [shape: f32[1,1,128], index: 1, kind: input, shape index: {}]
  %s2 = inlined_call_operand.vmem [shape: f32[1,1,128], index: 2, kind: input, shape index: {}]
  %s3 = inlined_call_operand.vmem [shape: bf16[9,128,128], index: 3, kind: input, shape index: {}]
  %s4 = inlined_call_operand.vmem [shape: f32[2,16,16,128], index: 4, kind: output, shape index: {0}]
  %s5 = inlined_call_operand.vmem [shape: f32[2,2,128], index: 5, kind: output, shape index: {1}]
  %6 = xla_tuple %s4, %s5
  %s7 = sld [smem:[#allocation0]]
  $region65: #{basic_block_forward.4} parent=0
    _
  %s9 = ssub.s32 1, %s7
  %s10 = scalar_select 0, %s9, %s7
  loop: start=0, step=1, limit=10
  $region2: #{basic_block_forward.4} parent=0 // loop_pre_header
    _
  $region3: #{basic_block_forward.4} parent=0 // loop_header
    %s12 = sphi 0, %s16
    %p13 = scmp.ge.s32.totalorder %s12, 10
    %s19 = sphi 0, %s31
    %s20 = sphi 0, %s27
    %s21 = sphi 0, %s19
    %s22 = sphi 0, %s20
    %s23 = sphi 0, %s21
    %s24 = sphi 0, %s22
    %s34 = sphi 0, %s36
    %s37 = sphi 0, %s34
    %s38 = sphi 0, %s37
    %s54 = sphi 0, %s38
    %s58 = sphi 0, %s58
    %s60 = sphi 0, %s58
    %s61 = sphi 0, %s60
    %s75 = sphi 0, %s61
    %s79 = sphi 0, %s79
    %s81 = sphi 0, %s79
    %s82 = sphi 0, %s81
    %s96 = sphi 0, %s82
    %s100 = sphi 0, %s100
    %s102 = sphi 0, %s100
    %s103 = sphi 0, %s102
    %s117 = sphi 0, %s103
    %s125 = sphi 0, %s127
    %s128 = sphi 0, %s125
    %s129 = sphi 0, %s128
    %s145 = sphi 0, %s129
    %s151 = sphi 0, %s153
    %s154 = sphi 0, %s151
    %s155 = sphi 0, %s154
    %s171 = sphi 0, %s155
  $region4: #{basic_block_forward.4} parent=0 // loop_header_branch
    %15 = sbr.rel (%p13) target = $region8
  $region5: #{basic_block_forward.4} parent=0 // loop_body
    %s17 = ssub.s32 %s12, 1
    %s18 = ssub.s32 %s12, 2
    %s25 = sadd.s32 1, %s20
    %p26 = scmp.ge.s32.totalorder %s25, 4
    %s27 = scalar_select %p26, 0, %s25
    %s28 = sadd.s32 1, %s19
    %s29 = scalar_select %p26, %s28, %s19
    %p30 = scmp.ge.s32.totalorder %s29, 2
    %s31 = scalar_select %p30, 0, %s29
    %s32 = ssub.s32 %s19, %s31
    %p33 = scmp.eq.s32.totalorder %s32, 0
    %s35 = sadd.s32 %s34, 1
    %s36 = scalar_select %p33, %s34, %s35
    %p39 = pneg %p33
    %p40 = scmp.eq.s32.totalorder %s12, 7
    %p41 = por %p39, %p40
    %p42 = scmp.ne.s32.totalorder %s34, %s37
    %p43 = scmp.eq.s32.totalorder %s12, 0
    %p44 = por %p42, %p43
    %p45 = scmp.ne.s32.totalorder %s34, %s37
    %p46 = scmp.eq.s32.totalorder %s17, 7
    %p47 = por %p45, %p46
    %p48 = scmp.ne.s32.totalorder %s37, %s38
    %p49 = scmp.eq.s32.totalorder %s17, 0
    %p50 = por %p48, %p49
    %p51 = scmp.ne.s32.totalorder %s37, %s38
    %p52 = scmp.eq.s32.totalorder %s18, 7
    %p53 = por %p51, %p52
    %p55 = scmp.ne.s32.totalorder %s38, %s54
    %p56 = scmp.eq.s32.totalorder %s18, 0
    %p57 = por %p55, %p56
    %s59 = sadd.s32 %s58, 1
    %p62 = scmp.eq.s32.totalorder %s12, 7
    %p63 = scmp.ne.s32.totalorder %s58, %s60
    %p64 = scmp.eq.s32.totalorder %s12, 0
    %p65 = por %p63, %p64
    %p66 = scmp.ne.s32.totalorder %s58, %s60
    %p67 = scmp.eq.s32.totalorder %s17, 7
    %p68 = por %p66, %p67
    %p69 = scmp.ne.s32.totalorder %s60, %s61
    %p70 = scmp.eq.s32.totalorder %s17, 0
    %p71 = por %p69, %p70
    %p72 = scmp.ne.s32.totalorder %s60, %s61
    %p73 = scmp.eq.s32.totalorder %s18, 7
    %p74 = por %p72, %p73
    %p76 = scmp.ne.s32.totalorder %s61, %s75
    %p77 = scmp.eq.s32.totalorder %s18, 0
    %p78 = por %p76, %p77
    %s80 = sadd.s32 %s79, 1
    %p83 = scmp.eq.s32.totalorder %s12, 7
    %p84 = scmp.ne.s32.totalorder %s79, %s81
    %p85 = scmp.eq.s32.totalorder %s12, 0
    %p86 = por %p84, %p85
    %p87 = scmp.ne.s32.totalorder %s79, %s81
    %p88 = scmp.eq.s32.totalorder %s17, 7
    %p89 = por %p87, %p88
    %p90 = scmp.ne.s32.totalorder %s81, %s82
    %p91 = scmp.eq.s32.totalorder %s17, 0
    %p92 = por %p90, %p91
    %p93 = scmp.ne.s32.totalorder %s81, %s82
    %p94 = scmp.eq.s32.totalorder %s18, 7
    %p95 = por %p93, %p94
    %p97 = scmp.ne.s32.totalorder %s82, %s96
    %p98 = scmp.eq.s32.totalorder %s18, 0
    %p99 = por %p97, %p98
    %s101 = sadd.s32 %s100, 1
    %p104 = scmp.eq.s32.totalorder %s12, 7
    %p105 = scmp.ne.s32.totalorder %s100, %s102
    %p106 = scmp.eq.s32.totalorder %s12, 0
    %p107 = por %p105, %p106
    %p108 = scmp.ne.s32.totalorder %s100, %s102
    %p109 = scmp.eq.s32.totalorder %s17, 7
    %p110 = por %p108, %p109
    %p111 = scmp.ne.s32.totalorder %s102, %s103
    %p112 = scmp.eq.s32.totalorder %s17, 0
    %p113 = por %p111, %p112
    %p114 = scmp.ne.s32.totalorder %s102, %s103
    %p115 = scmp.eq.s32.totalorder %s18, 7
    %p116 = por %p114, %p115
    %p118 = scmp.ne.s32.totalorder %s103, %s117
    %p119 = scmp.eq.s32.totalorder %s18, 0
    %p120 = por %p118, %p119
    %s121 = ssub.s32 %s19, %s31
    %s122 = ssub.s32 %s20, %s27
    %s123 = sor.u32 %s121, %s122
    %p124 = scmp.eq.s32.totalorder %s123, 0
    %s126 = sadd.s32 %s125, 1
    %s127 = scalar_select %p124, %s125, %s126
    %p130 = pneg %p124
    %p131 = scmp.eq.s32.totalorder %s12, 7
    %p132 = por %p130, %p131
    %p133 = scmp.ne.s32.totalorder %s125, %s128
    %p134 = scmp.eq.s32.totalorder %s12, 0
    %p135 = por %p133, %p134
    %p136 = scmp.ne.s32.totalorder %s125, %s128
    %p137 = scmp.eq.s32.totalorder %s17, 7
    %p138 = por %p136, %p137
    %p139 = scmp.ne.s32.totalorder %s128, %s129
    %p140 = scmp.eq.s32.totalorder %s17, 0
    %p141 = por %p139, %p140
    %p142 = scmp.ne.s32.totalorder %s128, %s129
    %p143 = scmp.eq.s32.totalorder %s18, 7
    %p144 = por %p142, %p143
    %p146 = scmp.ne.s32.totalorder %s129, %s145
    %p147 = scmp.eq.s32.totalorder %s18, 0
    %p148 = por %p146, %p147
    %s149 = ssub.s32 %s19, %s31
    %p150 = scmp.eq.s32.totalorder %s149, 0
    %s152 = sadd.s32 %s151, 1
    %s153 = scalar_select %p150, %s151, %s152
    %p156 = pneg %p150
    %p157 = scmp.eq.s32.totalorder %s12, 7
    %p158 = por %p156, %p157
    %p159 = scmp.ne.s32.totalorder %s151, %s154
    %p160 = scmp.eq.s32.totalorder %s12, 0
    %p161 = por %p159, %p160
    %p162 = scmp.ne.s32.totalorder %s151, %s154
    %p163 = scmp.eq.s32.totalorder %s17, 7
    %p164 = por %p162, %p163
    %p165 = scmp.ne.s32.totalorder %s154, %s155
    %p166 = scmp.eq.s32.totalorder %s17, 0
    %p167 = por %p165, %p166
    %p168 = scmp.ne.s32.totalorder %s154, %s155
    %p169 = scmp.eq.s32.totalorder %s18, 7
    %p170 = por %p168, %p169
    %p172 = scmp.ne.s32.totalorder %s155, %s171
    %p173 = scmp.eq.s32.totalorder %s18, 0
    %p174 = por %p172, %p173
    %p175 = scmp.le.s32.totalorder 1, %s12
    %p176 = scmp.lt.s32.totalorder %s12, 9
    %p177 = pnand %p175, %p176
    %p178 = pneg %p177
    // Predicated region
    $region9: #{basic_block_forward.4} parent=5 // pred_check
      _
    $region10: #{basic_block_forward.4} parent=5 // pred_check_branch
      %180 = sbr.rel (%p177) target = $region12
    $region11: #{basic_block_forward.4} parent=5 // pred_region
      %s181 = ssub.s32 %s12, 1
      // Predicated region
      $region13: #{basic_block_forward.4} parent=11 // pred_check
        %p182 = pneg %p71
      $region14: #{basic_block_forward.4} parent=11 // pred_check_branch
        %184 = sbr.rel (%p182) target = $region16
      $region15: #{basic_block_forward.4} parent=11 // pred_region
        _
      $region16: #{basic_block_forward.4} parent=11 // pred_fallthru
        _
      // Predicated region
      $region17: #{basic_block_forward.4} parent=11 // pred_check
        %p185 = pneg %p92
      $region18: #{basic_block_forward.4} parent=11 // pred_check_branch
        %187 = sbr.rel (%p185) target = $region20
      $region19: #{basic_block_forward.4} parent=11 // pred_region
        _
      $region20: #{basic_block_forward.4} parent=11 // pred_fallthru
        _
      // Predicated region
      $region21: #{basic_block_forward.4} parent=11 // pred_check
        %p188 = pneg %p113
      $region22: #{basic_block_forward.4} parent=11 // pred_check_branch
        %190 = sbr.rel (%p188) target = $region24
      $region23: #{basic_block_forward.4} parent=11 // pred_region
        _
      $region24: #{basic_block_forward.4} parent=11 // pred_fallthru
        _
    $region12: #{basic_block_forward.4} parent=5 // pred_fallthru
      _
    %p191 = scmp.lt.s32.totalorder %s12, 8
    // Predicated region
    $region25: #{basic_block_forward.4} parent=5 // pred_check
      %p192 = pneg %p191
    $region26: #{basic_block_forward.4} parent=5 // pred_check_branch
      %194 = sbr.rel (%p192) target = $region28
    $region27: #{basic_block_forward.4} parent=5 // pred_region
      // Predicated region
      $region29: #{basic_block_forward.4} parent=27 // pred_check
        %p195 = pneg %p44
      $region30: #{basic_block_forward.4} parent=27 // pred_check_branch
        %197 = sbr.rel (%p195) target = $region32
      $region31: #{basic_block_forward.4} parent=27 // pred_region
        %p198 = scmp.lt.s32.totalorder %s19, 1
        %s199 = scalar_select %p198, %s19, 1
        %s200 = smul.addr %s199, 32
        %s201 = smul.addr %s200, 8
        %s202 = scalar_lea.vmem %s0, %s201
      $region32: #{basic_block_forward.4} parent=27 // pred_fallthru
        _
    $region28: #{basic_block_forward.4} parent=5 // pred_fallthru
      _
    %p203 = scmp.le.s32.totalorder 1, %s12
    %p204 = scmp.lt.s32.totalorder %s12, 9
    %p205 = pnand %p203, %p204
    %p206 = pneg %p205
    // Predicated region
    $region33: #{basic_block_forward.4} parent=5 // pred_check
      _
    $region34: #{basic_block_forward.4} parent=5 // pred_check_branch
      %208 = sbr.rel (%p205) target = $region36
    $region35: #{basic_block_forward.4} parent=5 // pred_region
      %s209 = ssub.s32 %s12, 1
      %p210 = scmp.lt.s32.totalorder %s21, 1
      %s211 = scalar_select %p210, %s21, 1
      %s212 = smul.addr %s211, 32
      %s213 = smul.addr %s212, 8
      %s214 = scalar_lea.vmem %s0, %s213
      %p215 = pneg %p50
      %p216 = pneg %p47
      %p217 = pneg %p71
      %p218 = pneg %p68
      %p219 = pneg %p92
      %p220 = pneg %p89
      %p221 = pneg %p113
      %p222 = pneg %p110
      %p223 = pneg %p141
      %p224 = pneg %p138
      %s225 = smul.u32 4, %s22
      %p226 = scmp.lt.s32.totalorder %s21, 1
      %s227 = scalar_select %p226, %s21, 1
      %p228 = scmp.lt.s32.totalorder %s225, 15
      %s229 = scalar_select %p228, %s225, 15
      %s230 = smul.addr %s229, 2
      %s231 = smul.addr %s227, 32
      %s232 = sadd.s32 %s230, %s231
      %s233 = smul.addr %s232, 8
      %s234 = scalar_lea.vmem %s4, %s233
      %p235 = pneg %p167
      %p236 = pneg %p164
      %p237 = scmp.lt.s32.totalorder %s21, 1
      %s238 = scalar_select %p237, %s21, 1
      %s239 = smul.addr %s238, 2
      %s240 = scalar_lea.vmem %s5, %s239
      %p241 = scmp.lt.s32.totalorder %s21, 1
      %s242 = scalar_select %p241, %s21, 1
      %s243 = smul.addr %s242, 32
      %s244 = smul.addr %s243, 8
      %s245 = scalar_lea.vmem %s0, %s244
      %s246 = smul.u32 4, %s22
      %p247 = scmp.lt.s32.totalorder %s21, 1
      %s248 = scalar_select %p247, %s21, 1
      %p249 = scmp.lt.s32.totalorder %s246, 15
      %s250 = scalar_select %p249, %s246, 15
      %s251 = smul.addr %s250, 2
      %s252 = smul.addr %s248, 32
      %s253 = sadd.s32 %s251, %s252
      %s254 = smul.addr %s253, 8
      %s255 = scalar_lea.vmem %s4, %s254
      %s256 = smul.u32 4, %s22
      %p257 = scmp.lt.s32.totalorder %s21, 1
      %s258 = scalar_select %p257, %s21, 1
      %s259 = smul.addr %s258, 2
      %s260 = scalar_lea.vmem %s5, %s259
      %p262 = scmp.eq.s32.totalorder %s22, 0
      // Predicated region
      $region37: #{basic_block_forward.4} parent=35 // pred_check
        %p263 = pneg %p262
      $region38: #{basic_block_forward.4} parent=35 // pred_check_branch
        %265 = sbr.rel (%p263) target = $region40
      $region39: #{basic_block_forward.4} parent=35 // pred_region
        %266 = vst [vmem:[#allocation2] sm:$0xf] 0
        %267 = vst [vmem:[#allocation2 + $0x4] sm:$0xf] 0
        %268 = vst [vmem:[#allocation2 + $0x8] sm:$0xf] 0
        %269 = vst [vmem:[#allocation2 + $0xc] sm:$0xf] 0
        %270 = vst [vmem:[#allocation2 + $0x10] sm:$0xf] 0
        %271 = vst [vmem:[#allocation2 + $0x14] sm:$0xf] 0
        %272 = vst [vmem:[#allocation2 + $0x18] sm:$0xf] 0
        %273 = vst [vmem:[#allocation2 + $0x1c] sm:$0xf] 0
        %274 = vst [vmem:[#allocation2 + $0x20] sm:$0xf] 0
        %275 = vst [vmem:[#allocation2 + $0x24] sm:$0xf] 0
        %276 = vst [vmem:[#allocation2 + $0x28] sm:$0xf] 0
        %277 = vst [vmem:[#allocation2 + $0x2c] sm:$0xf] 0
        %278 = vst [vmem:[#allocation2 + $0x30] sm:$0xf] 0
        %279 = vst [vmem:[#allocation2 + $0x34] sm:$0xf] 0
        %280 = vst [vmem:[#allocation2 + $0x38] sm:$0xf] 0
        %281 = vst [vmem:[#allocation2 + $0x3c] sm:$0xf] 0
        %282 = vst [vmem:[#allocation2 + $0x40] sm:$0xf] 0
        %283 = vst [vmem:[#allocation2 + $0x44] sm:$0xf] 0
        %284 = vst [vmem:[#allocation2 + $0x48] sm:$0xf] 0
        %285 = vst [vmem:[#allocation2 + $0x4c] sm:$0xf] 0
        %286 = vst [vmem:[#allocation2 + $0x50] sm:$0xf] 0
        %287 = vst [vmem:[#allocation2 + $0x54] sm:$0xf] 0
        %288 = vst [vmem:[#allocation2 + $0x58] sm:$0xf] 0
        %289 = vst [vmem:[#allocation2 + $0x5c] sm:$0xf] 0
        %290 = vst [vmem:[#allocation2 + $0x60] sm:$0xf] 0
        %291 = vst [vmem:[#allocation2 + $0x64] sm:$0xf] 0
        %292 = vst [vmem:[#allocation2 + $0x68] sm:$0xf] 0
        %293 = vst [vmem:[#allocation2 + $0x6c] sm:$0xf] 0
        %294 = vst [vmem:[#allocation2 + $0x70] sm:$0xf] 0
        %295 = vst [vmem:[#allocation2 + $0x74] sm:$0xf] 0
        %296 = vst [vmem:[#allocation2 + $0x78] sm:$0xf] 0
        %297 = vst [vmem:[#allocation2 + $0x7c] sm:$0xf] 0
        %298 = vst [vmem:[#allocation2 + $0x80] sm:$0xf] 0
        %299 = vst [vmem:[#allocation2 + $0x84] sm:$0xf] 0
        %300 = vst [vmem:[#allocation2 + $0x88] sm:$0xf] 0
        %301 = vst [vmem:[#allocation2 + $0x8c] sm:$0xf] 0
        %302 = vst [vmem:[#allocation2 + $0x90] sm:$0xf] 0
        %303 = vst [vmem:[#allocation2 + $0x94] sm:$0xf] 0
        %304 = vst [vmem:[#allocation2 + $0x98] sm:$0xf] 0
        %305 = vst [vmem:[#allocation2 + $0x9c] sm:$0xf] 0
        %306 = vst [vmem:[#allocation2 + $0xa0] sm:$0xf] 0
        %307 = vst [vmem:[#allocation2 + $0xa4] sm:$0xf] 0
        %308 = vst [vmem:[#allocation2 + $0xa8] sm:$0xf] 0
        %309 = vst [vmem:[#allocation2 + $0xac] sm:$0xf] 0
        %310 = vst [vmem:[#allocation2 + $0xb0] sm:$0xf] 0
        %311 = vst [vmem:[#allocation2 + $0xb4] sm:$0xf] 0
        %312 = vst [vmem:[#allocation2 + $0xb8] sm:$0xf] 0
        %313 = vst [vmem:[#allocation2 + $0xbc] sm:$0xf] 0
        %314 = vst [vmem:[#allocation2 + $0xc0] sm:$0xf] 0
        %315 = vst [vmem:[#allocation2 + $0xc4] sm:$0xf] 0
        %316 = vst [vmem:[#allocation2 + $0xc8] sm:$0xf] 0
        %317 = vst [vmem:[#allocation2 + $0xcc] sm:$0xf] 0
        %318 = vst [vmem:[#allocation2 + $0xd0] sm:$0xf] 0
        %319 = vst [vmem:[#allocation2 + $0xd4] sm:$0xf] 0
        %320 = vst [vmem:[#allocation2 + $0xd8] sm:$0xf] 0
        %321 = vst [vmem:[#allocation2 + $0xdc] sm:$0xf] 0
        %322 = vst [vmem:[#allocation2 + $0xe0] sm:$0xf] 0
        %323 = vst [vmem:[#allocation2 + $0xe4] sm:$0xf] 0
        %324 = vst [vmem:[#allocation2 + $0xe8] sm:$0xf] 0
        %325 = vst [vmem:[#allocation2 + $0xec] sm:$0xf] 0
        %326 = vst [vmem:[#allocation2 + $0xf0] sm:$0xf] 0
        %327 = vst [vmem:[#allocation2 + $0xf4] sm:$0xf] 0
        %328 = vst [vmem:[#allocation2 + $0xf8] sm:$0xf] 0
        %329 = vst [vmem:[#allocation2 + $0xfc] sm:$0xf] 0
        %330 = vst [vmem:[#allocation2 + $0x100] sm:$0xf] 0
        %331 = vst [vmem:[#allocation2 + $0x104] sm:$0xf] 0
        %332 = vst [vmem:[#allocation2 + $0x108] sm:$0xf] 0
        %333 = vst [vmem:[#allocation2 + $0x10c] sm:$0xf] 0
        %334 = vst [vmem:[#allocation2 + $0x110] sm:$0xf] 0
        %335 = vst [vmem:[#allocation2 + $0x114] sm:$0xf] 0
        %336 = vst [vmem:[#allocation2 + $0x118] sm:$0xf] 0
        %337 = vst [vmem:[#allocation2 + $0x11c] sm:$0xf] 0
        %v338 = vld [vmem:[%s245] sm:$0xff]
        %v339 = vld [vmem:[%s245 + $0x8] sm:$0xff]
        %v340 = vld [vmem:[%s245 + $0x10] sm:$0xff]
        %v341 = vld [vmem:[%s245 + $0x18] sm:$0xff]
        %v342 = vld [vmem:[%s245 + $0x20] sm:$0xff]
        %v343 = vld [vmem:[%s245 + $0x28] sm:$0xff]
        %v344 = vld [vmem:[%s245 + $0x30] sm:$0xff]
        %v345 = vld [vmem:[%s245 + $0x38] sm:$0xff]
        %v346 = vld [vmem:[%s1] sm:$0x1]
        %v348 = vperm.slane %v346, 0
        %v350 = vmul.f32 %v338, %v348
        %v351 = vmul.f32 %v339, %v348
        %v352 = vmul.f32 %v340, %v348
        %v353 = vmul.f32 %v341, %v348
        %v354 = vmul.f32 %v342, %v348
        %v355 = vmul.f32 %v343, %v348
        %v356 = vmul.f32 %v344, %v348
        %v357 = vmul.f32 %v345, %v348
        %v358 = vld [vmem:[%s2] sm:$0x1]
        %v360 = vperm.slane %v358, 0
        %v362 = vadd.f32 %v350, %v360
        %v363 = vadd.f32 %v351, %v360
        %v364 = vadd.f32 %v352, %v360
        %v365 = vadd.f32 %v353, %v360
        %v366 = vadd.f32 %v354, %v360
        %v367 = vadd.f32 %v355, %v360
        %v368 = vadd.f32 %v356, %v360
        %v369 = vadd.f32 %v357, %v360
        %v370 = vmax.f32 %v362, 0.0
        %v371 = vmax.f32 %v363, 0.0
        %v372 = vmax.f32 %v364, 0.0
        %v373 = vmax.f32 %v365, 0.0
        %v374 = vmax.f32 %v366, 0.0
        %v375 = vmax.f32 %v367, 0.0
        %v376 = vmax.f32 %v368, 0.0
        %v377 = vmax.f32 %v369, 0.0
        %v378 = vpack.c.bf16 0.0, 0.0
        %v379 = vpack.c.bf16 %v370, %v370
        %v380 = vpack.c.bf16 %v371, %v371
        %v381 = vpack.c.bf16 %v372, %v372
        %v382 = vpack.c.bf16 %v373, %v373
        %v383 = vpack.c.bf16 %v374, %v374
        %v384 = vpack.c.bf16 %v375, %v375
        %v385 = vpack.c.bf16 %v376, %v376
        %v386 = vpack.c.bf16 %v377, %v377
        %s387 = scalar_lea.vmem [#allocation2], 16
        %388 = vst [vmem:[%s387] sm:$0xf] %v378
        %389 = vst [vmem:[%s387 + $0x4] sm:$0xf] %v379
        %390 = vst [vmem:[%s387 + $0x8] sm:$0xf] %v380
        %391 = vst [vmem:[%s387 + $0xc] sm:$0xf] %v378
        %392 = vst [vmem:[%s387 + $0x10] sm:$0xf] %v378
        %393 = vst [vmem:[%s387 + $0x14] sm:$0xf] %v381
        %394 = vst [vmem:[%s387 + $0x18] sm:$0xf] %v382
        %395 = vst [vmem:[%s387 + $0x1c] sm:$0xf] %v378
        %396 = vst [vmem:[%s387 + $0x20] sm:$0xf] %v378
        %397 = vst [vmem:[%s387 + $0x24] sm:$0xf] %v383
        %398 = vst [vmem:[%s387 + $0x28] sm:$0xf] %v384
        %399 = vst [vmem:[%s387 + $0x2c] sm:$0xf] %v378
        %400 = vst [vmem:[%s387 + $0x30] sm:$0xf] %v378
        %401 = vst [vmem:[%s387 + $0x34] sm:$0xf] %v385
        %402 = vst [vmem:[%s387 + $0x38] sm:$0xf] %v386
        %403 = vst [vmem:[%s387 + $0x3c] sm:$0xf] %v378
        %s404 = scalar_lea.vmem %s245, 64
        %v405 = vld [vmem:[%s404] sm:$0xff]
        %v406 = vld [vmem:[%s404 + $0x8] sm:$0xff]
        %v407 = vld [vmem:[%s404 + $0x10] sm:$0xff]
        %v408 = vld [vmem:[%s404 + $0x18] sm:$0xff]
        %v409 = vld [vmem:[%s404 + $0x20] sm:$0xff]
        %v410 = vld [vmem:[%s404 + $0x28] sm:$0xff]
        %v411 = vld [vmem:[%s404 + $0x30] sm:$0xff]
        %v412 = vld [vmem:[%s404 + $0x38] sm:$0xff]
        %v413 = vld [vmem:[%s1] sm:$0x1]
        %v415 = vperm.slane %v413, 0
        %v417 = vmul.f32 %v405, %v415
        %v418 = vmul.f32 %v406, %v415
        %v419 = vmul.f32 %v407, %v415
        %v420 = vmul.f32 %v408, %v415
        %v421 = vmul.f32 %v409, %v415
        %v422 = vmul.f32 %v410, %v415
        %v423 = vmul.f32 %v411, %v415
        %v424 = vmul.f32 %v412, %v415
        %v425 = vld [vmem:[%s2] sm:$0x1]
        %v427 = vperm.slane %v425, 0
        %v429 = vadd.f32 %v417, %v427
        %v430 = vadd.f32 %v418, %v427
        %v431 = vadd.f32 %v419, %v427
        %v432 = vadd.f32 %v420, %v427
        %v433 = vadd.f32 %v421, %v427
        %v434 = vadd.f32 %v422, %v427
        %v435 = vadd.f32 %v423, %v427
        %v436 = vadd.f32 %v424, %v427
        %v437 = vmax.f32 %v429, 0.0
        %v438 = vmax.f32 %v430, 0.0
        %v439 = vmax.f32 %v431, 0.0
        %v440 = vmax.f32 %v432, 0.0
        %v441 = vmax.f32 %v433, 0.0
        %v442 = vmax.f32 %v434, 0.0
        %v443 = vmax.f32 %v435, 0.0
        %v444 = vmax.f32 %v436, 0.0
        %v445 = vpack.c.bf16 %v437, %v437
        %v446 = vpack.c.bf16 %v438, %v438
        %v447 = vpack.c.bf16 %v439, %v439
        %v448 = vpack.c.bf16 %v440, %v440
        %v449 = vpack.c.bf16 %v441, %v441
        %v450 = vpack.c.bf16 %v442, %v442
        %v451 = vpack.c.bf16 %v443, %v443
        %v452 = vpack.c.bf16 %v444, %v444
        %s453 = scalar_lea.vmem [#allocation2], 80
        %454 = vst [vmem:[%s453] sm:$0xf] %v378
        %455 = vst [vmem:[%s453 + $0x4] sm:$0xf] %v445
        %456 = vst [vmem:[%s453 + $0x8] sm:$0xf] %v446
        %457 = vst [vmem:[%s453 + $0xc] sm:$0xf] %v378
        %458 = vst [vmem:[%s453 + $0x10] sm:$0xf] %v378
        %459 = vst [vmem:[%s453 + $0x14] sm:$0xf] %v447
        %460 = vst [vmem:[%s453 + $0x18] sm:$0xf] %v448
        %461 = vst [vmem:[%s453 + $0x1c] sm:$0xf] %v378
        %462 = vst [vmem:[%s453 + $0x20] sm:$0xf] %v378
        %463 = vst [vmem:[%s453 + $0x24] sm:$0xf] %v449
        %464 = vst [vmem:[%s453 + $0x28] sm:$0xf] %v450
        %465 = vst [vmem:[%s453 + $0x2c] sm:$0xf] %v378
        %466 = vst [vmem:[%s453 + $0x30] sm:$0xf] %v378
        %467 = vst [vmem:[%s453 + $0x34] sm:$0xf] %v451
        %468 = vst [vmem:[%s453 + $0x38] sm:$0xf] %v452
        %469 = vst [vmem:[%s453 + $0x3c] sm:$0xf] %v378
        %s470 = scalar_lea.vmem %s245, 128
        %v471 = vld [vmem:[%s470] sm:$0xff]
        %v472 = vld [vmem:[%s470 + $0x8] sm:$0xff]
        %v473 = vld [vmem:[%s470 + $0x10] sm:$0xff]
        %v474 = vld [vmem:[%s470 + $0x18] sm:$0xff]
        %v475 = vld [vmem:[%s470 + $0x20] sm:$0xff]
        %v476 = vld [vmem:[%s470 + $0x28] sm:$0xff]
        %v477 = vld [vmem:[%s470 + $0x30] sm:$0xff]
        %v478 = vld [vmem:[%s470 + $0x38] sm:$0xff]
        %v479 = vld [vmem:[%s1] sm:$0x1]
        %v481 = vperm.slane %v479, 0
        %v483 = vmul.f32 %v471, %v481
        %v484 = vmul.f32 %v472, %v481
        %v485 = vmul.f32 %v473, %v481
        %v486 = vmul.f32 %v474, %v481
        %v487 = vmul.f32 %v475, %v481
        %v488 = vmul.f32 %v476, %v481
        %v489 = vmul.f32 %v477, %v481
        %v490 = vmul.f32 %v478, %v481
        %v491 = vld [vmem:[%s2] sm:$0x1]
        %v493 = vperm.slane %v491, 0
        %v495 = vadd.f32 %v483, %v493
        %v496 = vadd.f32 %v484, %v493
        %v497 = vadd.f32 %v485, %v493
        %v498 = vadd.f32 %v486, %v493
        %v499 = vadd.f32 %v487, %v493
        %v500 = vadd.f32 %v488, %v493
        %v501 = vadd.f32 %v489, %v493
        %v502 = vadd.f32 %v490, %v493
        %v503 = vmax.f32 %v495, 0.0
        %v504 = vmax.f32 %v496, 0.0
        %v505 = vmax.f32 %v497, 0.0
        %v506 = vmax.f32 %v498, 0.0
        %v507 = vmax.f32 %v499, 0.0
        %v508 = vmax.f32 %v500, 0.0
        %v509 = vmax.f32 %v501, 0.0
        %v510 = vmax.f32 %v502, 0.0
        %v511 = vpack.c.bf16 %v503, %v503
        %v512 = vpack.c.bf16 %v504, %v504
        %v513 = vpack.c.bf16 %v505, %v505
        %v514 = vpack.c.bf16 %v506, %v506
        %v515 = vpack.c.bf16 %v507, %v507
        %v516 = vpack.c.bf16 %v508, %v508
        %v517 = vpack.c.bf16 %v509, %v509
        %v518 = vpack.c.bf16 %v510, %v510
        %s519 = scalar_lea.vmem [#allocation2], 144
        %520 = vst [vmem:[%s519] sm:$0xf] %v378
        %521 = vst [vmem:[%s519 + $0x4] sm:$0xf] %v511
        %522 = vst [vmem:[%s519 + $0x8] sm:$0xf] %v512
        %523 = vst [vmem:[%s519 + $0xc] sm:$0xf] %v378
        %524 = vst [vmem:[%s519 + $0x10] sm:$0xf] %v378
        %525 = vst [vmem:[%s519 + $0x14] sm:$0xf] %v513
        %526 = vst [vmem:[%s519 + $0x18] sm:$0xf] %v514
        %527 = vst [vmem:[%s519 + $0x1c] sm:$0xf] %v378
        %528 = vst [vmem:[%s519 + $0x20] sm:$0xf] %v378
        %529 = vst [vmem:[%s519 + $0x24] sm:$0xf] %v515
        %530 = vst [vmem:[%s519 + $0x28] sm:$0xf] %v516
        %531 = vst [vmem:[%s519 + $0x2c] sm:$0xf] %v378
        %532 = vst [vmem:[%s519 + $0x30] sm:$0xf] %v378
        %533 = vst [vmem:[%s519 + $0x34] sm:$0xf] %v517
        %534 = vst [vmem:[%s519 + $0x38] sm:$0xf] %v518
        %535 = vst [vmem:[%s519 + $0x3c] sm:$0xf] %v378
        %s536 = scalar_lea.vmem %s245, 192
        %v537 = vld [vmem:[%s536] sm:$0xff]
        %v538 = vld [vmem:[%s536 + $0x8] sm:$0xff]
        %v539 = vld [vmem:[%s536 + $0x10] sm:$0xff]
        %v540 = vld [vmem:[%s536 + $0x18] sm:$0xff]
        %v541 = vld [vmem:[%s536 + $0x20] sm:$0xff]
        %v542 = vld [vmem:[%s536 + $0x28] sm:$0xff]
        %v543 = vld [vmem:[%s536 + $0x30] sm:$0xff]
        %v544 = vld [vmem:[%s536 + $0x38] sm:$0xff]
        %v545 = vld [vmem:[%s1] sm:$0x1]
        %v547 = vperm.slane %v545, 0
        %v549 = vmul.f32 %v537, %v547
        %v550 = vmul.f32 %v538, %v547
        %v551 = vmul.f32 %v539, %v547
        %v552 = vmul.f32 %v540, %v547
        %v553 = vmul.f32 %v541, %v547
        %v554 = vmul.f32 %v542, %v547
        %v555 = vmul.f32 %v543, %v547
        %v556 = vmul.f32 %v544, %v547
        %v557 = vld [vmem:[%s2] sm:$0x1]
        %v559 = vperm.slane %v557, 0
        %v561 = vadd.f32 %v549, %v559
        %v562 = vadd.f32 %v550, %v559
        %v563 = vadd.f32 %v551, %v559
        %v564 = vadd.f32 %v552, %v559
        %v565 = vadd.f32 %v553, %v559
        %v566 = vadd.f32 %v554, %v559
        %v567 = vadd.f32 %v555, %v559
        %v568 = vadd.f32 %v556, %v559
        %v569 = vmax.f32 %v561, 0.0
        %v570 = vmax.f32 %v562, 0.0
        %v571 = vmax.f32 %v563, 0.0
        %v572 = vmax.f32 %v564, 0.0
        %v573 = vmax.f32 %v565, 0.0
        %v574 = vmax.f32 %v566, 0.0
        %v575 = vmax.f32 %v567, 0.0
        %v576 = vmax.f32 %v568, 0.0
        %v577 = vpack.c.bf16 %v569, %v569
        %v578 = vpack.c.bf16 %v570, %v570
        %v579 = vpack.c.bf16 %v571, %v571
        %v580 = vpack.c.bf16 %v572, %v572
        %v581 = vpack.c.bf16 %v573, %v573
        %v582 = vpack.c.bf16 %v574, %v574
        %v583 = vpack.c.bf16 %v575, %v575
        %v584 = vpack.c.bf16 %v576, %v576
        %s585 = scalar_lea.vmem [#allocation2], 208
        %586 = vst [vmem:[%s585] sm:$0xf] %v378
        %587 = vst [vmem:[%s585 + $0x4] sm:$0xf] %v577
        %588 = vst [vmem:[%s585 + $0x8] sm:$0xf] %v578
        %589 = vst [vmem:[%s585 + $0xc] sm:$0xf] %v378
        %590 = vst [vmem:[%s585 + $0x10] sm:$0xf] %v378
        %591 = vst [vmem:[%s585 + $0x14] sm:$0xf] %v579
        %592 = vst [vmem:[%s585 + $0x18] sm:$0xf] %v580
        %593 = vst [vmem:[%s585 + $0x1c] sm:$0xf] %v378
        %594 = vst [vmem:[%s585 + $0x20] sm:$0xf] %v378
        %595 = vst [vmem:[%s585 + $0x24] sm:$0xf] %v581
        %596 = vst [vmem:[%s585 + $0x28] sm:$0xf] %v582
        %597 = vst [vmem:[%s585 + $0x2c] sm:$0xf] %v378
        %598 = vst [vmem:[%s585 + $0x30] sm:$0xf] %v378
        %599 = vst [vmem:[%s585 + $0x34] sm:$0xf] %v583
        %600 = vst [vmem:[%s585 + $0x38] sm:$0xf] %v584
        %601 = vst [vmem:[%s585 + $0x3c] sm:$0xf] %v378
      $region40: #{basic_block_forward.4} parent=35 // pred_fallthru
        _
      %s602 = smul.u32 %s22, 4
      %s603 = smul.u32 %s602, 4
      %s604 = smul.addr %s603, 4
      %s605 = scalar_lea.vmem [#allocation2], %s604
      %v606 = vld [vmem:[%s605] sm:$0xf]
      %v607 = vld [vmem:[%s605 + $0x4] sm:$0xf]
      %v608 = vld [vmem:[%s605 + $0x8] sm:$0xf]
      %v609 = vld [vmem:[%s605 + $0xc] sm:$0xf]
      %v610 = vld [vmem:[%s605 + $0x10] sm:$0xf]
      %v611 = vld [vmem:[%s605 + $0x14] sm:$0xf]
      %v612 = vld [vmem:[%s605 + $0x18] sm:$0xf]
      %v613 = vld [vmem:[%s605 + $0x1c] sm:$0xf]
      %v614 = vld [vmem:[%s605 + $0x20] sm:$0xf]
      %v615 = vld [vmem:[%s605 + $0x24] sm:$0xf]
      %v616 = vld [vmem:[%s605 + $0x28] sm:$0xf]
      %v617 = vld [vmem:[%s605 + $0x2c] sm:$0xf]
      %v618 = vld [vmem:[%s605 + $0x30] sm:$0xf]
      %v619 = vld [vmem:[%s605 + $0x34] sm:$0xf]
      %v620 = vld [vmem:[%s605 + $0x38] sm:$0xf]
      %v621 = vld [vmem:[%s605 + $0x3c] sm:$0xf]
      %vm622 = vsmask.f32 256
      %vm623 = vsmask.f32 4368
      %vm624 = vmor %vm622, %vm623
      %v626 = vshrl.u32 %v606, 16
      %v628 = vrot.slane %v626, 7
      %v629 = vrot.slane %v628, 4
      %v631 = vshrl.u32 %v607, 16
      %v633 = vrot.slane %v631, 7
      %v634 = vshll.u32 %v607, 16
      %v636 = vor.u32 %v633, %v634
      %v637 = vsel %vm624, %v629, %v636
      %v638 = vrot.slane %v633, 4
      %v640 = vshrl.u32 %v608, 16
      %v642 = vrot.slane %v640, 7
      %v643 = vshll.u32 %v608, 16
      %v645 = vor.u32 %v642, %v643
      %v646 = vsel %vm624, %v638, %v645
      %v648 = vshrl.u32 %v610, 16
      %v650 = vrot.slane %v648, 7
      %v651 = vrot.slane %v650, 4
      %v653 = vshrl.u32 %v611, 16
      %v655 = vrot.slane %v653, 7
      %v656 = vshll.u32 %v611, 16
      %v658 = vor.u32 %v655, %v656
      %v659 = vsel %vm624, %v651, %v658
      %v660 = vrot.slane %v655, 4
      %v662 = vshrl.u32 %v612, 16
      %v664 = vrot.slane %v662, 7
      %v665 = vshll.u32 %v612, 16
      %v667 = vor.u32 %v664, %v665
      %v668 = vsel %vm624, %v660, %v667
      %v670 = vshrl.u32 %v614, 16
      %v672 = vrot.slane %v670, 7
      %v673 = vrot.slane %v672, 4
      %v675 = vshrl.u32 %v615, 16
      %v677 = vrot.slane %v675, 7
      %v678 = vshll.u32 %v615, 16
      %v680 = vor.u32 %v677, %v678
      %v681 = vsel %vm624, %v673, %v680
      %v682 = vrot.slane %v677, 4
      %v684 = vshrl.u32 %v616, 16
      %v686 = vrot.slane %v684, 7
      %v687 = vshll.u32 %v616, 16
      %v689 = vor.u32 %v686, %v687
      %v690 = vsel %vm624, %v682, %v689
      %v692 = vshrl.u32 %v618, 16
      %v694 = vrot.slane %v692, 7
      %v695 = vrot.slane %v694, 4
      %v697 = vshrl.u32 %v619, 16
      %v699 = vrot.slane %v697, 7
      %v700 = vshll.u32 %v619, 16
      %v702 = vor.u32 %v699, %v700
      %v703 = vsel %vm624, %v695, %v702
      %v704 = vrot.slane %v699, 4
      %v706 = vshrl.u32 %v620, 16
      %v708 = vrot.slane %v706, 7
      %v709 = vshll.u32 %v620, 16
      %v711 = vor.u32 %v708, %v709
      %v712 = vsel %vm624, %v704, %v711
      %v713 = vld [vmem:[%s3] sm:$0xf]
      %v714 = vld [vmem:[%s3 + $0x4] sm:$0xf]
      %v715 = vld [vmem:[%s3 + $0x8] sm:$0xf]
      %v716 = vld [vmem:[%s3 + $0xc] sm:$0xf]
      %v717 = vld [vmem:[%s3 + $0x10] sm:$0xf]
      %v718 = vld [vmem:[%s3 + $0x14] sm:$0xf]
      %v719 = vld [vmem:[%s3 + $0x18] sm:$0xf]
      %v720 = vld [vmem:[%s3 + $0x1c] sm:$0xf]
      %v721 = vld [vmem:[%s3 + $0x20] sm:$0xf]
      %v722 = vld [vmem:[%s3 + $0x24] sm:$0xf]
      %v723 = vld [vmem:[%s3 + $0x28] sm:$0xf]
      %v724 = vld [vmem:[%s3 + $0x2c] sm:$0xf]
      %v725 = vld [vmem:[%s3 + $0x30] sm:$0xf]
      %v726 = vld [vmem:[%s3 + $0x34] sm:$0xf]
      %v727 = vld [vmem:[%s3 + $0x38] sm:$0xf]
      %v728 = vld [vmem:[%s3 + $0x3c] sm:$0xf]
      %s729 = scalar_lea.vmem %s3, 64
      %v730 = vld [vmem:[%s729] sm:$0xf]
      %v731 = vld [vmem:[%s729 + $0x4] sm:$0xf]
      %v732 = vld [vmem:[%s729 + $0x8] sm:$0xf]
      %v733 = vld [vmem:[%s729 + $0xc] sm:$0xf]
      %v734 = vld [vmem:[%s729 + $0x10] sm:$0xf]
      %v735 = vld [vmem:[%s729 + $0x14] sm:$0xf]
      %v736 = vld [vmem:[%s729 + $0x18] sm:$0xf]
      %v737 = vld [vmem:[%s729 + $0x1c] sm:$0xf]
      %v738 = vld [vmem:[%s729 + $0x20] sm:$0xf]
      %v739 = vld [vmem:[%s729 + $0x24] sm:$0xf]
      %v740 = vld [vmem:[%s729 + $0x28] sm:$0xf]
      %v741 = vld [vmem:[%s729 + $0x2c] sm:$0xf]
      %v742 = vld [vmem:[%s729 + $0x30] sm:$0xf]
      %v743 = vld [vmem:[%s729 + $0x34] sm:$0xf]
      %v744 = vld [vmem:[%s729 + $0x38] sm:$0xf]
      %v745 = vld [vmem:[%s729 + $0x3c] sm:$0xf]
      %v754 = vunpack.c.l.b16 %v607
      %v755 = vunpack.c.l.b16 %v608
      %v756 = vunpack.c.l.b16 %v611
      %v757 = vunpack.c.l.b16 %v612
      %v758 = vunpack.c.l.b16 %v615
      %v759 = vunpack.c.l.b16 %v616
      %v760 = vunpack.c.l.b16 %v619
      %v761 = vunpack.c.l.b16 %v620
      %v762 = vpack.c.b16 %v755, %v754
      %v763 = vpack.c.b16 %v757, %v756
      %v764 = vpack.c.b16 %v759, %v758
      %v765 = vpack.c.b16 %v761, %v760
      %v786 = vunpack.c.l.b16 %v730
      %v787 = vunpack.c.l.b16 %v731
      %v788 = vunpack.c.l.b16 %v732
      %v789 = vunpack.c.l.b16 %v733
      %v790 = vunpack.c.l.b16 %v734
      %v791 = vunpack.c.l.b16 %v735
      %v792 = vunpack.c.l.b16 %v736
      %v793 = vunpack.c.l.b16 %v737
      %v794 = vunpack.c.l.b16 %v738
      %v795 = vunpack.c.l.b16 %v739
      %v796 = vunpack.c.l.b16 %v740
      %v797 = vunpack.c.l.b16 %v741
      %v798 = vunpack.c.l.b16 %v742
      %v799 = vunpack.c.l.b16 %v743
      %v800 = vunpack.c.l.b16 %v744
      %v801 = vunpack.c.l.b16 %v745
      %v802 = vpack.c.b16 %v787, %v786
      %v803 = vpack.c.b16 %v789, %v788
      %v804 = vpack.c.b16 %v791, %v790
      %v805 = vpack.c.b16 %v793, %v792
      %v806 = vpack.c.b16 %v795, %v794
      %v807 = vpack.c.b16 %v797, %v796
      %v808 = vpack.c.b16 %v799, %v798
      %v809 = vpack.c.b16 %v801, %v800
      %818 = vmatpush.bf16.msra.mxu0 %v809
      %819 = vmatpush.bf16.msra.mxu0 %v808
      %820 = vmatpush.bf16.msra.mxu0 %v807
      %821 = vmatpush.bf16.msra.mxu0 %v806
      %822 = vmatpush.bf16.msra.mxu0 %v805
      %823 = vmatpush.bf16.msra.mxu0 %v804
      %824 = vmatpush.bf16.msra.mxu0 %v803
      %825 = vmatpush.bf16.msra.mxu0 %v802
      %826 = vmatmul.bf16.gmra.mxu0 %v762
      %v827 = vpop.f32.mrf.mxu0
      %v828 = vadd.f32 0.0, %v827
      %v829 = vpop.f32.mrf.mxu0
      %v830 = vadd.f32 0.0, %v829
      %831 = vmatmul.bf16.gmra.mxu0 %v763
      %v832 = vpop.f32.mrf.mxu0
      %v833 = vadd.f32 0.0, %v832
      %v834 = vpop.f32.mrf.mxu0
      %v835 = vadd.f32 0.0, %v834
      %836 = vmatmul.bf16.gmra.mxu0 %v764
      %v837 = vpop.f32.mrf.mxu0
      %v838 = vadd.f32 0.0, %v837
      %v839 = vpop.f32.mrf.mxu0
      %v840 = vadd.f32 0.0, %v839
      %841 = vmatmul.bf16.gmra.mxu0 %v765
      %v842 = vpop.f32.mrf.mxu0
      %v843 = vadd.f32 0.0, %v842
      %v844 = vpop.f32.mrf.mxu0
      %v845 = vadd.f32 0.0, %v844
      %846 = vdwg.mxu0
      %v847 = vunpack.c.l.b16 %v637
      %v848 = vunpack.c.l.b16 %v646
      %v849 = vunpack.c.l.b16 %v659
      %v850 = vunpack.c.l.b16 %v668
      %v851 = vunpack.c.l.b16 %v681
      %v852 = vunpack.c.l.b16 %v690
      %v853 = vunpack.c.l.b16 %v703
      %v854 = vunpack.c.l.b16 %v712
      %v855 = vpack.c.b16 %v848, %v847
      %v856 = vpack.c.b16 %v850, %v849
      %v857 = vpack.c.b16 %v852, %v851
      %v858 = vpack.c.b16 %v854, %v853
      %v879 = vunpack.c.l.b16 %v713
      %v880 = vunpack.c.l.b16 %v714
      %v881 = vunpack.c.l.b16 %v715
      %v882 = vunpack.c.l.b16 %v716
      %v883 = vunpack.c.l.b16 %v717
      %v884 = vunpack.c.l.b16 %v718
      %v885 = vunpack.c.l.b16 %v719
      %v886 = vunpack.c.l.b16 %v720
      %v887 = vunpack.c.l.b16 %v721
      %v888 = vunpack.c.l.b16 %v722
      %v889 = vunpack.c.l.b16 %v723
      %v890 = vunpack.c.l.b16 %v724
      %v891 = vunpack.c.l.b16 %v725
      %v892 = vunpack.c.l.b16 %v726
      %v893 = vunpack.c.l.b16 %v727
      %v894 = vunpack.c.l.b16 %v728
      %v895 = vpack.c.b16 %v880, %v879
      %v896 = vpack.c.b16 %v882, %v881
      %v897 = vpack.c.b16 %v884, %v883
      %v898 = vpack.c.b16 %v886, %v885
      %v899 = vpack.c.b16 %v888, %v887
      %v900 = vpack.c.b16 %v890, %v889
      %v901 = vpack.c.b16 %v892, %v891
      %v902 = vpack.c.b16 %v894, %v893
      %911 = vmatpush.bf16.msra.mxu0 %v902
      %912 = vmatpush.bf16.msra.mxu0 %v901
      %913 = vmatpush.bf16.msra.mxu0 %v900
      %914 = vmatpush.bf16.msra.mxu0 %v899
      %915 = vmatpush.bf16.msra.mxu0 %v898
      %916 = vmatpush.bf16.msra.mxu0 %v897
      %917 = vmatpush.bf16.msra.mxu0 %v896
      %918 = vmatpush.bf16.msra.mxu0 %v895
      %919 = vmatmul.bf16.gmra.mxu0 %v855
      %v920 = vpop.f32.mrf.mxu0
      %v921 = vadd.f32 %v828, %v920
      %v922 = vpop.f32.mrf.mxu0
      %v923 = vadd.f32 %v830, %v922
      %924 = vmatmul.bf16.gmra.mxu0 %v856
      %v925 = vpop.f32.mrf.mxu0
      %v926 = vadd.f32 %v833, %v925
      %v927 = vpop.f32.mrf.mxu0
      %v928 = vadd.f32 %v835, %v927
      %929 = vmatmul.bf16.gmra.mxu0 %v857
      %v930 = vpop.f32.mrf.mxu0
      %v931 = vadd.f32 %v838, %v930
      %v932 = vpop.f32.mrf.mxu0
      %v933 = vadd.f32 %v840, %v932
      %934 = vmatmul.bf16.gmra.mxu0 %v858
      %v935 = vpop.f32.mrf.mxu0
      %v936 = vadd.f32 %v843, %v935
      %v937 = vpop.f32.mrf.mxu0
      %v938 = vadd.f32 %v845, %v937
      %939 = vdwg.mxu0
      %vm940 = vsmask.f32 3328
      %vm941 = vsmask.f32 7440
      %vm942 = vmor %vm940, %vm941
      %v943 = vrot.slane %v631, 4
      %v944 = vrot.slane %v634, 5
      %v945 = vor.u32 %v943, %v944
      %v946 = vrot.slane %v945, 4
      %v947 = vrot.slane %v643, 5
      %v948 = vsel %vm942, %v946, %v947
      %v949 = vrot.slane %v640, 4
      %v950 = vor.u32 %v949, %v947
      %v951 = vrot.slane %v950, 4
      %v953 = vshll.u32 %v609, 16
      %v955 = vrot.slane %v953, 5
      %v956 = vsel %vm942, %v951, %v955
      %v957 = vrot.slane %v653, 4
      %v958 = vrot.slane %v656, 5
      %v959 = vor.u32 %v957, %v958
      %v960 = vrot.slane %v959, 4
      %v961 = vrot.slane %v665, 5
      %v962 = vsel %vm942, %v960, %v961
      %v963 = vrot.slane %v662, 4
      %v964 = vor.u32 %v963, %v961
      %v965 = vrot.slane %v964, 4
      %v967 = vshll.u32 %v613, 16
      %v969 = vrot.slane %v967, 5
      %v970 = vsel %vm942, %v965, %v969
      %v971 = vrot.slane %v675, 4
      %v972 = vrot.slane %v678, 5
      %v973 = vor.u32 %v971, %v972
      %v974 = vrot.slane %v973, 4
      %v975 = vrot.slane %v687, 5
      %v976 = vsel %vm942, %v974, %v975
      %v977 = vrot.slane %v684, 4
      %v978 = vor.u32 %v977, %v975
      %v979 = vrot.slane %v978, 4
      %v981 = vshll.u32 %v617, 16
      %v983 = vrot.slane %v981, 5
      %v984 = vsel %vm942, %v979, %v983
      %v985 = vrot.slane %v697, 4
      %v986 = vrot.slane %v700, 5
      %v987 = vor.u32 %v985, %v986
      %v988 = vrot.slane %v987, 4
      %v989 = vrot.slane %v709, 5
      %v990 = vsel %vm942, %v988, %v989
      %v991 = vrot.slane %v706, 4
      %v992 = vor.u32 %v991, %v989
      %v993 = vrot.slane %v992, 4
      %v995 = vshll.u32 %v621, 16
      %v997 = vrot.slane %v995, 5
      %v998 = vsel %vm942, %v993, %v997
      %s999 = scalar_lea.vmem %s3, 128
      %v1000 = vld [vmem:[%s999] sm:$0xf]
      %v1001 = vld [vmem:[%s999 + $0x4] sm:$0xf]
      %v1002 = vld [vmem:[%s999 + $0x8] sm:$0xf]
      %v1003 = vld [vmem:[%s999 + $0xc] sm:$0xf]
      %v1004 = vld [vmem:[%s999 + $0x10] sm:$0xf]
      %v1005 = vld [vmem:[%s999 + $0x14] sm:$0xf]
      %v1006 = vld [vmem:[%s999 + $0x18] sm:$0xf]
      %v1007 = vld [vmem:[%s999 + $0x1c] sm:$0xf]
      %v1008 = vld [vmem:[%s999 + $0x20] sm:$0xf]
      %v1009 = vld [vmem:[%s999 + $0x24] sm:$0xf]
      %v1010 = vld [vmem:[%s999 + $0x28] sm:$0xf]
      %v1011 = vld [vmem:[%s999 + $0x2c] sm:$0xf]
      %v1012 = vld [vmem:[%s999 + $0x30] sm:$0xf]
      %v1013 = vld [vmem:[%s999 + $0x34] sm:$0xf]
      %v1014 = vld [vmem:[%s999 + $0x38] sm:$0xf]
      %v1015 = vld [vmem:[%s999 + $0x3c] sm:$0xf]
      %v1016 = vunpack.c.l.b16 %v948
      %v1017 = vunpack.c.l.b16 %v956
      %v1018 = vunpack.c.l.b16 %v962
      %v1019 = vunpack.c.l.b16 %v970
      %v1020 = vunpack.c.l.b16 %v976
      %v1021 = vunpack.c.l.b16 %v984
      %v1022 = vunpack.c.l.b16 %v990
      %v1023 = vunpack.c.l.b16 %v998
      %v1024 = vpack.c.b16 %v1017, %v1016
      %v1025 = vpack.c.b16 %v1019, %v1018
      %v1026 = vpack.c.b16 %v1021, %v1020
      %v1027 = vpack.c.b16 %v1023, %v1022
      %v1048 = vunpack.c.l.b16 %v1000
      %v1049 = vunpack.c.l.b16 %v1001
      %v1050 = vunpack.c.l.b16 %v1002
      %v1051 = vunpack.c.l.b16 %v1003
      %v1052 = vunpack.c.l.b16 %v1004
      %v1053 = vunpack.c.l.b16 %v1005
      %v1054 = vunpack.c.l.b16 %v1006
      %v1055 = vunpack.c.l.b16 %v1007
      %v1056 = vunpack.c.l.b16 %v1008
      %v1057 = vunpack.c.l.b16 %v1009
      %v1058 = vunpack.c.l.b16 %v1010
      %v1059 = vunpack.c.l.b16 %v1011
      %v1060 = vunpack.c.l.b16 %v1012
      %v1061 = vunpack.c.l.b16 %v1013
      %v1062 = vunpack.c.l.b16 %v1014
      %v1063 = vunpack.c.l.b16 %v1015
      %v1064 = vpack.c.b16 %v1049, %v1048
      %v1065 = vpack.c.b16 %v1051, %v1050
      %v1066 = vpack.c.b16 %v1053, %v1052
      %v1067 = vpack.c.b16 %v1055, %v1054
      %v1068 = vpack.c.b16 %v1057, %v1056
      %v1069 = vpack.c.b16 %v1059, %v1058
      %v1070 = vpack.c.b16 %v1061, %v1060
      %v1071 = vpack.c.b16 %v1063, %v1062
      %1080 = vmatpush.bf16.msra.mxu0 %v1071
      %1081 = vmatpush.bf16.msra.mxu0 %v1070
      %1082 = vmatpush.bf16.msra.mxu0 %v1069
      %1083 = vmatpush.bf16.msra.mxu0 %v1068
      %1084 = vmatpush.bf16.msra.mxu0 %v1067
      %1085 = vmatpush.bf16.msra.mxu0 %v1066
      %1086 = vmatpush.bf16.msra.mxu0 %v1065
      %1087 = vmatpush.bf16.msra.mxu0 %v1064
      %1088 = vmatmul.bf16.gmra.mxu0 %v1024
      %v1089 = vpop.f32.mrf.mxu0
      %v1090 = vadd.f32 0.0, %v1089
      %v1091 = vpop.f32.mrf.mxu0
      %v1092 = vadd.f32 0.0, %v1091
      %1093 = vmatmul.bf16.gmra.mxu0 %v1025
      %v1094 = vpop.f32.mrf.mxu0
      %v1095 = vadd.f32 0.0, %v1094
      %v1096 = vpop.f32.mrf.mxu0
      %v1097 = vadd.f32 0.0, %v1096
      %1098 = vmatmul.bf16.gmra.mxu0 %v1026
      %v1099 = vpop.f32.mrf.mxu0
      %v1100 = vadd.f32 0.0, %v1099
      %v1101 = vpop.f32.mrf.mxu0
      %v1102 = vadd.f32 0.0, %v1101
      %1103 = vmatmul.bf16.gmra.mxu0 %v1027
      %v1104 = vpop.f32.mrf.mxu0
      %v1105 = vadd.f32 0.0, %v1104
      %v1106 = vpop.f32.mrf.mxu0
      %v1107 = vadd.f32 0.0, %v1106
      %1108 = vdwg.mxu0
      %v1109 = vadd.f32 %v921, %v1090
      %v1110 = vadd.f32 %v923, %v1092
      %v1111 = vadd.f32 %v926, %v1095
      %v1112 = vadd.f32 %v928, %v1097
      %v1113 = vadd.f32 %v931, %v1100
      %v1114 = vadd.f32 %v933, %v1102
      %v1115 = vadd.f32 %v936, %v1105
      %v1116 = vadd.f32 %v938, %v1107
      %s1117 = sadd.s32 %s602, 1
      %s1118 = smul.u32 %s1117, 4
      %s1119 = smul.addr %s1118, 4
      %s1120 = scalar_lea.vmem [#allocation2], %s1119
      %v1121 = vld [vmem:[%s1120] sm:$0xf]
      %v1122 = vld [vmem:[%s1120 + $0x4] sm:$0xf]
      %v1123 = vld [vmem:[%s1120 + $0x8] sm:$0xf]
      %v1124 = vld [vmem:[%s1120 + $0xc] sm:$0xf]
      %v1125 = vld [vmem:[%s1120 + $0x10] sm:$0xf]
      %v1126 = vld [vmem:[%s1120 + $0x14] sm:$0xf]
      %v1127 = vld [vmem:[%s1120 + $0x18] sm:$0xf]
      %v1128 = vld [vmem:[%s1120 + $0x1c] sm:$0xf]
      %v1129 = vld [vmem:[%s1120 + $0x20] sm:$0xf]
      %v1130 = vld [vmem:[%s1120 + $0x24] sm:$0xf]
      %v1131 = vld [vmem:[%s1120 + $0x28] sm:$0xf]
      %v1132 = vld [vmem:[%s1120 + $0x2c] sm:$0xf]
      %v1133 = vld [vmem:[%s1120 + $0x30] sm:$0xf]
      %v1134 = vld [vmem:[%s1120 + $0x34] sm:$0xf]
      %v1135 = vld [vmem:[%s1120 + $0x38] sm:$0xf]
      %v1136 = vld [vmem:[%s1120 + $0x3c] sm:$0xf]
      %v1138 = vshrl.u32 %v1121, 16
      %v1140 = vrot.slane %v1138, 7
      %v1141 = vrot.slane %v1140, 4
      %v1143 = vshrl.u32 %v1122, 16
      %v1145 = vrot.slane %v1143, 7
      %v1146 = vshll.u32 %v1122, 16
      %v1148 = vor.u32 %v1145, %v1146
      %v1149 = vsel %vm624, %v1141, %v1148
      %v1150 = vrot.slane %v1145, 4
      %v1152 = vshrl.u32 %v1123, 16
      %v1154 = vrot.slane %v1152, 7
      %v1155 = vshll.u32 %v1123, 16
      %v1157 = vor.u32 %v1154, %v1155
      %v1158 = vsel %vm624, %v1150, %v1157
      %v1160 = vshrl.u32 %v1125, 16
      %v1162 = vrot.slane %v1160, 7
      %v1163 = vrot.slane %v1162, 4
      %v1165 = vshrl.u32 %v1126, 16
      %v1167 = vrot.slane %v1165, 7
      %v1168 = vshll.u32 %v1126, 16
      %v1170 = vor.u32 %v1167, %v1168
      %v1171 = vsel %vm624, %v1163, %v1170
      %v1172 = vrot.slane %v1167, 4
      %v1174 = vshrl.u32 %v1127, 16
      %v1176 = vrot.slane %v1174, 7
      %v1177 = vshll.u32 %v1127, 16
      %v1179 = vor.u32 %v1176, %v1177
      %v1180 = vsel %vm624, %v1172, %v1179
      %v1182 = vshrl.u32 %v1129, 16
      %v1184 = vrot.slane %v1182, 7
      %v1185 = vrot.slane %v1184, 4
      %v1187 = vshrl.u32 %v1130, 16
      %v1189 = vrot.slane %v1187, 7
      %v1190 = vshll.u32 %v1130, 16
      %v1192 = vor.u32 %v1189, %v1190
      %v1193 = vsel %vm624, %v1185, %v1192
      %v1194 = vrot.slane %v1189, 4
      %v1196 = vshrl.u32 %v1131, 16
      %v1198 = vrot.slane %v1196, 7
      %v1199 = vshll.u32 %v1131, 16
      %v1201 = vor.u32 %v1198, %v1199
      %v1202 = vsel %vm624, %v1194, %v1201
      %v1204 = vshrl.u32 %v1133, 16
      %v1206 = vrot.slane %v1204, 7
      %v1207 = vrot.slane %v1206, 4
      %v1209 = vshrl.u32 %v1134, 16
      %v1211 = vrot.slane %v1209, 7
      %v1212 = vshll.u32 %v1134, 16
      %v1214 = vor.u32 %v1211, %v1212
      %v1215 = vsel %vm624, %v1207, %v1214
      %v1216 = vrot.slane %v1211, 4
      %v1218 = vshrl.u32 %v1135, 16
      %v1220 = vrot.slane %v1218, 7
      %v1221 = vshll.u32 %v1135, 16
      %v1223 = vor.u32 %v1220, %v1221
      %v1224 = vsel %vm624, %v1216, %v1223
      %s1225 = scalar_lea.vmem %s3, 192
      %v1226 = vld [vmem:[%s1225] sm:$0xf]
      %v1227 = vld [vmem:[%s1225 + $0x4] sm:$0xf]
      %v1228 = vld [vmem:[%s1225 + $0x8] sm:$0xf]
      %v1229 = vld [vmem:[%s1225 + $0xc] sm:$0xf]
      %v1230 = vld [vmem:[%s1225 + $0x10] sm:$0xf]
      %v1231 = vld [vmem:[%s1225 + $0x14] sm:$0xf]
      %v1232 = vld [vmem:[%s1225 + $0x18] sm:$0xf]
      %v1233 = vld [vmem:[%s1225 + $0x1c] sm:$0xf]
      %v1234 = vld [vmem:[%s1225 + $0x20] sm:$0xf]
      %v1235 = vld [vmem:[%s1225 + $0x24] sm:$0xf]
      %v1236 = vld [vmem:[%s1225 + $0x28] sm:$0xf]
      %v1237 = vld [vmem:[%s1225 + $0x2c] sm:$0xf]
      %v1238 = vld [vmem:[%s1225 + $0x30] sm:$0xf]
      %v1239 = vld [vmem:[%s1225 + $0x34] sm:$0xf]
      %v1240 = vld [vmem:[%s1225 + $0x38] sm:$0xf]
      %v1241 = vld [vmem:[%s1225 + $0x3c] sm:$0xf]
      %v1242 = vunpack.c.l.b16 %v1149
      %v1243 = vunpack.c.l.b16 %v1158
      %v1244 = vunpack.c.l.b16 %v1171
      %v1245 = vunpack.c.l.b16 %v1180
      %v1246 = vunpack.c.l.b16 %v1193
      %v1247 = vunpack.c.l.b16 %v1202
      %v1248 = vunpack.c.l.b16 %v1215
      %v1249 = vunpack.c.l.b16 %v1224
      %v1250 = vpack.c.b16 %v1243, %v1242
      %v1251 = vpack.c.b16 %v1245, %v1244
      %v1252 = vpack.c.b16 %v1247, %v1246
      %v1253 = vpack.c.b16 %v1249, %v1248
      %v1274 = vunpack.c.l.b16 %v1226
      %v1275 = vunpack.c.l.b16 %v1227
      %v1276 = vunpack.c.l.b16 %v1228
      %v1277 = vunpack.c.l.b16 %v1229
      %v1278 = vunpack.c.l.b16 %v1230
      %v1279 = vunpack.c.l.b16 %v1231
      %v1280 = vunpack.c.l.b16 %v1232
      %v1281 = vunpack.c.l.b16 %v1233
      %v1282 = vunpack.c.l.b16 %v1234
      %v1283 = vunpack.c.l.b16 %v1235
      %v1284 = vunpack.c.l.b16 %v1236
      %v1285 = vunpack.c.l.b16 %v1237
      %v1286 = vunpack.c.l.b16 %v1238
      %v1287 = vunpack.c.l.b16 %v1239
      %v1288 = vunpack.c.l.b16 %v1240
      %v1289 = vunpack.c.l.b16 %v1241
      %v1290 = vpack.c.b16 %v1275, %v1274
      %v1291 = vpack.c.b16 %v1277, %v1276
      %v1292 = vpack.c.b16 %v1279, %v1278
      %v1293 = vpack.c.b16 %v1281, %v1280
      %v1294 = vpack.c.b16 %v1283, %v1282
      %v1295 = vpack.c.b16 %v1285, %v1284
      %v1296 = vpack.c.b16 %v1287, %v1286
      %v1297 = vpack.c.b16 %v1289, %v1288
      %1306 = vmatpush.bf16.msra.mxu0 %v1297
      %1307 = vmatpush.bf16.msra.mxu0 %v1296
      %1308 = vmatpush.bf16.msra.mxu0 %v1295
      %1309 = vmatpush.bf16.msra.mxu0 %v1294
      %1310 = vmatpush.bf16.msra.mxu0 %v1293
      %1311 = vmatpush.bf16.msra.mxu0 %v1292
      %1312 = vmatpush.bf16.msra.mxu0 %v1291
      %1313 = vmatpush.bf16.msra.mxu0 %v1290
      %1314 = vmatmul.bf16.gmra.mxu0 %v1250
      %v1315 = vpop.f32.mrf.mxu0
      %v1316 = vadd.f32 0.0, %v1315
      %v1317 = vpop.f32.mrf.mxu0
      %v1318 = vadd.f32 0.0, %v1317
      %1319 = vmatmul.bf16.gmra.mxu0 %v1251
      %v1320 = vpop.f32.mrf.mxu0
      %v1321 = vadd.f32 0.0, %v1320
      %v1322 = vpop.f32.mrf.mxu0
      %v1323 = vadd.f32 0.0, %v1322
      %1324 = vmatmul.bf16.gmra.mxu0 %v1252
      %v1325 = vpop.f32.mrf.mxu0
      %v1326 = vadd.f32 0.0, %v1325
      %v1327 = vpop.f32.mrf.mxu0
      %v1328 = vadd.f32 0.0, %v1327
      %1329 = vmatmul.bf16.gmra.mxu0 %v1253
      %v1330 = vpop.f32.mrf.mxu0
      %v1331 = vadd.f32 0.0, %v1330
      %v1332 = vpop.f32.mrf.mxu0
      %v1333 = vadd.f32 0.0, %v1332
      %1334 = vdwg.mxu0
      %v1335 = vadd.f32 %v1109, %v1316
      %v1336 = vadd.f32 %v1110, %v1318
      %v1337 = vadd.f32 %v1111, %v1321
      %v1338 = vadd.f32 %v1112, %v1323
      %v1339 = vadd.f32 %v1113, %v1326
      %v1340 = vadd.f32 %v1114, %v1328
      %v1341 = vadd.f32 %v1115, %v1331
      %v1342 = vadd.f32 %v1116, %v1333
      %s1343 = scalar_lea.vmem %s3, 256
      %v1344 = vld [vmem:[%s1343] sm:$0xf]
      %v1345 = vld [vmem:[%s1343 + $0x4] sm:$0xf]
      %v1346 = vld [vmem:[%s1343 + $0x8] sm:$0xf]
      %v1347 = vld [vmem:[%s1343 + $0xc] sm:$0xf]
      %v1348 = vld [vmem:[%s1343 + $0x10] sm:$0xf]
      %v1349 = vld [vmem:[%s1343 + $0x14] sm:$0xf]
      %v1350 = vld [vmem:[%s1343 + $0x18] sm:$0xf]
      %v1351 = vld [vmem:[%s1343 + $0x1c] sm:$0xf]
      %v1352 = vld [vmem:[%s1343 + $0x20] sm:$0xf]
      %v1353 = vld [vmem:[%s1343 + $0x24] sm:$0xf]
      %v1354 = vld [vmem:[%s1343 + $0x28] sm:$0xf]
      %v1355 = vld [vmem:[%s1343 + $0x2c] sm:$0xf]
      %v1356 = vld [vmem:[%s1343 + $0x30] sm:$0xf]
      %v1357 = vld [vmem:[%s1343 + $0x34] sm:$0xf]
      %v1358 = vld [vmem:[%s1343 + $0x38] sm:$0xf]
      %v1359 = vld [vmem:[%s1343 + $0x3c] sm:$0xf]
      %v1368 = vunpack.c.l.b16 %v1122
      %v1369 = vunpack.c.l.b16 %v1123
      %v1370 = vunpack.c.l.b16 %v1126
      %v1371 = vunpack.c.l.b16 %v1127
      %v1372 = vunpack.c.l.b16 %v1130
      %v1373 = vunpack.c.l.b16 %v1131
      %v1374 = vunpack.c.l.b16 %v1134
      %v1375 = vunpack.c.l.b16 %v1135
      %v1376 = vpack.c.b16 %v1369, %v1368
      %v1377 = vpack.c.b16 %v1371, %v1370
      %v1378 = vpack.c.b16 %v1373, %v1372
      %v1379 = vpack.c.b16 %v1375, %v1374
      %v1400 = vunpack.c.l.b16 %v1344
      %v1401 = vunpack.c.l.b16 %v1345
      %v1402 = vunpack.c.l.b16 %v1346
      %v1403 = vunpack.c.l.b16 %v1347
      %v1404 = vunpack.c.l.b16 %v1348
      %v1405 = vunpack.c.l.b16 %v1349
      %v1406 = vunpack.c.l.b16 %v1350
      %v1407 = vunpack.c.l.b16 %v1351
      %v1408 = vunpack.c.l.b16 %v1352
      %v1409 = vunpack.c.l.b16 %v1353
      %v1410 = vunpack.c.l.b16 %v1354
      %v1411 = vunpack.c.l.b16 %v1355
      %v1412 = vunpack.c.l.b16 %v1356
      %v1413 = vunpack.c.l.b16 %v1357
      %v1414 = vunpack.c.l.b16 %v1358
      %v1415 = vunpack.c.l.b16 %v1359
      %v1416 = vpack.c.b16 %v1401, %v1400
      %v1417 = vpack.c.b16 %v1403, %v1402
      %v1418 = vpack.c.b16 %v1405, %v1404
      %v1419 = vpack.c.b16 %v1407, %v1406
      %v1420 = vpack.c.b16 %v1409, %v1408
      %v1421 = vpack.c.b16 %v1411, %v1410
      %v1422 = vpack.c.b16 %v1413, %v1412
      %v1423 = vpack.c.b16 %v1415, %v1414
      %1432 = vmatpush.bf16.msra.mxu0 %v1423
      %1433 = vmatpush.bf16.msra.mxu0 %v1422
      %1434 = vmatpush.bf16.msra.mxu0 %v1421
      %1435 = vmatpush.bf16.msra.mxu0 %v1420
      %1436 = vmatpush.bf16.msra.mxu0 %v1419
      %1437 = vmatpush.bf16.msra.mxu0 %v1418
      %1438 = vmatpush.bf16.msra.mxu0 %v1417
      %1439 = vmatpush.bf16.msra.mxu0 %v1416
      %1440 = vmatmul.bf16.gmra.mxu0 %v1376
      %v1441 = vpop.f32.mrf.mxu0
      %v1442 = vadd.f32 0.0, %v1441
      %v1443 = vpop.f32.mrf.mxu0
      %v1444 = vadd.f32 0.0, %v1443
      %1445 = vmatmul.bf16.gmra.mxu0 %v1377
      %v1446 = vpop.f32.mrf.mxu0
      %v1447 = vadd.f32 0.0, %v1446
      %v1448 = vpop.f32.mrf.mxu0
      %v1449 = vadd.f32 0.0, %v1448
      %1450 = vmatmul.bf16.gmra.mxu0 %v1378
      %v1451 = vpop.f32.mrf.mxu0
      %v1452 = vadd.f32 0.0, %v1451
      %v1453 = vpop.f32.mrf.mxu0
      %v1454 = vadd.f32 0.0, %v1453
      %1455 = vmatmul.bf16.gmra.mxu0 %v1379
      %v1456 = vpop.f32.mrf.mxu0
      %v1457 = vadd.f32 0.0, %v1456
      %v1458 = vpop.f32.mrf.mxu0
      %v1459 = vadd.f32 0.0, %v1458
      %1460 = vdwg.mxu0
      %v1461 = vadd.f32 %v1335, %v1442
      %v1462 = vadd.f32 %v1336, %v1444
      %v1463 = vadd.f32 %v1337, %v1447
      %v1464 = vadd.f32 %v1338, %v1449
      %v1465 = vadd.f32 %v1339, %v1452
      %v1466 = vadd.f32 %v1340, %v1454
      %v1467 = vadd.f32 %v1341, %v1457
      %v1468 = vadd.f32 %v1342, %v1459
      %v1469 = vrot.slane %v1143, 4
      %v1470 = vrot.slane %v1146, 5
      %v1471 = vor.u32 %v1469, %v1470
      %v1472 = vrot.slane %v1471, 4
      %v1473 = vrot.slane %v1155, 5
      %v1474 = vsel %vm942, %v1472, %v1473
      %v1475 = vrot.slane %v1152, 4
      %v1476 = vor.u32 %v1475, %v1473
      %v1477 = vrot.slane %v1476, 4
      %v1479 = vshll.u32 %v1124, 16
      %v1481 = vrot.slane %v1479, 5
      %v1482 = vsel %vm942, %v1477, %v1481
      %v1483 = vrot.slane %v1165, 4
      %v1484 = vrot.slane %v1168, 5
      %v1485 = vor.u32 %v1483, %v1484
      %v1486 = vrot.slane %v1485, 4
      %v1487 = vrot.slane %v1177, 5
      %v1488 = vsel %vm942, %v1486, %v1487
      %v1489 = vrot.slane %v1174, 4
      %v1490 = vor.u32 %v1489, %v1487
      %v1491 = vrot.slane %v1490, 4
      %v1493 = vshll.u32 %v1128, 16
      %v1495 = vrot.slane %v1493, 5
      %v1496 = vsel %vm942, %v1491, %v1495
      %v1497 = vrot.slane %v1187, 4
      %v1498 = vrot.slane %v1190, 5
      %v1499 = vor.u32 %v1497, %v1498
      %v1500 = vrot.slane %v1499, 4
      %v1501 = vrot.slane %v1199, 5
      %v1502 = vsel %vm942, %v1500, %v1501
      %v1503 = vrot.slane %v1196, 4
      %v1504 = vor.u32 %v1503, %v1501
      %v1505 = vrot.slane %v1504, 4
      %v1507 = vshll.u32 %v1132, 16
      %v1509 = vrot.slane %v1507, 5
      %v1510 = vsel %vm942, %v1505, %v1509
      %v1511 = vrot.slane %v1209, 4
      %v1512 = vrot.slane %v1212, 5
      %v1513 = vor.u32 %v1511, %v1512
      %v1514 = vrot.slane %v1513, 4
      %v1515 = vrot.slane %v1221, 5
      %v1516 = vsel %vm942, %v1514, %v1515
      %v1517 = vrot.slane %v1218, 4
      %v1518 = vor.u32 %v1517, %v1515
      %v1519 = vrot.slane %v1518, 4
      %v1521 = vshll.u32 %v1136, 16
      %v1523 = vrot.slane %v1521, 5
      %v1524 = vsel %vm942, %v1519, %v1523
      %s1525 = scalar_lea.vmem %s3, 320
      %v1526 = vld [vmem:[%s1525] sm:$0xf]
      %v1527 = vld [vmem:[%s1525 + $0x4] sm:$0xf]
      %v1528 = vld [vmem:[%s1525 + $0x8] sm:$0xf]
      %v1529 = vld [vmem:[%s1525 + $0xc] sm:$0xf]
      %v1530 = vld [vmem:[%s1525 + $0x10] sm:$0xf]
      %v1531 = vld [vmem:[%s1525 + $0x14] sm:$0xf]
      %v1532 = vld [vmem:[%s1525 + $0x18] sm:$0xf]
      %v1533 = vld [vmem:[%s1525 + $0x1c] sm:$0xf]
      %v1534 = vld [vmem:[%s1525 + $0x20] sm:$0xf]
      %v1535 = vld [vmem:[%s1525 + $0x24] sm:$0xf]
      %v1536 = vld [vmem:[%s1525 + $0x28] sm:$0xf]
      %v1537 = vld [vmem:[%s1525 + $0x2c] sm:$0xf]
      %v1538 = vld [vmem:[%s1525 + $0x30] sm:$0xf]
      %v1539 = vld [vmem:[%s1525 + $0x34] sm:$0xf]
      %v1540 = vld [vmem:[%s1525 + $0x38] sm:$0xf]
      %v1541 = vld [vmem:[%s1525 + $0x3c] sm:$0xf]
      %v1542 = vunpack.c.l.b16 %v1474
      %v1543 = vunpack.c.l.b16 %v1482
      %v1544 = vunpack.c.l.b16 %v1488
      %v1545 = vunpack.c.l.b16 %v1496
      %v1546 = vunpack.c.l.b16 %v1502
      %v1547 = vunpack.c.l.b16 %v1510
      %v1548 = vunpack.c.l.b16 %v1516
      %v1549 = vunpack.c.l.b16 %v1524
      %v1550 = vpack.c.b16 %v1543, %v1542
      %v1551 = vpack.c.b16 %v1545, %v1544
      %v1552 = vpack.c.b16 %v1547, %v1546
      %v1553 = vpack.c.b16 %v1549, %v1548
      %v1574 = vunpack.c.l.b16 %v1526
      %v1575 = vunpack.c.l.b16 %v1527
      %v1576 = vunpack.c.l.b16 %v1528
      %v1577 = vunpack.c.l.b16 %v1529
      %v1578 = vunpack.c.l.b16 %v1530
      %v1579 = vunpack.c.l.b16 %v1531
      %v1580 = vunpack.c.l.b16 %v1532
      %v1581 = vunpack.c.l.b16 %v1533
      %v1582 = vunpack.c.l.b16 %v1534
      %v1583 = vunpack.c.l.b16 %v1535
      %v1584 = vunpack.c.l.b16 %v1536
      %v1585 = vunpack.c.l.b16 %v1537
      %v1586 = vunpack.c.l.b16 %v1538
      %v1587 = vunpack.c.l.b16 %v1539
      %v1588 = vunpack.c.l.b16 %v1540
      %v1589 = vunpack.c.l.b16 %v1541
      %v1590 = vpack.c.b16 %v1575, %v1574
      %v1591 = vpack.c.b16 %v1577, %v1576
      %v1592 = vpack.c.b16 %v1579, %v1578
      %v1593 = vpack.c.b16 %v1581, %v1580
      %v1594 = vpack.c.b16 %v1583, %v1582
      %v1595 = vpack.c.b16 %v1585, %v1584
      %v1596 = vpack.c.b16 %v1587, %v1586
      %v1597 = vpack.c.b16 %v1589, %v1588
      %1606 = vmatpush.bf16.msra.mxu0 %v1597
      %1607 = vmatpush.bf16.msra.mxu0 %v1596
      %1608 = vmatpush.bf16.msra.mxu0 %v1595
      %1609 = vmatpush.bf16.msra.mxu0 %v1594
      %1610 = vmatpush.bf16.msra.mxu0 %v1593
      %1611 = vmatpush.bf16.msra.mxu0 %v1592
      %1612 = vmatpush.bf16.msra.mxu0 %v1591
      %1613 = vmatpush.bf16.msra.mxu0 %v1590
      %1614 = vmatmul.bf16.gmra.mxu0 %v1550
      %v1615 = vpop.f32.mrf.mxu0
      %v1616 = vadd.f32 0.0, %v1615
      %v1617 = vpop.f32.mrf.mxu0
      %v1618 = vadd.f32 0.0, %v1617
      %1619 = vmatmul.bf16.gmra.mxu0 %v1551
      %v1620 = vpop.f32.mrf.mxu0
      %v1621 = vadd.f32 0.0, %v1620
      %v1622 = vpop.f32.mrf.mxu0
      %v1623 = vadd.f32 0.0, %v1622
      %1624 = vmatmul.bf16.gmra.mxu0 %v1552
      %v1625 = vpop.f32.mrf.mxu0
      %v1626 = vadd.f32 0.0, %v1625
      %v1627 = vpop.f32.mrf.mxu0
      %v1628 = vadd.f32 0.0, %v1627
      %1629 = vmatmul.bf16.gmra.mxu0 %v1553
      %v1630 = vpop.f32.mrf.mxu0
      %v1631 = vadd.f32 0.0, %v1630
      %v1632 = vpop.f32.mrf.mxu0
      %v1633 = vadd.f32 0.0, %v1632
      %1634 = vdwg.mxu0
      %v1635 = vadd.f32 %v1461, %v1616
      %v1636 = vadd.f32 %v1462, %v1618
      %v1637 = vadd.f32 %v1463, %v1621
      %v1638 = vadd.f32 %v1464, %v1623
      %v1639 = vadd.f32 %v1465, %v1626
      %v1640 = vadd.f32 %v1466, %v1628
      %v1641 = vadd.f32 %v1467, %v1631
      %v1642 = vadd.f32 %v1468, %v1633
      %s1643 = sadd.s32 %s602, 2
      %s1644 = smul.u32 %s1643, 4
      %s1645 = smul.addr %s1644, 4
      %s1646 = scalar_lea.vmem [#allocation2], %s1645
      %v1647 = vld [vmem:[%s1646] sm:$0xf]
      %v1648 = vld [vmem:[%s1646 + $0x4] sm:$0xf]
      %v1649 = vld [vmem:[%s1646 + $0x8] sm:$0xf]
      %v1650 = vld [vmem:[%s1646 + $0xc] sm:$0xf]
      %v1651 = vld [vmem:[%s1646 + $0x10] sm:$0xf]
      %v1652 = vld [vmem:[%s1646 + $0x14] sm:$0xf]
      %v1653 = vld [vmem:[%s1646 + $0x18] sm:$0xf]
      %v1654 = vld [vmem:[%s1646 + $0x1c] sm:$0xf]
      %v1655 = vld [vmem:[%s1646 + $0x20] sm:$0xf]
      %v1656 = vld [vmem:[%s1646 + $0x24] sm:$0xf]
      %v1657 = vld [vmem:[%s1646 + $0x28] sm:$0xf]
      %v1658 = vld [vmem:[%s1646 + $0x2c] sm:$0xf]
      %v1659 = vld [vmem:[%s1646 + $0x30] sm:$0xf]
      %v1660 = vld [vmem:[%s1646 + $0x34] sm:$0xf]
      %v1661 = vld [vmem:[%s1646 + $0x38] sm:$0xf]
      %v1662 = vld [vmem:[%s1646 + $0x3c] sm:$0xf]
      %v1664 = vshrl.u32 %v1647, 16
      %v1666 = vrot.slane %v1664, 7
      %v1667 = vrot.slane %v1666, 4
      %v1669 = vshrl.u32 %v1648, 16
      %v1671 = vrot.slane %v1669, 7
      %v1672 = vshll.u32 %v1648, 16
      %v1674 = vor.u32 %v1671, %v1672
      %v1675 = vsel %vm624, %v1667, %v1674
      %v1676 = vrot.slane %v1671, 4
      %v1678 = vshrl.u32 %v1649, 16
      %v1680 = vrot.slane %v1678, 7
      %v1681 = vshll.u32 %v1649, 16
      %v1683 = vor.u32 %v1680, %v1681
      %v1684 = vsel %vm624, %v1676, %v1683
      %v1686 = vshrl.u32 %v1651, 16
      %v1688 = vrot.slane %v1686, 7
      %v1689 = vrot.slane %v1688, 4
      %v1691 = vshrl.u32 %v1652, 16
      %v1693 = vrot.slane %v1691, 7
      %v1694 = vshll.u32 %v1652, 16
      %v1696 = vor.u32 %v1693, %v1694
      %v1697 = vsel %vm624, %v1689, %v1696
      %v1698 = vrot.slane %v1693, 4
      %v1700 = vshrl.u32 %v1653, 16
      %v1702 = vrot.slane %v1700, 7
      %v1703 = vshll.u32 %v1653, 16
      %v1705 = vor.u32 %v1702, %v1703
      %v1706 = vsel %vm624, %v1698, %v1705
      %v1708 = vshrl.u32 %v1655, 16
      %v1710 = vrot.slane %v1708, 7
      %v1711 = vrot.slane %v1710, 4
      %v1713 = vshrl.u32 %v1656, 16
      %v1715 = vrot.slane %v1713, 7
      %v1716 = vshll.u32 %v1656, 16
      %v1718 = vor.u32 %v1715, %v1716
      %v1719 = vsel %vm624, %v1711, %v1718
      %v1720 = vrot.slane %v1715, 4
      %v1722 = vshrl.u32 %v1657, 16
      %v1724 = vrot.slane %v1722, 7
      %v1725 = vshll.u32 %v1657, 16
      %v1727 = vor.u32 %v1724, %v1725
      %v1728 = vsel %vm624, %v1720, %v1727
      %v1730 = vshrl.u32 %v1659, 16
      %v1732 = vrot.slane %v1730, 7
      %v1733 = vrot.slane %v1732, 4
      %v1735 = vshrl.u32 %v1660, 16
      %v1737 = vrot.slane %v1735, 7
      %v1738 = vshll.u32 %v1660, 16
      %v1740 = vor.u32 %v1737, %v1738
      %v1741 = vsel %vm624, %v1733, %v1740
      %v1742 = vrot.slane %v1737, 4
      %v1744 = vshrl.u32 %v1661, 16
      %v1746 = vrot.slane %v1744, 7
      %v1747 = vshll.u32 %v1661, 16
      %v1749 = vor.u32 %v1746, %v1747
      %v1750 = vsel %vm624, %v1742, %v1749
      %s1751 = scalar_lea.vmem %s3, 384
      %v1752 = vld [vmem:[%s1751] sm:$0xf]
      %v1753 = vld [vmem:[%s1751 + $0x4] sm:$0xf]
      %v1754 = vld [vmem:[%s1751 + $0x8] sm:$0xf]
      %v1755 = vld [vmem:[%s1751 + $0xc] sm:$0xf]
      %v1756 = vld [vmem:[%s1751 + $0x10] sm:$0xf]
      %v1757 = vld [vmem:[%s1751 + $0x14] sm:$0xf]
      %v1758 = vld [vmem:[%s1751 + $0x18] sm:$0xf]
      %v1759 = vld [vmem:[%s1751 + $0x1c] sm:$0xf]
      %v1760 = vld [vmem:[%s1751 + $0x20] sm:$0xf]
      %v1761 = vld [vmem:[%s1751 + $0x24] sm:$0xf]
      %v1762 = vld [vmem:[%s1751 + $0x28] sm:$0xf]
      %v1763 = vld [vmem:[%s1751 + $0x2c] sm:$0xf]
      %v1764 = vld [vmem:[%s1751 + $0x30] sm:$0xf]
      %v1765 = vld [vmem:[%s1751 + $0x34] sm:$0xf]
      %v1766 = vld [vmem:[%s1751 + $0x38] sm:$0xf]
      %v1767 = vld [vmem:[%s1751 + $0x3c] sm:$0xf]
      %v1768 = vunpack.c.l.b16 %v1675
      %v1769 = vunpack.c.l.b16 %v1684
      %v1770 = vunpack.c.l.b16 %v1697
      %v1771 = vunpack.c.l.b16 %v1706
      %v1772 = vunpack.c.l.b16 %v1719
      %v1773 = vunpack.c.l.b16 %v1728
      %v1774 = vunpack.c.l.b16 %v1741
      %v1775 = vunpack.c.l.b16 %v1750
      %v1776 = vpack.c.b16 %v1769, %v1768
      %v1777 = vpack.c.b16 %v1771, %v1770
      %v1778 = vpack.c.b16 %v1773, %v1772
      %v1779 = vpack.c.b16 %v1775, %v1774
      %v1800 = vunpack.c.l.b16 %v1752
      %v1801 = vunpack.c.l.b16 %v1753
      %v1802 = vunpack.c.l.b16 %v1754
      %v1803 = vunpack.c.l.b16 %v1755
      %v1804 = vunpack.c.l.b16 %v1756
      %v1805 = vunpack.c.l.b16 %v1757
      %v1806 = vunpack.c.l.b16 %v1758
      %v1807 = vunpack.c.l.b16 %v1759
      %v1808 = vunpack.c.l.b16 %v1760
      %v1809 = vunpack.c.l.b16 %v1761
      %v1810 = vunpack.c.l.b16 %v1762
      %v1811 = vunpack.c.l.b16 %v1763
      %v1812 = vunpack.c.l.b16 %v1764
      %v1813 = vunpack.c.l.b16 %v1765
      %v1814 = vunpack.c.l.b16 %v1766
      %v1815 = vunpack.c.l.b16 %v1767
      %v1816 = vpack.c.b16 %v1801, %v1800
      %v1817 = vpack.c.b16 %v1803, %v1802
      %v1818 = vpack.c.b16 %v1805, %v1804
      %v1819 = vpack.c.b16 %v1807, %v1806
      %v1820 = vpack.c.b16 %v1809, %v1808
      %v1821 = vpack.c.b16 %v1811, %v1810
      %v1822 = vpack.c.b16 %v1813, %v1812
      %v1823 = vpack.c.b16 %v1815, %v1814
      %1832 = vmatpush.bf16.msra.mxu0 %v1823
      %1833 = vmatpush.bf16.msra.mxu0 %v1822
      %1834 = vmatpush.bf16.msra.mxu0 %v1821
      %1835 = vmatpush.bf16.msra.mxu0 %v1820
      %1836 = vmatpush.bf16.msra.mxu0 %v1819
      %1837 = vmatpush.bf16.msra.mxu0 %v1818
      %1838 = vmatpush.bf16.msra.mxu0 %v1817
      %1839 = vmatpush.bf16.msra.mxu0 %v1816
      %1840 = vmatmul.bf16.gmra.mxu0 %v1776
      %v1841 = vpop.f32.mrf.mxu0
      %v1842 = vadd.f32 0.0, %v1841
      %v1843 = vpop.f32.mrf.mxu0
      %v1844 = vadd.f32 0.0, %v1843
      %1845 = vmatmul.bf16.gmra.mxu0 %v1777
      %v1846 = vpop.f32.mrf.mxu0
      %v1847 = vadd.f32 0.0, %v1846
      %v1848 = vpop.f32.mrf.mxu0
      %v1849 = vadd.f32 0.0, %v1848
      %1850 = vmatmul.bf16.gmra.mxu0 %v1778
      %v1851 = vpop.f32.mrf.mxu0
      %v1852 = vadd.f32 0.0, %v1851
      %v1853 = vpop.f32.mrf.mxu0
      %v1854 = vadd.f32 0.0, %v1853
      %1855 = vmatmul.bf16.gmra.mxu0 %v1779
      %v1856 = vpop.f32.mrf.mxu0
      %v1857 = vadd.f32 0.0, %v1856
      %v1858 = vpop.f32.mrf.mxu0
      %v1859 = vadd.f32 0.0, %v1858
      %1860 = vdwg.mxu0
      %v1861 = vadd.f32 %v1635, %v1842
      %v1862 = vadd.f32 %v1636, %v1844
      %v1863 = vadd.f32 %v1637, %v1847
      %v1864 = vadd.f32 %v1638, %v1849
      %v1865 = vadd.f32 %v1639, %v1852
      %v1866 = vadd.f32 %v1640, %v1854
      %v1867 = vadd.f32 %v1641, %v1857
      %v1868 = vadd.f32 %v1642, %v1859
      %s1869 = scalar_lea.vmem %s3, 448
      %v1870 = vld [vmem:[%s1869] sm:$0xf]
      %v1871 = vld [vmem:[%s1869 + $0x4] sm:$0xf]
      %v1872 = vld [vmem:[%s1869 + $0x8] sm:$0xf]
      %v1873 = vld [vmem:[%s1869 + $0xc] sm:$0xf]
      %v1874 = vld [vmem:[%s1869 + $0x10] sm:$0xf]
      %v1875 = vld [vmem:[%s1869 + $0x14] sm:$0xf]
      %v1876 = vld [vmem:[%s1869 + $0x18] sm:$0xf]
      %v1877 = vld [vmem:[%s1869 + $0x1c] sm:$0xf]
      %v1878 = vld [vmem:[%s1869 + $0x20] sm:$0xf]
      %v1879 = vld [vmem:[%s1869 + $0x24] sm:$0xf]
      %v1880 = vld [vmem:[%s1869 + $0x28] sm:$0xf]
      %v1881 = vld [vmem:[%s1869 + $0x2c] sm:$0xf]
      %v1882 = vld [vmem:[%s1869 + $0x30] sm:$0xf]
      %v1883 = vld [vmem:[%s1869 + $0x34] sm:$0xf]
      %v1884 = vld [vmem:[%s1869 + $0x38] sm:$0xf]
      %v1885 = vld [vmem:[%s1869 + $0x3c] sm:$0xf]
      %v1894 = vunpack.c.l.b16 %v1648
      %v1895 = vunpack.c.l.b16 %v1649
      %v1896 = vunpack.c.l.b16 %v1652
      %v1897 = vunpack.c.l.b16 %v1653
      %v1898 = vunpack.c.l.b16 %v1656
      %v1899 = vunpack.c.l.b16 %v1657
      %v1900 = vunpack.c.l.b16 %v1660
      %v1901 = vunpack.c.l.b16 %v1661
      %v1902 = vpack.c.b16 %v1895, %v1894
      %v1903 = vpack.c.b16 %v1897, %v1896
      %v1904 = vpack.c.b16 %v1899, %v1898
      %v1905 = vpack.c.b16 %v1901, %v1900
      %v1926 = vunpack.c.l.b16 %v1870
      %v1927 = vunpack.c.l.b16 %v1871
      %v1928 = vunpack.c.l.b16 %v1872
      %v1929 = vunpack.c.l.b16 %v1873
      %v1930 = vunpack.c.l.b16 %v1874
      %v1931 = vunpack.c.l.b16 %v1875
      %v1932 = vunpack.c.l.b16 %v1876
      %v1933 = vunpack.c.l.b16 %v1877
      %v1934 = vunpack.c.l.b16 %v1878
      %v1935 = vunpack.c.l.b16 %v1879
      %v1936 = vunpack.c.l.b16 %v1880
      %v1937 = vunpack.c.l.b16 %v1881
      %v1938 = vunpack.c.l.b16 %v1882
      %v1939 = vunpack.c.l.b16 %v1883
      %v1940 = vunpack.c.l.b16 %v1884
      %v1941 = vunpack.c.l.b16 %v1885
      %v1942 = vpack.c.b16 %v1927, %v1926
      %v1943 = vpack.c.b16 %v1929, %v1928
      %v1944 = vpack.c.b16 %v1931, %v1930
      %v1945 = vpack.c.b16 %v1933, %v1932
      %v1946 = vpack.c.b16 %v1935, %v1934
      %v1947 = vpack.c.b16 %v1937, %v1936
      %v1948 = vpack.c.b16 %v1939, %v1938
      %v1949 = vpack.c.b16 %v1941, %v1940
      %1958 = vmatpush.bf16.msra.mxu0 %v1949
      %1959 = vmatpush.bf16.msra.mxu0 %v1948
      %1960 = vmatpush.bf16.msra.mxu0 %v1947
      %1961 = vmatpush.bf16.msra.mxu0 %v1946
      %1962 = vmatpush.bf16.msra.mxu0 %v1945
      %1963 = vmatpush.bf16.msra.mxu0 %v1944
      %1964 = vmatpush.bf16.msra.mxu0 %v1943
      %1965 = vmatpush.bf16.msra.mxu0 %v1942
      %1966 = vmatmul.bf16.gmra.mxu0 %v1902
      %v1967 = vpop.f32.mrf.mxu0
      %v1968 = vadd.f32 0.0, %v1967
      %v1969 = vpop.f32.mrf.mxu0
      %v1970 = vadd.f32 0.0, %v1969
      %1971 = vmatmul.bf16.gmra.mxu0 %v1903
      %v1972 = vpop.f32.mrf.mxu0
      %v1973 = vadd.f32 0.0, %v1972
      %v1974 = vpop.f32.mrf.mxu0
      %v1975 = vadd.f32 0.0, %v1974
      %1976 = vmatmul.bf16.gmra.mxu0 %v1904
      %v1977 = vpop.f32.mrf.mxu0
      %v1978 = vadd.f32 0.0, %v1977
      %v1979 = vpop.f32.mrf.mxu0
      %v1980 = vadd.f32 0.0, %v1979
      %1981 = vmatmul.bf16.gmra.mxu0 %v1905
      %v1982 = vpop.f32.mrf.mxu0
      %v1983 = vadd.f32 0.0, %v1982
      %v1984 = vpop.f32.mrf.mxu0
      %v1985 = vadd.f32 0.0, %v1984
      %1986 = vdwg.mxu0
      %v1987 = vadd.f32 %v1861, %v1968
      %v1988 = vadd.f32 %v1862, %v1970
      %v1989 = vadd.f32 %v1863, %v1973
      %v1990 = vadd.f32 %v1864, %v1975
      %v1991 = vadd.f32 %v1865, %v1978
      %v1992 = vadd.f32 %v1866, %v1980
      %v1993 = vadd.f32 %v1867, %v1983
      %v1994 = vadd.f32 %v1868, %v1985
      %v1995 = vrot.slane %v1669, 4
      %v1996 = vrot.slane %v1672, 5
      %v1997 = vor.u32 %v1995, %v1996
      %v1998 = vrot.slane %v1997, 4
      %v1999 = vrot.slane %v1681, 5
      %v2000 = vsel %vm942, %v1998, %v1999
      %v2001 = vrot.slane %v1678, 4
      %v2002 = vor.u32 %v2001, %v1999
      %v2003 = vrot.slane %v2002, 4
      %v2005 = vshll.u32 %v1650, 16
      %v2007 = vrot.slane %v2005, 5
      %v2008 = vsel %vm942, %v2003, %v2007
      %v2009 = vrot.slane %v1691, 4
      %v2010 = vrot.slane %v1694, 5
      %v2011 = vor.u32 %v2009, %v2010
      %v2012 = vrot.slane %v2011, 4
      %v2013 = vrot.slane %v1703, 5
      %v2014 = vsel %vm942, %v2012, %v2013
      %v2015 = vrot.slane %v1700, 4
      %v2016 = vor.u32 %v2015, %v2013
      %v2017 = vrot.slane %v2016, 4
      %v2019 = vshll.u32 %v1654, 16
      %v2021 = vrot.slane %v2019, 5
      %v2022 = vsel %vm942, %v2017, %v2021
      %v2023 = vrot.slane %v1713, 4
      %v2024 = vrot.slane %v1716, 5
      %v2025 = vor.u32 %v2023, %v2024
      %v2026 = vrot.slane %v2025, 4
      %v2027 = vrot.slane %v1725, 5
      %v2028 = vsel %vm942, %v2026, %v2027
      %v2029 = vrot.slane %v1722, 4
      %v2030 = vor.u32 %v2029, %v2027
      %v2031 = vrot.slane %v2030, 4
      %v2033 = vshll.u32 %v1658, 16
      %v2035 = vrot.slane %v2033, 5
      %v2036 = vsel %vm942, %v2031, %v2035
      %v2037 = vrot.slane %v1735, 4
      %v2038 = vrot.slane %v1738, 5
      %v2039 = vor.u32 %v2037, %v2038
      %v2040 = vrot.slane %v2039, 4
      %v2041 = vrot.slane %v1747, 5
      %v2042 = vsel %vm942, %v2040, %v2041
      %v2043 = vrot.slane %v1744, 4
      %v2044 = vor.u32 %v2043, %v2041
      %v2045 = vrot.slane %v2044, 4
      %v2047 = vshll.u32 %v1662, 16
      %v2049 = vrot.slane %v2047, 5
      %v2050 = vsel %vm942, %v2045, %v2049
      %s2051 = scalar_lea.vmem %s3, 512
      %v2052 = vld [vmem:[%s2051] sm:$0xf]
      %v2053 = vld [vmem:[%s2051 + $0x4] sm:$0xf]
      %v2054 = vld [vmem:[%s2051 + $0x8] sm:$0xf]
      %v2055 = vld [vmem:[%s2051 + $0xc] sm:$0xf]
      %v2056 = vld [vmem:[%s2051 + $0x10] sm:$0xf]
      %v2057 = vld [vmem:[%s2051 + $0x14] sm:$0xf]
      %v2058 = vld [vmem:[%s2051 + $0x18] sm:$0xf]
      %v2059 = vld [vmem:[%s2051 + $0x1c] sm:$0xf]
      %v2060 = vld [vmem:[%s2051 + $0x20] sm:$0xf]
      %v2061 = vld [vmem:[%s2051 + $0x24] sm:$0xf]
      %v2062 = vld [vmem:[%s2051 + $0x28] sm:$0xf]
      %v2063 = vld [vmem:[%s2051 + $0x2c] sm:$0xf]
      %v2064 = vld [vmem:[%s2051 + $0x30] sm:$0xf]
      %v2065 = vld [vmem:[%s2051 + $0x34] sm:$0xf]
      %v2066 = vld [vmem:[%s2051 + $0x38] sm:$0xf]
      %v2067 = vld [vmem:[%s2051 + $0x3c] sm:$0xf]
      %v2068 = vunpack.c.l.b16 %v2000
      %v2069 = vunpack.c.l.b16 %v2008
      %v2070 = vunpack.c.l.b16 %v2014
      %v2071 = vunpack.c.l.b16 %v2022
      %v2072 = vunpack.c.l.b16 %v2028
      %v2073 = vunpack.c.l.b16 %v2036
      %v2074 = vunpack.c.l.b16 %v2042
      %v2075 = vunpack.c.l.b16 %v2050
      %v2076 = vpack.c.b16 %v2069, %v2068
      %v2077 = vpack.c.b16 %v2071, %v2070
      %v2078 = vpack.c.b16 %v2073, %v2072
      %v2079 = vpack.c.b16 %v2075, %v2074
      %v2100 = vunpack.c.l.b16 %v2052
      %v2101 = vunpack.c.l.b16 %v2053
      %v2102 = vunpack.c.l.b16 %v2054
      %v2103 = vunpack.c.l.b16 %v2055
      %v2104 = vunpack.c.l.b16 %v2056
      %v2105 = vunpack.c.l.b16 %v2057
      %v2106 = vunpack.c.l.b16 %v2058
      %v2107 = vunpack.c.l.b16 %v2059
      %v2108 = vunpack.c.l.b16 %v2060
      %v2109 = vunpack.c.l.b16 %v2061
      %v2110 = vunpack.c.l.b16 %v2062
      %v2111 = vunpack.c.l.b16 %v2063
      %v2112 = vunpack.c.l.b16 %v2064
      %v2113 = vunpack.c.l.b16 %v2065
      %v2114 = vunpack.c.l.b16 %v2066
      %v2115 = vunpack.c.l.b16 %v2067
      %v2116 = vpack.c.b16 %v2101, %v2100
      %v2117 = vpack.c.b16 %v2103, %v2102
      %v2118 = vpack.c.b16 %v2105, %v2104
      %v2119 = vpack.c.b16 %v2107, %v2106
      %v2120 = vpack.c.b16 %v2109, %v2108
      %v2121 = vpack.c.b16 %v2111, %v2110
      %v2122 = vpack.c.b16 %v2113, %v2112
      %v2123 = vpack.c.b16 %v2115, %v2114
      %2132 = vmatpush.bf16.msra.mxu0 %v2123
      %2133 = vmatpush.bf16.msra.mxu0 %v2122
      %2134 = vmatpush.bf16.msra.mxu0 %v2121
      %2135 = vmatpush.bf16.msra.mxu0 %v2120
      %2136 = vmatpush.bf16.msra.mxu0 %v2119
      %2137 = vmatpush.bf16.msra.mxu0 %v2118
      %2138 = vmatpush.bf16.msra.mxu0 %v2117
      %2139 = vmatpush.bf16.msra.mxu0 %v2116
      %2140 = vmatmul.bf16.gmra.mxu0 %v2076
      %v2141 = vpop.f32.mrf.mxu0
      %v2142 = vadd.f32 0.0, %v2141
      %v2143 = vpop.f32.mrf.mxu0
      %v2144 = vadd.f32 0.0, %v2143
      %2145 = vmatmul.bf16.gmra.mxu0 %v2077
      %v2146 = vpop.f32.mrf.mxu0
      %v2147 = vadd.f32 0.0, %v2146
      %v2148 = vpop.f32.mrf.mxu0
      %v2149 = vadd.f32 0.0, %v2148
      %2150 = vmatmul.bf16.gmra.mxu0 %v2078
      %v2151 = vpop.f32.mrf.mxu0
      %v2152 = vadd.f32 0.0, %v2151
      %v2153 = vpop.f32.mrf.mxu0
      %v2154 = vadd.f32 0.0, %v2153
      %2155 = vmatmul.bf16.gmra.mxu0 %v2079
      %v2156 = vpop.f32.mrf.mxu0
      %v2157 = vadd.f32 0.0, %v2156
      %v2158 = vpop.f32.mrf.mxu0
      %v2159 = vadd.f32 0.0, %v2158
      %2160 = vdwg.mxu0
      %v2161 = vadd.f32 %v1987, %v2142
      %v2162 = vadd.f32 %v1988, %v2144
      %v2163 = vadd.f32 %v1989, %v2147
      %v2164 = vadd.f32 %v1990, %v2149
      %v2165 = vadd.f32 %v1991, %v2152
      %v2166 = vadd.f32 %v1992, %v2154
      %v2167 = vadd.f32 %v1993, %v2157
      %v2168 = vadd.f32 %v1994, %v2159
      %2169 = vst [vmem:[%s255] sm:$0xff] %v2161
      %2170 = vst [vmem:[%s255 + $0x8] sm:$0xff] %v2162
      %2171 = vst [vmem:[%s255 + $0x10] sm:$0xff] %v2163
      %2172 = vst [vmem:[%s255 + $0x18] sm:$0xff] %v2164
      %2173 = vst [vmem:[%s255 + $0x20] sm:$0xff] %v2165
      %2174 = vst [vmem:[%s255 + $0x28] sm:$0xff] %v2166
      %2175 = vst [vmem:[%s255 + $0x30] sm:$0xff] %v2167
      %2176 = vst [vmem:[%s255 + $0x38] sm:$0xff] %v2168
      %v2177 = vadd.f32 %v2161, %v2162
      %v2178 = vadd.f32 %v2177, %v2163
      %v2179 = vadd.f32 %v2178, %v2164
      %v2180 = vadd.f32 %v2179, %v2165
      %v2181 = vadd.f32 %v2180, %v2166
      %v2182 = vadd.f32 %v2181, %v2167
      %v2183 = vadd.f32 %v2182, %v2168
      %v2184 = vrot.slane %v2183, 4
      %v2185 = vadd.f32 %v2183, %v2184
      %v2186 = vrot.slane %v2185, 2
      %v2187 = vadd.f32 %v2185, %v2186
      %v2188 = vrot.slane %v2187, 1
      %v2189 = vadd.f32 %v2187, %v2188
      %v2190 = vmul.f32 %v2161, %v2161
      %v2191 = vmul.f32 %v2162, %v2162
      %v2192 = vmul.f32 %v2163, %v2163
      %v2193 = vmul.f32 %v2164, %v2164
      %v2194 = vmul.f32 %v2165, %v2165
      %v2195 = vmul.f32 %v2166, %v2166
      %v2196 = vmul.f32 %v2167, %v2167
      %v2197 = vmul.f32 %v2168, %v2168
      %v2198 = vadd.f32 %v2190, %v2191
      %v2199 = vadd.f32 %v2198, %v2192
      %v2200 = vadd.f32 %v2199, %v2193
      %v2201 = vadd.f32 %v2200, %v2194
      %v2202 = vadd.f32 %v2201, %v2195
      %v2203 = vadd.f32 %v2202, %v2196
      %v2204 = vadd.f32 %v2203, %v2197
      %v2205 = vrot.slane %v2204, 4
      %v2206 = vadd.f32 %v2204, %v2205
      %v2207 = vrot.slane %v2206, 2
      %v2208 = vadd.f32 %v2206, %v2207
      %v2209 = vrot.slane %v2208, 1
      %v2210 = vadd.f32 %v2208, %v2209
      %vm2211 = vcmask 1040384
      %v2212 = vsel %vm2211, %v2189, %v2210
      // Predicated region
      $region41: #{basic_block_forward.4} parent=35 // pred_check
        %p2213 = pneg %p262
      $region42: #{basic_block_forward.4} parent=35 // pred_check_branch
        %2215 = sbr.rel (%p2213) target = $region44
      $region43: #{basic_block_forward.4} parent=35 // pred_region
        %2216 = vst [vmem:[%s260] sm:$0x3] 0.0
      $region44: #{basic_block_forward.4} parent=35 // pred_fallthru
        _
      %v2217 = vld [vmem:[%s260] sm:$0x3]
      %v2218 = vadd.f32 %v2217, %v2212
      %2219 = vst [vmem:[%s260] sm:$0x3] %v2218
      %s2220 = smul.u32 4, %s22
      %p2221 = scmp.lt.s32.totalorder %s21, 1
      %s2222 = scalar_select %p2221, %s21, 1
      %p2223 = scmp.lt.s32.totalorder %s2220, 15
      %s2224 = scalar_select %p2223, %s2220, 15
      %s2225 = smul.addr %s2224, 2
      %s2226 = smul.addr %s2222, 32
      %s2227 = sadd.s32 %s2225, %s2226
      %s2228 = smul.addr %s2227, 8
      %s2229 = scalar_lea.vmem %s4, %s2228
      %p2230 = scmp.lt.s32.totalorder %s21, 1
      %s2231 = scalar_select %p2230, %s21, 1
      %s2232 = smul.addr %s2231, 2
      %s2233 = scalar_lea.vmem %s5, %s2232
      // Predicated region
      $region45: #{basic_block_forward.4} parent=35 // pred_check
        %p2234 = pneg %p138
      $region46: #{basic_block_forward.4} parent=35 // pred_check_branch
        %2236 = sbr.rel (%p2234) target = $region48
      $region47: #{basic_block_forward.4} parent=35 // pred_region
        %s2237 = smul.u32 4, %s22
      $region48: #{basic_block_forward.4} parent=35 // pred_fallthru
        _
      // Predicated region
      $region49: #{basic_block_forward.4} parent=35 // pred_check
        %p2238 = pneg %p164
      $region50: #{basic_block_forward.4} parent=35 // pred_check_branch
        %2240 = sbr.rel (%p2238) target = $region52
      $region51: #{basic_block_forward.4} parent=35 // pred_region
        _
      $region52: #{basic_block_forward.4} parent=35 // pred_fallthru
        _
    $region36: #{basic_block_forward.4} parent=5 // pred_fallthru
      _
    %p2241 = scmp.le.s32.totalorder 2, %s12
    // Predicated region
    $region53: #{basic_block_forward.4} parent=5 // pred_check
      %p2242 = pneg %p2241
    $region54: #{basic_block_forward.4} parent=5 // pred_check_branch
      %2244 = sbr.rel (%p2242) target = $region56
    $region55: #{basic_block_forward.4} parent=5 // pred_region
      %s2245 = ssub.s32 %s12, 2
      // Predicated region
      $region57: #{basic_block_forward.4} parent=55 // pred_check
        %p2246 = pneg %p144
      $region58: #{basic_block_forward.4} parent=55 // pred_check_branch
        %2248 = sbr.rel (%p2246) target = $region60
      $region59: #{basic_block_forward.4} parent=55 // pred_region
        %s2249 = smul.u32 4, %s24
        %p2250 = scmp.lt.s32.totalorder %s23, 1
        %s2251 = scalar_select %p2250, %s23, 1
        %p2252 = scmp.lt.s32.totalorder %s2249, 15
        %s2253 = scalar_select %p2252, %s2249, 15
        %s2254 = smul.addr %s2253, 2
        %s2255 = smul.addr %s2251, 32
        %s2256 = sadd.s32 %s2254, %s2255
        %s2257 = smul.addr %s2256, 8
        %s2258 = scalar_lea.vmem %s4, %s2257
      $region60: #{basic_block_forward.4} parent=55 // pred_fallthru
        _
      // Predicated region
      $region61: #{basic_block_forward.4} parent=55 // pred_check
        %p2259 = pneg %p170
      $region62: #{basic_block_forward.4} parent=55 // pred_check_branch
        %2261 = sbr.rel (%p2259) target = $region64
      $region63: #{basic_block_forward.4} parent=55 // pred_region
        %p2262 = scmp.lt.s32.totalorder %s23, 1
        %s2263 = scalar_select %p2262, %s23, 1
        %s2264 = smul.addr %s2263, 2
        %s2265 = scalar_lea.vmem %s5, %s2264
      $region64: #{basic_block_forward.4} parent=55 // pred_fallthru
        _
    $region56: #{basic_block_forward.4} parent=5 // pred_fallthru
      _
  $region6: #{basic_block_forward.4} parent=0 // loop_footer
    %s16 = sadd.s32 1, %s12
  $region7: #{basic_block_forward.4} parent=0 // loop_footer_branch
    %11 = sbr.rel target = $region3
  $region8: #{basic_block_forward.4} parent=0 // loop_exit
    _

// kernel: basic_block_forward.3
$region0: #{basic_block_forward.3}
  #allocation0 [shape = 'u32[]', space=smem, size = 0x4, offset = 0x4, fixed_abs, tag = 'smem constant byte address 0x4 - core index']
  #allocation1 [shape = 'u32[72,128]{1,0:T(1,128)}', space=vmem, size = 0x9000, scoped, tag = 'internal scratch']
  %s0 = inlined_call_operand.vmem [shape: bf16[2,18,18,4], index: 0, kind: input, shape index: {}]
  %s1 = inlined_call_operand.vmem [shape: bf16[9,4,128], index: 1, kind: input, shape index: {}]
  %s2 = inlined_call_operand.vmem [shape: f32[2,16,16,128], index: 2, kind: output, shape index: {0}]
  %s3 = inlined_call_operand.vmem [shape: f32[2,2,128], index: 3, kind: output, shape index: {1}]
  %4 = xla_tuple %s2, %s3
  %s5 = sld [smem:[#allocation0]]
  $region53: #{basic_block_forward.3} parent=0
    _
  %s7 = ssub.s32 1, %s5
  %s8 = scalar_select 0, %s7, %s5
  loop: start=0, step=1, limit=10
  $region2: #{basic_block_forward.3} parent=0 // loop_pre_header
    _
  $region3: #{basic_block_forward.3} parent=0 // loop_header
    %s10 = sphi 0, %s14
    %p11 = scmp.ge.s32.totalorder %s10, 10
    %s17 = sphi 0, %s29
    %s18 = sphi 0, %s25
    %s19 = sphi 0, %s17
    %s20 = sphi 0, %s18
    %s21 = sphi 0, %s19
    %s22 = sphi 0, %s20
    %s32 = sphi 0, %s34
    %s35 = sphi 0, %s32
    %s36 = sphi 0, %s35
    %s52 = sphi 0, %s36
    %s56 = sphi 0, %s56
    %s58 = sphi 0, %s56
    %s59 = sphi 0, %s58
    %s73 = sphi 0, %s59
    %s81 = sphi 0, %s83
    %s84 = sphi 0, %s81
    %s85 = sphi 0, %s84
    %s101 = sphi 0, %s85
    %s107 = sphi 0, %s109
    %s110 = sphi 0, %s107
    %s111 = sphi 0, %s110
    %s127 = sphi 0, %s111
  $region4: #{basic_block_forward.3} parent=0 // loop_header_branch
    %13 = sbr.rel (%p11) target = $region8
  $region5: #{basic_block_forward.3} parent=0 // loop_body
    %s15 = ssub.s32 %s10, 1
    %s16 = ssub.s32 %s10, 2
    %s23 = sadd.s32 1, %s18
    %p24 = scmp.ge.s32.totalorder %s23, 4
    %s25 = scalar_select %p24, 0, %s23
    %s26 = sadd.s32 1, %s17
    %s27 = scalar_select %p24, %s26, %s17
    %p28 = scmp.ge.s32.totalorder %s27, 2
    %s29 = scalar_select %p28, 0, %s27
    %s30 = ssub.s32 %s17, %s29
    %p31 = scmp.eq.s32.totalorder %s30, 0
    %s33 = sadd.s32 %s32, 1
    %s34 = scalar_select %p31, %s32, %s33
    %p37 = pneg %p31
    %p38 = scmp.eq.s32.totalorder %s10, 7
    %p39 = por %p37, %p38
    %p40 = scmp.ne.s32.totalorder %s32, %s35
    %p41 = scmp.eq.s32.totalorder %s10, 0
    %p42 = por %p40, %p41
    %p43 = scmp.ne.s32.totalorder %s32, %s35
    %p44 = scmp.eq.s32.totalorder %s15, 7
    %p45 = por %p43, %p44
    %p46 = scmp.ne.s32.totalorder %s35, %s36
    %p47 = scmp.eq.s32.totalorder %s15, 0
    %p48 = por %p46, %p47
    %p49 = scmp.ne.s32.totalorder %s35, %s36
    %p50 = scmp.eq.s32.totalorder %s16, 7
    %p51 = por %p49, %p50
    %p53 = scmp.ne.s32.totalorder %s36, %s52
    %p54 = scmp.eq.s32.totalorder %s16, 0
    %p55 = por %p53, %p54
    %s57 = sadd.s32 %s56, 1
    %p60 = scmp.eq.s32.totalorder %s10, 7
    %p61 = scmp.ne.s32.totalorder %s56, %s58
    %p62 = scmp.eq.s32.totalorder %s10, 0
    %p63 = por %p61, %p62
    %p64 = scmp.ne.s32.totalorder %s56, %s58
    %p65 = scmp.eq.s32.totalorder %s15, 7
    %p66 = por %p64, %p65
    %p67 = scmp.ne.s32.totalorder %s58, %s59
    %p68 = scmp.eq.s32.totalorder %s15, 0
    %p69 = por %p67, %p68
    %p70 = scmp.ne.s32.totalorder %s58, %s59
    %p71 = scmp.eq.s32.totalorder %s16, 7
    %p72 = por %p70, %p71
    %p74 = scmp.ne.s32.totalorder %s59, %s73
    %p75 = scmp.eq.s32.totalorder %s16, 0
    %p76 = por %p74, %p75
    %s77 = ssub.s32 %s17, %s29
    %s78 = ssub.s32 %s18, %s25
    %s79 = sor.u32 %s77, %s78
    %p80 = scmp.eq.s32.totalorder %s79, 0
    %s82 = sadd.s32 %s81, 1
    %s83 = scalar_select %p80, %s81, %s82
    %p86 = pneg %p80
    %p87 = scmp.eq.s32.totalorder %s10, 7
    %p88 = por %p86, %p87
    %p89 = scmp.ne.s32.totalorder %s81, %s84
    %p90 = scmp.eq.s32.totalorder %s10, 0
    %p91 = por %p89, %p90
    %p92 = scmp.ne.s32.totalorder %s81, %s84
    %p93 = scmp.eq.s32.totalorder %s15, 7
    %p94 = por %p92, %p93
    %p95 = scmp.ne.s32.totalorder %s84, %s85
    %p96 = scmp.eq.s32.totalorder %s15, 0
    %p97 = por %p95, %p96
    %p98 = scmp.ne.s32.totalorder %s84, %s85
    %p99 = scmp.eq.s32.totalorder %s16, 7
    %p100 = por %p98, %p99
    %p102 = scmp.ne.s32.totalorder %s85, %s101
    %p103 = scmp.eq.s32.totalorder %s16, 0
    %p104 = por %p102, %p103
    %s105 = ssub.s32 %s17, %s29
    %p106 = scmp.eq.s32.totalorder %s105, 0
    %s108 = sadd.s32 %s107, 1
    %s109 = scalar_select %p106, %s107, %s108
    %p112 = pneg %p106
    %p113 = scmp.eq.s32.totalorder %s10, 7
    %p114 = por %p112, %p113
    %p115 = scmp.ne.s32.totalorder %s107, %s110
    %p116 = scmp.eq.s32.totalorder %s10, 0
    %p117 = por %p115, %p116
    %p118 = scmp.ne.s32.totalorder %s107, %s110
    %p119 = scmp.eq.s32.totalorder %s15, 7
    %p120 = por %p118, %p119
    %p121 = scmp.ne.s32.totalorder %s110, %s111
    %p122 = scmp.eq.s32.totalorder %s15, 0
    %p123 = por %p121, %p122
    %p124 = scmp.ne.s32.totalorder %s110, %s111
    %p125 = scmp.eq.s32.totalorder %s16, 7
    %p126 = por %p124, %p125
    %p128 = scmp.ne.s32.totalorder %s111, %s127
    %p129 = scmp.eq.s32.totalorder %s16, 0
    %p130 = por %p128, %p129
    %p131 = scmp.le.s32.totalorder 1, %s10
    %p132 = scmp.lt.s32.totalorder %s10, 9
    %p133 = pnand %p131, %p132
    %p134 = pneg %p133
    // Predicated region
    $region9: #{basic_block_forward.3} parent=5 // pred_check
      _
    $region10: #{basic_block_forward.3} parent=5 // pred_check_branch
      %136 = sbr.rel (%p133) target = $region12
    $region11: #{basic_block_forward.3} parent=5 // pred_region
      %s137 = ssub.s32 %s10, 1
      // Predicated region
      $region13: #{basic_block_forward.3} parent=11 // pred_check
        %p138 = pneg %p69
      $region14: #{basic_block_forward.3} parent=11 // pred_check_branch
        %140 = sbr.rel (%p138) target = $region16
      $region15: #{basic_block_forward.3} parent=11 // pred_region
        _
      $region16: #{basic_block_forward.3} parent=11 // pred_fallthru
        _
    $region12: #{basic_block_forward.3} parent=5 // pred_fallthru
      _
    %p141 = scmp.lt.s32.totalorder %s10, 8
    // Predicated region
    $region17: #{basic_block_forward.3} parent=5 // pred_check
      %p142 = pneg %p141
    $region18: #{basic_block_forward.3} parent=5 // pred_check_branch
      %144 = sbr.rel (%p142) target = $region20
    $region19: #{basic_block_forward.3} parent=5 // pred_region
      // Predicated region
      $region21: #{basic_block_forward.3} parent=19 // pred_check
        %p145 = pneg %p42
      $region22: #{basic_block_forward.3} parent=19 // pred_check_branch
        %147 = sbr.rel (%p145) target = $region24
      $region23: #{basic_block_forward.3} parent=19 // pred_region
        %p148 = scmp.lt.s32.totalorder %s17, 1
        %s149 = scalar_select %p148, %s17, 1
        %s150 = smul.addr %s149, 54
        %s151 = smul.addr %s150, 4
        %s152 = scalar_lea.vmem %s0, %s151
      $region24: #{basic_block_forward.3} parent=19 // pred_fallthru
        _
    $region20: #{basic_block_forward.3} parent=5 // pred_fallthru
      _
    %p153 = scmp.le.s32.totalorder 1, %s10
    %p154 = scmp.lt.s32.totalorder %s10, 9
    %p155 = pnand %p153, %p154
    %p156 = pneg %p155
    // Predicated region
    $region25: #{basic_block_forward.3} parent=5 // pred_check
      _
    $region26: #{basic_block_forward.3} parent=5 // pred_check_branch
      %158 = sbr.rel (%p155) target = $region28
    $region27: #{basic_block_forward.3} parent=5 // pred_region
      %s159 = ssub.s32 %s10, 1
      %p160 = scmp.lt.s32.totalorder %s19, 1
      %s161 = scalar_select %p160, %s19, 1
      %s162 = smul.addr %s161, 54
      %s163 = smul.addr %s162, 4
      %s164 = scalar_lea.vmem %s0, %s163
      %p165 = pneg %p48
      %p166 = pneg %p45
      %p167 = pneg %p69
      %p168 = pneg %p66
      %p169 = pneg %p97
      %p170 = pneg %p94
      %s171 = smul.u32 4, %s20
      %p172 = scmp.lt.s32.totalorder %s19, 1
      %s173 = scalar_select %p172, %s19, 1
      %p174 = scmp.lt.s32.totalorder %s171, 15
      %s175 = scalar_select %p174, %s171, 15
      %s176 = smul.addr %s175, 2
      %s177 = smul.addr %s173, 32
      %s178 = sadd.s32 %s176, %s177
      %s179 = smul.addr %s178, 8
      %s180 = scalar_lea.vmem %s2, %s179
      %p181 = pneg %p123
      %p182 = pneg %p120
      %p183 = scmp.lt.s32.totalorder %s19, 1
      %s184 = scalar_select %p183, %s19, 1
      %s185 = smul.addr %s184, 2
      %s186 = scalar_lea.vmem %s3, %s185
      %p187 = scmp.lt.s32.totalorder %s19, 1
      %s188 = scalar_select %p187, %s19, 1
      %s189 = smul.addr %s188, 54
      %s190 = smul.addr %s189, 4
      %s191 = scalar_lea.vmem %s0, %s190
      %s192 = smul.u32 4, %s20
      %p193 = scmp.lt.s32.totalorder %s19, 1
      %s194 = scalar_select %p193, %s19, 1
      %p195 = scmp.lt.s32.totalorder %s192, 15
      %s196 = scalar_select %p195, %s192, 15
      %s197 = smul.addr %s196, 2
      %s198 = smul.addr %s194, 32
      %s199 = sadd.s32 %s197, %s198
      %s200 = smul.addr %s199, 8
      %s201 = scalar_lea.vmem %s2, %s200
      %s202 = smul.u32 4, %s20
      %p203 = scmp.lt.s32.totalorder %s19, 1
      %s204 = scalar_select %p203, %s19, 1
      %s205 = smul.addr %s204, 2
      %s206 = scalar_lea.vmem %s3, %s205
      %s208 = smul.u32 %s20, 4
      %s209 = smul.u32 %s208, 3
      %s210 = smul.addr %s209, 4
      %s211 = scalar_lea.vmem %s191, %s210
      %v212 = vld [vmem:[%s211] sm:$0xf]
      %v213 = vld [vmem:[%s211 + $0x4] sm:$0xf]
      %v214 = vld [vmem:[%s211 + $0x8] sm:$0x1]
      %v215 = vld [vmem:[%s211 + $0xc] sm:$0xf]
      %v216 = vld [vmem:[%s211 + $0x10] sm:$0xf]
      %v217 = vld [vmem:[%s211 + $0x14] sm:$0x1]
      %v218 = vld [vmem:[%s211 + $0x18] sm:$0xf]
      %v219 = vld [vmem:[%s211 + $0x1c] sm:$0xf]
      %v220 = vld [vmem:[%s211 + $0x20] sm:$0x1]
      %v221 = vld [vmem:[%s211 + $0x24] sm:$0xf]
      %v222 = vld [vmem:[%s211 + $0x28] sm:$0xf]
      %v223 = vld [vmem:[%s211 + $0x2c] sm:$0x1]
      %v224 = vld [vmem:[%s1] sm:$0x3]
      %vm225 = vsmask.f32 3328
      %vm226 = vsmask.f32 7440
      %vm227 = vmor %vm225, %vm226
      %v229 = vshrl.u32 %v212, 16
      %v231 = vrot.slane %v229, 4
      %v232 = vshll.u32 %v212, 16
      %v234 = vrot.slane %v232, 5
      %v235 = vor.u32 %v231, %v234
      %v236 = vrot.slane %v235, 4
      %v238 = vshll.u32 %v213, 16
      %v240 = vrot.slane %v238, 5
      %v241 = vsel %vm227, %v236, %v240
      %v242 = vshrl.u32 %v213, 16
      %v244 = vrot.slane %v242, 4
      %v245 = vor.u32 %v244, %v240
      %v246 = vrot.slane %v245, 4
      %v248 = vshll.u32 %v214, 16
      %v250 = vrot.slane %v248, 5
      %v251 = vsel %vm227, %v246, %v250
      %v253 = vshrl.u32 %v215, 16
      %v255 = vrot.slane %v253, 4
      %v256 = vshll.u32 %v215, 16
      %v258 = vrot.slane %v256, 5
      %v259 = vor.u32 %v255, %v258
      %v260 = vrot.slane %v259, 4
      %v262 = vshll.u32 %v216, 16
      %v264 = vrot.slane %v262, 5
      %v265 = vsel %vm227, %v260, %v264
      %v266 = vshrl.u32 %v216, 16
      %v268 = vrot.slane %v266, 4
      %v269 = vor.u32 %v268, %v264
      %v270 = vrot.slane %v269, 4
      %v272 = vshll.u32 %v217, 16
      %v274 = vrot.slane %v272, 5
      %v275 = vsel %vm227, %v270, %v274
      %v277 = vshrl.u32 %v218, 16
      %v279 = vrot.slane %v277, 4
      %v280 = vshll.u32 %v218, 16
      %v282 = vrot.slane %v280, 5
      %v283 = vor.u32 %v279, %v282
      %v284 = vrot.slane %v283, 4
      %v286 = vshll.u32 %v219, 16
      %v288 = vrot.slane %v286, 5
      %v289 = vsel %vm227, %v284, %v288
      %v290 = vshrl.u32 %v219, 16
      %v292 = vrot.slane %v290, 4
      %v293 = vor.u32 %v292, %v288
      %v294 = vrot.slane %v293, 4
      %v296 = vshll.u32 %v220, 16
      %v298 = vrot.slane %v296, 5
      %v299 = vsel %vm227, %v294, %v298
      %v301 = vshrl.u32 %v221, 16
      %v303 = vrot.slane %v301, 4
      %v304 = vshll.u32 %v221, 16
      %v306 = vrot.slane %v304, 5
      %v307 = vor.u32 %v303, %v306
      %v308 = vrot.slane %v307, 4
      %v310 = vshll.u32 %v222, 16
      %v312 = vrot.slane %v310, 5
      %v313 = vsel %vm227, %v308, %v312
      %v314 = vshrl.u32 %v222, 16
      %v316 = vrot.slane %v314, 4
      %v317 = vor.u32 %v316, %v312
      %v318 = vrot.slane %v317, 4
      %v320 = vshll.u32 %v223, 16
      %v322 = vrot.slane %v320, 5
      %v323 = vsel %vm227, %v318, %v322
      %s324 = scalar_lea.vmem %s1, 2
      %v325 = vld [vmem:[%s324] sm:$0x3]
      %v326 = vunpack.c.l.b16 %v241
      %v327 = vunpack.c.l.b16 %v251
      %v328 = vunpack.c.l.b16 %v265
      %v329 = vunpack.c.l.b16 %v275
      %v330 = vunpack.c.l.b16 %v289
      %v331 = vunpack.c.l.b16 %v299
      %v332 = vunpack.c.l.b16 %v313
      %v333 = vunpack.c.l.b16 %v323
      %v334 = vpack.c.b16 %v327, %v326
      %v335 = vpack.c.b16 %v329, %v328
      %v336 = vpack.c.b16 %v331, %v330
      %v337 = vpack.c.b16 %v333, %v332
      %vm338 = vcmask 31744
      %v340 = vsel %vm338, %v334, 0
      %v343 = vsel %vm338, %v335, 0
      %v346 = vsel %vm338, %v336, 0
      %v349 = vsel %vm338, %v337, 0
      %vm351 = vcmask 1041408
      %v353 = vsel %vm351, %v325, 0
      %355 = vmatpush.bf16.msra.mxu0 0
      %356 = vmatpush.bf16.msra.mxu0 0
      %357 = vmatpush.bf16.msra.mxu0 0
      %358 = vmatpush.bf16.msra.mxu0 0
      %359 = vmatpush.bf16.msra.mxu0 0
      %360 = vmatpush.bf16.msra.mxu0 0
      %361 = vmatpush.bf16.msra.mxu0 0
      %362 = vmatpush.bf16.msra.mxu0 %v353
      %363 = vmatmul.bf16.gmra.mxu0 %v340
      %v364 = vpop.f32.mrf.mxu0
      %v365 = vadd.f32 0.0, %v364
      %v366 = vpop.f32.mrf.mxu0
      %v367 = vadd.f32 0.0, %v366
      %368 = vmatmul.bf16.gmra.mxu0 %v343
      %v369 = vpop.f32.mrf.mxu0
      %v370 = vadd.f32 0.0, %v369
      %v371 = vpop.f32.mrf.mxu0
      %v372 = vadd.f32 0.0, %v371
      %373 = vmatmul.bf16.gmra.mxu0 %v346
      %v374 = vpop.f32.mrf.mxu0
      %v375 = vadd.f32 0.0, %v374
      %v376 = vpop.f32.mrf.mxu0
      %v377 = vadd.f32 0.0, %v376
      %378 = vmatmul.bf16.gmra.mxu0 %v349
      %v379 = vpop.f32.mrf.mxu0
      %v380 = vadd.f32 0.0, %v379
      %v381 = vpop.f32.mrf.mxu0
      %v382 = vadd.f32 0.0, %v381
      %383 = vdwg.mxu0
      %v392 = vunpack.c.l.b16 %v212
      %v393 = vunpack.c.l.b16 %v213
      %v394 = vunpack.c.l.b16 %v215
      %v395 = vunpack.c.l.b16 %v216
      %v396 = vunpack.c.l.b16 %v218
      %v397 = vunpack.c.l.b16 %v219
      %v398 = vunpack.c.l.b16 %v221
      %v399 = vunpack.c.l.b16 %v222
      %v400 = vpack.c.b16 %v393, %v392
      %v401 = vpack.c.b16 %v395, %v394
      %v402 = vpack.c.b16 %v397, %v396
      %v403 = vpack.c.b16 %v399, %v398
      %v405 = vsel %vm338, %v400, 0
      %v408 = vsel %vm338, %v401, 0
      %v411 = vsel %vm338, %v402, 0
      %v414 = vsel %vm338, %v403, 0
      %v417 = vsel %vm351, %v224, 0
      %419 = vmatpush.bf16.msra.mxu0 0
      %420 = vmatpush.bf16.msra.mxu0 0
      %421 = vmatpush.bf16.msra.mxu0 0
      %422 = vmatpush.bf16.msra.mxu0 0
      %423 = vmatpush.bf16.msra.mxu0 0
      %424 = vmatpush.bf16.msra.mxu0 0
      %425 = vmatpush.bf16.msra.mxu0 0
      %426 = vmatpush.bf16.msra.mxu0 %v417
      %427 = vmatmul.bf16.gmra.mxu0 %v405
      %v428 = vpop.f32.mrf.mxu0
      %v429 = vadd.f32 %v365, %v428
      %v430 = vpop.f32.mrf.mxu0
      %v431 = vadd.f32 %v367, %v430
      %432 = vmatmul.bf16.gmra.mxu0 %v408
      %v433 = vpop.f32.mrf.mxu0
      %v434 = vadd.f32 %v370, %v433
      %v435 = vpop.f32.mrf.mxu0
      %v436 = vadd.f32 %v372, %v435
      %437 = vmatmul.bf16.gmra.mxu0 %v411
      %v438 = vpop.f32.mrf.mxu0
      %v439 = vadd.f32 %v375, %v438
      %v440 = vpop.f32.mrf.mxu0
      %v441 = vadd.f32 %v377, %v440
      %442 = vmatmul.bf16.gmra.mxu0 %v414
      %v443 = vpop.f32.mrf.mxu0
      %v444 = vadd.f32 %v380, %v443
      %v445 = vpop.f32.mrf.mxu0
      %v446 = vadd.f32 %v382, %v445
      %447 = vdwg.mxu0
      %vm452 = vcmask 1042432
      %vm453 = vcmask 1046532
      %vm454 = vmor %vm452, %vm453
      %v455 = vrot.slane %v212, 5
      %v456 = vrot.slane %v455, 4
      %v457 = vrot.slane %v213, 5
      %v458 = vsel %vm454, %v456, %v457
      %v459 = vrot.slane %v457, 4
      %v460 = vrot.slane %v214, 5
      %v461 = vsel %vm454, %v459, %v460
      %v462 = vrot.slane %v215, 5
      %v463 = vrot.slane %v462, 4
      %v464 = vrot.slane %v216, 5
      %v465 = vsel %vm454, %v463, %v464
      %v466 = vrot.slane %v464, 4
      %v467 = vrot.slane %v217, 5
      %v468 = vsel %vm454, %v466, %v467
      %v469 = vrot.slane %v218, 5
      %v470 = vrot.slane %v469, 4
      %v471 = vrot.slane %v219, 5
      %v472 = vsel %vm454, %v470, %v471
      %v473 = vrot.slane %v471, 4
      %v474 = vrot.slane %v220, 5
      %v475 = vsel %vm454, %v473, %v474
      %v476 = vrot.slane %v221, 5
      %v477 = vrot.slane %v476, 4
      %v478 = vrot.slane %v222, 5
      %v479 = vsel %vm454, %v477, %v478
      %v480 = vrot.slane %v478, 4
      %v481 = vrot.slane %v223, 5
      %v482 = vsel %vm454, %v480, %v481
      %s483 = scalar_lea.vmem %s1, 4
      %v484 = vld [vmem:[%s483] sm:$0x3]
      %v485 = vunpack.c.l.b16 %v458
      %v486 = vunpack.c.l.b16 %v461
      %v487 = vunpack.c.l.b16 %v465
      %v488 = vunpack.c.l.b16 %v468
      %v489 = vunpack.c.l.b16 %v472
      %v490 = vunpack.c.l.b16 %v475
      %v491 = vunpack.c.l.b16 %v479
      %v492 = vunpack.c.l.b16 %v482
      %v493 = vpack.c.b16 %v486, %v485
      %v494 = vpack.c.b16 %v488, %v487
      %v495 = vpack.c.b16 %v490, %v489
      %v496 = vpack.c.b16 %v492, %v491
      %v498 = vsel %vm338, %v493, 0
      %v501 = vsel %vm338, %v494, 0
      %v504 = vsel %vm338, %v495, 0
      %v507 = vsel %vm338, %v496, 0
      %v510 = vsel %vm351, %v484, 0
      %512 = vmatpush.bf16.msra.mxu0 0
      %513 = vmatpush.bf16.msra.mxu0 0
      %514 = vmatpush.bf16.msra.mxu0 0
      %515 = vmatpush.bf16.msra.mxu0 0
      %516 = vmatpush.bf16.msra.mxu0 0
      %517 = vmatpush.bf16.msra.mxu0 0
      %518 = vmatpush.bf16.msra.mxu0 0
      %519 = vmatpush.bf16.msra.mxu0 %v510
      %520 = vmatmul.bf16.gmra.mxu0 %v498
      %v521 = vpop.f32.mrf.mxu0
      %v522 = vadd.f32 0.0, %v521
      %v523 = vpop.f32.mrf.mxu0
      %v524 = vadd.f32 0.0, %v523
      %525 = vmatmul.bf16.gmra.mxu0 %v501
      %v526 = vpop.f32.mrf.mxu0
      %v527 = vadd.f32 0.0, %v526
      %v528 = vpop.f32.mrf.mxu0
      %v529 = vadd.f32 0.0, %v528
      %530 = vmatmul.bf16.gmra.mxu0 %v504
      %v531 = vpop.f32.mrf.mxu0
      %v532 = vadd.f32 0.0, %v531
      %v533 = vpop.f32.mrf.mxu0
      %v534 = vadd.f32 0.0, %v533
      %535 = vmatmul.bf16.gmra.mxu0 %v507
      %v536 = vpop.f32.mrf.mxu0
      %v537 = vadd.f32 0.0, %v536
      %v538 = vpop.f32.mrf.mxu0
      %v539 = vadd.f32 0.0, %v538
      %540 = vdwg.mxu0
      %v541 = vadd.f32 %v429, %v522
      %v542 = vadd.f32 %v431, %v524
      %v543 = vadd.f32 %v434, %v527
      %v544 = vadd.f32 %v436, %v529
      %v545 = vadd.f32 %v439, %v532
      %v546 = vadd.f32 %v441, %v534
      %v547 = vadd.f32 %v444, %v537
      %v548 = vadd.f32 %v446, %v539
      %s549 = sadd.s32 %s208, 1
      %s550 = smul.u32 %s549, 3
      %s551 = smul.addr %s550, 4
      %s552 = scalar_lea.vmem %s191, %s551
      %v553 = vld [vmem:[%s552] sm:$0xf]
      %v554 = vld [vmem:[%s552 + $0x4] sm:$0xf]
      %v555 = vld [vmem:[%s552 + $0x8] sm:$0x1]
      %v556 = vld [vmem:[%s552 + $0xc] sm:$0xf]
      %v557 = vld [vmem:[%s552 + $0x10] sm:$0xf]
      %v558 = vld [vmem:[%s552 + $0x14] sm:$0x1]
      %v559 = vld [vmem:[%s552 + $0x18] sm:$0xf]
      %v560 = vld [vmem:[%s552 + $0x1c] sm:$0xf]
      %v561 = vld [vmem:[%s552 + $0x20] sm:$0x1]
      %v562 = vld [vmem:[%s552 + $0x24] sm:$0xf]
      %v563 = vld [vmem:[%s552 + $0x28] sm:$0xf]
      %v564 = vld [vmem:[%s552 + $0x2c] sm:$0x1]
      %s565 = scalar_lea.vmem %s1, 6
      %v566 = vld [vmem:[%s565] sm:$0x3]
      %v575 = vunpack.c.l.b16 %v553
      %v576 = vunpack.c.l.b16 %v554
      %v577 = vunpack.c.l.b16 %v556
      %v578 = vunpack.c.l.b16 %v557
      %v579 = vunpack.c.l.b16 %v559
      %v580 = vunpack.c.l.b16 %v560
      %v581 = vunpack.c.l.b16 %v562
      %v582 = vunpack.c.l.b16 %v563
      %v583 = vpack.c.b16 %v576, %v575
      %v584 = vpack.c.b16 %v578, %v577
      %v585 = vpack.c.b16 %v580, %v579
      %v586 = vpack.c.b16 %v582, %v581
      %v588 = vsel %vm338, %v583, 0
      %v591 = vsel %vm338, %v584, 0
      %v594 = vsel %vm338, %v585, 0
      %v597 = vsel %vm338, %v586, 0
      %v600 = vsel %vm351, %v566, 0
      %602 = vmatpush.bf16.msra.mxu0 0
      %603 = vmatpush.bf16.msra.mxu0 0
      %604 = vmatpush.bf16.msra.mxu0 0
      %605 = vmatpush.bf16.msra.mxu0 0
      %606 = vmatpush.bf16.msra.mxu0 0
      %607 = vmatpush.bf16.msra.mxu0 0
      %608 = vmatpush.bf16.msra.mxu0 0
      %609 = vmatpush.bf16.msra.mxu0 %v600
      %610 = vmatmul.bf16.gmra.mxu0 %v588
      %v611 = vpop.f32.mrf.mxu0
      %v612 = vadd.f32 0.0, %v611
      %v613 = vpop.f32.mrf.mxu0
      %v614 = vadd.f32 0.0, %v613
      %615 = vmatmul.bf16.gmra.mxu0 %v591
      %v616 = vpop.f32.mrf.mxu0
      %v617 = vadd.f32 0.0, %v616
      %v618 = vpop.f32.mrf.mxu0
      %v619 = vadd.f32 0.0, %v618
      %620 = vmatmul.bf16.gmra.mxu0 %v594
      %v621 = vpop.f32.mrf.mxu0
      %v622 = vadd.f32 0.0, %v621
      %v623 = vpop.f32.mrf.mxu0
      %v624 = vadd.f32 0.0, %v623
      %625 = vmatmul.bf16.gmra.mxu0 %v597
      %v626 = vpop.f32.mrf.mxu0
      %v627 = vadd.f32 0.0, %v626
      %v628 = vpop.f32.mrf.mxu0
      %v629 = vadd.f32 0.0, %v628
      %630 = vdwg.mxu0
      %v631 = vadd.f32 %v541, %v612
      %v632 = vadd.f32 %v542, %v614
      %v633 = vadd.f32 %v543, %v617
      %v634 = vadd.f32 %v544, %v619
      %v635 = vadd.f32 %v545, %v622
      %v636 = vadd.f32 %v546, %v624
      %v637 = vadd.f32 %v547, %v627
      %v638 = vadd.f32 %v548, %v629
      %v640 = vshrl.u32 %v553, 16
      %v642 = vrot.slane %v640, 4
      %v643 = vshll.u32 %v553, 16
      %v645 = vrot.slane %v643, 5
      %v646 = vor.u32 %v642, %v645
      %v647 = vrot.slane %v646, 4
      %v649 = vshll.u32 %v554, 16
      %v651 = vrot.slane %v649, 5
      %v652 = vsel %vm227, %v647, %v651
      %v653 = vshrl.u32 %v554, 16
      %v655 = vrot.slane %v653, 4
      %v656 = vor.u32 %v655, %v651
      %v657 = vrot.slane %v656, 4
      %v659 = vshll.u32 %v555, 16
      %v661 = vrot.slane %v659, 5
      %v662 = vsel %vm227, %v657, %v661
      %v664 = vshrl.u32 %v556, 16
      %v666 = vrot.slane %v664, 4
      %v667 = vshll.u32 %v556, 16
      %v669 = vrot.slane %v667, 5
      %v670 = vor.u32 %v666, %v669
      %v671 = vrot.slane %v670, 4
      %v673 = vshll.u32 %v557, 16
      %v675 = vrot.slane %v673, 5
      %v676 = vsel %vm227, %v671, %v675
      %v677 = vshrl.u32 %v557, 16
      %v679 = vrot.slane %v677, 4
      %v680 = vor.u32 %v679, %v675
      %v681 = vrot.slane %v680, 4
      %v683 = vshll.u32 %v558, 16
      %v685 = vrot.slane %v683, 5
      %v686 = vsel %vm227, %v681, %v685
      %v688 = vshrl.u32 %v559, 16
      %v690 = vrot.slane %v688, 4
      %v691 = vshll.u32 %v559, 16
      %v693 = vrot.slane %v691, 5
      %v694 = vor.u32 %v690, %v693
      %v695 = vrot.slane %v694, 4
      %v697 = vshll.u32 %v560, 16
      %v699 = vrot.slane %v697, 5
      %v700 = vsel %vm227, %v695, %v699
      %v701 = vshrl.u32 %v560, 16
      %v703 = vrot.slane %v701, 4
      %v704 = vor.u32 %v703, %v699
      %v705 = vrot.slane %v704, 4
      %v707 = vshll.u32 %v561, 16
      %v709 = vrot.slane %v707, 5
      %v710 = vsel %vm227, %v705, %v709
      %v712 = vshrl.u32 %v562, 16
      %v714 = vrot.slane %v712, 4
      %v715 = vshll.u32 %v562, 16
      %v717 = vrot.slane %v715, 5
      %v718 = vor.u32 %v714, %v717
      %v719 = vrot.slane %v718, 4
      %v721 = vshll.u32 %v563, 16
      %v723 = vrot.slane %v721, 5
      %v724 = vsel %vm227, %v719, %v723
      %v725 = vshrl.u32 %v563, 16
      %v727 = vrot.slane %v725, 4
      %v728 = vor.u32 %v727, %v723
      %v729 = vrot.slane %v728, 4
      %v731 = vshll.u32 %v564, 16
      %v733 = vrot.slane %v731, 5
      %v734 = vsel %vm227, %v729, %v733
      %s735 = scalar_lea.vmem %s1, 8
      %v736 = vld [vmem:[%s735] sm:$0x3]
      %v737 = vunpack.c.l.b16 %v652
      %v738 = vunpack.c.l.b16 %v662
      %v739 = vunpack.c.l.b16 %v676
      %v740 = vunpack.c.l.b16 %v686
      %v741 = vunpack.c.l.b16 %v700
      %v742 = vunpack.c.l.b16 %v710
      %v743 = vunpack.c.l.b16 %v724
      %v744 = vunpack.c.l.b16 %v734
      %v745 = vpack.c.b16 %v738, %v737
      %v746 = vpack.c.b16 %v740, %v739
      %v747 = vpack.c.b16 %v742, %v741
      %v748 = vpack.c.b16 %v744, %v743
      %v750 = vsel %vm338, %v745, 0
      %v753 = vsel %vm338, %v746, 0
      %v756 = vsel %vm338, %v747, 0
      %v759 = vsel %vm338, %v748, 0
      %v762 = vsel %vm351, %v736, 0
      %764 = vmatpush.bf16.msra.mxu0 0
      %765 = vmatpush.bf16.msra.mxu0 0
      %766 = vmatpush.bf16.msra.mxu0 0
      %767 = vmatpush.bf16.msra.mxu0 0
      %768 = vmatpush.bf16.msra.mxu0 0
      %769 = vmatpush.bf16.msra.mxu0 0
      %770 = vmatpush.bf16.msra.mxu0 0
      %771 = vmatpush.bf16.msra.mxu0 %v762
      %772 = vmatmul.bf16.gmra.mxu0 %v750
      %v773 = vpop.f32.mrf.mxu0
      %v774 = vadd.f32 0.0, %v773
      %v775 = vpop.f32.mrf.mxu0
      %v776 = vadd.f32 0.0, %v775
      %777 = vmatmul.bf16.gmra.mxu0 %v753
      %v778 = vpop.f32.mrf.mxu0
      %v779 = vadd.f32 0.0, %v778
      %v780 = vpop.f32.mrf.mxu0
      %v781 = vadd.f32 0.0, %v780
      %782 = vmatmul.bf16.gmra.mxu0 %v756
      %v783 = vpop.f32.mrf.mxu0
      %v784 = vadd.f32 0.0, %v783
      %v785 = vpop.f32.mrf.mxu0
      %v786 = vadd.f32 0.0, %v785
      %787 = vmatmul.bf16.gmra.mxu0 %v759
      %v788 = vpop.f32.mrf.mxu0
      %v789 = vadd.f32 0.0, %v788
      %v790 = vpop.f32.mrf.mxu0
      %v791 = vadd.f32 0.0, %v790
      %792 = vdwg.mxu0
      %v793 = vadd.f32 %v631, %v774
      %v794 = vadd.f32 %v632, %v776
      %v795 = vadd.f32 %v633, %v779
      %v796 = vadd.f32 %v634, %v781
      %v797 = vadd.f32 %v635, %v784
      %v798 = vadd.f32 %v636, %v786
      %v799 = vadd.f32 %v637, %v789
      %v800 = vadd.f32 %v638, %v791
      %v805 = vrot.slane %v553, 5
      %v806 = vrot.slane %v805, 4
      %v807 = vrot.slane %v554, 5
      %v808 = vsel %vm454, %v806, %v807
      %v809 = vrot.slane %v807, 4
      %v810 = vrot.slane %v555, 5
      %v811 = vsel %vm454, %v809, %v810
      %v812 = vrot.slane %v556, 5
      %v813 = vrot.slane %v812, 4
      %v814 = vrot.slane %v557, 5
      %v815 = vsel %vm454, %v813, %v814
      %v816 = vrot.slane %v814, 4
      %v817 = vrot.slane %v558, 5
      %v818 = vsel %vm454, %v816, %v817
      %v819 = vrot.slane %v559, 5
      %v820 = vrot.slane %v819, 4
      %v821 = vrot.slane %v560, 5
      %v822 = vsel %vm454, %v820, %v821
      %v823 = vrot.slane %v821, 4
      %v824 = vrot.slane %v561, 5
      %v825 = vsel %vm454, %v823, %v824
      %v826 = vrot.slane %v562, 5
      %v827 = vrot.slane %v826, 4
      %v828 = vrot.slane %v563, 5
      %v829 = vsel %vm454, %v827, %v828
      %v830 = vrot.slane %v828, 4
      %v831 = vrot.slane %v564, 5
      %v832 = vsel %vm454, %v830, %v831
      %s833 = scalar_lea.vmem %s1, 10
      %v834 = vld [vmem:[%s833] sm:$0x3]
      %v835 = vunpack.c.l.b16 %v808
      %v836 = vunpack.c.l.b16 %v811
      %v837 = vunpack.c.l.b16 %v815
      %v838 = vunpack.c.l.b16 %v818
      %v839 = vunpack.c.l.b16 %v822
      %v840 = vunpack.c.l.b16 %v825
      %v841 = vunpack.c.l.b16 %v829
      %v842 = vunpack.c.l.b16 %v832
      %v843 = vpack.c.b16 %v836, %v835
      %v844 = vpack.c.b16 %v838, %v837
      %v845 = vpack.c.b16 %v840, %v839
      %v846 = vpack.c.b16 %v842, %v841
      %v848 = vsel %vm338, %v843, 0
      %v851 = vsel %vm338, %v844, 0
      %v854 = vsel %vm338, %v845, 0
      %v857 = vsel %vm338, %v846, 0
      %v860 = vsel %vm351, %v834, 0
      %862 = vmatpush.bf16.msra.mxu0 0
      %863 = vmatpush.bf16.msra.mxu0 0
      %864 = vmatpush.bf16.msra.mxu0 0
      %865 = vmatpush.bf16.msra.mxu0 0
      %866 = vmatpush.bf16.msra.mxu0 0
      %867 = vmatpush.bf16.msra.mxu0 0
      %868 = vmatpush.bf16.msra.mxu0 0
      %869 = vmatpush.bf16.msra.mxu0 %v860
      %870 = vmatmul.bf16.gmra.mxu0 %v848
      %v871 = vpop.f32.mrf.mxu0
      %v872 = vadd.f32 0.0, %v871
      %v873 = vpop.f32.mrf.mxu0
      %v874 = vadd.f32 0.0, %v873
      %875 = vmatmul.bf16.gmra.mxu0 %v851
      %v876 = vpop.f32.mrf.mxu0
      %v877 = vadd.f32 0.0, %v876
      %v878 = vpop.f32.mrf.mxu0
      %v879 = vadd.f32 0.0, %v878
      %880 = vmatmul.bf16.gmra.mxu0 %v854
      %v881 = vpop.f32.mrf.mxu0
      %v882 = vadd.f32 0.0, %v881
      %v883 = vpop.f32.mrf.mxu0
      %v884 = vadd.f32 0.0, %v883
      %885 = vmatmul.bf16.gmra.mxu0 %v857
      %v886 = vpop.f32.mrf.mxu0
      %v887 = vadd.f32 0.0, %v886
      %v888 = vpop.f32.mrf.mxu0
      %v889 = vadd.f32 0.0, %v888
      %890 = vdwg.mxu0
      %v891 = vadd.f32 %v793, %v872
      %v892 = vadd.f32 %v794, %v874
      %v893 = vadd.f32 %v795, %v877
      %v894 = vadd.f32 %v796, %v879
      %v895 = vadd.f32 %v797, %v882
      %v896 = vadd.f32 %v798, %v884
      %v897 = vadd.f32 %v799, %v887
      %v898 = vadd.f32 %v800, %v889
      %s899 = sadd.s32 %s208, 2
      %s900 = smul.u32 %s899, 3
      %s901 = smul.addr %s900, 4
      %s902 = scalar_lea.vmem %s191, %s901
      %v903 = vld [vmem:[%s902] sm:$0xf]
      %v904 = vld [vmem:[%s902 + $0x4] sm:$0xf]
      %v905 = vld [vmem:[%s902 + $0x8] sm:$0x1]
      %v906 = vld [vmem:[%s902 + $0xc] sm:$0xf]
      %v907 = vld [vmem:[%s902 + $0x10] sm:$0xf]
      %v908 = vld [vmem:[%s902 + $0x14] sm:$0x1]
      %v909 = vld [vmem:[%s902 + $0x18] sm:$0xf]
      %v910 = vld [vmem:[%s902 + $0x1c] sm:$0xf]
      %v911 = vld [vmem:[%s902 + $0x20] sm:$0x1]
      %v912 = vld [vmem:[%s902 + $0x24] sm:$0xf]
      %v913 = vld [vmem:[%s902 + $0x28] sm:$0xf]
      %v914 = vld [vmem:[%s902 + $0x2c] sm:$0x1]
      %s915 = scalar_lea.vmem %s1, 12
      %v916 = vld [vmem:[%s915] sm:$0x3]
      %v925 = vunpack.c.l.b16 %v903
      %v926 = vunpack.c.l.b16 %v904
      %v927 = vunpack.c.l.b16 %v906
      %v928 = vunpack.c.l.b16 %v907
      %v929 = vunpack.c.l.b16 %v909
      %v930 = vunpack.c.l.b16 %v910
      %v931 = vunpack.c.l.b16 %v912
      %v932 = vunpack.c.l.b16 %v913
      %v933 = vpack.c.b16 %v926, %v925
      %v934 = vpack.c.b16 %v928, %v927
      %v935 = vpack.c.b16 %v930, %v929
      %v936 = vpack.c.b16 %v932, %v931
      %v938 = vsel %vm338, %v933, 0
      %v941 = vsel %vm338, %v934, 0
      %v944 = vsel %vm338, %v935, 0
      %v947 = vsel %vm338, %v936, 0
      %v950 = vsel %vm351, %v916, 0
      %952 = vmatpush.bf16.msra.mxu0 0
      %953 = vmatpush.bf16.msra.mxu0 0
      %954 = vmatpush.bf16.msra.mxu0 0
      %955 = vmatpush.bf16.msra.mxu0 0
      %956 = vmatpush.bf16.msra.mxu0 0
      %957 = vmatpush.bf16.msra.mxu0 0
      %958 = vmatpush.bf16.msra.mxu0 0
      %959 = vmatpush.bf16.msra.mxu0 %v950
      %960 = vmatmul.bf16.gmra.mxu0 %v938
      %v961 = vpop.f32.mrf.mxu0
      %v962 = vadd.f32 0.0, %v961
      %v963 = vpop.f32.mrf.mxu0
      %v964 = vadd.f32 0.0, %v963
      %965 = vmatmul.bf16.gmra.mxu0 %v941
      %v966 = vpop.f32.mrf.mxu0
      %v967 = vadd.f32 0.0, %v966
      %v968 = vpop.f32.mrf.mxu0
      %v969 = vadd.f32 0.0, %v968
      %970 = vmatmul.bf16.gmra.mxu0 %v944
      %v971 = vpop.f32.mrf.mxu0
      %v972 = vadd.f32 0.0, %v971
      %v973 = vpop.f32.mrf.mxu0
      %v974 = vadd.f32 0.0, %v973
      %975 = vmatmul.bf16.gmra.mxu0 %v947
      %v976 = vpop.f32.mrf.mxu0
      %v977 = vadd.f32 0.0, %v976
      %v978 = vpop.f32.mrf.mxu0
      %v979 = vadd.f32 0.0, %v978
      %980 = vdwg.mxu0
      %v981 = vadd.f32 %v891, %v962
      %v982 = vadd.f32 %v892, %v964
      %v983 = vadd.f32 %v893, %v967
      %v984 = vadd.f32 %v894, %v969
      %v985 = vadd.f32 %v895, %v972
      %v986 = vadd.f32 %v896, %v974
      %v987 = vadd.f32 %v897, %v977
      %v988 = vadd.f32 %v898, %v979
      %v990 = vshrl.u32 %v903, 16
      %v992 = vrot.slane %v990, 4
      %v993 = vshll.u32 %v903, 16
      %v995 = vrot.slane %v993, 5
      %v996 = vor.u32 %v992, %v995
      %v997 = vrot.slane %v996, 4
      %v999 = vshll.u32 %v904, 16
      %v1001 = vrot.slane %v999, 5
      %v1002 = vsel %vm227, %v997, %v1001
      %v1003 = vshrl.u32 %v904, 16
      %v1005 = vrot.slane %v1003, 4
      %v1006 = vor.u32 %v1005, %v1001
      %v1007 = vrot.slane %v1006, 4
      %v1009 = vshll.u32 %v905, 16
      %v1011 = vrot.slane %v1009, 5
      %v1012 = vsel %vm227, %v1007, %v1011
      %v1014 = vshrl.u32 %v906, 16
      %v1016 = vrot.slane %v1014, 4
      %v1017 = vshll.u32 %v906, 16
      %v1019 = vrot.slane %v1017, 5
      %v1020 = vor.u32 %v1016, %v1019
      %v1021 = vrot.slane %v1020, 4
      %v1023 = vshll.u32 %v907, 16
      %v1025 = vrot.slane %v1023, 5
      %v1026 = vsel %vm227, %v1021, %v1025
      %v1027 = vshrl.u32 %v907, 16
      %v1029 = vrot.slane %v1027, 4
      %v1030 = vor.u32 %v1029, %v1025
      %v1031 = vrot.slane %v1030, 4
      %v1033 = vshll.u32 %v908, 16
      %v1035 = vrot.slane %v1033, 5
      %v1036 = vsel %vm227, %v1031, %v1035
      %v1038 = vshrl.u32 %v909, 16
      %v1040 = vrot.slane %v1038, 4
      %v1041 = vshll.u32 %v909, 16
      %v1043 = vrot.slane %v1041, 5
      %v1044 = vor.u32 %v1040, %v1043
      %v1045 = vrot.slane %v1044, 4
      %v1047 = vshll.u32 %v910, 16
      %v1049 = vrot.slane %v1047, 5
      %v1050 = vsel %vm227, %v1045, %v1049
      %v1051 = vshrl.u32 %v910, 16
      %v1053 = vrot.slane %v1051, 4
      %v1054 = vor.u32 %v1053, %v1049
      %v1055 = vrot.slane %v1054, 4
      %v1057 = vshll.u32 %v911, 16
      %v1059 = vrot.slane %v1057, 5
      %v1060 = vsel %vm227, %v1055, %v1059
      %v1062 = vshrl.u32 %v912, 16
      %v1064 = vrot.slane %v1062, 4
      %v1065 = vshll.u32 %v912, 16
      %v1067 = vrot.slane %v1065, 5
      %v1068 = vor.u32 %v1064, %v1067
      %v1069 = vrot.slane %v1068, 4
      %v1071 = vshll.u32 %v913, 16
      %v1073 = vrot.slane %v1071, 5
      %v1074 = vsel %vm227, %v1069, %v1073
      %v1075 = vshrl.u32 %v913, 16
      %v1077 = vrot.slane %v1075, 4
      %v1078 = vor.u32 %v1077, %v1073
      %v1079 = vrot.slane %v1078, 4
      %v1081 = vshll.u32 %v914, 16
      %v1083 = vrot.slane %v1081, 5
      %v1084 = vsel %vm227, %v1079, %v1083
      %s1085 = scalar_lea.vmem %s1, 14
      %v1086 = vld [vmem:[%s1085] sm:$0x3]
      %v1087 = vunpack.c.l.b16 %v1002
      %v1088 = vunpack.c.l.b16 %v1012
      %v1089 = vunpack.c.l.b16 %v1026
      %v1090 = vunpack.c.l.b16 %v1036
      %v1091 = vunpack.c.l.b16 %v1050
      %v1092 = vunpack.c.l.b16 %v1060
      %v1093 = vunpack.c.l.b16 %v1074
      %v1094 = vunpack.c.l.b16 %v1084
      %v1095 = vpack.c.b16 %v1088, %v1087
      %v1096 = vpack.c.b16 %v1090, %v1089
      %v1097 = vpack.c.b16 %v1092, %v1091
      %v1098 = vpack.c.b16 %v1094, %v1093
      %v1100 = vsel %vm338, %v1095, 0
      %v1103 = vsel %vm338, %v1096, 0
      %v1106 = vsel %vm338, %v1097, 0
      %v1109 = vsel %vm338, %v1098, 0
      %v1112 = vsel %vm351, %v1086, 0
      %1114 = vmatpush.bf16.msra.mxu0 0
      %1115 = vmatpush.bf16.msra.mxu0 0
      %1116 = vmatpush.bf16.msra.mxu0 0
      %1117 = vmatpush.bf16.msra.mxu0 0
      %1118 = vmatpush.bf16.msra.mxu0 0
      %1119 = vmatpush.bf16.msra.mxu0 0
      %1120 = vmatpush.bf16.msra.mxu0 0
      %1121 = vmatpush.bf16.msra.mxu0 %v1112
      %1122 = vmatmul.bf16.gmra.mxu0 %v1100
      %v1123 = vpop.f32.mrf.mxu0
      %v1124 = vadd.f32 0.0, %v1123
      %v1125 = vpop.f32.mrf.mxu0
      %v1126 = vadd.f32 0.0, %v1125
      %1127 = vmatmul.bf16.gmra.mxu0 %v1103
      %v1128 = vpop.f32.mrf.mxu0
      %v1129 = vadd.f32 0.0, %v1128
      %v1130 = vpop.f32.mrf.mxu0
      %v1131 = vadd.f32 0.0, %v1130
      %1132 = vmatmul.bf16.gmra.mxu0 %v1106
      %v1133 = vpop.f32.mrf.mxu0
      %v1134 = vadd.f32 0.0, %v1133
      %v1135 = vpop.f32.mrf.mxu0
      %v1136 = vadd.f32 0.0, %v1135
      %1137 = vmatmul.bf16.gmra.mxu0 %v1109
      %v1138 = vpop.f32.mrf.mxu0
      %v1139 = vadd.f32 0.0, %v1138
      %v1140 = vpop.f32.mrf.mxu0
      %v1141 = vadd.f32 0.0, %v1140
      %1142 = vdwg.mxu0
      %v1143 = vadd.f32 %v981, %v1124
      %v1144 = vadd.f32 %v982, %v1126
      %v1145 = vadd.f32 %v983, %v1129
      %v1146 = vadd.f32 %v984, %v1131
      %v1147 = vadd.f32 %v985, %v1134
      %v1148 = vadd.f32 %v986, %v1136
      %v1149 = vadd.f32 %v987, %v1139
      %v1150 = vadd.f32 %v988, %v1141
      %v1155 = vrot.slane %v903, 5
      %v1156 = vrot.slane %v1155, 4
      %v1157 = vrot.slane %v904, 5
      %v1158 = vsel %vm454, %v1156, %v1157
      %v1159 = vrot.slane %v1157, 4
      %v1160 = vrot.slane %v905, 5
      %v1161 = vsel %vm454, %v1159, %v1160
      %v1162 = vrot.slane %v906, 5
      %v1163 = vrot.slane %v1162, 4
      %v1164 = vrot.slane %v907, 5
      %v1165 = vsel %vm454, %v1163, %v1164
      %v1166 = vrot.slane %v1164, 4
      %v1167 = vrot.slane %v908, 5
      %v1168 = vsel %vm454, %v1166, %v1167
      %v1169 = vrot.slane %v909, 5
      %v1170 = vrot.slane %v1169, 4
      %v1171 = vrot.slane %v910, 5
      %v1172 = vsel %vm454, %v1170, %v1171
      %v1173 = vrot.slane %v1171, 4
      %v1174 = vrot.slane %v911, 5
      %v1175 = vsel %vm454, %v1173, %v1174
      %v1176 = vrot.slane %v912, 5
      %v1177 = vrot.slane %v1176, 4
      %v1178 = vrot.slane %v913, 5
      %v1179 = vsel %vm454, %v1177, %v1178
      %v1180 = vrot.slane %v1178, 4
      %v1181 = vrot.slane %v914, 5
      %v1182 = vsel %vm454, %v1180, %v1181
      %s1183 = scalar_lea.vmem %s1, 16
      %v1184 = vld [vmem:[%s1183] sm:$0x3]
      %v1185 = vunpack.c.l.b16 %v1158
      %v1186 = vunpack.c.l.b16 %v1161
      %v1187 = vunpack.c.l.b16 %v1165
      %v1188 = vunpack.c.l.b16 %v1168
      %v1189 = vunpack.c.l.b16 %v1172
      %v1190 = vunpack.c.l.b16 %v1175
      %v1191 = vunpack.c.l.b16 %v1179
      %v1192 = vunpack.c.l.b16 %v1182
      %v1193 = vpack.c.b16 %v1186, %v1185
      %v1194 = vpack.c.b16 %v1188, %v1187
      %v1195 = vpack.c.b16 %v1190, %v1189
      %v1196 = vpack.c.b16 %v1192, %v1191
      %v1198 = vsel %vm338, %v1193, 0
      %v1201 = vsel %vm338, %v1194, 0
      %v1204 = vsel %vm338, %v1195, 0
      %v1207 = vsel %vm338, %v1196, 0
      %v1210 = vsel %vm351, %v1184, 0
      %1212 = vmatpush.bf16.msra.mxu0 0
      %1213 = vmatpush.bf16.msra.mxu0 0
      %1214 = vmatpush.bf16.msra.mxu0 0
      %1215 = vmatpush.bf16.msra.mxu0 0
      %1216 = vmatpush.bf16.msra.mxu0 0
      %1217 = vmatpush.bf16.msra.mxu0 0
      %1218 = vmatpush.bf16.msra.mxu0 0
      %1219 = vmatpush.bf16.msra.mxu0 %v1210
      %1220 = vmatmul.bf16.gmra.mxu0 %v1198
      %v1221 = vpop.f32.mrf.mxu0
      %v1222 = vadd.f32 0.0, %v1221
      %v1223 = vpop.f32.mrf.mxu0
      %v1224 = vadd.f32 0.0, %v1223
      %1225 = vmatmul.bf16.gmra.mxu0 %v1201
      %v1226 = vpop.f32.mrf.mxu0
      %v1227 = vadd.f32 0.0, %v1226
      %v1228 = vpop.f32.mrf.mxu0
      %v1229 = vadd.f32 0.0, %v1228
      %1230 = vmatmul.bf16.gmra.mxu0 %v1204
      %v1231 = vpop.f32.mrf.mxu0
      %v1232 = vadd.f32 0.0, %v1231
      %v1233 = vpop.f32.mrf.mxu0
      %v1234 = vadd.f32 0.0, %v1233
      %1235 = vmatmul.bf16.gmra.mxu0 %v1207
      %v1236 = vpop.f32.mrf.mxu0
      %v1237 = vadd.f32 0.0, %v1236
      %v1238 = vpop.f32.mrf.mxu0
      %v1239 = vadd.f32 0.0, %v1238
      %1240 = vdwg.mxu0
      %v1241 = vadd.f32 %v1143, %v1222
      %v1242 = vadd.f32 %v1144, %v1224
      %v1243 = vadd.f32 %v1145, %v1227
      %v1244 = vadd.f32 %v1146, %v1229
      %v1245 = vadd.f32 %v1147, %v1232
      %v1246 = vadd.f32 %v1148, %v1234
      %v1247 = vadd.f32 %v1149, %v1237
      %v1248 = vadd.f32 %v1150, %v1239
      %1249 = vst [vmem:[%s201] sm:$0xff] %v1241
      %1250 = vst [vmem:[%s201 + $0x8] sm:$0xff] %v1242
      %1251 = vst [vmem:[%s201 + $0x10] sm:$0xff] %v1243
      %1252 = vst [vmem:[%s201 + $0x18] sm:$0xff] %v1244
      %1253 = vst [vmem:[%s201 + $0x20] sm:$0xff] %v1245
      %1254 = vst [vmem:[%s201 + $0x28] sm:$0xff] %v1246
      %1255 = vst [vmem:[%s201 + $0x30] sm:$0xff] %v1247
      %1256 = vst [vmem:[%s201 + $0x38] sm:$0xff] %v1248
      %v1257 = vadd.f32 %v1241, %v1242
      %v1258 = vadd.f32 %v1257, %v1243
      %v1259 = vadd.f32 %v1258, %v1244
      %v1260 = vadd.f32 %v1259, %v1245
      %v1261 = vadd.f32 %v1260, %v1246
      %v1262 = vadd.f32 %v1261, %v1247
      %v1263 = vadd.f32 %v1262, %v1248
      %v1264 = vrot.slane %v1263, 4
      %v1265 = vadd.f32 %v1263, %v1264
      %v1266 = vrot.slane %v1265, 2
      %v1267 = vadd.f32 %v1265, %v1266
      %v1268 = vrot.slane %v1267, 1
      %v1269 = vadd.f32 %v1267, %v1268
      %v1270 = vmul.f32 %v1241, %v1241
      %v1271 = vmul.f32 %v1242, %v1242
      %v1272 = vmul.f32 %v1243, %v1243
      %v1273 = vmul.f32 %v1244, %v1244
      %v1274 = vmul.f32 %v1245, %v1245
      %v1275 = vmul.f32 %v1246, %v1246
      %v1276 = vmul.f32 %v1247, %v1247
      %v1277 = vmul.f32 %v1248, %v1248
      %v1278 = vadd.f32 %v1270, %v1271
      %v1279 = vadd.f32 %v1278, %v1272
      %v1280 = vadd.f32 %v1279, %v1273
      %v1281 = vadd.f32 %v1280, %v1274
      %v1282 = vadd.f32 %v1281, %v1275
      %v1283 = vadd.f32 %v1282, %v1276
      %v1284 = vadd.f32 %v1283, %v1277
      %v1285 = vrot.slane %v1284, 4
      %v1286 = vadd.f32 %v1284, %v1285
      %v1287 = vrot.slane %v1286, 2
      %v1288 = vadd.f32 %v1286, %v1287
      %v1289 = vrot.slane %v1288, 1
      %v1290 = vadd.f32 %v1288, %v1289
      %vm1291 = vcmask 1040384
      %v1292 = vsel %vm1291, %v1269, %v1290
      %p1293 = scmp.eq.s32.totalorder %s20, 0
      // Predicated region
      $region29: #{basic_block_forward.3} parent=27 // pred_check
        %p1294 = pneg %p1293
      $region30: #{basic_block_forward.3} parent=27 // pred_check_branch
        %1296 = sbr.rel (%p1294) target = $region32
      $region31: #{basic_block_forward.3} parent=27 // pred_region
        %1297 = vst [vmem:[%s206] sm:$0x3] 0.0
      $region32: #{basic_block_forward.3} parent=27 // pred_fallthru
        _
      %v1298 = vld [vmem:[%s206] sm:$0x3]
      %v1299 = vadd.f32 %v1298, %v1292
      %1300 = vst [vmem:[%s206] sm:$0x3] %v1299
      %s1301 = smul.u32 4, %s20
      %p1302 = scmp.lt.s32.totalorder %s19, 1
      %s1303 = scalar_select %p1302, %s19, 1
      %p1304 = scmp.lt.s32.totalorder %s1301, 15
      %s1305 = scalar_select %p1304, %s1301, 15
      %s1306 = smul.addr %s1305, 2
      %s1307 = smul.addr %s1303, 32
      %s1308 = sadd.s32 %s1306, %s1307
      %s1309 = smul.addr %s1308, 8
      %s1310 = scalar_lea.vmem %s2, %s1309
      %p1311 = scmp.lt.s32.totalorder %s19, 1
      %s1312 = scalar_select %p1311, %s19, 1
      %s1313 = smul.addr %s1312, 2
      %s1314 = scalar_lea.vmem %s3, %s1313
      // Predicated region
      $region33: #{basic_block_forward.3} parent=27 // pred_check
        %p1315 = pneg %p94
      $region34: #{basic_block_forward.3} parent=27 // pred_check_branch
        %1317 = sbr.rel (%p1315) target = $region36
      $region35: #{basic_block_forward.3} parent=27 // pred_region
        %s1318 = smul.u32 4, %s20
      $region36: #{basic_block_forward.3} parent=27 // pred_fallthru
        _
      // Predicated region
      $region37: #{basic_block_forward.3} parent=27 // pred_check
        %p1319 = pneg %p120
      $region38: #{basic_block_forward.3} parent=27 // pred_check_branch
        %1321 = sbr.rel (%p1319) target = $region40
      $region39: #{basic_block_forward.3} parent=27 // pred_region
        _
      $region40: #{basic_block_forward.3} parent=27 // pred_fallthru
        _
    $region28: #{basic_block_forward.3} parent=5 // pred_fallthru
      _
    %p1322 = scmp.le.s32.totalorder 2, %s10
    // Predicated region
    $region41: #{basic_block_forward.3} parent=5 // pred_check
      %p1323 = pneg %p1322
    $region42: #{basic_block_forward.3} parent=5 // pred_check_branch
      %1325 = sbr.rel (%p1323) target = $region44
    $region43: #{basic_block_forward.3} parent=5 // pred_region
      %s1326 = ssub.s32 %s10, 2
      // Predicated region
      $region45: #{basic_block_forward.3} parent=43 // pred_check
        %p1327 = pneg %p100
      $region46: #{basic_block_forward.3} parent=43 // pred_check_branch
        %1329 = sbr.rel (%p1327) target = $region48
      $region47: #{basic_block_forward.3} parent=43 // pred_region
        %s1330 = smul.u32 4, %s22
        %p1331 = scmp.lt.s32.totalorder %s21, 1
        %s1332 = scalar_select %p1331, %s21, 1
        %p1333 = scmp.lt.s32.totalorder %s1330, 15
        %s1334 = scalar_select %p1333, %s1330, 15
        %s1335 = smul.addr %s1334, 2
        %s1336 = smul.addr %s1332, 32
        %s1337 = sadd.s32 %s1335, %s1336
        %s1338 = smul.addr %s1337, 8
        %s1339 = scalar_lea.vmem %s2, %s1338
      $region48: #{basic_block_forward.3} parent=43 // pred_fallthru
        _
      // Predicated region
      $region49: #{basic_block_forward.3} parent=43 // pred_check
        %p1340 = pneg %p126
      $region50: #{basic_block_forward.3} parent=43 // pred_check_branch
        %1342 = sbr.rel (%p1340) target = $region52
      $region51: #{basic_block_forward.3} parent=43 // pred_region
        %p1343 = scmp.lt.s32.totalorder %s21, 1
        %s1344 = scalar_select %p1343, %s21, 1
        %s1345 = smul.addr %s1344, 2
        %s1346 = scalar_lea.vmem %s3, %s1345
      $region52: #{basic_block_forward.3} parent=43 // pred_fallthru
        _
    $region44: #{basic_block_forward.3} parent=5 // pred_fallthru
      _
  $region6: #{basic_block_forward.3} parent=0 // loop_footer
    %s14 = sadd.s32 1, %s10
  $region7: #{basic_block_forward.3} parent=0 // loop_footer_branch
    %9 = sbr.rel target = $region3
  $region8: #{basic_block_forward.3} parent=0 // loop_exit
    _

// kernel: basic_block_forward.5
$region0: #{basic_block_forward.5}
  #allocation0 [shape = 'u32[]', space=smem, size = 0x4, offset = 0x4, fixed_abs, tag = 'smem constant byte address 0x4 - core index']
  #allocation1 [shape = 'u32[72,128]{1,0:T(1,128)}', space=vmem, size = 0x9000, scoped, tag = 'internal scratch']
  %s0 = inlined_call_operand.vmem [shape: f32[2,16,16,128], index: 0, kind: input, shape index: {}]
  %s1 = inlined_call_operand.vmem [shape: bf16[2,16,16,4], index: 1, kind: input, shape index: {}]
  %s2 = inlined_call_operand.vmem [shape: bf16[4,128], index: 2, kind: input, shape index: {}]
  %s3 = inlined_call_operand.vmem [shape: f32[1,1,128], index: 3, kind: input, shape index: {}]
  %s4 = inlined_call_operand.vmem [shape: f32[1,1,128], index: 4, kind: input, shape index: {}]
  %s5 = inlined_call_operand.vmem [shape: f32[2,16,16,128], index: 5, kind: output, shape index: {}]
  %s6 = sld [smem:[#allocation0]]
  $region53: #{basic_block_forward.5} parent=0
    _
  %s8 = ssub.s32 1, %s6
  %s9 = scalar_select 0, %s8, %s6
  loop: start=0, step=1, limit=10
  $region2: #{basic_block_forward.5} parent=0 // loop_pre_header
    _
  $region3: #{basic_block_forward.5} parent=0 // loop_header
    %s11 = sphi 0, %s15
    %p12 = scmp.ge.s32.totalorder %s11, 10
    %s18 = sphi 0, %s30
    %s19 = sphi 0, %s26
    %s20 = sphi 0, %s18
    %s21 = sphi 0, %s19
    %s22 = sphi 0, %s20
    %s23 = sphi 0, %s21
    %s35 = sphi 0, %s37
    %s38 = sphi 0, %s35
    %s39 = sphi 0, %s38
    %s55 = sphi 0, %s39
    %s63 = sphi 0, %s65
    %s66 = sphi 0, %s63
    %s67 = sphi 0, %s66
    %s83 = sphi 0, %s67
    %s87 = sphi 0, %s87
    %s89 = sphi 0, %s87
    %s90 = sphi 0, %s89
    %s104 = sphi 0, %s90
    %s108 = sphi 0, %s108
    %s110 = sphi 0, %s108
    %s111 = sphi 0, %s110
    %s125 = sphi 0, %s111
    %s129 = sphi 0, %s129
    %s131 = sphi 0, %s129
    %s132 = sphi 0, %s131
    %s146 = sphi 0, %s132
    %s154 = sphi 0, %s156
    %s157 = sphi 0, %s154
    %s158 = sphi 0, %s157
    %s174 = sphi 0, %s158
  $region4: #{basic_block_forward.5} parent=0 // loop_header_branch
    %14 = sbr.rel (%p12) target = $region8
  $region5: #{basic_block_forward.5} parent=0 // loop_body
    %s16 = ssub.s32 %s11, 1
    %s17 = ssub.s32 %s11, 2
    %s24 = sadd.s32 1, %s19
    %p25 = scmp.ge.s32.totalorder %s24, 4
    %s26 = scalar_select %p25, 0, %s24
    %s27 = sadd.s32 1, %s18
    %s28 = scalar_select %p25, %s27, %s18
    %p29 = scmp.ge.s32.totalorder %s28, 2
    %s30 = scalar_select %p29, 0, %s28
    %s31 = ssub.s32 %s18, %s30
    %s32 = ssub.s32 %s19, %s26
    %s33 = sor.u32 %s31, %s32
    %p34 = scmp.eq.s32.totalorder %s33, 0
    %s36 = sadd.s32 %s35, 1
    %s37 = scalar_select %p34, %s35, %s36
    %p40 = pneg %p34
    %p41 = scmp.eq.s32.totalorder %s11, 7
    %p42 = por %p40, %p41
    %p43 = scmp.ne.s32.totalorder %s35, %s38
    %p44 = scmp.eq.s32.totalorder %s11, 0
    %p45 = por %p43, %p44
    %p46 = scmp.ne.s32.totalorder %s35, %s38
    %p47 = scmp.eq.s32.totalorder %s16, 7
    %p48 = por %p46, %p47
    %p49 = scmp.ne.s32.totalorder %s38, %s39
    %p50 = scmp.eq.s32.totalorder %s16, 0
    %p51 = por %p49, %p50
    %p52 = scmp.ne.s32.totalorder %s38, %s39
    %p53 = scmp.eq.s32.totalorder %s17, 7
    %p54 = por %p52, %p53
    %p56 = scmp.ne.s32.totalorder %s39, %s55
    %p57 = scmp.eq.s32.totalorder %s17, 0
    %p58 = por %p56, %p57
    %s59 = ssub.s32 %s18, %s30
    %s60 = ssub.s32 %s19, %s26
    %s61 = sor.u32 %s59, %s60
    %p62 = scmp.eq.s32.totalorder %s61, 0
    %s64 = sadd.s32 %s63, 1
    %s65 = scalar_select %p62, %s63, %s64
    %p68 = pneg %p62
    %p69 = scmp.eq.s32.totalorder %s11, 7
    %p70 = por %p68, %p69
    %p71 = scmp.ne.s32.totalorder %s63, %s66
    %p72 = scmp.eq.s32.totalorder %s11, 0
    %p73 = por %p71, %p72
    %p74 = scmp.ne.s32.totalorder %s63, %s66
    %p75 = scmp.eq.s32.totalorder %s16, 7
    %p76 = por %p74, %p75
    %p77 = scmp.ne.s32.totalorder %s66, %s67
    %p78 = scmp.eq.s32.totalorder %s16, 0
    %p79 = por %p77, %p78
    %p80 = scmp.ne.s32.totalorder %s66, %s67
    %p81 = scmp.eq.s32.totalorder %s17, 7
    %p82 = por %p80, %p81
    %p84 = scmp.ne.s32.totalorder %s67, %s83
    %p85 = scmp.eq.s32.totalorder %s17, 0
    %p86 = por %p84, %p85
    %s88 = sadd.s32 %s87, 1
    %p91 = scmp.eq.s32.totalorder %s11, 7
    %p92 = scmp.ne.s32.totalorder %s87, %s89
    %p93 = scmp.eq.s32.totalorder %s11, 0
    %p94 = por %p92, %p93
    %p95 = scmp.ne.s32.totalorder %s87, %s89
    %p96 = scmp.eq.s32.totalorder %s16, 7
    %p97 = por %p95, %p96
    %p98 = scmp.ne.s32.totalorder %s89, %s90
    %p99 = scmp.eq.s32.totalorder %s16, 0
    %p100 = por %p98, %p99
    %p101 = scmp.ne.s32.totalorder %s89, %s90
    %p102 = scmp.eq.s32.totalorder %s17, 7
    %p103 = por %p101, %p102
    %p105 = scmp.ne.s32.totalorder %s90, %s104
    %p106 = scmp.eq.s32.totalorder %s17, 0
    %p107 = por %p105, %p106
    %s109 = sadd.s32 %s108, 1
    %p112 = scmp.eq.s32.totalorder %s11, 7
    %p113 = scmp.ne.s32.totalorder %s108, %s110
    %p114 = scmp.eq.s32.totalorder %s11, 0
    %p115 = por %p113, %p114
    %p116 = scmp.ne.s32.totalorder %s108, %s110
    %p117 = scmp.eq.s32.totalorder %s16, 7
    %p118 = por %p116, %p117
    %p119 = scmp.ne.s32.totalorder %s110, %s111
    %p120 = scmp.eq.s32.totalorder %s16, 0
    %p121 = por %p119, %p120
    %p122 = scmp.ne.s32.totalorder %s110, %s111
    %p123 = scmp.eq.s32.totalorder %s17, 7
    %p124 = por %p122, %p123
    %p126 = scmp.ne.s32.totalorder %s111, %s125
    %p127 = scmp.eq.s32.totalorder %s17, 0
    %p128 = por %p126, %p127
    %s130 = sadd.s32 %s129, 1
    %p133 = scmp.eq.s32.totalorder %s11, 7
    %p134 = scmp.ne.s32.totalorder %s129, %s131
    %p135 = scmp.eq.s32.totalorder %s11, 0
    %p136 = por %p134, %p135
    %p137 = scmp.ne.s32.totalorder %s129, %s131
    %p138 = scmp.eq.s32.totalorder %s16, 7
    %p139 = por %p137, %p138
    %p140 = scmp.ne.s32.totalorder %s131, %s132
    %p141 = scmp.eq.s32.totalorder %s16, 0
    %p142 = por %p140, %p141
    %p143 = scmp.ne.s32.totalorder %s131, %s132
    %p144 = scmp.eq.s32.totalorder %s17, 7
    %p145 = por %p143, %p144
    %p147 = scmp.ne.s32.totalorder %s132, %s146
    %p148 = scmp.eq.s32.totalorder %s17, 0
    %p149 = por %p147, %p148
    %s150 = ssub.s32 %s18, %s30
    %s151 = ssub.s32 %s19, %s26
    %s152 = sor.u32 %s150, %s151
    %p153 = scmp.eq.s32.totalorder %s152, 0
    %s155 = sadd.s32 %s154, 1
    %s156 = scalar_select %p153, %s154, %s155
    %p159 = pneg %p153
    %p160 = scmp.eq.s32.totalorder %s11, 7
    %p161 = por %p159, %p160
    %p162 = scmp.ne.s32.totalorder %s154, %s157
    %p163 = scmp.eq.s32.totalorder %s11, 0
    %p164 = por %p162, %p163
    %p165 = scmp.ne.s32.totalorder %s154, %s157
    %p166 = scmp.eq.s32.totalorder %s16, 7
    %p167 = por %p165, %p166
    %p168 = scmp.ne.s32.totalorder %s157, %s158
    %p169 = scmp.eq.s32.totalorder %s16, 0
    %p170 = por %p168, %p169
    %p171 = scmp.ne.s32.totalorder %s157, %s158
    %p172 = scmp.eq.s32.totalorder %s17, 7
    %p173 = por %p171, %p172
    %p175 = scmp.ne.s32.totalorder %s158, %s174
    %p176 = scmp.eq.s32.totalorder %s17, 0
    %p177 = por %p175, %p176
    %p178 = scmp.le.s32.totalorder 1, %s11
    %p179 = scmp.lt.s32.totalorder %s11, 9
    %p180 = pnand %p178, %p179
    %p181 = pneg %p180
    // Predicated region
    $region9: #{basic_block_forward.5} parent=5 // pred_check
      _
    $region10: #{basic_block_forward.5} parent=5 // pred_check_branch
      %183 = sbr.rel (%p180) target = $region12
    $region11: #{basic_block_forward.5} parent=5 // pred_region
      %s184 = ssub.s32 %s11, 1
      // Predicated region
      $region13: #{basic_block_forward.5} parent=11 // pred_check
        %p185 = pneg %p100
      $region14: #{basic_block_forward.5} parent=11 // pred_check_branch
        %187 = sbr.rel (%p185) target = $region16
      $region15: #{basic_block_forward.5} parent=11 // pred_region
        _
      $region16: #{basic_block_forward.5} parent=11 // pred_fallthru
        _
      // Predicated region
      $region17: #{basic_block_forward.5} parent=11 // pred_check
        %p188 = pneg %p121
      $region18: #{basic_block_forward.5} parent=11 // pred_check_branch
        %190 = sbr.rel (%p188) target = $region20
      $region19: #{basic_block_forward.5} parent=11 // pred_region
        _
      $region20: #{basic_block_forward.5} parent=11 // pred_fallthru
        _
      // Predicated region
      $region21: #{basic_block_forward.5} parent=11 // pred_check
        %p191 = pneg %p142
      $region22: #{basic_block_forward.5} parent=11 // pred_check_branch
        %193 = sbr.rel (%p191) target = $region24
      $region23: #{basic_block_forward.5} parent=11 // pred_region
        _
      $region24: #{basic_block_forward.5} parent=11 // pred_fallthru
        _
    $region12: #{basic_block_forward.5} parent=5 // pred_fallthru
      _
    %p194 = scmp.lt.s32.totalorder %s11, 8
    // Predicated region
    $region25: #{basic_block_forward.5} parent=5 // pred_check
      %p195 = pneg %p194
    $region26: #{basic_block_forward.5} parent=5 // pred_check_branch
      %197 = sbr.rel (%p195) target = $region28
    $region27: #{basic_block_forward.5} parent=5 // pred_region
      // Predicated region
      $region29: #{basic_block_forward.5} parent=27 // pred_check
        %p198 = pneg %p45
      $region30: #{basic_block_forward.5} parent=27 // pred_check_branch
        %200 = sbr.rel (%p198) target = $region32
      $region31: #{basic_block_forward.5} parent=27 // pred_region
        %s201 = smul.u32 4, %s19
        %p202 = scmp.lt.s32.totalorder %s18, 1
        %s203 = scalar_select %p202, %s18, 1
        %p204 = scmp.lt.s32.totalorder %s201, 15
        %s205 = scalar_select %p204, %s201, 15
        %s206 = smul.addr %s205, 2
        %s207 = smul.addr %s203, 32
        %s208 = sadd.s32 %s206, %s207
        %s209 = smul.addr %s208, 8
        %s210 = scalar_lea.vmem %s0, %s209
        %s211 = smul.u32 4, %s19
      $region32: #{basic_block_forward.5} parent=27 // pred_fallthru
        _
      // Predicated region
      $region33: #{basic_block_forward.5} parent=27 // pred_check
        %p212 = pneg %p73
      $region34: #{basic_block_forward.5} parent=27 // pred_check_branch
        %214 = sbr.rel (%p212) target = $region36
      $region35: #{basic_block_forward.5} parent=27 // pred_region
        %s215 = smul.u32 4, %s19
        %p216 = scmp.lt.s32.totalorder %s18, 1
        %s217 = scalar_select %p216, %s18, 1
        %p218 = scmp.lt.s32.totalorder %s215, 15
        %s219 = scalar_select %p218, %s215, 15
        %s220 = smul.addr %s219, 2
        %s221 = smul.addr %s217, 32
        %s222 = sadd.s32 %s220, %s221
        %s223 = smul.addr %s222, 4
        %s224 = scalar_lea.vmem %s1, %s223
        %s225 = smul.u32 4, %s19
      $region36: #{basic_block_forward.5} parent=27 // pred_fallthru
        _
    $region28: #{basic_block_forward.5} parent=5 // pred_fallthru
      _
    %p226 = scmp.le.s32.totalorder 1, %s11
    %p227 = scmp.lt.s32.totalorder %s11, 9
    %p228 = pnand %p226, %p227
    %p229 = pneg %p228
    // Predicated region
    $region37: #{basic_block_forward.5} parent=5 // pred_check
      _
    $region38: #{basic_block_forward.5} parent=5 // pred_check_branch
      %231 = sbr.rel (%p228) target = $region40
    $region39: #{basic_block_forward.5} parent=5 // pred_region
      %s232 = ssub.s32 %s11, 1
      %s233 = smul.u32 4, %s21
      %p234 = scmp.lt.s32.totalorder %s20, 1
      %s235 = scalar_select %p234, %s20, 1
      %p236 = scmp.lt.s32.totalorder %s233, 15
      %s237 = scalar_select %p236, %s233, 15
      %s238 = smul.addr %s237, 2
      %s239 = smul.addr %s235, 32
      %s240 = sadd.s32 %s238, %s239
      %s241 = smul.addr %s240, 8
      %s242 = scalar_lea.vmem %s0, %s241
      %p243 = pneg %p51
      %p244 = pneg %p48
      %s245 = smul.u32 4, %s21
      %p246 = scmp.lt.s32.totalorder %s20, 1
      %s247 = scalar_select %p246, %s20, 1
      %p248 = scmp.lt.s32.totalorder %s245, 15
      %s249 = scalar_select %p248, %s245, 15
      %s250 = smul.addr %s249, 2
      %s251 = smul.addr %s247, 32
      %s252 = sadd.s32 %s250, %s251
      %s253 = smul.addr %s252, 4
      %s254 = scalar_lea.vmem %s1, %s253
      %p255 = pneg %p79
      %p256 = pneg %p76
      %p257 = pneg %p100
      %p258 = pneg %p97
      %p259 = pneg %p121
      %p260 = pneg %p118
      %p261 = pneg %p142
      %p262 = pneg %p139
      %p263 = pneg %p170
      %p264 = pneg %p167
      %s265 = smul.u32 4, %s21
      %p266 = scmp.lt.s32.totalorder %s20, 1
      %s267 = scalar_select %p266, %s20, 1
      %p268 = scmp.lt.s32.totalorder %s265, 15
      %s269 = scalar_select %p268, %s265, 15
      %s270 = smul.addr %s269, 2
      %s271 = smul.addr %s267, 32
      %s272 = sadd.s32 %s270, %s271
      %s273 = smul.addr %s272, 8
      %s274 = scalar_lea.vmem %s5, %s273
      %s275 = smul.u32 4, %s21
      %p276 = scmp.lt.s32.totalorder %s20, 1
      %s277 = scalar_select %p276, %s20, 1
      %p278 = scmp.lt.s32.totalorder %s275, 15
      %s279 = scalar_select %p278, %s275, 15
      %s280 = smul.addr %s279, 2
      %s281 = smul.addr %s277, 32
      %s282 = sadd.s32 %s280, %s281
      %s283 = smul.addr %s282, 8
      %s284 = scalar_lea.vmem %s0, %s283
      %s285 = smul.u32 4, %s21
      %s286 = smul.u32 4, %s21
      %p287 = scmp.lt.s32.totalorder %s20, 1
      %s288 = scalar_select %p287, %s20, 1
      %p289 = scmp.lt.s32.totalorder %s286, 15
      %s290 = scalar_select %p289, %s286, 15
      %s291 = smul.addr %s290, 2
      %s292 = smul.addr %s288, 32
      %s293 = sadd.s32 %s291, %s292
      %s294 = smul.addr %s293, 4
      %s295 = scalar_lea.vmem %s1, %s294
      %s296 = smul.u32 4, %s21
      %s297 = smul.u32 4, %s21
      %p298 = scmp.lt.s32.totalorder %s20, 1
      %s299 = scalar_select %p298, %s20, 1
      %p300 = scmp.lt.s32.totalorder %s297, 15
      %s301 = scalar_select %p300, %s297, 15
      %s302 = smul.addr %s301, 2
      %s303 = smul.addr %s299, 32
      %s304 = sadd.s32 %s302, %s303
      %s305 = smul.addr %s304, 8
      %s306 = scalar_lea.vmem %s5, %s305
      %s307 = smul.u32 4, %s21
      %v309 = vld [vmem:[%s284] sm:$0xff]
      %v310 = vld [vmem:[%s284 + $0x8] sm:$0xff]
      %v311 = vld [vmem:[%s284 + $0x10] sm:$0xff]
      %v312 = vld [vmem:[%s284 + $0x18] sm:$0xff]
      %v313 = vld [vmem:[%s284 + $0x20] sm:$0xff]
      %v314 = vld [vmem:[%s284 + $0x28] sm:$0xff]
      %v315 = vld [vmem:[%s284 + $0x30] sm:$0xff]
      %v316 = vld [vmem:[%s284 + $0x38] sm:$0xff]
      %v317 = vld [vmem:[%s295] sm:$0xf]
      %v318 = vld [vmem:[%s295 + $0x4] sm:$0xf]
      %v319 = vld [vmem:[%s295 + $0x8] sm:$0xf]
      %v320 = vld [vmem:[%s295 + $0xc] sm:$0xf]
      %v321 = vld [vmem:[%s295 + $0x10] sm:$0xf]
      %v322 = vld [vmem:[%s295 + $0x14] sm:$0xf]
      %v323 = vld [vmem:[%s295 + $0x18] sm:$0xf]
      %v324 = vld [vmem:[%s295 + $0x1c] sm:$0xf]
      %v325 = vld [vmem:[%s2] sm:$0x3]
      %v334 = vunpack.c.l.b16 %v317
      %v335 = vunpack.c.l.b16 %v318
      %v336 = vunpack.c.l.b16 %v319
      %v337 = vunpack.c.l.b16 %v320
      %v338 = vunpack.c.l.b16 %v321
      %v339 = vunpack.c.l.b16 %v322
      %v340 = vunpack.c.l.b16 %v323
      %v341 = vunpack.c.l.b16 %v324
      %v342 = vpack.c.b16 %v335, %v334
      %v343 = vpack.c.b16 %v337, %v336
      %v344 = vpack.c.b16 %v339, %v338
      %v345 = vpack.c.b16 %v341, %v340
      %vm346 = vcmask 31744
      %v348 = vsel %vm346, %v342, 0
      %v351 = vsel %vm346, %v343, 0
      %v354 = vsel %vm346, %v344, 0
      %v357 = vsel %vm346, %v345, 0
      %vm359 = vcmask 1041408
      %v361 = vsel %vm359, %v325, 0
      %363 = vmatpush.bf16.msra.mxu0 0
      %364 = vmatpush.bf16.msra.mxu0 0
      %365 = vmatpush.bf16.msra.mxu0 0
      %366 = vmatpush.bf16.msra.mxu0 0
      %367 = vmatpush.bf16.msra.mxu0 0
      %368 = vmatpush.bf16.msra.mxu0 0
      %369 = vmatpush.bf16.msra.mxu0 0
      %370 = vmatpush.bf16.msra.mxu0 %v361
      %371 = vmatmul.bf16.gmra.mxu0 %v348
      %v372 = vpop.f32.mrf.mxu0
      %v373 = vadd.f32 0.0, %v372
      %v374 = vpop.f32.mrf.mxu0
      %v375 = vadd.f32 0.0, %v374
      %376 = vmatmul.bf16.gmra.mxu0 %v351
      %v377 = vpop.f32.mrf.mxu0
      %v378 = vadd.f32 0.0, %v377
      %v379 = vpop.f32.mrf.mxu0
      %v380 = vadd.f32 0.0, %v379
      %381 = vmatmul.bf16.gmra.mxu0 %v354
      %v382 = vpop.f32.mrf.mxu0
      %v383 = vadd.f32 0.0, %v382
      %v384 = vpop.f32.mrf.mxu0
      %v385 = vadd.f32 0.0, %v384
      %386 = vmatmul.bf16.gmra.mxu0 %v357
      %v387 = vpop.f32.mrf.mxu0
      %v388 = vadd.f32 0.0, %v387
      %v389 = vpop.f32.mrf.mxu0
      %v390 = vadd.f32 0.0, %v389
      %391 = vdwg.mxu0
      %v392 = vld [vmem:[%s3] sm:$0x1]
      %v394 = vperm.slane %v392, 0
      %v396 = vmul.f32 %v309, %v394
      %v397 = vmul.f32 %v310, %v394
      %v398 = vmul.f32 %v311, %v394
      %v399 = vmul.f32 %v312, %v394
      %v400 = vmul.f32 %v313, %v394
      %v401 = vmul.f32 %v314, %v394
      %v402 = vmul.f32 %v315, %v394
      %v403 = vmul.f32 %v316, %v394
      %v404 = vld [vmem:[%s4] sm:$0x1]
      %v406 = vperm.slane %v404, 0
      %v408 = vadd.f32 %v396, %v406
      %v409 = vadd.f32 %v397, %v406
      %v410 = vadd.f32 %v398, %v406
      %v411 = vadd.f32 %v399, %v406
      %v412 = vadd.f32 %v400, %v406
      %v413 = vadd.f32 %v401, %v406
      %v414 = vadd.f32 %v402, %v406
      %v415 = vadd.f32 %v403, %v406
      %v416 = vadd.f32 %v408, %v373
      %v417 = vadd.f32 %v409, %v375
      %v418 = vadd.f32 %v410, %v378
      %v419 = vadd.f32 %v411, %v380
      %v420 = vadd.f32 %v412, %v383
      %v421 = vadd.f32 %v413, %v385
      %v422 = vadd.f32 %v414, %v388
      %v423 = vadd.f32 %v415, %v390
      %v424 = vmax.f32 %v416, 0.0
      %v425 = vmax.f32 %v417, 0.0
      %v426 = vmax.f32 %v418, 0.0
      %v427 = vmax.f32 %v419, 0.0
      %v428 = vmax.f32 %v420, 0.0
      %v429 = vmax.f32 %v421, 0.0
      %v430 = vmax.f32 %v422, 0.0
      %v431 = vmax.f32 %v423, 0.0
      %432 = vst [vmem:[%s306] sm:$0xff] %v424
      %433 = vst [vmem:[%s306 + $0x8] sm:$0xff] %v425
      %434 = vst [vmem:[%s306 + $0x10] sm:$0xff] %v426
      %435 = vst [vmem:[%s306 + $0x18] sm:$0xff] %v427
      %436 = vst [vmem:[%s306 + $0x20] sm:$0xff] %v428
      %437 = vst [vmem:[%s306 + $0x28] sm:$0xff] %v429
      %438 = vst [vmem:[%s306 + $0x30] sm:$0xff] %v430
      %439 = vst [vmem:[%s306 + $0x38] sm:$0xff] %v431
      %s440 = smul.u32 4, %s21
      %p441 = scmp.lt.s32.totalorder %s20, 1
      %s442 = scalar_select %p441, %s20, 1
      %p443 = scmp.lt.s32.totalorder %s440, 15
      %s444 = scalar_select %p443, %s440, 15
      %s445 = smul.addr %s444, 2
      %s446 = smul.addr %s442, 32
      %s447 = sadd.s32 %s445, %s446
      %s448 = smul.addr %s447, 8
      %s449 = scalar_lea.vmem %s5, %s448
      // Predicated region
      $region41: #{basic_block_forward.5} parent=39 // pred_check
        %p450 = pneg %p167
      $region42: #{basic_block_forward.5} parent=39 // pred_check_branch
        %452 = sbr.rel (%p450) target = $region44
      $region43: #{basic_block_forward.5} parent=39 // pred_region
        %s453 = smul.u32 4, %s21
      $region44: #{basic_block_forward.5} parent=39 // pred_fallthru
        _
    $region40: #{basic_block_forward.5} parent=5 // pred_fallthru
      _
    %p454 = scmp.le.s32.totalorder 2, %s11
    // Predicated region
    $region45: #{basic_block_forward.5} parent=5 // pred_check
      %p455 = pneg %p454
    $region46: #{basic_block_forward.5} parent=5 // pred_check_branch
      %457 = sbr.rel (%p455) target = $region48
    $region47: #{basic_block_forward.5} parent=5 // pred_region
      %s458 = ssub.s32 %s11, 2
      // Predicated region
      $region49: #{basic_block_forward.5} parent=47 // pred_check
        %p459 = pneg %p173
      $region50: #{basic_block_forward.5} parent=47 // pred_check_branch
        %461 = sbr.rel (%p459) target = $region52
      $region51: #{basic_block_forward.5} parent=47 // pred_region
        %s462 = smul.u32 4, %s23
        %p463 = scmp.lt.s32.totalorder %s22, 1
        %s464 = scalar_select %p463, %s22, 1
        %p465 = scmp.lt.s32.totalorder %s462, 15
        %s466 = scalar_select %p465, %s462, 15
        %s467 = smul.addr %s466, 2
        %s468 = smul.addr %s464, 32
        %s469 = sadd.s32 %s467, %s468
        %s470 = smul.addr %s469, 8
        %s471 = scalar_lea.vmem %s5, %s470
      $region52: #{basic_block_forward.5} parent=47 // pred_fallthru
        _
    $region48: #{basic_block_forward.5} parent=5 // pred_fallthru
      _
  $region6: #{basic_block_forward.5} parent=0 // loop_footer
    %s15 = sadd.s32 1, %s11
  $region7: #{basic_block_forward.5} parent=0 // loop_footer_branch
    %10 = sbr.rel target = $region3
  $region8: #{basic_block_forward.5} parent=0 // loop_exit
    _

// kernel: basic_block_forward.4
$region0: #{basic_block_forward.4}
  #allocation0 [shape = 'u32[]', space=smem, size = 0x4, offset = 0x4, fixed_abs, tag = 'smem constant byte address 0x4 - core index']
  #allocation1 [shape = 'u32[72,128]{1,0:T(1,128)}', space=vmem, size = 0x9000, scoped, tag = 'internal scratch']
  %s0 = inlined_call_operand.vmem [shape: bf16[2,18,18,128], index: 0, kind: input, shape index: {}]
  %s1 = inlined_call_operand.vmem [shape: bf16[9,128,128], index: 1, kind: input, shape index: {}]
  %s2 = inlined_call_operand.vmem [shape: f32[2,16,16,128], index: 2, kind: output, shape index: {0}]
  %s3 = inlined_call_operand.vmem [shape: f32[2,2,128], index: 3, kind: output, shape index: {1}]
  %4 = xla_tuple %s2, %s3
  %s5 = sld [smem:[#allocation0]]
  $region53: #{basic_block_forward.4} parent=0
    _
  %s7 = ssub.s32 1, %s5
  %s8 = scalar_select 0, %s7, %s5
  loop: start=0, step=1, limit=10
  $region2: #{basic_block_forward.4} parent=0 // loop_pre_header
    _
  $region3: #{basic_block_forward.4} parent=0 // loop_header
    %s10 = sphi 0, %s14
    %p11 = scmp.ge.s32.totalorder %s10, 10
    %s17 = sphi 0, %s29
    %s18 = sphi 0, %s25
    %s19 = sphi 0, %s17
    %s20 = sphi 0, %s18
    %s21 = sphi 0, %s19
    %s22 = sphi 0, %s20
    %s32 = sphi 0, %s34
    %s35 = sphi 0, %s32
    %s36 = sphi 0, %s35
    %s52 = sphi 0, %s36
    %s56 = sphi 0, %s56
    %s58 = sphi 0, %s56
    %s59 = sphi 0, %s58
    %s73 = sphi 0, %s59
    %s81 = sphi 0, %s83
    %s84 = sphi 0, %s81
    %s85 = sphi 0, %s84
    %s101 = sphi 0, %s85
    %s107 = sphi 0, %s109
    %s110 = sphi 0, %s107
    %s111 = sphi 0, %s110
    %s127 = sphi 0, %s111
  $region4: #{basic_block_forward.4} parent=0 // loop_header_branch
    %13 = sbr.rel (%p11) target = $region8
  $region5: #{basic_block_forward.4} parent=0 // loop_body
    %s15 = ssub.s32 %s10, 1
    %s16 = ssub.s32 %s10, 2
    %s23 = sadd.s32 1, %s18
    %p24 = scmp.ge.s32.totalorder %s23, 4
    %s25 = scalar_select %p24, 0, %s23
    %s26 = sadd.s32 1, %s17
    %s27 = scalar_select %p24, %s26, %s17
    %p28 = scmp.ge.s32.totalorder %s27, 2
    %s29 = scalar_select %p28, 0, %s27
    %s30 = ssub.s32 %s17, %s29
    %p31 = scmp.eq.s32.totalorder %s30, 0
    %s33 = sadd.s32 %s32, 1
    %s34 = scalar_select %p31, %s32, %s33
    %p37 = pneg %p31
    %p38 = scmp.eq.s32.totalorder %s10, 7
    %p39 = por %p37, %p38
    %p40 = scmp.ne.s32.totalorder %s32, %s35
    %p41 = scmp.eq.s32.totalorder %s10, 0
    %p42 = por %p40, %p41
    %p43 = scmp.ne.s32.totalorder %s32, %s35
    %p44 = scmp.eq.s32.totalorder %s15, 7
    %p45 = por %p43, %p44
    %p46 = scmp.ne.s32.totalorder %s35, %s36
    %p47 = scmp.eq.s32.totalorder %s15, 0
    %p48 = por %p46, %p47
    %p49 = scmp.ne.s32.totalorder %s35, %s36
    %p50 = scmp.eq.s32.totalorder %s16, 7
    %p51 = por %p49, %p50
    %p53 = scmp.ne.s32.totalorder %s36, %s52
    %p54 = scmp.eq.s32.totalorder %s16, 0
    %p55 = por %p53, %p54
    %s57 = sadd.s32 %s56, 1
    %p60 = scmp.eq.s32.totalorder %s10, 7
    %p61 = scmp.ne.s32.totalorder %s56, %s58
    %p62 = scmp.eq.s32.totalorder %s10, 0
    %p63 = por %p61, %p62
    %p64 = scmp.ne.s32.totalorder %s56, %s58
    %p65 = scmp.eq.s32.totalorder %s15, 7
    %p66 = por %p64, %p65
    %p67 = scmp.ne.s32.totalorder %s58, %s59
    %p68 = scmp.eq.s32.totalorder %s15, 0
    %p69 = por %p67, %p68
    %p70 = scmp.ne.s32.totalorder %s58, %s59
    %p71 = scmp.eq.s32.totalorder %s16, 7
    %p72 = por %p70, %p71
    %p74 = scmp.ne.s32.totalorder %s59, %s73
    %p75 = scmp.eq.s32.totalorder %s16, 0
    %p76 = por %p74, %p75
    %s77 = ssub.s32 %s17, %s29
    %s78 = ssub.s32 %s18, %s25
    %s79 = sor.u32 %s77, %s78
    %p80 = scmp.eq.s32.totalorder %s79, 0
    %s82 = sadd.s32 %s81, 1
    %s83 = scalar_select %p80, %s81, %s82
    %p86 = pneg %p80
    %p87 = scmp.eq.s32.totalorder %s10, 7
    %p88 = por %p86, %p87
    %p89 = scmp.ne.s32.totalorder %s81, %s84
    %p90 = scmp.eq.s32.totalorder %s10, 0
    %p91 = por %p89, %p90
    %p92 = scmp.ne.s32.totalorder %s81, %s84
    %p93 = scmp.eq.s32.totalorder %s15, 7
    %p94 = por %p92, %p93
    %p95 = scmp.ne.s32.totalorder %s84, %s85
    %p96 = scmp.eq.s32.totalorder %s15, 0
    %p97 = por %p95, %p96
    %p98 = scmp.ne.s32.totalorder %s84, %s85
    %p99 = scmp.eq.s32.totalorder %s16, 7
    %p100 = por %p98, %p99
    %p102 = scmp.ne.s32.totalorder %s85, %s101
    %p103 = scmp.eq.s32.totalorder %s16, 0
    %p104 = por %p102, %p103
    %s105 = ssub.s32 %s17, %s29
    %p106 = scmp.eq.s32.totalorder %s105, 0
    %s108 = sadd.s32 %s107, 1
    %s109 = scalar_select %p106, %s107, %s108
    %p112 = pneg %p106
    %p113 = scmp.eq.s32.totalorder %s10, 7
    %p114 = por %p112, %p113
    %p115 = scmp.ne.s32.totalorder %s107, %s110
    %p116 = scmp.eq.s32.totalorder %s10, 0
    %p117 = por %p115, %p116
    %p118 = scmp.ne.s32.totalorder %s107, %s110
    %p119 = scmp.eq.s32.totalorder %s15, 7
    %p120 = por %p118, %p119
    %p121 = scmp.ne.s32.totalorder %s110, %s111
    %p122 = scmp.eq.s32.totalorder %s15, 0
    %p123 = por %p121, %p122
    %p124 = scmp.ne.s32.totalorder %s110, %s111
    %p125 = scmp.eq.s32.totalorder %s16, 7
    %p126 = por %p124, %p125
    %p128 = scmp.ne.s32.totalorder %s111, %s127
    %p129 = scmp.eq.s32.totalorder %s16, 0
    %p130 = por %p128, %p129
    %p131 = scmp.le.s32.totalorder 1, %s10
    %p132 = scmp.lt.s32.totalorder %s10, 9
    %p133 = pnand %p131, %p132
    %p134 = pneg %p133
    // Predicated region
    $region9: #{basic_block_forward.4} parent=5 // pred_check
      _
    $region10: #{basic_block_forward.4} parent=5 // pred_check_branch
      %136 = sbr.rel (%p133) target = $region12
    $region11: #{basic_block_forward.4} parent=5 // pred_region
      %s137 = ssub.s32 %s10, 1
      // Predicated region
      $region13: #{basic_block_forward.4} parent=11 // pred_check
        %p138 = pneg %p69
      $region14: #{basic_block_forward.4} parent=11 // pred_check_branch
        %140 = sbr.rel (%p138) target = $region16
      $region15: #{basic_block_forward.4} parent=11 // pred_region
        _
      $region16: #{basic_block_forward.4} parent=11 // pred_fallthru
        _
    $region12: #{basic_block_forward.4} parent=5 // pred_fallthru
      _
    %p141 = scmp.lt.s32.totalorder %s10, 8
    // Predicated region
    $region17: #{basic_block_forward.4} parent=5 // pred_check
      %p142 = pneg %p141
    $region18: #{basic_block_forward.4} parent=5 // pred_check_branch
      %144 = sbr.rel (%p142) target = $region20
    $region19: #{basic_block_forward.4} parent=5 // pred_region
      // Predicated region
      $region21: #{basic_block_forward.4} parent=19 // pred_check
        %p145 = pneg %p42
      $region22: #{basic_block_forward.4} parent=19 // pred_check_branch
        %147 = sbr.rel (%p145) target = $region24
      $region23: #{basic_block_forward.4} parent=19 // pred_region
        %p148 = scmp.lt.s32.totalorder %s17, 1
        %s149 = scalar_select %p148, %s17, 1
        %s150 = smul.addr %s149, 54
        %s151 = smul.addr %s150, 4
        %s152 = scalar_lea.vmem %s0, %s151
      $region24: #{basic_block_forward.4} parent=19 // pred_fallthru
        _
    $region20: #{basic_block_forward.4} parent=5 // pred_fallthru
      _
    %p153 = scmp.le.s32.totalorder 1, %s10
    %p154 = scmp.lt.s32.totalorder %s10, 9
    %p155 = pnand %p153, %p154
    %p156 = pneg %p155
    // Predicated region
    $region25: #{basic_block_forward.4} parent=5 // pred_check
      _
    $region26: #{basic_block_forward.4} parent=5 // pred_check_branch
      %158 = sbr.rel (%p155) target = $region28
    $region27: #{basic_block_forward.4} parent=5 // pred_region
      %s159 = ssub.s32 %s10, 1
      %p160 = scmp.lt.s32.totalorder %s19, 1
      %s161 = scalar_select %p160, %s19, 1
      %s162 = smul.addr %s161, 54
      %s163 = smul.addr %s162, 4
      %s164 = scalar_lea.vmem %s0, %s163
      %p165 = pneg %p48
      %p166 = pneg %p45
      %p167 = pneg %p69
      %p168 = pneg %p66
      %p169 = pneg %p97
      %p170 = pneg %p94
      %s171 = smul.u32 4, %s20
      %p172 = scmp.lt.s32.totalorder %s19, 1
      %s173 = scalar_select %p172, %s19, 1
      %p174 = scmp.lt.s32.totalorder %s171, 15
      %s175 = scalar_select %p174, %s171, 15
      %s176 = smul.addr %s175, 2
      %s177 = smul.addr %s173, 32
      %s178 = sadd.s32 %s176, %s177
      %s179 = smul.addr %s178, 8
      %s180 = scalar_lea.vmem %s2, %s179
      %p181 = pneg %p123
      %p182 = pneg %p120
      %p183 = scmp.lt.s32.totalorder %s19, 1
      %s184 = scalar_select %p183, %s19, 1
      %s185 = smul.addr %s184, 2
      %s186 = scalar_lea.vmem %s3, %s185
      %p187 = scmp.lt.s32.totalorder %s19, 1
      %s188 = scalar_select %p187, %s19, 1
      %s189 = smul.addr %s188, 54
      %s190 = smul.addr %s189, 4
      %s191 = scalar_lea.vmem %s0, %s190
      %s192 = smul.u32 4, %s20
      %p193 = scmp.lt.s32.totalorder %s19, 1
      %s194 = scalar_select %p193, %s19, 1
      %p195 = scmp.lt.s32.totalorder %s192, 15
      %s196 = scalar_select %p195, %s192, 15
      %s197 = smul.addr %s196, 2
      %s198 = smul.addr %s194, 32
      %s199 = sadd.s32 %s197, %s198
      %s200 = smul.addr %s199, 8
      %s201 = scalar_lea.vmem %s2, %s200
      %s202 = smul.u32 4, %s20
      %p203 = scmp.lt.s32.totalorder %s19, 1
      %s204 = scalar_select %p203, %s19, 1
      %s205 = smul.addr %s204, 2
      %s206 = scalar_lea.vmem %s3, %s205
      %s207 = smul.u32 %s20, 4
      %s208 = smul.u32 %s207, 3
      %s209 = smul.addr %s208, 4
      %s210 = scalar_lea.vmem %s191, %s209
      %v211 = vld [vmem:[%s210] sm:$0xf]
      %v212 = vld [vmem:[%s210 + $0x4] sm:$0xf]
      %v213 = vld [vmem:[%s210 + $0x8] sm:$0x1]
      %v214 = vld [vmem:[%s210 + $0xc] sm:$0xf]
      %v215 = vld [vmem:[%s210 + $0x10] sm:$0xf]
      %v216 = vld [vmem:[%s210 + $0x14] sm:$0x1]
      %v217 = vld [vmem:[%s210 + $0x18] sm:$0xf]
      %v218 = vld [vmem:[%s210 + $0x1c] sm:$0xf]
      %v219 = vld [vmem:[%s210 + $0x20] sm:$0x1]
      %v220 = vld [vmem:[%s210 + $0x24] sm:$0xf]
      %v221 = vld [vmem:[%s210 + $0x28] sm:$0xf]
      %v222 = vld [vmem:[%s210 + $0x2c] sm:$0x1]
      %v223 = vld [vmem:[%s1] sm:$0xf]
      %v224 = vld [vmem:[%s1 + $0x4] sm:$0xf]
      %v225 = vld [vmem:[%s1 + $0x8] sm:$0xf]
      %v226 = vld [vmem:[%s1 + $0xc] sm:$0xf]
      %v227 = vld [vmem:[%s1 + $0x10] sm:$0xf]
      %v228 = vld [vmem:[%s1 + $0x14] sm:$0xf]
      %v229 = vld [vmem:[%s1 + $0x18] sm:$0xf]
      %v230 = vld [vmem:[%s1 + $0x1c] sm:$0xf]
      %v231 = vld [vmem:[%s1 + $0x20] sm:$0xf]
      %v232 = vld [vmem:[%s1 + $0x24] sm:$0xf]
      %v233 = vld [vmem:[%s1 + $0x28] sm:$0xf]
      %v234 = vld [vmem:[%s1 + $0x2c] sm:$0xf]
      %v235 = vld [vmem:[%s1 + $0x30] sm:$0xf]
      %v236 = vld [vmem:[%s1 + $0x34] sm:$0xf]
      %v237 = vld [vmem:[%s1 + $0x38] sm:$0xf]
      %v238 = vld [vmem:[%s1 + $0x3c] sm:$0xf]
      %vm239 = vsmask.f32 3328
      %vm240 = vsmask.f32 7440
      %vm241 = vmor %vm239, %vm240
      %v243 = vshrl.u32 %v211, 16
      %v245 = vrot.slane %v243, 4
      %v246 = vshll.u32 %v211, 16
      %v248 = vrot.slane %v246, 5
      %v249 = vor.u32 %v245, %v248
      %v250 = vrot.slane %v249, 4
      %v252 = vshll.u32 %v212, 16
      %v254 = vrot.slane %v252, 5
      %v255 = vsel %vm241, %v250, %v254
      %v256 = vshrl.u32 %v212, 16
      %v258 = vrot.slane %v256, 4
      %v259 = vor.u32 %v258, %v254
      %v260 = vrot.slane %v259, 4
      %v262 = vshll.u32 %v213, 16
      %v264 = vrot.slane %v262, 5
      %v265 = vsel %vm241, %v260, %v264
      %v267 = vshrl.u32 %v214, 16
      %v269 = vrot.slane %v267, 4
      %v270 = vshll.u32 %v214, 16
      %v272 = vrot.slane %v270, 5
      %v273 = vor.u32 %v269, %v272
      %v274 = vrot.slane %v273, 4
      %v276 = vshll.u32 %v215, 16
      %v278 = vrot.slane %v276, 5
      %v279 = vsel %vm241, %v274, %v278
      %v280 = vshrl.u32 %v215, 16
      %v282 = vrot.slane %v280, 4
      %v283 = vor.u32 %v282, %v278
      %v284 = vrot.slane %v283, 4
      %v286 = vshll.u32 %v216, 16
      %v288 = vrot.slane %v286, 5
      %v289 = vsel %vm241, %v284, %v288
      %v291 = vshrl.u32 %v217, 16
      %v293 = vrot.slane %v291, 4
      %v294 = vshll.u32 %v217, 16
      %v296 = vrot.slane %v294, 5
      %v297 = vor.u32 %v293, %v296
      %v298 = vrot.slane %v297, 4
      %v300 = vshll.u32 %v218, 16
      %v302 = vrot.slane %v300, 5
      %v303 = vsel %vm241, %v298, %v302
      %v304 = vshrl.u32 %v218, 16
      %v306 = vrot.slane %v304, 4
      %v307 = vor.u32 %v306, %v302
      %v308 = vrot.slane %v307, 4
      %v310 = vshll.u32 %v219, 16
      %v312 = vrot.slane %v310, 5
      %v313 = vsel %vm241, %v308, %v312
      %v315 = vshrl.u32 %v220, 16
      %v317 = vrot.slane %v315, 4
      %v318 = vshll.u32 %v220, 16
      %v320 = vrot.slane %v318, 5
      %v321 = vor.u32 %v317, %v320
      %v322 = vrot.slane %v321, 4
      %v324 = vshll.u32 %v221, 16
      %v326 = vrot.slane %v324, 5
      %v327 = vsel %vm241, %v322, %v326
      %v328 = vshrl.u32 %v221, 16
      %v330 = vrot.slane %v328, 4
      %v331 = vor.u32 %v330, %v326
      %v332 = vrot.slane %v331, 4
      %v334 = vshll.u32 %v222, 16
      %v336 = vrot.slane %v334, 5
      %v337 = vsel %vm241, %v332, %v336
      %s338 = scalar_lea.vmem %s1, 64
      %v339 = vld [vmem:[%s338] sm:$0xf]
      %v340 = vld [vmem:[%s338 + $0x4] sm:$0xf]
      %v341 = vld [vmem:[%s338 + $0x8] sm:$0xf]
      %v342 = vld [vmem:[%s338 + $0xc] sm:$0xf]
      %v343 = vld [vmem:[%s338 + $0x10] sm:$0xf]
      %v344 = vld [vmem:[%s338 + $0x14] sm:$0xf]
      %v345 = vld [vmem:[%s338 + $0x18] sm:$0xf]
      %v346 = vld [vmem:[%s338 + $0x1c] sm:$0xf]
      %v347 = vld [vmem:[%s338 + $0x20] sm:$0xf]
      %v348 = vld [vmem:[%s338 + $0x24] sm:$0xf]
      %v349 = vld [vmem:[%s338 + $0x28] sm:$0xf]
      %v350 = vld [vmem:[%s338 + $0x2c] sm:$0xf]
      %v351 = vld [vmem:[%s338 + $0x30] sm:$0xf]
      %v352 = vld [vmem:[%s338 + $0x34] sm:$0xf]
      %v353 = vld [vmem:[%s338 + $0x38] sm:$0xf]
      %v354 = vld [vmem:[%s338 + $0x3c] sm:$0xf]
      %v355 = vunpack.c.l.b16 %v255
      %v356 = vunpack.c.l.b16 %v265
      %v357 = vunpack.c.l.b16 %v279
      %v358 = vunpack.c.l.b16 %v289
      %v359 = vunpack.c.l.b16 %v303
      %v360 = vunpack.c.l.b16 %v313
      %v361 = vunpack.c.l.b16 %v327
      %v362 = vunpack.c.l.b16 %v337
      %v363 = vpack.c.b16 %v356, %v355
      %v364 = vpack.c.b16 %v358, %v357
      %v365 = vpack.c.b16 %v360, %v359
      %v366 = vpack.c.b16 %v362, %v361
      %v387 = vunpack.c.l.b16 %v339
      %v388 = vunpack.c.l.b16 %v340
      %v389 = vunpack.c.l.b16 %v341
      %v390 = vunpack.c.l.b16 %v342
      %v391 = vunpack.c.l.b16 %v343
      %v392 = vunpack.c.l.b16 %v344
      %v393 = vunpack.c.l.b16 %v345
      %v394 = vunpack.c.l.b16 %v346
      %v395 = vunpack.c.l.b16 %v347
      %v396 = vunpack.c.l.b16 %v348
      %v397 = vunpack.c.l.b16 %v349
      %v398 = vunpack.c.l.b16 %v350
      %v399 = vunpack.c.l.b16 %v351
      %v400 = vunpack.c.l.b16 %v352
      %v401 = vunpack.c.l.b16 %v353
      %v402 = vunpack.c.l.b16 %v354
      %v403 = vpack.c.b16 %v388, %v387
      %v404 = vpack.c.b16 %v390, %v389
      %v405 = vpack.c.b16 %v392, %v391
      %v406 = vpack.c.b16 %v394, %v393
      %v407 = vpack.c.b16 %v396, %v395
      %v408 = vpack.c.b16 %v398, %v397
      %v409 = vpack.c.b16 %v400, %v399
      %v410 = vpack.c.b16 %v402, %v401
      %419 = vmatpush.bf16.msra.mxu0 %v410
      %420 = vmatpush.bf16.msra.mxu0 %v409
      %421 = vmatpush.bf16.msra.mxu0 %v408
      %422 = vmatpush.bf16.msra.mxu0 %v407
      %423 = vmatpush.bf16.msra.mxu0 %v406
      %424 = vmatpush.bf16.msra.mxu0 %v405
      %425 = vmatpush.bf16.msra.mxu0 %v404
      %426 = vmatpush.bf16.msra.mxu0 %v403
      %427 = vmatmul.bf16.gmra.mxu0 %v363
      %v428 = vpop.f32.mrf.mxu0
      %v429 = vadd.f32 0.0, %v428
      %v430 = vpop.f32.mrf.mxu0
      %v431 = vadd.f32 0.0, %v430
      %432 = vmatmul.bf16.gmra.mxu0 %v364
      %v433 = vpop.f32.mrf.mxu0
      %v434 = vadd.f32 0.0, %v433
      %v435 = vpop.f32.mrf.mxu0
      %v436 = vadd.f32 0.0, %v435
      %437 = vmatmul.bf16.gmra.mxu0 %v365
      %v438 = vpop.f32.mrf.mxu0
      %v439 = vadd.f32 0.0, %v438
      %v440 = vpop.f32.mrf.mxu0
      %v441 = vadd.f32 0.0, %v440
      %442 = vmatmul.bf16.gmra.mxu0 %v366
      %v443 = vpop.f32.mrf.mxu0
      %v444 = vadd.f32 0.0, %v443
      %v445 = vpop.f32.mrf.mxu0
      %v446 = vadd.f32 0.0, %v445
      %447 = vdwg.mxu0
      %v456 = vunpack.c.l.b16 %v211
      %v457 = vunpack.c.l.b16 %v212
      %v458 = vunpack.c.l.b16 %v214
      %v459 = vunpack.c.l.b16 %v215
      %v460 = vunpack.c.l.b16 %v217
      %v461 = vunpack.c.l.b16 %v218
      %v462 = vunpack.c.l.b16 %v220
      %v463 = vunpack.c.l.b16 %v221
      %v464 = vpack.c.b16 %v457, %v456
      %v465 = vpack.c.b16 %v459, %v458
      %v466 = vpack.c.b16 %v461, %v460
      %v467 = vpack.c.b16 %v463, %v462
      %v488 = vunpack.c.l.b16 %v223
      %v489 = vunpack.c.l.b16 %v224
      %v490 = vunpack.c.l.b16 %v225
      %v491 = vunpack.c.l.b16 %v226
      %v492 = vunpack.c.l.b16 %v227
      %v493 = vunpack.c.l.b16 %v228
      %v494 = vunpack.c.l.b16 %v229
      %v495 = vunpack.c.l.b16 %v230
      %v496 = vunpack.c.l.b16 %v231
      %v497 = vunpack.c.l.b16 %v232
      %v498 = vunpack.c.l.b16 %v233
      %v499 = vunpack.c.l.b16 %v234
      %v500 = vunpack.c.l.b16 %v235
      %v501 = vunpack.c.l.b16 %v236
      %v502 = vunpack.c.l.b16 %v237
      %v503 = vunpack.c.l.b16 %v238
      %v504 = vpack.c.b16 %v489, %v488
      %v505 = vpack.c.b16 %v491, %v490
      %v506 = vpack.c.b16 %v493, %v492
      %v507 = vpack.c.b16 %v495, %v494
      %v508 = vpack.c.b16 %v497, %v496
      %v509 = vpack.c.b16 %v499, %v498
      %v510 = vpack.c.b16 %v501, %v500
      %v511 = vpack.c.b16 %v503, %v502
      %520 = vmatpush.bf16.msra.mxu0 %v511
      %521 = vmatpush.bf16.msra.mxu0 %v510
      %522 = vmatpush.bf16.msra.mxu0 %v509
      %523 = vmatpush.bf16.msra.mxu0 %v508
      %524 = vmatpush.bf16.msra.mxu0 %v507
      %525 = vmatpush.bf16.msra.mxu0 %v506
      %526 = vmatpush.bf16.msra.mxu0 %v505
      %527 = vmatpush.bf16.msra.mxu0 %v504
      %528 = vmatmul.bf16.gmra.mxu0 %v464
      %v529 = vpop.f32.mrf.mxu0
      %v530 = vadd.f32 %v429, %v529
      %v531 = vpop.f32.mrf.mxu0
      %v532 = vadd.f32 %v431, %v531
      %533 = vmatmul.bf16.gmra.mxu0 %v465
      %v534 = vpop.f32.mrf.mxu0
      %v535 = vadd.f32 %v434, %v534
      %v536 = vpop.f32.mrf.mxu0
      %v537 = vadd.f32 %v436, %v536
      %538 = vmatmul.bf16.gmra.mxu0 %v466
      %v539 = vpop.f32.mrf.mxu0
      %v540 = vadd.f32 %v439, %v539
      %v541 = vpop.f32.mrf.mxu0
      %v542 = vadd.f32 %v441, %v541
      %543 = vmatmul.bf16.gmra.mxu0 %v467
      %v544 = vpop.f32.mrf.mxu0
      %v545 = vadd.f32 %v444, %v544
      %v546 = vpop.f32.mrf.mxu0
      %v547 = vadd.f32 %v446, %v546
      %548 = vdwg.mxu0
      %vm553 = vcmask 1042432
      %vm554 = vcmask 1046532
      %vm555 = vmor %vm553, %vm554
      %v556 = vrot.slane %v211, 5
      %v557 = vrot.slane %v556, 4
      %v558 = vrot.slane %v212, 5
      %v559 = vsel %vm555, %v557, %v558
      %v560 = vrot.slane %v558, 4
      %v561 = vrot.slane %v213, 5
      %v562 = vsel %vm555, %v560, %v561
      %v563 = vrot.slane %v214, 5
      %v564 = vrot.slane %v563, 4
      %v565 = vrot.slane %v215, 5
      %v566 = vsel %vm555, %v564, %v565
      %v567 = vrot.slane %v565, 4
      %v568 = vrot.slane %v216, 5
      %v569 = vsel %vm555, %v567, %v568
      %v570 = vrot.slane %v217, 5
      %v571 = vrot.slane %v570, 4
      %v572 = vrot.slane %v218, 5
      %v573 = vsel %vm555, %v571, %v572
      %v574 = vrot.slane %v572, 4
      %v575 = vrot.slane %v219, 5
      %v576 = vsel %vm555, %v574, %v575
      %v577 = vrot.slane %v220, 5
      %v578 = vrot.slane %v577, 4
      %v579 = vrot.slane %v221, 5
      %v580 = vsel %vm555, %v578, %v579
      %v581 = vrot.slane %v579, 4
      %v582 = vrot.slane %v222, 5
      %v583 = vsel %vm555, %v581, %v582
      %s584 = scalar_lea.vmem %s1, 128
      %v585 = vld [vmem:[%s584] sm:$0xf]
      %v586 = vld [vmem:[%s584 + $0x4] sm:$0xf]
      %v587 = vld [vmem:[%s584 + $0x8] sm:$0xf]
      %v588 = vld [vmem:[%s584 + $0xc] sm:$0xf]
      %v589 = vld [vmem:[%s584 + $0x10] sm:$0xf]
      %v590 = vld [vmem:[%s584 + $0x14] sm:$0xf]
      %v591 = vld [vmem:[%s584 + $0x18] sm:$0xf]
      %v592 = vld [vmem:[%s584 + $0x1c] sm:$0xf]
      %v593 = vld [vmem:[%s584 + $0x20] sm:$0xf]
      %v594 = vld [vmem:[%s584 + $0x24] sm:$0xf]
      %v595 = vld [vmem:[%s584 + $0x28] sm:$0xf]
      %v596 = vld [vmem:[%s584 + $0x2c] sm:$0xf]
      %v597 = vld [vmem:[%s584 + $0x30] sm:$0xf]
      %v598 = vld [vmem:[%s584 + $0x34] sm:$0xf]
      %v599 = vld [vmem:[%s584 + $0x38] sm:$0xf]
      %v600 = vld [vmem:[%s584 + $0x3c] sm:$0xf]
      %v601 = vunpack.c.l.b16 %v559
      %v602 = vunpack.c.l.b16 %v562
      %v603 = vunpack.c.l.b16 %v566
      %v604 = vunpack.c.l.b16 %v569
      %v605 = vunpack.c.l.b16 %v573
      %v606 = vunpack.c.l.b16 %v576
      %v607 = vunpack.c.l.b16 %v580
      %v608 = vunpack.c.l.b16 %v583
      %v609 = vpack.c.b16 %v602, %v601
      %v610 = vpack.c.b16 %v604, %v603
      %v611 = vpack.c.b16 %v606, %v605
      %v612 = vpack.c.b16 %v608, %v607
      %v633 = vunpack.c.l.b16 %v585
      %v634 = vunpack.c.l.b16 %v586
      %v635 = vunpack.c.l.b16 %v587
      %v636 = vunpack.c.l.b16 %v588
      %v637 = vunpack.c.l.b16 %v589
      %v638 = vunpack.c.l.b16 %v590
      %v639 = vunpack.c.l.b16 %v591
      %v640 = vunpack.c.l.b16 %v592
      %v641 = vunpack.c.l.b16 %v593
      %v642 = vunpack.c.l.b16 %v594
      %v643 = vunpack.c.l.b16 %v595
      %v644 = vunpack.c.l.b16 %v596
      %v645 = vunpack.c.l.b16 %v597
      %v646 = vunpack.c.l.b16 %v598
      %v647 = vunpack.c.l.b16 %v599
      %v648 = vunpack.c.l.b16 %v600
      %v649 = vpack.c.b16 %v634, %v633
      %v650 = vpack.c.b16 %v636, %v635
      %v651 = vpack.c.b16 %v638, %v637
      %v652 = vpack.c.b16 %v640, %v639
      %v653 = vpack.c.b16 %v642, %v641
      %v654 = vpack.c.b16 %v644, %v643
      %v655 = vpack.c.b16 %v646, %v645
      %v656 = vpack.c.b16 %v648, %v647
      %665 = vmatpush.bf16.msra.mxu0 %v656
      %666 = vmatpush.bf16.msra.mxu0 %v655
      %667 = vmatpush.bf16.msra.mxu0 %v654
      %668 = vmatpush.bf16.msra.mxu0 %v653
      %669 = vmatpush.bf16.msra.mxu0 %v652
      %670 = vmatpush.bf16.msra.mxu0 %v651
      %671 = vmatpush.bf16.msra.mxu0 %v650
      %672 = vmatpush.bf16.msra.mxu0 %v649
      %673 = vmatmul.bf16.gmra.mxu0 %v609
      %v674 = vpop.f32.mrf.mxu0
      %v675 = vadd.f32 0.0, %v674
      %v676 = vpop.f32.mrf.mxu0
      %v677 = vadd.f32 0.0, %v676
      %678 = vmatmul.bf16.gmra.mxu0 %v610
      %v679 = vpop.f32.mrf.mxu0
      %v680 = vadd.f32 0.0, %v679
      %v681 = vpop.f32.mrf.mxu0
      %v682 = vadd.f32 0.0, %v681
      %683 = vmatmul.bf16.gmra.mxu0 %v611
      %v684 = vpop.f32.mrf.mxu0
      %v685 = vadd.f32 0.0, %v684
      %v686 = vpop.f32.mrf.mxu0
      %v687 = vadd.f32 0.0, %v686
      %688 = vmatmul.bf16.gmra.mxu0 %v612
      %v689 = vpop.f32.mrf.mxu0
      %v690 = vadd.f32 0.0, %v689
      %v691 = vpop.f32.mrf.mxu0
      %v692 = vadd.f32 0.0, %v691
      %693 = vdwg.mxu0
      %v694 = vadd.f32 %v530, %v675
      %v695 = vadd.f32 %v532, %v677
      %v696 = vadd.f32 %v535, %v680
      %v697 = vadd.f32 %v537, %v682
      %v698 = vadd.f32 %v540, %v685
      %v699 = vadd.f32 %v542, %v687
      %v700 = vadd.f32 %v545, %v690
      %v701 = vadd.f32 %v547, %v692
      %s702 = sadd.s32 %s207, 1
      %s703 = smul.u32 %s702, 3
      %s704 = smul.addr %s703, 4
      %s705 = scalar_lea.vmem %s191, %s704
      %v706 = vld [vmem:[%s705] sm:$0xf]
      %v707 = vld [vmem:[%s705 + $0x4] sm:$0xf]
      %v708 = vld [vmem:[%s705 + $0x8] sm:$0x1]
      %v709 = vld [vmem:[%s705 + $0xc] sm:$0xf]
      %v710 = vld [vmem:[%s705 + $0x10] sm:$0xf]
      %v711 = vld [vmem:[%s705 + $0x14] sm:$0x1]
      %v712 = vld [vmem:[%s705 + $0x18] sm:$0xf]
      %v713 = vld [vmem:[%s705 + $0x1c] sm:$0xf]
      %v714 = vld [vmem:[%s705 + $0x20] sm:$0x1]
      %v715 = vld [vmem:[%s705 + $0x24] sm:$0xf]
      %v716 = vld [vmem:[%s705 + $0x28] sm:$0xf]
      %v717 = vld [vmem:[%s705 + $0x2c] sm:$0x1]
      %s718 = scalar_lea.vmem %s1, 192
      %v719 = vld [vmem:[%s718] sm:$0xf]
      %v720 = vld [vmem:[%s718 + $0x4] sm:$0xf]
      %v721 = vld [vmem:[%s718 + $0x8] sm:$0xf]
      %v722 = vld [vmem:[%s718 + $0xc] sm:$0xf]
      %v723 = vld [vmem:[%s718 + $0x10] sm:$0xf]
      %v724 = vld [vmem:[%s718 + $0x14] sm:$0xf]
      %v725 = vld [vmem:[%s718 + $0x18] sm:$0xf]
      %v726 = vld [vmem:[%s718 + $0x1c] sm:$0xf]
      %v727 = vld [vmem:[%s718 + $0x20] sm:$0xf]
      %v728 = vld [vmem:[%s718 + $0x24] sm:$0xf]
      %v729 = vld [vmem:[%s718 + $0x28] sm:$0xf]
      %v730 = vld [vmem:[%s718 + $0x2c] sm:$0xf]
      %v731 = vld [vmem:[%s718 + $0x30] sm:$0xf]
      %v732 = vld [vmem:[%s718 + $0x34] sm:$0xf]
      %v733 = vld [vmem:[%s718 + $0x38] sm:$0xf]
      %v734 = vld [vmem:[%s718 + $0x3c] sm:$0xf]
      %v743 = vunpack.c.l.b16 %v706
      %v744 = vunpack.c.l.b16 %v707
      %v745 = vunpack.c.l.b16 %v709
      %v746 = vunpack.c.l.b16 %v710
      %v747 = vunpack.c.l.b16 %v712
      %v748 = vunpack.c.l.b16 %v713
      %v749 = vunpack.c.l.b16 %v715
      %v750 = vunpack.c.l.b16 %v716
      %v751 = vpack.c.b16 %v744, %v743
      %v752 = vpack.c.b16 %v746, %v745
      %v753 = vpack.c.b16 %v748, %v747
      %v754 = vpack.c.b16 %v750, %v749
      %v775 = vunpack.c.l.b16 %v719
      %v776 = vunpack.c.l.b16 %v720
      %v777 = vunpack.c.l.b16 %v721
      %v778 = vunpack.c.l.b16 %v722
      %v779 = vunpack.c.l.b16 %v723
      %v780 = vunpack.c.l.b16 %v724
      %v781 = vunpack.c.l.b16 %v725
      %v782 = vunpack.c.l.b16 %v726
      %v783 = vunpack.c.l.b16 %v727
      %v784 = vunpack.c.l.b16 %v728
      %v785 = vunpack.c.l.b16 %v729
      %v786 = vunpack.c.l.b16 %v730
      %v787 = vunpack.c.l.b16 %v731
      %v788 = vunpack.c.l.b16 %v732
      %v789 = vunpack.c.l.b16 %v733
      %v790 = vunpack.c.l.b16 %v734
      %v791 = vpack.c.b16 %v776, %v775
      %v792 = vpack.c.b16 %v778, %v777
      %v793 = vpack.c.b16 %v780, %v779
      %v794 = vpack.c.b16 %v782, %v781
      %v795 = vpack.c.b16 %v784, %v783
      %v796 = vpack.c.b16 %v786, %v785
      %v797 = vpack.c.b16 %v788, %v787
      %v798 = vpack.c.b16 %v790, %v789
      %807 = vmatpush.bf16.msra.mxu0 %v798
      %808 = vmatpush.bf16.msra.mxu0 %v797
      %809 = vmatpush.bf16.msra.mxu0 %v796
      %810 = vmatpush.bf16.msra.mxu0 %v795
      %811 = vmatpush.bf16.msra.mxu0 %v794
      %812 = vmatpush.bf16.msra.mxu0 %v793
      %813 = vmatpush.bf16.msra.mxu0 %v792
      %814 = vmatpush.bf16.msra.mxu0 %v791
      %815 = vmatmul.bf16.gmra.mxu0 %v751
      %v816 = vpop.f32.mrf.mxu0
      %v817 = vadd.f32 0.0, %v816
      %v818 = vpop.f32.mrf.mxu0
      %v819 = vadd.f32 0.0, %v818
      %820 = vmatmul.bf16.gmra.mxu0 %v752
      %v821 = vpop.f32.mrf.mxu0
      %v822 = vadd.f32 0.0, %v821
      %v823 = vpop.f32.mrf.mxu0
      %v824 = vadd.f32 0.0, %v823
      %825 = vmatmul.bf16.gmra.mxu0 %v753
      %v826 = vpop.f32.mrf.mxu0
      %v827 = vadd.f32 0.0, %v826
      %v828 = vpop.f32.mrf.mxu0
      %v829 = vadd.f32 0.0, %v828
      %830 = vmatmul.bf16.gmra.mxu0 %v754
      %v831 = vpop.f32.mrf.mxu0
      %v832 = vadd.f32 0.0, %v831
      %v833 = vpop.f32.mrf.mxu0
      %v834 = vadd.f32 0.0, %v833
      %835 = vdwg.mxu0
      %v836 = vadd.f32 %v694, %v817
      %v837 = vadd.f32 %v695, %v819
      %v838 = vadd.f32 %v696, %v822
      %v839 = vadd.f32 %v697, %v824
      %v840 = vadd.f32 %v698, %v827
      %v841 = vadd.f32 %v699, %v829
      %v842 = vadd.f32 %v700, %v832
      %v843 = vadd.f32 %v701, %v834
      %v845 = vshrl.u32 %v706, 16
      %v847 = vrot.slane %v845, 4
      %v848 = vshll.u32 %v706, 16
      %v850 = vrot.slane %v848, 5
      %v851 = vor.u32 %v847, %v850
      %v852 = vrot.slane %v851, 4
      %v854 = vshll.u32 %v707, 16
      %v856 = vrot.slane %v854, 5
      %v857 = vsel %vm241, %v852, %v856
      %v858 = vshrl.u32 %v707, 16
      %v860 = vrot.slane %v858, 4
      %v861 = vor.u32 %v860, %v856
      %v862 = vrot.slane %v861, 4
      %v864 = vshll.u32 %v708, 16
      %v866 = vrot.slane %v864, 5
      %v867 = vsel %vm241, %v862, %v866
      %v869 = vshrl.u32 %v709, 16
      %v871 = vrot.slane %v869, 4
      %v872 = vshll.u32 %v709, 16
      %v874 = vrot.slane %v872, 5
      %v875 = vor.u32 %v871, %v874
      %v876 = vrot.slane %v875, 4
      %v878 = vshll.u32 %v710, 16
      %v880 = vrot.slane %v878, 5
      %v881 = vsel %vm241, %v876, %v880
      %v882 = vshrl.u32 %v710, 16
      %v884 = vrot.slane %v882, 4
      %v885 = vor.u32 %v884, %v880
      %v886 = vrot.slane %v885, 4
      %v888 = vshll.u32 %v711, 16
      %v890 = vrot.slane %v888, 5
      %v891 = vsel %vm241, %v886, %v890
      %v893 = vshrl.u32 %v712, 16
      %v895 = vrot.slane %v893, 4
      %v896 = vshll.u32 %v712, 16
      %v898 = vrot.slane %v896, 5
      %v899 = vor.u32 %v895, %v898
      %v900 = vrot.slane %v899, 4
      %v902 = vshll.u32 %v713, 16
      %v904 = vrot.slane %v902, 5
      %v905 = vsel %vm241, %v900, %v904
      %v906 = vshrl.u32 %v713, 16
      %v908 = vrot.slane %v906, 4
      %v909 = vor.u32 %v908, %v904
      %v910 = vrot.slane %v909, 4
      %v912 = vshll.u32 %v714, 16
      %v914 = vrot.slane %v912, 5
      %v915 = vsel %vm241, %v910, %v914
      %v917 = vshrl.u32 %v715, 16
      %v919 = vrot.slane %v917, 4
      %v920 = vshll.u32 %v715, 16
      %v922 = vrot.slane %v920, 5
      %v923 = vor.u32 %v919, %v922
      %v924 = vrot.slane %v923, 4
      %v926 = vshll.u32 %v716, 16
      %v928 = vrot.slane %v926, 5
      %v929 = vsel %vm241, %v924, %v928
      %v930 = vshrl.u32 %v716, 16
      %v932 = vrot.slane %v930, 4
      %v933 = vor.u32 %v932, %v928
      %v934 = vrot.slane %v933, 4
      %v936 = vshll.u32 %v717, 16
      %v938 = vrot.slane %v936, 5
      %v939 = vsel %vm241, %v934, %v938
      %s940 = scalar_lea.vmem %s1, 256
      %v941 = vld [vmem:[%s940] sm:$0xf]
      %v942 = vld [vmem:[%s940 + $0x4] sm:$0xf]
      %v943 = vld [vmem:[%s940 + $0x8] sm:$0xf]
      %v944 = vld [vmem:[%s940 + $0xc] sm:$0xf]
      %v945 = vld [vmem:[%s940 + $0x10] sm:$0xf]
      %v946 = vld [vmem:[%s940 + $0x14] sm:$0xf]
      %v947 = vld [vmem:[%s940 + $0x18] sm:$0xf]
      %v948 = vld [vmem:[%s940 + $0x1c] sm:$0xf]
      %v949 = vld [vmem:[%s940 + $0x20] sm:$0xf]
      %v950 = vld [vmem:[%s940 + $0x24] sm:$0xf]
      %v951 = vld [vmem:[%s940 + $0x28] sm:$0xf]
      %v952 = vld [vmem:[%s940 + $0x2c] sm:$0xf]
      %v953 = vld [vmem:[%s940 + $0x30] sm:$0xf]
      %v954 = vld [vmem:[%s940 + $0x34] sm:$0xf]
      %v955 = vld [vmem:[%s940 + $0x38] sm:$0xf]
      %v956 = vld [vmem:[%s940 + $0x3c] sm:$0xf]
      %v957 = vunpack.c.l.b16 %v857
      %v958 = vunpack.c.l.b16 %v867
      %v959 = vunpack.c.l.b16 %v881
      %v960 = vunpack.c.l.b16 %v891
      %v961 = vunpack.c.l.b16 %v905
      %v962 = vunpack.c.l.b16 %v915
      %v963 = vunpack.c.l.b16 %v929
      %v964 = vunpack.c.l.b16 %v939
      %v965 = vpack.c.b16 %v958, %v957
      %v966 = vpack.c.b16 %v960, %v959
      %v967 = vpack.c.b16 %v962, %v961
      %v968 = vpack.c.b16 %v964, %v963
      %v989 = vunpack.c.l.b16 %v941
      %v990 = vunpack.c.l.b16 %v942
      %v991 = vunpack.c.l.b16 %v943
      %v992 = vunpack.c.l.b16 %v944
      %v993 = vunpack.c.l.b16 %v945
      %v994 = vunpack.c.l.b16 %v946
      %v995 = vunpack.c.l.b16 %v947
      %v996 = vunpack.c.l.b16 %v948
      %v997 = vunpack.c.l.b16 %v949
      %v998 = vunpack.c.l.b16 %v950
      %v999 = vunpack.c.l.b16 %v951
      %v1000 = vunpack.c.l.b16 %v952
      %v1001 = vunpack.c.l.b16 %v953
      %v1002 = vunpack.c.l.b16 %v954
      %v1003 = vunpack.c.l.b16 %v955
      %v1004 = vunpack.c.l.b16 %v956
      %v1005 = vpack.c.b16 %v990, %v989
      %v1006 = vpack.c.b16 %v992, %v991
      %v1007 = vpack.c.b16 %v994, %v993
      %v1008 = vpack.c.b16 %v996, %v995
      %v1009 = vpack.c.b16 %v998, %v997
      %v1010 = vpack.c.b16 %v1000, %v999
      %v1011 = vpack.c.b16 %v1002, %v1001
      %v1012 = vpack.c.b16 %v1004, %v1003
      %1021 = vmatpush.bf16.msra.mxu0 %v1012
      %1022 = vmatpush.bf16.msra.mxu0 %v1011
      %1023 = vmatpush.bf16.msra.mxu0 %v1010
      %1024 = vmatpush.bf16.msra.mxu0 %v1009
      %1025 = vmatpush.bf16.msra.mxu0 %v1008
      %1026 = vmatpush.bf16.msra.mxu0 %v1007
      %1027 = vmatpush.bf16.msra.mxu0 %v1006
      %1028 = vmatpush.bf16.msra.mxu0 %v1005
      %1029 = vmatmul.bf16.gmra.mxu0 %v965
      %v1030 = vpop.f32.mrf.mxu0
      %v1031 = vadd.f32 0.0, %v1030
      %v1032 = vpop.f32.mrf.mxu0
      %v1033 = vadd.f32 0.0, %v1032
      %1034 = vmatmul.bf16.gmra.mxu0 %v966
      %v1035 = vpop.f32.mrf.mxu0
      %v1036 = vadd.f32 0.0, %v1035
      %v1037 = vpop.f32.mrf.mxu0
      %v1038 = vadd.f32 0.0, %v1037
      %1039 = vmatmul.bf16.gmra.mxu0 %v967
      %v1040 = vpop.f32.mrf.mxu0
      %v1041 = vadd.f32 0.0, %v1040
      %v1042 = vpop.f32.mrf.mxu0
      %v1043 = vadd.f32 0.0, %v1042
      %1044 = vmatmul.bf16.gmra.mxu0 %v968
      %v1045 = vpop.f32.mrf.mxu0
      %v1046 = vadd.f32 0.0, %v1045
      %v1047 = vpop.f32.mrf.mxu0
      %v1048 = vadd.f32 0.0, %v1047
      %1049 = vdwg.mxu0
      %v1050 = vadd.f32 %v836, %v1031
      %v1051 = vadd.f32 %v837, %v1033
      %v1052 = vadd.f32 %v838, %v1036
      %v1053 = vadd.f32 %v839, %v1038
      %v1054 = vadd.f32 %v840, %v1041
      %v1055 = vadd.f32 %v841, %v1043
      %v1056 = vadd.f32 %v842, %v1046
      %v1057 = vadd.f32 %v843, %v1048
      %v1062 = vrot.slane %v706, 5
      %v1063 = vrot.slane %v1062, 4
      %v1064 = vrot.slane %v707, 5
      %v1065 = vsel %vm555, %v1063, %v1064
      %v1066 = vrot.slane %v1064, 4
      %v1067 = vrot.slane %v708, 5
      %v1068 = vsel %vm555, %v1066, %v1067
      %v1069 = vrot.slane %v709, 5
      %v1070 = vrot.slane %v1069, 4
      %v1071 = vrot.slane %v710, 5
      %v1072 = vsel %vm555, %v1070, %v1071
      %v1073 = vrot.slane %v1071, 4
      %v1074 = vrot.slane %v711, 5
      %v1075 = vsel %vm555, %v1073, %v1074
      %v1076 = vrot.slane %v712, 5
      %v1077 = vrot.slane %v1076, 4
      %v1078 = vrot.slane %v713, 5
      %v1079 = vsel %vm555, %v1077, %v1078
      %v1080 = vrot.slane %v1078, 4
      %v1081 = vrot.slane %v714, 5
      %v1082 = vsel %vm555, %v1080, %v1081
      %v1083 = vrot.slane %v715, 5
      %v1084 = vrot.slane %v1083, 4
      %v1085 = vrot.slane %v716, 5
      %v1086 = vsel %vm555, %v1084, %v1085
      %v1087 = vrot.slane %v1085, 4
      %v1088 = vrot.slane %v717, 5
      %v1089 = vsel %vm555, %v1087, %v1088
      %s1090 = scalar_lea.vmem %s1, 320
      %v1091 = vld [vmem:[%s1090] sm:$0xf]
      %v1092 = vld [vmem:[%s1090 + $0x4] sm:$0xf]
      %v1093 = vld [vmem:[%s1090 + $0x8] sm:$0xf]
      %v1094 = vld [vmem:[%s1090 + $0xc] sm:$0xf]
      %v1095 = vld [vmem:[%s1090 + $0x10] sm:$0xf]
      %v1096 = vld [vmem:[%s1090 + $0x14] sm:$0xf]
      %v1097 = vld [vmem:[%s1090 + $0x18] sm:$0xf]
      %v1098 = vld [vmem:[%s1090 + $0x1c] sm:$0xf]
      %v1099 = vld [vmem:[%s1090 + $0x20] sm:$0xf]
      %v1100 = vld [vmem:[%s1090 + $0x24] sm:$0xf]
      %v1101 = vld [vmem:[%s1090 + $0x28] sm:$0xf]
      %v1102 = vld [vmem:[%s1090 + $0x2c] sm:$0xf]
      %v1103 = vld [vmem:[%s1090 + $0x30] sm:$0xf]
      %v1104 = vld [vmem:[%s1090 + $0x34] sm:$0xf]
      %v1105 = vld [vmem:[%s1090 + $0x38] sm:$0xf]
      %v1106 = vld [vmem:[%s1090 + $0x3c] sm:$0xf]
      %v1107 = vunpack.c.l.b16 %v1065
      %v1108 = vunpack.c.l.b16 %v1068
      %v1109 = vunpack.c.l.b16 %v1072
      %v1110 = vunpack.c.l.b16 %v1075
      %v1111 = vunpack.c.l.b16 %v1079
      %v1112 = vunpack.c.l.b16 %v1082
      %v1113 = vunpack.c.l.b16 %v1086
      %v1114 = vunpack.c.l.b16 %v1089
      %v1115 = vpack.c.b16 %v1108, %v1107
      %v1116 = vpack.c.b16 %v1110, %v1109
      %v1117 = vpack.c.b16 %v1112, %v1111
      %v1118 = vpack.c.b16 %v1114, %v1113
      %v1139 = vunpack.c.l.b16 %v1091
      %v1140 = vunpack.c.l.b16 %v1092
      %v1141 = vunpack.c.l.b16 %v1093
      %v1142 = vunpack.c.l.b16 %v1094
      %v1143 = vunpack.c.l.b16 %v1095
      %v1144 = vunpack.c.l.b16 %v1096
      %v1145 = vunpack.c.l.b16 %v1097
      %v1146 = vunpack.c.l.b16 %v1098
      %v1147 = vunpack.c.l.b16 %v1099
      %v1148 = vunpack.c.l.b16 %v1100
      %v1149 = vunpack.c.l.b16 %v1101
      %v1150 = vunpack.c.l.b16 %v1102
      %v1151 = vunpack.c.l.b16 %v1103
      %v1152 = vunpack.c.l.b16 %v1104
      %v1153 = vunpack.c.l.b16 %v1105
      %v1154 = vunpack.c.l.b16 %v1106
      %v1155 = vpack.c.b16 %v1140, %v1139
      %v1156 = vpack.c.b16 %v1142, %v1141
      %v1157 = vpack.c.b16 %v1144, %v1143
      %v1158 = vpack.c.b16 %v1146, %v1145
      %v1159 = vpack.c.b16 %v1148, %v1147
      %v1160 = vpack.c.b16 %v1150, %v1149
      %v1161 = vpack.c.b16 %v1152, %v1151
      %v1162 = vpack.c.b16 %v1154, %v1153
      %1171 = vmatpush.bf16.msra.mxu0 %v1162
      %1172 = vmatpush.bf16.msra.mxu0 %v1161
      %1173 = vmatpush.bf16.msra.mxu0 %v1160
      %1174 = vmatpush.bf16.msra.mxu0 %v1159
      %1175 = vmatpush.bf16.msra.mxu0 %v1158
      %1176 = vmatpush.bf16.msra.mxu0 %v1157
      %1177 = vmatpush.bf16.msra.mxu0 %v1156
      %1178 = vmatpush.bf16.msra.mxu0 %v1155
      %1179 = vmatmul.bf16.gmra.mxu0 %v1115
      %v1180 = vpop.f32.mrf.mxu0
      %v1181 = vadd.f32 0.0, %v1180
      %v1182 = vpop.f32.mrf.mxu0
      %v1183 = vadd.f32 0.0, %v1182
      %1184 = vmatmul.bf16.gmra.mxu0 %v1116
      %v1185 = vpop.f32.mrf.mxu0
      %v1186 = vadd.f32 0.0, %v1185
      %v1187 = vpop.f32.mrf.mxu0
      %v1188 = vadd.f32 0.0, %v1187
      %1189 = vmatmul.bf16.gmra.mxu0 %v1117
      %v1190 = vpop.f32.mrf.mxu0
      %v1191 = vadd.f32 0.0, %v1190
      %v1192 = vpop.f32.mrf.mxu0
      %v1193 = vadd.f32 0.0, %v1192
      %1194 = vmatmul.bf16.gmra.mxu0 %v1118
      %v1195 = vpop.f32.mrf.mxu0
      %v1196 = vadd.f32 0.0, %v1195
      %v1197 = vpop.f32.mrf.mxu0
      %v1198 = vadd.f32 0.0, %v1197
      %1199 = vdwg.mxu0
      %v1200 = vadd.f32 %v1050, %v1181
      %v1201 = vadd.f32 %v1051, %v1183
      %v1202 = vadd.f32 %v1052, %v1186
      %v1203 = vadd.f32 %v1053, %v1188
      %v1204 = vadd.f32 %v1054, %v1191
      %v1205 = vadd.f32 %v1055, %v1193
      %v1206 = vadd.f32 %v1056, %v1196
      %v1207 = vadd.f32 %v1057, %v1198
      %s1208 = sadd.s32 %s207, 2
      %s1209 = smul.u32 %s1208, 3
      %s1210 = smul.addr %s1209, 4
      %s1211 = scalar_lea.vmem %s191, %s1210
      %v1212 = vld [vmem:[%s1211] sm:$0xf]
      %v1213 = vld [vmem:[%s1211 + $0x4] sm:$0xf]
      %v1214 = vld [vmem:[%s1211 + $0x8] sm:$0x1]
      %v1215 = vld [vmem:[%s1211 + $0xc] sm:$0xf]
      %v1216 = vld [vmem:[%s1211 + $0x10] sm:$0xf]
      %v1217 = vld [vmem:[%s1211 + $0x14] sm:$0x1]
      %v1218 = vld [vmem:[%s1211 + $0x18] sm:$0xf]
      %v1219 = vld [vmem:[%s1211 + $0x1c] sm:$0xf]
      %v1220 = vld [vmem:[%s1211 + $0x20] sm:$0x1]
      %v1221 = vld [vmem:[%s1211 + $0x24] sm:$0xf]
      %v1222 = vld [vmem:[%s1211 + $0x28] sm:$0xf]
      %v1223 = vld [vmem:[%s1211 + $0x2c] sm:$0x1]
      %s1224 = scalar_lea.vmem %s1, 384
      %v1225 = vld [vmem:[%s1224] sm:$0xf]
      %v1226 = vld [vmem:[%s1224 + $0x4] sm:$0xf]
      %v1227 = vld [vmem:[%s1224 + $0x8] sm:$0xf]
      %v1228 = vld [vmem:[%s1224 + $0xc] sm:$0xf]
      %v1229 = vld [vmem:[%s1224 + $0x10] sm:$0xf]
      %v1230 = vld [vmem:[%s1224 + $0x14] sm:$0xf]
      %v1231 = vld [vmem:[%s1224 + $0x18] sm:$0xf]
      %v1232 = vld [vmem:[%s1224 + $0x1c] sm:$0xf]
      %v1233 = vld [vmem:[%s1224 + $0x20] sm:$0xf]
      %v1234 = vld [vmem:[%s1224 + $0x24] sm:$0xf]
      %v1235 = vld [vmem:[%s1224 + $0x28] sm:$0xf]
      %v1236 = vld [vmem:[%s1224 + $0x2c] sm:$0xf]
      %v1237 = vld [vmem:[%s1224 + $0x30] sm:$0xf]
      %v1238 = vld [vmem:[%s1224 + $0x34] sm:$0xf]
      %v1239 = vld [vmem:[%s1224 + $0x38] sm:$0xf]
      %v1240 = vld [vmem:[%s1224 + $0x3c] sm:$0xf]
      %v1249 = vunpack.c.l.b16 %v1212
      %v1250 = vunpack.c.l.b16 %v1213
      %v1251 = vunpack.c.l.b16 %v1215
      %v1252 = vunpack.c.l.b16 %v1216
      %v1253 = vunpack.c.l.b16 %v1218
      %v1254 = vunpack.c.l.b16 %v1219
      %v1255 = vunpack.c.l.b16 %v1221
      %v1256 = vunpack.c.l.b16 %v1222
      %v1257 = vpack.c.b16 %v1250, %v1249
      %v1258 = vpack.c.b16 %v1252, %v1251
      %v1259 = vpack.c.b16 %v1254, %v1253
      %v1260 = vpack.c.b16 %v1256, %v1255
      %v1281 = vunpack.c.l.b16 %v1225
      %v1282 = vunpack.c.l.b16 %v1226
      %v1283 = vunpack.c.l.b16 %v1227
      %v1284 = vunpack.c.l.b16 %v1228
      %v1285 = vunpack.c.l.b16 %v1229
      %v1286 = vunpack.c.l.b16 %v1230
      %v1287 = vunpack.c.l.b16 %v1231
      %v1288 = vunpack.c.l.b16 %v1232
      %v1289 = vunpack.c.l.b16 %v1233
      %v1290 = vunpack.c.l.b16 %v1234
      %v1291 = vunpack.c.l.b16 %v1235
      %v1292 = vunpack.c.l.b16 %v1236
      %v1293 = vunpack.c.l.b16 %v1237
      %v1294 = vunpack.c.l.b16 %v1238
      %v1295 = vunpack.c.l.b16 %v1239
      %v1296 = vunpack.c.l.b16 %v1240
      %v1297 = vpack.c.b16 %v1282, %v1281
      %v1298 = vpack.c.b16 %v1284, %v1283
      %v1299 = vpack.c.b16 %v1286, %v1285
      %v1300 = vpack.c.b16 %v1288, %v1287
      %v1301 = vpack.c.b16 %v1290, %v1289
      %v1302 = vpack.c.b16 %v1292, %v1291
      %v1303 = vpack.c.b16 %v1294, %v1293
      %v1304 = vpack.c.b16 %v1296, %v1295
      %1313 = vmatpush.bf16.msra.mxu0 %v1304
      %1314 = vmatpush.bf16.msra.mxu0 %v1303
      %1315 = vmatpush.bf16.msra.mxu0 %v1302
      %1316 = vmatpush.bf16.msra.mxu0 %v1301
      %1317 = vmatpush.bf16.msra.mxu0 %v1300
      %1318 = vmatpush.bf16.msra.mxu0 %v1299
      %1319 = vmatpush.bf16.msra.mxu0 %v1298
      %1320 = vmatpush.bf16.msra.mxu0 %v1297
      %1321 = vmatmul.bf16.gmra.mxu0 %v1257
      %v1322 = vpop.f32.mrf.mxu0
      %v1323 = vadd.f32 0.0, %v1322
      %v1324 = vpop.f32.mrf.mxu0
      %v1325 = vadd.f32 0.0, %v1324
      %1326 = vmatmul.bf16.gmra.mxu0 %v1258
      %v1327 = vpop.f32.mrf.mxu0
      %v1328 = vadd.f32 0.0, %v1327
      %v1329 = vpop.f32.mrf.mxu0
      %v1330 = vadd.f32 0.0, %v1329
      %1331 = vmatmul.bf16.gmra.mxu0 %v1259
      %v1332 = vpop.f32.mrf.mxu0
      %v1333 = vadd.f32 0.0, %v1332
      %v1334 = vpop.f32.mrf.mxu0
      %v1335 = vadd.f32 0.0, %v1334
      %1336 = vmatmul.bf16.gmra.mxu0 %v1260
      %v1337 = vpop.f32.mrf.mxu0
      %v1338 = vadd.f32 0.0, %v1337
      %v1339 = vpop.f32.mrf.mxu0
      %v1340 = vadd.f32 0.0, %v1339
      %1341 = vdwg.mxu0
      %v1342 = vadd.f32 %v1200, %v1323
      %v1343 = vadd.f32 %v1201, %v1325
      %v1344 = vadd.f32 %v1202, %v1328
      %v1345 = vadd.f32 %v1203, %v1330
      %v1346 = vadd.f32 %v1204, %v1333
      %v1347 = vadd.f32 %v1205, %v1335
      %v1348 = vadd.f32 %v1206, %v1338
      %v1349 = vadd.f32 %v1207, %v1340
      %v1351 = vshrl.u32 %v1212, 16
      %v1353 = vrot.slane %v1351, 4
      %v1354 = vshll.u32 %v1212, 16
      %v1356 = vrot.slane %v1354, 5
      %v1357 = vor.u32 %v1353, %v1356
      %v1358 = vrot.slane %v1357, 4
      %v1360 = vshll.u32 %v1213, 16
      %v1362 = vrot.slane %v1360, 5
      %v1363 = vsel %vm241, %v1358, %v1362
      %v1364 = vshrl.u32 %v1213, 16
      %v1366 = vrot.slane %v1364, 4
      %v1367 = vor.u32 %v1366, %v1362
      %v1368 = vrot.slane %v1367, 4
      %v1370 = vshll.u32 %v1214, 16
      %v1372 = vrot.slane %v1370, 5
      %v1373 = vsel %vm241, %v1368, %v1372
      %v1375 = vshrl.u32 %v1215, 16
      %v1377 = vrot.slane %v1375, 4
      %v1378 = vshll.u32 %v1215, 16
      %v1380 = vrot.slane %v1378, 5
      %v1381 = vor.u32 %v1377, %v1380
      %v1382 = vrot.slane %v1381, 4
      %v1384 = vshll.u32 %v1216, 16
      %v1386 = vrot.slane %v1384, 5
      %v1387 = vsel %vm241, %v1382, %v1386
      %v1388 = vshrl.u32 %v1216, 16
      %v1390 = vrot.slane %v1388, 4
      %v1391 = vor.u32 %v1390, %v1386
      %v1392 = vrot.slane %v1391, 4
      %v1394 = vshll.u32 %v1217, 16
      %v1396 = vrot.slane %v1394, 5
      %v1397 = vsel %vm241, %v1392, %v1396
      %v1399 = vshrl.u32 %v1218, 16
      %v1401 = vrot.slane %v1399, 4
      %v1402 = vshll.u32 %v1218, 16
      %v1404 = vrot.slane %v1402, 5
      %v1405 = vor.u32 %v1401, %v1404
      %v1406 = vrot.slane %v1405, 4
      %v1408 = vshll.u32 %v1219, 16
      %v1410 = vrot.slane %v1408, 5
      %v1411 = vsel %vm241, %v1406, %v1410
      %v1412 = vshrl.u32 %v1219, 16
      %v1414 = vrot.slane %v1412, 4
      %v1415 = vor.u32 %v1414, %v1410
      %v1416 = vrot.slane %v1415, 4
      %v1418 = vshll.u32 %v1220, 16
      %v1420 = vrot.slane %v1418, 5
      %v1421 = vsel %vm241, %v1416, %v1420
      %v1423 = vshrl.u32 %v1221, 16
      %v1425 = vrot.slane %v1423, 4
      %v1426 = vshll.u32 %v1221, 16
      %v1428 = vrot.slane %v1426, 5
      %v1429 = vor.u32 %v1425, %v1428
      %v1430 = vrot.slane %v1429, 4
      %v1432 = vshll.u32 %v1222, 16
      %v1434 = vrot.slane %v1432, 5
      %v1435 = vsel %vm241, %v1430, %v1434
      %v1436 = vshrl.u32 %v1222, 16
      %v1438 = vrot.slane %v1436, 4
      %v1439 = vor.u32 %v1438, %v1434
      %v1440 = vrot.slane %v1439, 4
      %v1442 = vshll.u32 %v1223, 16
      %v1444 = vrot.slane %v1442, 5
      %v1445 = vsel %vm241, %v1440, %v1444
      %s1446 = scalar_lea.vmem %s1, 448
      %v1447 = vld [vmem:[%s1446] sm:$0xf]
      %v1448 = vld [vmem:[%s1446 + $0x4] sm:$0xf]
      %v1449 = vld [vmem:[%s1446 + $0x8] sm:$0xf]
      %v1450 = vld [vmem:[%s1446 + $0xc] sm:$0xf]
      %v1451 = vld [vmem:[%s1446 + $0x10] sm:$0xf]
      %v1452 = vld [vmem:[%s1446 + $0x14] sm:$0xf]
      %v1453 = vld [vmem:[%s1446 + $0x18] sm:$0xf]
      %v1454 = vld [vmem:[%s1446 + $0x1c] sm:$0xf]
      %v1455 = vld [vmem:[%s1446 + $0x20] sm:$0xf]
      %v1456 = vld [vmem:[%s1446 + $0x24] sm:$0xf]
      %v1457 = vld [vmem:[%s1446 + $0x28] sm:$0xf]
      %v1458 = vld [vmem:[%s1446 + $0x2c] sm:$0xf]
      %v1459 = vld [vmem:[%s1446 + $0x30] sm:$0xf]
      %v1460 = vld [vmem:[%s1446 + $0x34] sm:$0xf]
      %v1461 = vld [vmem:[%s1446 + $0x38] sm:$0xf]
      %v1462 = vld [vmem:[%s1446 + $0x3c] sm:$0xf]
      %v1463 = vunpack.c.l.b16 %v1363
      %v1464 = vunpack.c.l.b16 %v1373
      %v1465 = vunpack.c.l.b16 %v1387
      %v1466 = vunpack.c.l.b16 %v1397
      %v1467 = vunpack.c.l.b16 %v1411
      %v1468 = vunpack.c.l.b16 %v1421
      %v1469 = vunpack.c.l.b16 %v1435
      %v1470 = vunpack.c.l.b16 %v1445
      %v1471 = vpack.c.b16 %v1464, %v1463
      %v1472 = vpack.c.b16 %v1466, %v1465
      %v1473 = vpack.c.b16 %v1468, %v1467
      %v1474 = vpack.c.b16 %v1470, %v1469
      %v1495 = vunpack.c.l.b16 %v1447
      %v1496 = vunpack.c.l.b16 %v1448
      %v1497 = vunpack.c.l.b16 %v1449
      %v1498 = vunpack.c.l.b16 %v1450
      %v1499 = vunpack.c.l.b16 %v1451
      %v1500 = vunpack.c.l.b16 %v1452
      %v1501 = vunpack.c.l.b16 %v1453
      %v1502 = vunpack.c.l.b16 %v1454
      %v1503 = vunpack.c.l.b16 %v1455
      %v1504 = vunpack.c.l.b16 %v1456
      %v1505 = vunpack.c.l.b16 %v1457
      %v1506 = vunpack.c.l.b16 %v1458
      %v1507 = vunpack.c.l.b16 %v1459
      %v1508 = vunpack.c.l.b16 %v1460
      %v1509 = vunpack.c.l.b16 %v1461
      %v1510 = vunpack.c.l.b16 %v1462
      %v1511 = vpack.c.b16 %v1496, %v1495
      %v1512 = vpack.c.b16 %v1498, %v1497
      %v1513 = vpack.c.b16 %v1500, %v1499
      %v1514 = vpack.c.b16 %v1502, %v1501
      %v1515 = vpack.c.b16 %v1504, %v1503
      %v1516 = vpack.c.b16 %v1506, %v1505
      %v1517 = vpack.c.b16 %v1508, %v1507
      %v1518 = vpack.c.b16 %v1510, %v1509
      %1527 = vmatpush.bf16.msra.mxu0 %v1518
      %1528 = vmatpush.bf16.msra.mxu0 %v1517
      %1529 = vmatpush.bf16.msra.mxu0 %v1516
      %1530 = vmatpush.bf16.msra.mxu0 %v1515
      %1531 = vmatpush.bf16.msra.mxu0 %v1514
      %1532 = vmatpush.bf16.msra.mxu0 %v1513
      %1533 = vmatpush.bf16.msra.mxu0 %v1512
      %1534 = vmatpush.bf16.msra.mxu0 %v1511
      %1535 = vmatmul.bf16.gmra.mxu0 %v1471
      %v1536 = vpop.f32.mrf.mxu0
      %v1537 = vadd.f32 0.0, %v1536
      %v1538 = vpop.f32.mrf.mxu0
      %v1539 = vadd.f32 0.0, %v1538
      %1540 = vmatmul.bf16.gmra.mxu0 %v1472
      %v1541 = vpop.f32.mrf.mxu0
      %v1542 = vadd.f32 0.0, %v1541
      %v1543 = vpop.f32.mrf.mxu0
      %v1544 = vadd.f32 0.0, %v1543
      %1545 = vmatmul.bf16.gmra.mxu0 %v1473
      %v1546 = vpop.f32.mrf.mxu0
      %v1547 = vadd.f32 0.0, %v1546
      %v1548 = vpop.f32.mrf.mxu0
      %v1549 = vadd.f32 0.0, %v1548
      %1550 = vmatmul.bf16.gmra.mxu0 %v1474
      %v1551 = vpop.f32.mrf.mxu0
      %v1552 = vadd.f32 0.0, %v1551
      %v1553 = vpop.f32.mrf.mxu0
      %v1554 = vadd.f32 0.0, %v1553
      %1555 = vdwg.mxu0
      %v1556 = vadd.f32 %v1342, %v1537
      %v1557 = vadd.f32 %v1343, %v1539
      %v1558 = vadd.f32 %v1344, %v1542
      %v1559 = vadd.f32 %v1345, %v1544
      %v1560 = vadd.f32 %v1346, %v1547
      %v1561 = vadd.f32 %v1347, %v1549
      %v1562 = vadd.f32 %v1348, %v1552
      %v1563 = vadd.f32 %v1349, %v1554
      %v1568 = vrot.slane %v1212, 5
      %v1569 = vrot.slane %v1568, 4
      %v1570 = vrot.slane %v1213, 5
      %v1571 = vsel %vm555, %v1569, %v1570
      %v1572 = vrot.slane %v1570, 4
      %v1573 = vrot.slane %v1214, 5
      %v1574 = vsel %vm555, %v1572, %v1573
      %v1575 = vrot.slane %v1215, 5
      %v1576 = vrot.slane %v1575, 4
      %v1577 = vrot.slane %v1216, 5
      %v1578 = vsel %vm555, %v1576, %v1577
      %v1579 = vrot.slane %v1577, 4
      %v1580 = vrot.slane %v1217, 5
      %v1581 = vsel %vm555, %v1579, %v1580
      %v1582 = vrot.slane %v1218, 5
      %v1583 = vrot.slane %v1582, 4
      %v1584 = vrot.slane %v1219, 5
      %v1585 = vsel %vm555, %v1583, %v1584
      %v1586 = vrot.slane %v1584, 4
      %v1587 = vrot.slane %v1220, 5
      %v1588 = vsel %vm555, %v1586, %v1587
      %v1589 = vrot.slane %v1221, 5
      %v1590 = vrot.slane %v1589, 4
      %v1591 = vrot.slane %v1222, 5
      %v1592 = vsel %vm555, %v1590, %v1591
      %v1593 = vrot.slane %v1591, 4
      %v1594 = vrot.slane %v1223, 5
      %v1595 = vsel %vm555, %v1593, %v1594
      %s1596 = scalar_lea.vmem %s1, 512
      %v1597 = vld [vmem:[%s1596] sm:$0xf]
      %v1598 = vld [vmem:[%s1596 + $0x4] sm:$0xf]
      %v1599 = vld [vmem:[%s1596 + $0x8] sm:$0xf]
      %v1600 = vld [vmem:[%s1596 + $0xc] sm:$0xf]
      %v1601 = vld [vmem:[%s1596 + $0x10] sm:$0xf]
      %v1602 = vld [vmem:[%s1596 + $0x14] sm:$0xf]
      %v1603 = vld [vmem:[%s1596 + $0x18] sm:$0xf]
      %v1604 = vld [vmem:[%s1596 + $0x1c] sm:$0xf]
      %v1605 = vld [vmem:[%s1596 + $0x20] sm:$0xf]
      %v1606 = vld [vmem:[%s1596 + $0x24] sm:$0xf]
      %v1607 = vld [vmem:[%s1596 + $0x28] sm:$0xf]
      %v1608 = vld [vmem:[%s1596 + $0x2c] sm:$0xf]
      %v1609 = vld [vmem:[%s1596 + $0x30] sm:$0xf]
      %v1610 = vld [vmem:[%s1596 + $0x34] sm:$0xf]
      %v1611 = vld [vmem:[%s1596 + $0x38] sm:$0xf]
      %v1612 = vld [vmem:[%s1596 + $0x3c] sm:$0xf]
      %v1613 = vunpack.c.l.b16 %v1571
      %v1614 = vunpack.c.l.b16 %v1574
      %v1615 = vunpack.c.l.b16 %v1578
      %v1616 = vunpack.c.l.b16 %v1581
      %v1617 = vunpack.c.l.b16 %v1585
      %v1618 = vunpack.c.l.b16 %v1588
      %v1619 = vunpack.c.l.b16 %v1592
      %v1620 = vunpack.c.l.b16 %v1595
      %v1621 = vpack.c.b16 %v1614, %v1613
      %v1622 = vpack.c.b16 %v1616, %v1615
      %v1623 = vpack.c.b16 %v1618, %v1617
      %v1624 = vpack.c.b16 %v1620, %v1619
      %v1645 = vunpack.c.l.b16 %v1597
      %v1646 = vunpack.c.l.b16 %v1598
      %v1647 = vunpack.c.l.b16 %v1599
      %v1648 = vunpack.c.l.b16 %v1600
      %v1649 = vunpack.c.l.b16 %v1601
      %v1650 = vunpack.c.l.b16 %v1602
      %v1651 = vunpack.c.l.b16 %v1603
      %v1652 = vunpack.c.l.b16 %v1604
      %v1653 = vunpack.c.l.b16 %v1605
      %v1654 = vunpack.c.l.b16 %v1606
      %v1655 = vunpack.c.l.b16 %v1607
      %v1656 = vunpack.c.l.b16 %v1608
      %v1657 = vunpack.c.l.b16 %v1609
      %v1658 = vunpack.c.l.b16 %v1610
      %v1659 = vunpack.c.l.b16 %v1611
      %v1660 = vunpack.c.l.b16 %v1612
      %v1661 = vpack.c.b16 %v1646, %v1645
      %v1662 = vpack.c.b16 %v1648, %v1647
      %v1663 = vpack.c.b16 %v1650, %v1649
      %v1664 = vpack.c.b16 %v1652, %v1651
      %v1665 = vpack.c.b16 %v1654, %v1653
      %v1666 = vpack.c.b16 %v1656, %v1655
      %v1667 = vpack.c.b16 %v1658, %v1657
      %v1668 = vpack.c.b16 %v1660, %v1659
      %1677 = vmatpush.bf16.msra.mxu0 %v1668
      %1678 = vmatpush.bf16.msra.mxu0 %v1667
      %1679 = vmatpush.bf16.msra.mxu0 %v1666
      %1680 = vmatpush.bf16.msra.mxu0 %v1665
      %1681 = vmatpush.bf16.msra.mxu0 %v1664
      %1682 = vmatpush.bf16.msra.mxu0 %v1663
      %1683 = vmatpush.bf16.msra.mxu0 %v1662
      %1684 = vmatpush.bf16.msra.mxu0 %v1661
      %1685 = vmatmul.bf16.gmra.mxu0 %v1621
      %v1686 = vpop.f32.mrf.mxu0
      %v1687 = vadd.f32 0.0, %v1686
      %v1688 = vpop.f32.mrf.mxu0
      %v1689 = vadd.f32 0.0, %v1688
      %1690 = vmatmul.bf16.gmra.mxu0 %v1622
      %v1691 = vpop.f32.mrf.mxu0
      %v1692 = vadd.f32 0.0, %v1691
      %v1693 = vpop.f32.mrf.mxu0
      %v1694 = vadd.f32 0.0, %v1693
      %1695 = vmatmul.bf16.gmra.mxu0 %v1623
      %v1696 = vpop.f32.mrf.mxu0
      %v1697 = vadd.f32 0.0, %v1696
      %v1698 = vpop.f32.mrf.mxu0
      %v1699 = vadd.f32 0.0, %v1698
      %1700 = vmatmul.bf16.gmra.mxu0 %v1624
      %v1701 = vpop.f32.mrf.mxu0
      %v1702 = vadd.f32 0.0, %v1701
      %v1703 = vpop.f32.mrf.mxu0
      %v1704 = vadd.f32 0.0, %v1703
      %1705 = vdwg.mxu0
      %v1706 = vadd.f32 %v1556, %v1687
      %v1707 = vadd.f32 %v1557, %v1689
      %v1708 = vadd.f32 %v1558, %v1692
      %v1709 = vadd.f32 %v1559, %v1694
      %v1710 = vadd.f32 %v1560, %v1697
      %v1711 = vadd.f32 %v1561, %v1699
      %v1712 = vadd.f32 %v1562, %v1702
      %v1713 = vadd.f32 %v1563, %v1704
      %1714 = vst [vmem:[%s201] sm:$0xff] %v1706
      %1715 = vst [vmem:[%s201 + $0x8] sm:$0xff] %v1707
      %1716 = vst [vmem:[%s201 + $0x10] sm:$0xff] %v1708
      %1717 = vst [vmem:[%s201 + $0x18] sm:$0xff] %v1709
      %1718 = vst [vmem:[%s201 + $0x20] sm:$0xff] %v1710
      %1719 = vst [vmem:[%s201 + $0x28] sm:$0xff] %v1711
      %1720 = vst [vmem:[%s201 + $0x30] sm:$0xff] %v1712
      %1721 = vst [vmem:[%s201 + $0x38] sm:$0xff] %v1713
      %v1722 = vadd.f32 %v1706, %v1707
      %v1723 = vadd.f32 %v1722, %v1708
      %v1724 = vadd.f32 %v1723, %v1709
      %v1725 = vadd.f32 %v1724, %v1710
      %v1726 = vadd.f32 %v1725, %v1711
      %v1727 = vadd.f32 %v1726, %v1712
      %v1728 = vadd.f32 %v1727, %v1713
      %v1729 = vrot.slane %v1728, 4
      %v1730 = vadd.f32 %v1728, %v1729
      %v1731 = vrot.slane %v1730, 2
      %v1732 = vadd.f32 %v1730, %v1731
      %v1733 = vrot.slane %v1732, 1
      %v1734 = vadd.f32 %v1732, %v1733
      %v1735 = vmul.f32 %v1706, %v1706
      %v1736 = vmul.f32 %v1707, %v1707
      %v1737 = vmul.f32 %v1708, %v1708
      %v1738 = vmul.f32 %v1709, %v1709
      %v1739 = vmul.f32 %v1710, %v1710
      %v1740 = vmul.f32 %v1711, %v1711
      %v1741 = vmul.f32 %v1712, %v1712
      %v1742 = vmul.f32 %v1713, %v1713
      %v1743 = vadd.f32 %v1735, %v1736
      %v1744 = vadd.f32 %v1743, %v1737
      %v1745 = vadd.f32 %v1744, %v1738
      %v1746 = vadd.f32 %v1745, %v1739
      %v1747 = vadd.f32 %v1746, %v1740
      %v1748 = vadd.f32 %v1747, %v1741
      %v1749 = vadd.f32 %v1748, %v1742
      %v1750 = vrot.slane %v1749, 4
      %v1751 = vadd.f32 %v1749, %v1750
      %v1752 = vrot.slane %v1751, 2
      %v1753 = vadd.f32 %v1751, %v1752
      %v1754 = vrot.slane %v1753, 1
      %v1755 = vadd.f32 %v1753, %v1754
      %vm1756 = vcmask 1040384
      %v1757 = vsel %vm1756, %v1734, %v1755
      %p1758 = scmp.eq.s32.totalorder %s20, 0
      // Predicated region
      $region29: #{basic_block_forward.4} parent=27 // pred_check
        %p1759 = pneg %p1758
      $region30: #{basic_block_forward.4} parent=27 // pred_check_branch
        %1761 = sbr.rel (%p1759) target = $region32
      $region31: #{basic_block_forward.4} parent=27 // pred_region
        %1762 = vst [vmem:[%s206] sm:$0x3] 0.0
      $region32: #{basic_block_forward.4} parent=27 // pred_fallthru
        _
      %v1763 = vld [vmem:[%s206] sm:$0x3]
      %v1764 = vadd.f32 %v1763, %v1757
      %1765 = vst [vmem:[%s206] sm:$0x3] %v1764
      %s1766 = smul.u32 4, %s20
      %p1767 = scmp.lt.s32.totalorder %s19, 1
      %s1768 = scalar_select %p1767, %s19, 1
      %p1769 = scmp.lt.s32.totalorder %s1766, 15
      %s1770 = scalar_select %p1769, %s1766, 15
      %s1771 = smul.addr %s1770, 2
      %s1772 = smul.addr %s1768, 32
      %s1773 = sadd.s32 %s1771, %s1772
      %s1774 = smul.addr %s1773, 8
      %s1775 = scalar_lea.vmem %s2, %s1774
      %p1776 = scmp.lt.s32.totalorder %s19, 1
      %s1777 = scalar_select %p1776, %s19, 1
      %s1778 = smul.addr %s1777, 2
      %s1779 = scalar_lea.vmem %s3, %s1778
      // Predicated region
      $region33: #{basic_block_forward.4} parent=27 // pred_check
        %p1780 = pneg %p94
      $region34: #{basic_block_forward.4} parent=27 // pred_check_branch
        %1782 = sbr.rel (%p1780) target = $region36
      $region35: #{basic_block_forward.4} parent=27 // pred_region
        %s1783 = smul.u32 4, %s20
      $region36: #{basic_block_forward.4} parent=27 // pred_fallthru
        _
      // Predicated region
      $region37: #{basic_block_forward.4} parent=27 // pred_check
        %p1784 = pneg %p120
      $region38: #{basic_block_forward.4} parent=27 // pred_check_branch
        %1786 = sbr.rel (%p1784) target = $region40
      $region39: #{basic_block_forward.4} parent=27 // pred_region
        _
      $region40: #{basic_block_forward.4} parent=27 // pred_fallthru
        _
    $region28: #{basic_block_forward.4} parent=5 // pred_fallthru
      _
    %p1787 = scmp.le.s32.totalorder 2, %s10
    // Predicated region
    $region41: #{basic_block_forward.4} parent=5 // pred_check
      %p1788 = pneg %p1787
    $region42: #{basic_block_forward.4} parent=5 // pred_check_branch
      %1790 = sbr.rel (%p1788) target = $region44
    $region43: #{basic_block_forward.4} parent=5 // pred_region
      %s1791 = ssub.s32 %s10, 2
      // Predicated region
      $region45: #{basic_block_forward.4} parent=43 // pred_check
        %p1792 = pneg %p100
      $region46: #{basic_block_forward.4} parent=43 // pred_check_branch
        %1794 = sbr.rel (%p1792) target = $region48
      $region47: #{basic_block_forward.4} parent=43 // pred_region
        %s1795 = smul.u32 4, %s22
        %p1796 = scmp.lt.s32.totalorder %s21, 1
        %s1797 = scalar_select %p1796, %s21, 1
        %p1798 = scmp.lt.s32.totalorder %s1795, 15
        %s1799 = scalar_select %p1798, %s1795, 15
        %s1800 = smul.addr %s1799, 2
        %s1801 = smul.addr %s1797, 32
        %s1802 = sadd.s32 %s1800, %s1801
        %s1803 = smul.addr %s1802, 8
        %s1804 = scalar_lea.vmem %s2, %s1803
      $region48: #{basic_block_forward.4} parent=43 // pred_fallthru
        _
      // Predicated region
      $region49: #{basic_block_forward.4} parent=43 // pred_check
        %p1805 = pneg %p126
      $region50: #{basic_block_forward.4} parent=43 // pred_check_branch
        %1807 = sbr.rel (%p1805) target = $region52
      $region51: #{basic_block_forward.4} parent=43 // pred_region
        %p1808 = scmp.lt.s32.totalorder %s21, 1
        %s1809 = scalar_select %p1808, %s21, 1
        %s1810 = smul.addr %s1809, 2
        %s1811 = scalar_lea.vmem %s3, %s1810
      $region52: #{basic_block_forward.4} parent=43 // pred_fallthru
        _
    $region44: #{basic_block_forward.4} parent=5 // pred_fallthru
      _
  $region6: #{basic_block_forward.4} parent=0 // loop_footer
    %s14 = sadd.s32 1, %s10
  $region7: #{basic_block_forward.4} parent=0 // loop_footer_branch
    %9 = sbr.rel target = $region3
  $region8: #{basic_block_forward.4} parent=0 // loop_exit
    _

</llo_original>
